<compile_context>
chip_gen: v6e
topology: v6e:2x2x1
jax: 0.10.0
libtpu: 0.0.40
codegen_flags: <defaults>
</compile_context>

<pallas_src>
import jax
import jax.numpy as jnp
import numpy as np
from jax.experimental import pallas as pl
from jax.experimental.pallas import tpu as pltpu

NUM_GROUPS = 32
EPS = 1e-6


# ------------------------------- kernel helpers -------------------------------

def _swish(x):
    # Exact swish: x * sigmoid(x) = x / (1 + exp(-x)).  Clamp the exponent so
    # exp() never overflows to inf for very negative x (result is ~0 there).
    e = jnp.exp(jnp.minimum(-x, 80.0))
    return x * pl.reciprocal(1.0 + e, approx=False)


def _group_norm_swish_lane(x, gamma_lane, beta_lane, W, C):
    """GroupNorm(32, eps=1e-6) + swish on a lane-dense (bt, H, W*C) tile.

    Stats (mean, centered variance) in f32.  gamma_lane/beta_lane: (1, W*C)
    with the per-channel values tiled over W (lane index = w*C + c).
    """
    bt, H, WC = x.shape
    G = NUM_GROUPS
    cs = C // G
    inv_n = 1.0 / float(H * W * cs)

    def per_group(v_wc):                       # (bt, W*C) -> (bt, G)
        v_c = jnp.sum(v_wc.reshape(bt, W, C), axis=1)
        return jnp.sum(v_c.reshape(bt, G, cs), axis=2)

    def to_lane(v_g):                          # (bt, G) -> (bt, 1, W*C)
        v_c = jnp.broadcast_to(v_g[:, :, None], (bt, G, cs)).reshape(bt, C)
        return jnp.tile(v_c, (1, W))[:, None, :]

    mean = to_lane(per_group(jnp.sum(x, axis=1)) * inv_n)
    xc = x - mean                              # centered (two-pass variance)
    var = per_group(jnp.sum(xc * xc, axis=1)) * inv_n
    inv = to_lane(jax.lax.rsqrt(var + EPS))

    # Fold gamma into the scale: y = (x - mean) * (inv * gamma) + beta.
    y = xc * (inv * gamma_lane.reshape(1, 1, WC)) + beta_lane.reshape(1, 1, WC)
    return _swish(y)


def _conv3x3_band(h, band_ref, bias_lane, H):
    """3x3 SAME conv via 3 banded matmuls (one per kh row tap).

    h: (bt, H, W*Ci) bf16.  band_ref: Ref (3, W*Ci, W*Co) bf16 -- the kw taps
    and the zero padding along W are folded into the band structure, so each
    row tap needs exactly one lane-dense MXU matmul.  bias_lane: (1, W*Co) f32.
    Returns (bt, H, W*Co) f32.
    """
    bt, _, WCi = h.shape
    WCo = band_ref.shape[-1]
    zero_row = jnp.zeros((bt, 1, WCi), h.dtype)
    taps = (
        jnp.concatenate([zero_row, h[:, :H - 1, :]], axis=1),   # rows y-1
        h,                                                      # rows y
        jnp.concatenate([h[:, 1:, :], zero_row], axis=1),       # rows y+1
    )
    acc = jnp.dot(taps[0].reshape(bt * H, WCi), band_ref[0],
                  preferred_element_type=jnp.float32)
    for kh in (1, 2):
        acc = acc + jnp.dot(taps[kh].reshape(bt * H, WCi), band_ref[kh],
                            preferred_element_type=jnp.float32)
    return acc.reshape(bt, H, WCo) + bias_lane.reshape(1, 1, WCo)


# ---------------------------------- kernel ------------------------------------

def _make_kernel(bt, H, W, cin, cout, has_nin):
    def kernel(x_ref, tproj_ref,
               g1_ref, be1_ref, band1_ref, cb1_ref,
               g2_ref, be2_ref, band2_ref, cb2_ref,
               *rest):
        if has_nin:
            ninw_ref, ninb_ref, o_ref = rest
        else:
            (o_ref,) = rest

        x = x_ref[...]                                            # (bt, H, W*cin) f32

        # norm1 + swish (f32 stats), conv1 (bf16 banded matmuls, f32 accumulate)
        h = _group_norm_swish_lane(x, g1_ref[...], be1_ref[...], W, cin)
        h = _conv3x3_band(h.astype(jnp.bfloat16), band1_ref, cb1_ref[...], H)

        # + hoisted temb projection (already tiled over W lanes), broadcast over H
        h = h + tproj_ref[...]                                    # (bt, 1, W*cout)

        # norm2 + swish + (dropout = identity at inference) + conv2
        h = _group_norm_swish_lane(h, g2_ref[...], be2_ref[...], W, cout)
        h = _conv3x3_band(h.astype(jnp.bfloat16), band2_ref, cb2_ref[...], H)

        # shortcut: 1x1 nin as a block-diagonal lane-dense matmul
        if has_nin:
            xs = jnp.dot(x.astype(jnp.bfloat16).reshape(bt * H, W * cin),
                         ninw_ref[...], preferred_element_type=jnp.float32)
            xs = xs.reshape(bt, H, W * cout) + ninb_ref[...].reshape(1, 1, W * cout)
        else:
            xs = x

        o_ref[...] = xs + h                                       # lane-dense store

    return kernel


# --------------------------------- wrapper ------------------------------------

def _pick_batch_tile(batch, hw, target_rows=512, max_rows=4096):
    """Pack images per grid step; keep >= 2 grid steps so both v7x TCs get work."""
    best = 1
    for cand in range(1, batch + 1):
        if batch % cand:
            continue
        if cand * hw > max_rows:
            break
        if batch >= 2 and batch // cand < 2:
            break
        best = cand
        if cand * hw >= target_rows:
            break
    return best


def _conv_band_weight(w_hwio, W):
    """(3, 3, Ci, Co) HWIO conv weight -> (3, W*Ci, W*Co) banded matrices.

    band[kh, x*Ci + i, xo*Co + o] = w[kh, x - xo + 1, i, o] for |x - xo| <= 1,
    so (bt*H, W*Ci) @ band[kh] applies all kw taps of row kh with SAME padding.
    """
    _, _, ci, co = w_hwio.shape
    sel = np.zeros((3, W, W), np.float32)          # sel[kw, x, xo]
    for kw in range(3):
        for xo in range(W):
            x = xo + kw - 1
            if 0 <= x < W:
                sel[kw, x, xo] = 1.0
    band = jnp.einsum("hwio,wxz->hxizo", w_hwio, jnp.asarray(sel, w_hwio.dtype))
    return band.reshape(3, W * ci, W * co)


def _nin_band_weight(w_io, W):
    """(Ci, Co) 1x1 conv weight -> block-diagonal (W*Ci, W*Co)."""
    ci, co = w_io.shape
    eye = jnp.asarray(np.eye(W, dtype=np.float32), w_io.dtype)
    return jnp.einsum("io,xz->xizo", w_io, eye).reshape(W * ci, W * co)


def resnet_block_forward(x_nchw, temb, params):
    """x_nchw: (B, Cin, H, W) f32; temb: (B, Tc) f32. Returns (B, Cout, H, W) f32."""
    B, cin, H, W = x_nchw.shape
    cout = params["conv1_w"].shape[-1]
    has_nin = cin != cout
    assert cin % NUM_GROUPS == 0 and cout % NUM_GROUPS == 0, \
        "GroupNorm(32, C) requires channels divisible by 32"
    bt = _pick_batch_tile(B, H * W)
    wcin, wcout = W * cin, W * cout

    # Lane-dense NHWC view with W folded into the lane axis: (B, H, W*Cin).
    # TODO(synk): keep the whole UNet NHWC to drop these two wrapper transposes.
    x_lane = jnp.transpose(x_nchw, (0, 2, 3, 1)).reshape(B, H, wcin).astype(jnp.float32)

    # temb projection hoisted (one batched matmul), tiled over W lanes.
    tproj = jax.nn.silu(temb.astype(jnp.float32)) @ params["temb_w"] + params["temb_b"]
    tproj_lane = jnp.tile(tproj, (1, W)).reshape(B, 1, wcout)

    # Per-channel parameters tiled over W so they align with the lane layout.
    tile_w = lambda v: jnp.tile(v.reshape(1, -1).astype(jnp.float32), (1, W))
    g1, be1 = tile_w(params["norm1_g"]), tile_w(params["norm1_b"])
    g2, be2 = tile_w(params["norm2_g"]), tile_w(params["norm2_b"])
    cb1, cb2 = tile_w(params["conv1_b"]), tile_w(params["conv2_b"])

    # Banded conv weights (kw taps + zero padding folded in), bf16 for the MXU.
    band1 = _conv_band_weight(params["conv1_w"], W).astype(jnp.bfloat16)
    band2 = _conv_band_weight(params["conv2_w"], W).astype(jnp.bfloat16)

    args = [x_lane, tproj_lane, g1, be1, band1, cb1, g2, be2, band2, cb2]
    const = lambda shp: pl.BlockSpec(shp, lambda b: (0,) * len(shp))
    in_specs = [
        pl.BlockSpec((bt, H, wcin), lambda b: (b, 0, 0)),
        pl.BlockSpec((bt, 1, wcout), lambda b: (b, 0, 0)),
        const((1, wcin)), const((1, wcin)),
        const((3, wcin, wcout)), const((1, wcout)),
        const((1, wcout)), const((1, wcout)),
        const((3, wcout, wcout)), const((1, wcout)),
    ]
    if has_nin:
        args += [_nin_band_weight(params["nin_w"], W).astype(jnp.bfloat16),
                 tile_w(params["nin_b"])]
        in_specs += [const((wcin, wcout)), const((1, wcout))]

    out = pl.pallas_call(
        _make_kernel(bt, H, W, cin, cout, has_nin),
        out_shape=jax.ShapeDtypeStruct((B, H, wcout), jnp.float32),
        grid_spec=pltpu.PrefetchScalarGridSpec(
            num_scalar_prefetch=0,
            grid=(B // bt,),
            in_specs=in_specs,
            out_specs=pl.BlockSpec((bt, H, wcout), lambda b: (b, 0, 0)),
        ),
        compiler_params=pltpu.CompilerParams(
            dimension_semantics=("parallel",)),
    )(*args)

    return jnp.transpose(out.reshape(B, H, W, cout), (0, 3, 1, 2))


# ------------------------------ plain-JAX reference ----------------------------

def _ref_forward(x_nchw, temb, params):
    cin = x_nchw.shape[1]
    cout = params["conv1_w"].shape[-1]

    def gn(x, gamma, beta, c):
        b, _, h, w = x.shape
        xr = x.reshape(b, NUM_GROUPS, c // NUM_GROUPS, h, w)
        m = xr.mean(axis=(2, 3, 4), keepdims=True)
        v = xr.var(axis=(2, 3, 4), keepdims=True)
        xn = ((xr - m) * jax.lax.rsqrt(v + EPS)).reshape(b, c, h, w)
        return xn * gamma.reshape(1, c, 1, 1) + beta.reshape(1, c, 1, 1)

    def conv3(x, w, b):  # x NCHW, w HWIO
        y = jax.lax.conv_general_dilated(
            jnp.transpose(x, (0, 2, 3, 1)), w, (1, 1), "SAME",
            dimension_numbers=("NHWC", "HWIO", "NHWC"))
        return jnp.transpose(y + b.reshape(1, 1, 1, -1), (0, 3, 1, 2))

    sw = lambda z: z * jax.nn.sigmoid(z)
    h = gn(x_nchw, params["norm1_g"][0], params["norm1_b"][0], cin)
    h = conv3(sw(h), params["conv1_w"], params["conv1_b"][0])
    h = h + (sw(temb) @ params["temb_w"] + params["temb_b"][0]).reshape(-1, cout, 1, 1)
    h = gn(h, params["norm2_g"][0], params["norm2_b"][0], cout)
    h = conv3(sw(h), params["conv2_w"], params["conv2_b"][0])
    if cin != cout:
        xs = (jnp.einsum("bchw,cd->bdhw", x_nchw, params["nin_w"])
              + params["nin_b"][0].reshape(1, cout, 1, 1))
    else:
        xs = x_nchw
    return xs + h


# ----------------------------------- main --------------------------------------

def _make_params(key, cin, cout, tc):
    ks = jax.random.split(key, 12)
    f32 = jnp.float32
    return {
        "norm1_g": 1.0 + 0.1 * jax.random.normal(ks[0], (1, cin), f32),
        "norm1_b": 0.1 * jax.random.normal(ks[1], (1, cin), f32),
        "conv1_w": 0.05 * jax.random.normal(ks[2], (3, 3, cin, cout), f32),
        "conv1_b": 0.05 * jax.random.normal(ks[3], (1, cout), f32),
        "temb_w": 0.05 * jax.random.normal(ks[4], (tc, cout), f32),
        "temb_b": 0.05 * jax.random.normal(ks[5], (1, cout), f32),
        "norm2_g": 1.0 + 0.1 * jax.random.normal(ks[6], (1, cout), f32),
        "norm2_b": 0.1 * jax.random.normal(ks[7], (1, cout), f32),
        "conv2_w": 0.05 * jax.random.normal(ks[8], (3, 3, cout, cout), f32),
        "conv2_b": 0.05 * jax.random.normal(ks[9], (1, cout), f32),
        "nin_w": 0.05 * jax.random.normal(ks[10], (cin, cout), f32),
        "nin_b": 0.05 * jax.random.normal(ks[11], (1, cout), f32),
    }


if __name__ == "__main__":
    key = jax.random.PRNGKey(0)
    B, H, W, Tc = 8, 8, 8, 64

    # Two configs: channel-changing block (nin_shortcut path) and identity shortcut.
    for cin, cout in [(32, 64), (32, 32)]:
        kp, kx, kt, key = jax.random.split(key, 4)
        params = _make_params(kp, cin, cout, Tc)
        x = jax.random.normal(kx, (B, cin, H, W), jnp.float32)
        temb = jax.random.normal(kt, (B, Tc), jnp.float32)

        out = jax.block_until_ready(resnet_block_forward(x, temb, params))
        ref = _ref_forward(x, temb, params)

        assert out.shape == (B, cout, H, W)
        max_err = jnp.max(jnp.abs(out - ref))
        # bf16 conv / nin matmuls -> loose (but meaningful) tolerance.
        assert jnp.allclose(out, ref, atol=5e-2, rtol=5e-2), f"max abs err {max_err}"

    print("KERNEL_OK")
</pallas_src>

<mosaic_0001>
module attributes {stable_mosaic.version = 11 : i64} {
  func.func @kernel(%arg0: i32, %arg1: memref<4x8x256xf32, #tpu.memory_space<vmem>>, %arg2: memref<4x1x512xf32, #tpu.memory_space<vmem>>, %arg3: memref<1x256xf32, #tpu.memory_space<vmem>>, %arg4: memref<1x256xf32, #tpu.memory_space<vmem>>, %arg5: memref<3x256x512xbf16, #tpu.memory_space<vmem>>, %arg6: memref<1x512xf32, #tpu.memory_space<vmem>>, %arg7: memref<1x512xf32, #tpu.memory_space<vmem>>, %arg8: memref<1x512xf32, #tpu.memory_space<vmem>>, %arg9: memref<3x512x512xbf16, #tpu.memory_space<vmem>>, %arg10: memref<1x512xf32, #tpu.memory_space<vmem>>, %arg11: memref<256x512xbf16, #tpu.memory_space<vmem>>, %arg12: memref<1x512xf32, #tpu.memory_space<vmem>>, %arg13: memref<4x8x512xf32, #tpu.memory_space<vmem>>) attributes {dimension_semantics = [#tpu.dimension_semantics<parallel>], iteration_bounds = array<i64: 2>, scalar_prefetch = 0 : i64, scratch_operands = 0 : i64, tpu.core_type = #tpu.core_type<tc>, window_params = [{transform_indices = @transform_0, window_bounds = array<i64: 4, 8, 256>}, {transform_indices = @transform_1, window_bounds = array<i64: 4, 1, 512>}, {pipeline_mode = #tpu.pipeline_mode<synchronous>, transform_indices = @transform_2, window_bounds = array<i64: 1, 256>}, {pipeline_mode = #tpu.pipeline_mode<synchronous>, transform_indices = @transform_3, window_bounds = array<i64: 1, 256>}, {pipeline_mode = #tpu.pipeline_mode<synchronous>, transform_indices = @transform_4, window_bounds = array<i64: 3, 256, 512>}, {pipeline_mode = #tpu.pipeline_mode<synchronous>, transform_indices = @transform_5, window_bounds = array<i64: 1, 512>}, {pipeline_mode = #tpu.pipeline_mode<synchronous>, transform_indices = @transform_6, window_bounds = array<i64: 1, 512>}, {pipeline_mode = #tpu.pipeline_mode<synchronous>, transform_indices = @transform_7, window_bounds = array<i64: 1, 512>}, {pipeline_mode = #tpu.pipeline_mode<synchronous>, transform_indices = @transform_8, window_bounds = array<i64: 3, 512, 512>}, {pipeline_mode = #tpu.pipeline_mode<synchronous>, transform_indices = @transform_9, window_bounds = array<i64: 1, 512>}, {pipeline_mode = #tpu.pipeline_mode<synchronous>, transform_indices = @transform_10, window_bounds = array<i64: 256, 512>}, {pipeline_mode = #tpu.pipeline_mode<synchronous>, transform_indices = @transform_11, window_bounds = array<i64: 1, 512>}, {transform_indices = @transform_12, window_bounds = array<i64: 4, 8, 512>}]} {
    %c0 = arith.constant 0 : index
    %c0_0 = arith.constant 0 : index
    %c0_1 = arith.constant 0 : index
    %0 = vector.load %arg1[%c0, %c0_0, %c0_1] : memref<4x8x256xf32, #tpu.memory_space<vmem>>, vector<4x8x256xf32>
    %c0_2 = arith.constant 0 : index
    %c0_3 = arith.constant 0 : index
    %1 = vector.load %arg3[%c0_2, %c0_3] : memref<1x256xf32, #tpu.memory_space<vmem>>, vector<1x256xf32>
    %c0_4 = arith.constant 0 : index
    %c0_5 = arith.constant 0 : index
    %2 = vector.load %arg4[%c0_4, %c0_5] : memref<1x256xf32, #tpu.memory_space<vmem>>, vector<1x256xf32>
    %cst = arith.constant dense<0.000000e+00> : vector<4x256xf32>
    %3 = vector.multi_reduction <add>, %0, %cst [1] : vector<4x8x256xf32> to vector<4x256xf32>
    %4 = vector.shape_cast %3 : vector<4x256xf32> to vector<4x8x32xf32>
    %cst_6 = arith.constant dense<0.000000e+00> : vector<4x32xf32>
    %5 = vector.multi_reduction <add>, %4, %cst_6 [1] : vector<4x8x32xf32> to vector<4x32xf32>
    %6 = vector.shape_cast %5 : vector<4x32xf32> to vector<4x32x1xf32>
    %cst_7 = arith.constant dense<0.000000e+00> : vector<4x32xf32>
    %7 = vector.multi_reduction <add>, %6, %cst_7 [2] : vector<4x32x1xf32> to vector<4x32xf32>
    %cst_8 = arith.constant 1.562500e-02 : f32
    %8 = vector.broadcast %cst_8 : f32 to vector<4x32xf32>
    %9 = arith.mulf %7, %8 : vector<4x32xf32>
    %10 = vector.shape_cast %9 : vector<4x32xf32> to vector<4x32x1xf32>
    %11 = vector.shape_cast %10 : vector<4x32x1xf32> to vector<4x32xf32>
    %12 = tpu.concatenate %11, %11, %11, %11, %11, %11, %11, %11 in 1 : vector<4x32xf32>, vector<4x32xf32>, vector<4x32xf32>, vector<4x32xf32>, vector<4x32xf32>, vector<4x32xf32>, vector<4x32xf32>, vector<4x32xf32> -> vector<4x256xf32>
    %13 = vector.shape_cast %12 : vector<4x256xf32> to vector<4x1x256xf32>
    %14 = vector.broadcast %13 : vector<4x1x256xf32> to vector<4x8x256xf32>
    %15 = arith.subf %0, %14 : vector<4x8x256xf32>
    %16 = arith.mulf %15, %15 : vector<4x8x256xf32>
    %cst_9 = arith.constant dense<0.000000e+00> : vector<4x256xf32>
    %17 = vector.multi_reduction <add>, %16, %cst_9 [1] : vector<4x8x256xf32> to vector<4x256xf32>
    %18 = vector.shape_cast %17 : vector<4x256xf32> to vector<4x8x32xf32>
    %cst_10 = arith.constant dense<0.000000e+00> : vector<4x32xf32>
    %19 = vector.multi_reduction <add>, %18, %cst_10 [1] : vector<4x8x32xf32> to vector<4x32xf32>
    %20 = vector.shape_cast %19 : vector<4x32xf32> to vector<4x32x1xf32>
    %cst_11 = arith.constant dense<0.000000e+00> : vector<4x32xf32>
    %21 = vector.multi_reduction <add>, %20, %cst_11 [2] : vector<4x32x1xf32> to vector<4x32xf32>
    %cst_12 = arith.constant 1.562500e-02 : f32
    %22 = vector.broadcast %cst_12 : f32 to vector<4x32xf32>
    %23 = arith.mulf %21, %22 : vector<4x32xf32>
    %cst_13 = arith.constant 9.99999997E-7 : f32
    %24 = vector.broadcast %cst_13 : f32 to vector<4x32xf32>
    %25 = arith.addf %23, %24 : vector<4x32xf32>
    %26 = math.rsqrt %25 : vector<4x32xf32>
    %27 = vector.shape_cast %26 : vector<4x32xf32> to vector<4x32x1xf32>
    %28 = vector.shape_cast %27 : vector<4x32x1xf32> to vector<4x32xf32>
    %29 = tpu.concatenate %28, %28, %28, %28, %28, %28, %28, %28 in 1 : vector<4x32xf32>, vector<4x32xf32>, vector<4x32xf32>, vector<4x32xf32>, vector<4x32xf32>, vector<4x32xf32>, vector<4x32xf32>, vector<4x32xf32> -> vector<4x256xf32>
    %30 = vector.shape_cast %29 : vector<4x256xf32> to vector<4x1x256xf32>
    %31 = vector.shape_cast %1 : vector<1x256xf32> to vector<1x1x256xf32>
    %32 = vector.broadcast %31 : vector<1x1x256xf32> to vector<4x1x256xf32>
    %33 = arith.mulf %30, %32 : vector<4x1x256xf32>
    %34 = vector.broadcast %33 : vector<4x1x256xf32> to vector<4x8x256xf32>
    %35 = arith.mulf %15, %34 : vector<4x8x256xf32>
    %36 = vector.shape_cast %2 : vector<1x256xf32> to vector<1x1x256xf32>
    %37 = vector.broadcast %36 : vector<1x1x256xf32> to vector<4x8x256xf32>
    %38 = arith.addf %35, %37 : vector<4x8x256xf32>
    %cst_14 = arith.constant 0.000000e+00 : f32
    %39 = vector.broadcast %cst_14 : f32 to vector<4x8x256xf32>
    %40 = arith.subf %39, %38 : vector<4x8x256xf32>
    %cst_15 = arith.constant 8.000000e+01 : f32
    %41 = vector.broadcast %cst_15 : f32 to vector<4x8x256xf32>
    %42 = arith.minimumf %40, %41 : vector<4x8x256xf32>
    %43 = math.exp %42 : vector<4x8x256xf32>
    %cst_16 = arith.constant 1.000000e+00 : f32
    %44 = vector.broadcast %cst_16 : f32 to vector<4x8x256xf32>
    %45 = arith.addf %44, %43 : vector<4x8x256xf32>
    %46 = tpu.reciprocal %45 : vector<4x8x256xf32> -> vector<4x8x256xf32>
    %47 = arith.mulf %38, %46 : vector<4x8x256xf32>
    %48 = arith.truncf %47 : vector<4x8x256xf32> to vector<4x8x256xbf16>
    %c0_17 = arith.constant 0 : index
    %c0_18 = arith.constant 0 : index
    %49 = vector.load %arg6[%c0_17, %c0_18] : memref<1x512xf32, #tpu.memory_space<vmem>>, vector<1x512xf32>
    %cst_19 = arith.constant 0.000000e+00 : bf16
    %50 = vector.broadcast %cst_19 : bf16 to vector<4x1x256xbf16>
    %51 = vector.extract_strided_slice %48 {offsets = [0, 0, 0], sizes = [4, 7, 256], strides = [1, 1, 1]} : vector<4x8x256xbf16> to vector<4x7x256xbf16>
    %52 = tpu.concatenate %50, %51 in 1 : vector<4x1x256xbf16>, vector<4x7x256xbf16> -> vector<4x8x256xbf16>
    %53 = vector.extract_strided_slice %48 {offsets = [0, 1, 0], sizes = [4, 7, 256], strides = [1, 1, 1]} : vector<4x8x256xbf16> to vector<4x7x256xbf16>
    %54 = tpu.concatenate %53, %50 in 1 : vector<4x7x256xbf16>, vector<4x1x256xbf16> -> vector<4x8x256xbf16>
    %55 = vector.shape_cast %52 : vector<4x8x256xbf16> to vector<32x256xbf16>
    %c0_20 = arith.constant 0 : index
    %c0_21 = arith.constant 0 : index
    %c0_22 = arith.constant 0 : index
    %56 = vector.load %arg5[%c0_20, %c0_21, %c0_22] : memref<3x256x512xbf16, #tpu.memory_space<vmem>>, vector<1x256x512xbf16>
    %57 = vector.shape_cast %56 : vector<1x256x512xbf16> to vector<256x512xbf16>
    %cst_23 = arith.constant dense<0.000000e+00> : vector<32x512xf32>
    %58 = tpu.matmul %55, %57, %cst_23 {dimension_numbers = #tpu.dot_dimension_numbers<[1], [0], [0], [1], [0, 0, 1, 1], [], []>} : vector<32x256xbf16>, vector<256x512xbf16>, vector<32x512xf32> -> vector<32x512xf32>
    %59 = vector.shape_cast %48 : vector<4x8x256xbf16> to vector<32x256xbf16>
    %c1 = arith.constant 1 : index
    %c0_24 = arith.constant 0 : index
    %c0_25 = arith.constant 0 : index
    %60 = vector.load %arg5[%c1, %c0_24, %c0_25] : memref<3x256x512xbf16, #tpu.memory_space<vmem>>, vector<1x256x512xbf16>
    %61 = vector.shape_cast %60 : vector<1x256x512xbf16> to vector<256x512xbf16>
    %cst_26 = arith.constant dense<0.000000e+00> : vector<32x512xf32>
    %62 = tpu.matmul %59, %61, %cst_26 {dimension_numbers = #tpu.dot_dimension_numbers<[1], [0], [0], [1], [0, 0, 1, 1], [], []>} : vector<32x256xbf16>, vector<256x512xbf16>, vector<32x512xf32> -> vector<32x512xf32>
    %63 = arith.addf %58, %62 : vector<32x512xf32>
    %64 = vector.shape_cast %54 : vector<4x8x256xbf16> to vector<32x256xbf16>
    %c2 = arith.constant 2 : index
    %c0_27 = arith.constant 0 : index
    %c0_28 = arith.constant 0 : index
    %65 = vector.load %arg5[%c2, %c0_27, %c0_28] : memref<3x256x512xbf16, #tpu.memory_space<vmem>>, vector<1x256x512xbf16>
    %66 = vector.shape_cast %65 : vector<1x256x512xbf16> to vector<256x512xbf16>
    %cst_29 = arith.constant dense<0.000000e+00> : vector<32x512xf32>
    %67 = tpu.matmul %64, %66, %cst_29 {dimension_numbers = #tpu.dot_dimension_numbers<[1], [0], [0], [1], [0, 0, 1, 1], [], []>} : vector<32x256xbf16>, vector<256x512xbf16>, vector<32x512xf32> -> vector<32x512xf32>
    %68 = arith.addf %63, %67 : vector<32x512xf32>
    %69 = vector.shape_cast %68 : vector<32x512xf32> to vector<4x8x512xf32>
    %70 = vector.shape_cast %49 : vector<1x512xf32> to vector<1x1x512xf32>
    %71 = vector.broadcast %70 : vector<1x1x512xf32> to vector<4x8x512xf32>
    %72 = arith.addf %69, %71 : vector<4x8x512xf32>
    %c0_30 = arith.constant 0 : index
    %c0_31 = arith.constant 0 : index
    %c0_32 = arith.constant 0 : index
    %73 = vector.load %arg2[%c0_30, %c0_31, %c0_32] : memref<4x1x512xf32, #tpu.memory_space<vmem>>, vector<4x1x512xf32>
    %74 = vector.broadcast %73 : vector<4x1x512xf32> to vector<4x8x512xf32>
    %75 = arith.addf %72, %74 : vector<4x8x512xf32>
    %c0_33 = arith.constant 0 : index
    %c0_34 = arith.constant 0 : index
    %76 = vector.load %arg7[%c0_33, %c0_34] : memref<1x512xf32, #tpu.memory_space<vmem>>, vector<1x512xf32>
    %c0_35 = arith.constant 0 : index
    %c0_36 = arith.constant 0 : index
    %77 = vector.load %arg8[%c0_35, %c0_36] : memref<1x512xf32, #tpu.memory_space<vmem>>, vector<1x512xf32>
    %cst_37 = arith.constant dense<0.000000e+00> : vector<4x512xf32>
    %78 = vector.multi_reduction <add>, %75, %cst_37 [1] : vector<4x8x512xf32> to vector<4x512xf32>
    %79 = vector.shape_cast %78 : vector<4x512xf32> to vector<4x8x64xf32>
    %cst_38 = arith.constant dense<0.000000e+00> : vector<4x64xf32>
    %80 = vector.multi_reduction <add>, %79, %cst_38 [1] : vector<4x8x64xf32> to vector<4x64xf32>
    %81 = vector.shape_cast %80 : vector<4x64xf32> to vector<4x32x2xf32>
    %cst_39 = arith.constant dense<0.000000e+00> : vector<4x32xf32>
    %82 = vector.multi_reduction <add>, %81, %cst_39 [2] : vector<4x32x2xf32> to vector<4x32xf32>
    %cst_40 = arith.constant 7.812500e-03 : f32
    %83 = vector.broadcast %cst_40 : f32 to vector<4x32xf32>
    %84 = arith.mulf %82, %83 : vector<4x32xf32>
    %85 = vector.shape_cast %84 : vector<4x32xf32> to vector<4x32x1xf32>
    %86 = vector.shape_cast %85 : vector<4x32x1xf32> to vector<4x32x1xf32>
    %87 = vector.broadcast %86 : vector<4x32x1xf32> to vector<4x32x2xf32>
    %88 = vector.shape_cast %87 : vector<4x32x2xf32> to vector<4x64xf32>
    %89 = tpu.concatenate %88, %88, %88, %88, %88, %88, %88, %88 in 1 : vector<4x64xf32>, vector<4x64xf32>, vector<4x64xf32>, vector<4x64xf32>, vector<4x64xf32>, vector<4x64xf32>, vector<4x64xf32>, vector<4x64xf32> -> vector<4x512xf32>
    %90 = vector.shape_cast %89 : vector<4x512xf32> to vector<4x1x512xf32>
    %91 = vector.broadcast %90 : vector<4x1x512xf32> to vector<4x8x512xf32>
    %92 = arith.subf %75, %91 : vector<4x8x512xf32>
    %93 = arith.mulf %92, %92 : vector<4x8x512xf32>
    %cst_41 = arith.constant dense<0.000000e+00> : vector<4x512xf32>
    %94 = vector.multi_reduction <add>, %93, %cst_41 [1] : vector<4x8x512xf32> to vector<4x512xf32>
    %95 = vector.shape_cast %94 : vector<4x512xf32> to vector<4x8x64xf32>
    %cst_42 = arith.constant dense<0.000000e+00> : vector<4x64xf32>
    %96 = vector.multi_reduction <add>, %95, %cst_42 [1] : vector<4x8x64xf32> to vector<4x64xf32>
    %97 = vector.shape_cast %96 : vector<4x64xf32> to vector<4x32x2xf32>
    %cst_43 = arith.constant dense<0.000000e+00> : vector<4x32xf32>
    %98 = vector.multi_reduction <add>, %97, %cst_43 [2] : vector<4x32x2xf32> to vector<4x32xf32>
    %cst_44 = arith.constant 7.812500e-03 : f32
    %99 = vector.broadcast %cst_44 : f32 to vector<4x32xf32>
    %100 = arith.mulf %98, %99 : vector<4x32xf32>
    %cst_45 = arith.constant 9.99999997E-7 : f32
    %101 = vector.broadcast %cst_45 : f32 to vector<4x32xf32>
    %102 = arith.addf %100, %101 : vector<4x32xf32>
    %103 = math.rsqrt %102 : vector<4x32xf32>
    %104 = vector.shape_cast %103 : vector<4x32xf32> to vector<4x32x1xf32>
    %105 = vector.shape_cast %104 : vector<4x32x1xf32> to vector<4x32x1xf32>
    %106 = vector.broadcast %105 : vector<4x32x1xf32> to vector<4x32x2xf32>
    %107 = vector.shape_cast %106 : vector<4x32x2xf32> to vector<4x64xf32>
    %108 = tpu.concatenate %107, %107, %107, %107, %107, %107, %107, %107 in 1 : vector<4x64xf32>, vector<4x64xf32>, vector<4x64xf32>, vector<4x64xf32>, vector<4x64xf32>, vector<4x64xf32>, vector<4x64xf32>, vector<4x64xf32> -> vector<4x512xf32>
    %109 = vector.shape_cast %108 : vector<4x512xf32> to vector<4x1x512xf32>
    %110 = vector.shape_cast %76 : vector<1x512xf32> to vector<1x1x512xf32>
    %111 = vector.broadcast %110 : vector<1x1x512xf32> to vector<4x1x512xf32>
    %112 = arith.mulf %109, %111 : vector<4x1x512xf32>
    %113 = vector.broadcast %112 : vector<4x1x512xf32> to vector<4x8x512xf32>
    %114 = arith.mulf %92, %113 : vector<4x8x512xf32>
    %115 = vector.shape_cast %77 : vector<1x512xf32> to vector<1x1x512xf32>
    %116 = vector.broadcast %115 : vector<1x1x512xf32> to vector<4x8x512xf32>
    %117 = arith.addf %114, %116 : vector<4x8x512xf32>
    %cst_46 = arith.constant 0.000000e+00 : f32
    %118 = vector.broadcast %cst_46 : f32 to vector<4x8x512xf32>
    %119 = arith.subf %118, %117 : vector<4x8x512xf32>
    %cst_47 = arith.constant 8.000000e+01 : f32
    %120 = vector.broadcast %cst_47 : f32 to vector<4x8x512xf32>
    %121 = arith.minimumf %119, %120 : vector<4x8x512xf32>
    %122 = math.exp %121 : vector<4x8x512xf32>
    %cst_48 = arith.constant 1.000000e+00 : f32
    %123 = vector.broadcast %cst_48 : f32 to vector<4x8x512xf32>
    %124 = arith.addf %123, %122 : vector<4x8x512xf32>
    %125 = tpu.reciprocal %124 : vector<4x8x512xf32> -> vector<4x8x512xf32>
    %126 = arith.mulf %117, %125 : vector<4x8x512xf32>
    %127 = arith.truncf %126 : vector<4x8x512xf32> to vector<4x8x512xbf16>
    %c0_49 = arith.constant 0 : index
    %c0_50 = arith.constant 0 : index
    %128 = vector.load %arg10[%c0_49, %c0_50] : memref<1x512xf32, #tpu.memory_space<vmem>>, vector<1x512xf32>
    %cst_51 = arith.constant 0.000000e+00 : bf16
    %129 = vector.broadcast %cst_51 : bf16 to vector<4x1x512xbf16>
    %130 = vector.extract_strided_slice %127 {offsets = [0, 0, 0], sizes = [4, 7, 512], strides = [1, 1, 1]} : vector<4x8x512xbf16> to vector<4x7x512xbf16>
    %131 = tpu.concatenate %129, %130 in 1 : vector<4x1x512xbf16>, vector<4x7x512xbf16> -> vector<4x8x512xbf16>
    %132 = vector.extract_strided_slice %127 {offsets = [0, 1, 0], sizes = [4, 7, 512], strides = [1, 1, 1]} : vector<4x8x512xbf16> to vector<4x7x512xbf16>
    %133 = tpu.concatenate %132, %129 in 1 : vector<4x7x512xbf16>, vector<4x1x512xbf16> -> vector<4x8x512xbf16>
    %134 = vector.shape_cast %131 : vector<4x8x512xbf16> to vector<32x512xbf16>
    %c0_52 = arith.constant 0 : index
    %c0_53 = arith.constant 0 : index
    %c0_54 = arith.constant 0 : index
    %135 = vector.load %arg9[%c0_52, %c0_53, %c0_54] : memref<3x512x512xbf16, #tpu.memory_space<vmem>>, vector<1x512x512xbf16>
    %136 = vector.shape_cast %135 : vector<1x512x512xbf16> to vector<512x512xbf16>
    %cst_55 = arith.constant dense<0.000000e+00> : vector<32x512xf32>
    %137 = tpu.matmul %134, %136, %cst_55 {dimension_numbers = #tpu.dot_dimension_numbers<[1], [0], [0], [1], [0, 0, 1, 1], [], []>} : vector<32x512xbf16>, vector<512x512xbf16>, vector<32x512xf32> -> vector<32x512xf32>
    %138 = vector.shape_cast %127 : vector<4x8x512xbf16> to vector<32x512xbf16>
    %c1_56 = arith.constant 1 : index
    %c0_57 = arith.constant 0 : index
    %c0_58 = arith.constant 0 : index
    %139 = vector.load %arg9[%c1_56, %c0_57, %c0_58] : memref<3x512x512xbf16, #tpu.memory_space<vmem>>, vector<1x512x512xbf16>
    %140 = vector.shape_cast %139 : vector<1x512x512xbf16> to vector<512x512xbf16>
    %cst_59 = arith.constant dense<0.000000e+00> : vector<32x512xf32>
    %141 = tpu.matmul %138, %140, %cst_59 {dimension_numbers = #tpu.dot_dimension_numbers<[1], [0], [0], [1], [0, 0, 1, 1], [], []>} : vector<32x512xbf16>, vector<512x512xbf16>, vector<32x512xf32> -> vector<32x512xf32>
    %142 = arith.addf %137, %141 : vector<32x512xf32>
    %143 = vector.shape_cast %133 : vector<4x8x512xbf16> to vector<32x512xbf16>
    %c2_60 = arith.constant 2 : index
    %c0_61 = arith.constant 0 : index
    %c0_62 = arith.constant 0 : index
    %144 = vector.load %arg9[%c2_60, %c0_61, %c0_62] : memref<3x512x512xbf16, #tpu.memory_space<vmem>>, vector<1x512x512xbf16>
    %145 = vector.shape_cast %144 : vector<1x512x512xbf16> to vector<512x512xbf16>
    %cst_63 = arith.constant dense<0.000000e+00> : vector<32x512xf32>
    %146 = tpu.matmul %143, %145, %cst_63 {dimension_numbers = #tpu.dot_dimension_numbers<[1], [0], [0], [1], [0, 0, 1, 1], [], []>} : vector<32x512xbf16>, vector<512x512xbf16>, vector<32x512xf32> -> vector<32x512xf32>
    %147 = arith.addf %142, %146 : vector<32x512xf32>
    %148 = vector.shape_cast %147 : vector<32x512xf32> to vector<4x8x512xf32>
    %149 = vector.shape_cast %128 : vector<1x512xf32> to vector<1x1x512xf32>
    %150 = vector.broadcast %149 : vector<1x1x512xf32> to vector<4x8x512xf32>
    %151 = arith.addf %148, %150 : vector<4x8x512xf32>
    %152 = arith.truncf %0 : vector<4x8x256xf32> to vector<4x8x256xbf16>
    %153 = vector.shape_cast %152 : vector<4x8x256xbf16> to vector<32x256xbf16>
    %c0_64 = arith.constant 0 : index
    %c0_65 = arith.constant 0 : index
    %154 = vector.load %arg11[%c0_64, %c0_65] : memref<256x512xbf16, #tpu.memory_space<vmem>>, vector<256x512xbf16>
    %cst_66 = arith.constant dense<0.000000e+00> : vector<32x512xf32>
    %155 = tpu.matmul %153, %154, %cst_66 {dimension_numbers = #tpu.dot_dimension_numbers<[1], [0], [0], [1], [0, 0, 1, 1], [], []>} : vector<32x256xbf16>, vector<256x512xbf16>, vector<32x512xf32> -> vector<32x512xf32>
    %156 = vector.shape_cast %155 : vector<32x512xf32> to vector<4x8x512xf32>
    %c0_67 = arith.constant 0 : index
    %c0_68 = arith.constant 0 : index
    %157 = vector.load %arg12[%c0_67, %c0_68] : memref<1x512xf32, #tpu.memory_space<vmem>>, vector<1x512xf32>
    %158 = vector.shape_cast %157 : vector<1x512xf32> to vector<1x1x512xf32>
    %159 = vector.broadcast %158 : vector<1x1x512xf32> to vector<4x8x512xf32>
    %160 = arith.addf %156, %159 : vector<4x8x512xf32>
    %161 = arith.addf %160, %151 : vector<4x8x512xf32>
    %c0_69 = arith.constant 0 : index
    %c0_70 = arith.constant 0 : index
    %c0_71 = arith.constant 0 : index
    %162 = vector.load %arg13[%c0_69, %c0_70, %c0_71] : memref<4x8x512xf32, #tpu.memory_space<vmem>>, vector<4x8x512xf32>
    tpu.vector_store %arg13[%c0_69, %c0_70, %c0_71], %161 {strides = array<i32>} : memref<4x8x512xf32, #tpu.memory_space<vmem>>, vector<4x8x512xf32>,
    return
  }
  func.func @transform_0(%arg0: i32) -> (i32, i32, i32) {
    %c0_i32 = arith.constant 0 : i32
    %c0_i32_0 = arith.constant 0 : i32
    %c0_i32_1 = arith.constant 0 : i32
    return %arg0, %c0_i32, %c0_i32_0 : i32, i32, i32
  }
  func.func @transform_1(%arg0: i32) -> (i32, i32, i32) {
    %c0_i32 = arith.constant 0 : i32
    %c0_i32_0 = arith.constant 0 : i32
    %c0_i32_1 = arith.constant 0 : i32
    return %arg0, %c0_i32, %c0_i32_0 : i32, i32, i32
  }
  func.func @transform_2(%arg0: i32) -> (i32, i32) {
    %c0_i32 = arith.constant 0 : i32
    %c0_i32_0 = arith.constant 0 : i32
    %c0_i32_1 = arith.constant 0 : i32
    return %c0_i32, %c0_i32_0 : i32, i32
  }
  func.func @transform_3(%arg0: i32) -> (i32, i32) {
    %c0_i32 = arith.constant 0 : i32
    %c0_i32_0 = arith.constant 0 : i32
    %c0_i32_1 = arith.constant 0 : i32
    return %c0_i32, %c0_i32_0 : i32, i32
  }
  func.func @transform_4(%arg0: i32) -> (i32, i32, i32) {
    %c0_i32 = arith.constant 0 : i32
    %c0_i32_0 = arith.constant 0 : i32
    %c0_i32_1 = arith.constant 0 : i32
    %c0_i32_2 = arith.constant 0 : i32
    return %c0_i32, %c0_i32_0, %c0_i32_1 : i32, i32, i32
  }
  func.func @transform_5(%arg0: i32) -> (i32, i32) {
    %c0_i32 = arith.constant 0 : i32
    %c0_i32_0 = arith.constant 0 : i32
    %c0_i32_1 = arith.constant 0 : i32
    return %c0_i32, %c0_i32_0 : i32, i32
  }
  func.func @transform_6(%arg0: i32) -> (i32, i32) {
    %c0_i32 = arith.constant 0 : i32
    %c0_i32_0 = arith.constant 0 : i32
    %c0_i32_1 = arith.constant 0 : i32
    return %c0_i32, %c0_i32_0 : i32, i32
  }
  func.func @transform_7(%arg0: i32) -> (i32, i32) {
    %c0_i32 = arith.constant 0 : i32
    %c0_i32_0 = arith.constant 0 : i32
    %c0_i32_1 = arith.constant 0 : i32
    return %c0_i32, %c0_i32_0 : i32, i32
  }
  func.func @transform_8(%arg0: i32) -> (i32, i32, i32) {
    %c0_i32 = arith.constant 0 : i32
    %c0_i32_0 = arith.constant 0 : i32
    %c0_i32_1 = arith.constant 0 : i32
    %c0_i32_2 = arith.constant 0 : i32
    return %c0_i32, %c0_i32_0, %c0_i32_1 : i32, i32, i32
  }
  func.func @transform_9(%arg0: i32) -> (i32, i32) {
    %c0_i32 = arith.constant 0 : i32
    %c0_i32_0 = arith.constant 0 : i32
    %c0_i32_1 = arith.constant 0 : i32
    return %c0_i32, %c0_i32_0 : i32, i32
  }
  func.func @transform_10(%arg0: i32) -> (i32, i32) {
    %c0_i32 = arith.constant 0 : i32
    %c0_i32_0 = arith.constant 0 : i32
    %c0_i32_1 = arith.constant 0 : i32
    return %c0_i32, %c0_i32_0 : i32, i32
  }
  func.func @transform_11(%arg0: i32) -> (i32, i32) {
    %c0_i32 = arith.constant 0 : i32
    %c0_i32_0 = arith.constant 0 : i32
    %c0_i32_1 = arith.constant 0 : i32
    return %c0_i32, %c0_i32_0 : i32, i32
  }
  func.func @transform_12(%arg0: i32) -> (i32, i32, i32) {
    %c0_i32 = arith.constant 0 : i32
    %c0_i32_0 = arith.constant 0 : i32
    %c0_i32_1 = arith.constant 0 : i32
    return %arg0, %c0_i32, %c0_i32_0 : i32, i32, i32
  }
}

</mosaic_0001>

<llo_original>
// kernel: tpu_custom_call.1
$region0: #{tpu_custom_call.1}
  #allocation0 [shape = 'u32[]', space=smem, size = 0x4, offset = 0x4, fixed_abs, tag = 'smem constant byte address 0x4 - core index']
  #allocation1 [shape = 'u32[144,128]{1,0:T(1,128)}', space=vmem, size = 0x12000, scoped, tag = 'internal scratch']
  %s0 = inlined_call_operand.hbm [shape: f32[8,8,256], index: 0, kind: input, shape index: {}]
  %s1 = inlined_call_operand.hbm [shape: f32[8,1,512], index: 1, kind: input, shape index: {}]
  %s2 = inlined_call_operand.hbm [shape: f32[1,256], index: 2, kind: input, shape index: {}]
  %s3 = inlined_call_operand.hbm [shape: f32[1,256], index: 3, kind: input, shape index: {}]
  %s4 = inlined_call_operand.hbm [shape: bf16[3,256,512], index: 4, kind: input, shape index: {}]
  %s5 = inlined_call_operand.hbm [shape: f32[1,512], index: 5, kind: input, shape index: {}]
  %s6 = inlined_call_operand.hbm [shape: f32[1,512], index: 6, kind: input, shape index: {}]
  %s7 = inlined_call_operand.hbm [shape: f32[1,512], index: 7, kind: input, shape index: {}]
  %s8 = inlined_call_operand.hbm [shape: bf16[3,512,512], index: 8, kind: input, shape index: {}]
  %s9 = inlined_call_operand.hbm [shape: f32[1,512], index: 9, kind: input, shape index: {}]
  %s10 = inlined_call_operand.hbm [shape: bf16[256,512], index: 10, kind: input, shape index: {}]
  %s11 = inlined_call_operand.hbm [shape: f32[1,512], index: 11, kind: input, shape index: {}]
  %s12 = inlined_call_operand.hbm [shape: f32[8,8,512], index: 12, kind: output, shape index: {}]
  %s13 = sld [smem:[#allocation0]]
  $region129: #{tpu_custom_call.1} parent=0
    _
  %s15 = ssub.s32 1, %s13
  %s16 = scalar_select 0, %s15, %s13
  $region1: #{tpu_custom_call.1} parent=0
    #allocation2 [shape = 'u8[65536]{0}', space=vmem, size = 0x10000, scoped, tag = 'input window, operand 0']
    #allocation3 [shape = 's32[2]{0}', space=sflag, size = 0x8, scoped, tag = 'scoped memory for tpu_custom_call.1']
    #allocation4 [shape = 's32[2]{0}', space=sflag, size = 0x8, scoped, tag = 'scoped memory for tpu_custom_call.1']
    #allocation5 [shape = 'u8[16384]{0}', space=vmem, size = 0x4000, scoped, tag = 'input window, operand 1']
    #allocation6 [shape = 's32[2]{0}', space=sflag, size = 0x8, scoped, tag = 'scoped memory for tpu_custom_call.1']
    #allocation7 [shape = 'u8[1024]{0}', space=vmem, size = 0x400, scoped, tag = 'input window, operand 2, single buffered']
    #allocation8 [shape = 'u8[1024]{0}', space=vmem, size = 0x400, scoped, tag = 'input window, operand 3, single buffered']
    #allocation9 [shape = 's32[1]{0}', space=sflag, size = 0x4, scoped, tag = 'scoped memory for tpu_custom_call.1']
    #allocation10 [shape = 'u8[786432]{0}', space=vmem, size = 0xc0000, scoped, tag = 'input window, operand 4, single buffered']
    #allocation11 [shape = 'u8[2048]{0}', space=vmem, size = 0x800, scoped, tag = 'input window, operand 5, single buffered']
    #allocation12 [shape = 's32[1]{0}', space=sflag, size = 0x4, scoped, tag = 'scoped memory for tpu_custom_call.1']
    #allocation13 [shape = 'u8[2048]{0}', space=vmem, size = 0x800, scoped, tag = 'input window, operand 6, single buffered']
    #allocation14 [shape = 'u8[2048]{0}', space=vmem, size = 0x800, scoped, tag = 'input window, operand 7, single buffered']
    #allocation15 [shape = 's32[1]{0}', space=sflag, size = 0x4, scoped, tag = 'scoped memory for tpu_custom_call.1']
    #allocation16 [shape = 'u8[1572864]{0}', space=vmem, size = 0x180000, scoped, tag = 'input window, operand 8, single buffered']
    #allocation17 [shape = 'u8[2048]{0}', space=vmem, size = 0x800, scoped, tag = 'input window, operand 9, single buffered']
    #allocation18 [shape = 's32[1]{0}', space=sflag, size = 0x4, scoped, tag = 'scoped memory for tpu_custom_call.1']
    #allocation19 [shape = 'u8[262144]{0}', space=vmem, size = 0x40000, scoped, tag = 'input window, operand 10, single buffered']
    #allocation20 [shape = 'u8[2048]{0}', space=vmem, size = 0x800, scoped, tag = 'input window, operand 11, single buffered']
    #allocation21 [shape = 's32[1]{0}', space=sflag, size = 0x4, scoped, tag = 'scoped memory for tpu_custom_call.1']
    #allocation22 [shape = 'u8[131072]{0}', space=vmem, size = 0x20000, scoped, tag = 'output window, operand 0']
    %17 = vsyncpa [#allocation3], 0
    %s18 = scalar_lea.sflag [#allocation3], 1
    %19 = vsyncpa %s18, 0
    %20 = vsyncpa [#allocation6], 0
    %s21 = scalar_lea.sflag [#allocation6], 1
    %22 = vsyncpa %s21, 0
    %23 = vsyncpa [#allocation9], 0
    %24 = vsyncpa [#allocation12], 0
    %25 = vsyncpa [#allocation15], 0
    %26 = vsyncpa [#allocation18], 0
    %27 = vsyncpa [#allocation21], 0
    %28 = vsyncpa [#allocation4], 0
    %s29 = scalar_lea.sflag [#allocation4], 1
    %30 = vsyncpa %s29, 0
    loop: start=0, step=1, limit=4
    $region2: #{tpu_custom_call.1} parent=1 // loop_pre_header
      _
    $region3: #{tpu_custom_call.1} parent=1 // loop_header
      %s32 = sphi 0, %s36
      %p33 = scmp.ge.s32.totalorder %s32, 4
      %s42 = sphi 0, %s44
      %s45 = sphi 0, %s42
      %s46 = sphi 0, %s45
      %s62 = sphi 0, %s46
      %s68 = sphi 0, %s70
      %s71 = sphi 0, %s68
      %s72 = sphi 0, %s71
      %s88 = sphi 0, %s72
      %s92 = sphi 0, %s92
      %s94 = sphi 0, %s92
      %s95 = sphi 0, %s94
      %s109 = sphi 0, %s95
      %s113 = sphi 0, %s113
      %s115 = sphi 0, %s113
      %s116 = sphi 0, %s115
      %s130 = sphi 0, %s116
      %s134 = sphi 0, %s134
      %s136 = sphi 0, %s134
      %s137 = sphi 0, %s136
      %s151 = sphi 0, %s137
      %s155 = sphi 0, %s155
      %s157 = sphi 0, %s155
      %s158 = sphi 0, %s157
      %s172 = sphi 0, %s158
      %s176 = sphi 0, %s176
      %s178 = sphi 0, %s176
      %s179 = sphi 0, %s178
      %s193 = sphi 0, %s179
      %s197 = sphi 0, %s197
      %s199 = sphi 0, %s197
      %s200 = sphi 0, %s199
      %s214 = sphi 0, %s200
      %s218 = sphi 0, %s218
      %s220 = sphi 0, %s218
      %s221 = sphi 0, %s220
      %s235 = sphi 0, %s221
      %s239 = sphi 0, %s239
      %s241 = sphi 0, %s239
      %s242 = sphi 0, %s241
      %s256 = sphi 0, %s242
      %s260 = sphi 0, %s260
      %s262 = sphi 0, %s260
      %s263 = sphi 0, %s262
      %s277 = sphi 0, %s263
      %s281 = sphi 0, %s281
      %s283 = sphi 0, %s281
      %s284 = sphi 0, %s283
      %s298 = sphi 0, %s284
      %s304 = sphi 0, %s306
      %s307 = sphi 0, %s304
      %s308 = sphi 0, %s307
      %s324 = sphi 0, %s308
    $region4: #{tpu_custom_call.1} parent=1 // loop_header_branch
      %35 = sbr.rel (%p33) target = $region8
    $region5: #{tpu_custom_call.1} parent=1 // loop_body
      %s37 = ssub.s32 %s32, 1
      %s38 = ssub.s32 %s32, 2
      %s39 = sadd.s32 %s32, 1
      %s40 = ssub.s32 %s32, %s39
      %p41 = scmp.eq.s32.totalorder %s40, 0
      %s43 = sadd.s32 %s42, 1
      %s44 = scalar_select %p41, %s42, %s43
      %p47 = pneg %p41
      %p48 = scmp.eq.s32.totalorder %s32, 1
      %p49 = por %p47, %p48
      %p50 = scmp.ne.s32.totalorder %s42, %s45
      %p51 = scmp.eq.s32.totalorder %s32, 0
      %p52 = por %p50, %p51
      %p53 = scmp.ne.s32.totalorder %s42, %s45
      %p54 = scmp.eq.s32.totalorder %s37, 1
      %p55 = por %p53, %p54
      %p56 = scmp.ne.s32.totalorder %s45, %s46
      %p57 = scmp.eq.s32.totalorder %s37, 0
      %p58 = por %p56, %p57
      %p59 = scmp.ne.s32.totalorder %s45, %s46
      %p60 = scmp.eq.s32.totalorder %s38, 1
      %p61 = por %p59, %p60
      %p63 = scmp.ne.s32.totalorder %s46, %s62
      %p64 = scmp.eq.s32.totalorder %s38, 0
      %p65 = por %p63, %p64
      %s66 = ssub.s32 %s32, %s39
      %p67 = scmp.eq.s32.totalorder %s66, 0
      %s69 = sadd.s32 %s68, 1
      %s70 = scalar_select %p67, %s68, %s69
      %p73 = pneg %p67
      %p74 = scmp.eq.s32.totalorder %s32, 1
      %p75 = por %p73, %p74
      %p76 = scmp.ne.s32.totalorder %s68, %s71
      %p77 = scmp.eq.s32.totalorder %s32, 0
      %p78 = por %p76, %p77
      %p79 = scmp.ne.s32.totalorder %s68, %s71
      %p80 = scmp.eq.s32.totalorder %s37, 1
      %p81 = por %p79, %p80
      %p82 = scmp.ne.s32.totalorder %s71, %s72
      %p83 = scmp.eq.s32.totalorder %s37, 0
      %p84 = por %p82, %p83
      %p85 = scmp.ne.s32.totalorder %s71, %s72
      %p86 = scmp.eq.s32.totalorder %s38, 1
      %p87 = por %p85, %p86
      %p89 = scmp.ne.s32.totalorder %s72, %s88
      %p90 = scmp.eq.s32.totalorder %s38, 0
      %p91 = por %p89, %p90
      %s93 = sadd.s32 %s92, 1
      %p96 = scmp.eq.s32.totalorder %s32, 1
      %p97 = scmp.ne.s32.totalorder %s92, %s94
      %p98 = scmp.eq.s32.totalorder %s32, 0
      %p99 = por %p97, %p98
      %p100 = scmp.ne.s32.totalorder %s92, %s94
      %p101 = scmp.eq.s32.totalorder %s37, 1
      %p102 = por %p100, %p101
      %p103 = scmp.ne.s32.totalorder %s94, %s95
      %p104 = scmp.eq.s32.totalorder %s37, 0
      %p105 = por %p103, %p104
      %p106 = scmp.ne.s32.totalorder %s94, %s95
      %p107 = scmp.eq.s32.totalorder %s38, 1
      %p108 = por %p106, %p107
      %p110 = scmp.ne.s32.totalorder %s95, %s109
      %p111 = scmp.eq.s32.totalorder %s38, 0
      %p112 = por %p110, %p111
      %s114 = sadd.s32 %s113, 1
      %p117 = scmp.eq.s32.totalorder %s32, 1
      %p118 = scmp.ne.s32.totalorder %s113, %s115
      %p119 = scmp.eq.s32.totalorder %s32, 0
      %p120 = por %p118, %p119
      %p121 = scmp.ne.s32.totalorder %s113, %s115
      %p122 = scmp.eq.s32.totalorder %s37, 1
      %p123 = por %p121, %p122
      %p124 = scmp.ne.s32.totalorder %s115, %s116
      %p125 = scmp.eq.s32.totalorder %s37, 0
      %p126 = por %p124, %p125
      %p127 = scmp.ne.s32.totalorder %s115, %s116
      %p128 = scmp.eq.s32.totalorder %s38, 1
      %p129 = por %p127, %p128
      %p131 = scmp.ne.s32.totalorder %s116, %s130
      %p132 = scmp.eq.s32.totalorder %s38, 0
      %p133 = por %p131, %p132
      %s135 = sadd.s32 %s134, 1
      %p138 = scmp.eq.s32.totalorder %s32, 1
      %p139 = scmp.ne.s32.totalorder %s134, %s136
      %p140 = scmp.eq.s32.totalorder %s32, 0
      %p141 = por %p139, %p140
      %p142 = scmp.ne.s32.totalorder %s134, %s136
      %p143 = scmp.eq.s32.totalorder %s37, 1
      %p144 = por %p142, %p143
      %p145 = scmp.ne.s32.totalorder %s136, %s137
      %p146 = scmp.eq.s32.totalorder %s37, 0
      %p147 = por %p145, %p146
      %p148 = scmp.ne.s32.totalorder %s136, %s137
      %p149 = scmp.eq.s32.totalorder %s38, 1
      %p150 = por %p148, %p149
      %p152 = scmp.ne.s32.totalorder %s137, %s151
      %p153 = scmp.eq.s32.totalorder %s38, 0
      %p154 = por %p152, %p153
      %s156 = sadd.s32 %s155, 1
      %p159 = scmp.eq.s32.totalorder %s32, 1
      %p160 = scmp.ne.s32.totalorder %s155, %s157
      %p161 = scmp.eq.s32.totalorder %s32, 0
      %p162 = por %p160, %p161
      %p163 = scmp.ne.s32.totalorder %s155, %s157
      %p164 = scmp.eq.s32.totalorder %s37, 1
      %p165 = por %p163, %p164
      %p166 = scmp.ne.s32.totalorder %s157, %s158
      %p167 = scmp.eq.s32.totalorder %s37, 0
      %p168 = por %p166, %p167
      %p169 = scmp.ne.s32.totalorder %s157, %s158
      %p170 = scmp.eq.s32.totalorder %s38, 1
      %p171 = por %p169, %p170
      %p173 = scmp.ne.s32.totalorder %s158, %s172
      %p174 = scmp.eq.s32.totalorder %s38, 0
      %p175 = por %p173, %p174
      %s177 = sadd.s32 %s176, 1
      %p180 = scmp.eq.s32.totalorder %s32, 1
      %p181 = scmp.ne.s32.totalorder %s176, %s178
      %p182 = scmp.eq.s32.totalorder %s32, 0
      %p183 = por %p181, %p182
      %p184 = scmp.ne.s32.totalorder %s176, %s178
      %p185 = scmp.eq.s32.totalorder %s37, 1
      %p186 = por %p184, %p185
      %p187 = scmp.ne.s32.totalorder %s178, %s179
      %p188 = scmp.eq.s32.totalorder %s37, 0
      %p189 = por %p187, %p188
      %p190 = scmp.ne.s32.totalorder %s178, %s179
      %p191 = scmp.eq.s32.totalorder %s38, 1
      %p192 = por %p190, %p191
      %p194 = scmp.ne.s32.totalorder %s179, %s193
      %p195 = scmp.eq.s32.totalorder %s38, 0
      %p196 = por %p194, %p195
      %s198 = sadd.s32 %s197, 1
      %p201 = scmp.eq.s32.totalorder %s32, 1
      %p202 = scmp.ne.s32.totalorder %s197, %s199
      %p203 = scmp.eq.s32.totalorder %s32, 0
      %p204 = por %p202, %p203
      %p205 = scmp.ne.s32.totalorder %s197, %s199
      %p206 = scmp.eq.s32.totalorder %s37, 1
      %p207 = por %p205, %p206
      %p208 = scmp.ne.s32.totalorder %s199, %s200
      %p209 = scmp.eq.s32.totalorder %s37, 0
      %p210 = por %p208, %p209
      %p211 = scmp.ne.s32.totalorder %s199, %s200
      %p212 = scmp.eq.s32.totalorder %s38, 1
      %p213 = por %p211, %p212
      %p215 = scmp.ne.s32.totalorder %s200, %s214
      %p216 = scmp.eq.s32.totalorder %s38, 0
      %p217 = por %p215, %p216
      %s219 = sadd.s32 %s218, 1
      %p222 = scmp.eq.s32.totalorder %s32, 1
      %p223 = scmp.ne.s32.totalorder %s218, %s220
      %p224 = scmp.eq.s32.totalorder %s32, 0
      %p225 = por %p223, %p224
      %p226 = scmp.ne.s32.totalorder %s218, %s220
      %p227 = scmp.eq.s32.totalorder %s37, 1
      %p228 = por %p226, %p227
      %p229 = scmp.ne.s32.totalorder %s220, %s221
      %p230 = scmp.eq.s32.totalorder %s37, 0
      %p231 = por %p229, %p230
      %p232 = scmp.ne.s32.totalorder %s220, %s221
      %p233 = scmp.eq.s32.totalorder %s38, 1
      %p234 = por %p232, %p233
      %p236 = scmp.ne.s32.totalorder %s221, %s235
      %p237 = scmp.eq.s32.totalorder %s38, 0
      %p238 = por %p236, %p237
      %s240 = sadd.s32 %s239, 1
      %p243 = scmp.eq.s32.totalorder %s32, 1
      %p244 = scmp.ne.s32.totalorder %s239, %s241
      %p245 = scmp.eq.s32.totalorder %s32, 0
      %p246 = por %p244, %p245
      %p247 = scmp.ne.s32.totalorder %s239, %s241
      %p248 = scmp.eq.s32.totalorder %s37, 1
      %p249 = por %p247, %p248
      %p250 = scmp.ne.s32.totalorder %s241, %s242
      %p251 = scmp.eq.s32.totalorder %s37, 0
      %p252 = por %p250, %p251
      %p253 = scmp.ne.s32.totalorder %s241, %s242
      %p254 = scmp.eq.s32.totalorder %s38, 1
      %p255 = por %p253, %p254
      %p257 = scmp.ne.s32.totalorder %s242, %s256
      %p258 = scmp.eq.s32.totalorder %s38, 0
      %p259 = por %p257, %p258
      %s261 = sadd.s32 %s260, 1
      %p264 = scmp.eq.s32.totalorder %s32, 1
      %p265 = scmp.ne.s32.totalorder %s260, %s262
      %p266 = scmp.eq.s32.totalorder %s32, 0
      %p267 = por %p265, %p266
      %p268 = scmp.ne.s32.totalorder %s260, %s262
      %p269 = scmp.eq.s32.totalorder %s37, 1
      %p270 = por %p268, %p269
      %p271 = scmp.ne.s32.totalorder %s262, %s263
      %p272 = scmp.eq.s32.totalorder %s37, 0
      %p273 = por %p271, %p272
      %p274 = scmp.ne.s32.totalorder %s262, %s263
      %p275 = scmp.eq.s32.totalorder %s38, 1
      %p276 = por %p274, %p275
      %p278 = scmp.ne.s32.totalorder %s263, %s277
      %p279 = scmp.eq.s32.totalorder %s38, 0
      %p280 = por %p278, %p279
      %s282 = sadd.s32 %s281, 1
      %p285 = scmp.eq.s32.totalorder %s32, 1
      %p286 = scmp.ne.s32.totalorder %s281, %s283
      %p287 = scmp.eq.s32.totalorder %s32, 0
      %p288 = por %p286, %p287
      %p289 = scmp.ne.s32.totalorder %s281, %s283
      %p290 = scmp.eq.s32.totalorder %s37, 1
      %p291 = por %p289, %p290
      %p292 = scmp.ne.s32.totalorder %s283, %s284
      %p293 = scmp.eq.s32.totalorder %s37, 0
      %p294 = por %p292, %p293
      %p295 = scmp.ne.s32.totalorder %s283, %s284
      %p296 = scmp.eq.s32.totalorder %s38, 1
      %p297 = por %p295, %p296
      %p299 = scmp.ne.s32.totalorder %s284, %s298
      %p300 = scmp.eq.s32.totalorder %s38, 0
      %p301 = por %p299, %p300
      %s302 = ssub.s32 %s32, %s39
      %p303 = scmp.eq.s32.totalorder %s302, 0
      %s305 = sadd.s32 %s304, 1
      %s306 = scalar_select %p303, %s304, %s305
      %p309 = pneg %p303
      %p310 = scmp.eq.s32.totalorder %s32, 1
      %p311 = por %p309, %p310
      %p312 = scmp.ne.s32.totalorder %s304, %s307
      %p313 = scmp.eq.s32.totalorder %s32, 0
      %p314 = por %p312, %p313
      %p315 = scmp.ne.s32.totalorder %s304, %s307
      %p316 = scmp.eq.s32.totalorder %s37, 1
      %p317 = por %p315, %p316
      %p318 = scmp.ne.s32.totalorder %s307, %s308
      %p319 = scmp.eq.s32.totalorder %s37, 0
      %p320 = por %p318, %p319
      %p321 = scmp.ne.s32.totalorder %s307, %s308
      %p322 = scmp.eq.s32.totalorder %s38, 1
      %p323 = por %p321, %p322
      %p325 = scmp.ne.s32.totalorder %s308, %s324
      %p326 = scmp.eq.s32.totalorder %s38, 0
      %p327 = por %p325, %p326
      %p328 = scmp.le.s32.totalorder 1, %s32
      %p329 = scmp.lt.s32.totalorder %s32, 3
      %p330 = pnand %p328, %p329
      %p331 = pneg %p330
      // Predicated region
      $region9: #{tpu_custom_call.1} parent=5 // pred_check
        _
      $region10: #{tpu_custom_call.1} parent=5 // pred_check_branch
        %333 = sbr.rel (%p330) target = $region12
      $region11: #{tpu_custom_call.1} parent=5 // pred_region
        %s334 = ssub.s32 %s32, 1
        // Predicated region
        $region13: #{tpu_custom_call.1} parent=11 // pred_check
          %p335 = pneg %p105
        $region14: #{tpu_custom_call.1} parent=11 // pred_check_branch
          %337 = sbr.rel (%p335) target = $region16
        $region15: #{tpu_custom_call.1} parent=11 // pred_region
          %s339 = ssub.s32 32, 32
          %340 = vsyncadd [#allocation6], %s339
          %s342 = sshll.u32 [#allocation7], 4
          %s343 = int_to_ptr.vmem [resolvable:$true] %s342
          %345 = dma.hbm_to_vmem [thread:$0]  %s2, 32, %s343, [#allocation6]
        $region16: #{tpu_custom_call.1} parent=11 // pred_fallthru
          _
        // Predicated region
        $region17: #{tpu_custom_call.1} parent=11 // pred_check
          %p346 = pneg %p126
        $region18: #{tpu_custom_call.1} parent=11 // pred_check_branch
          %348 = sbr.rel (%p346) target = $region20
        $region19: #{tpu_custom_call.1} parent=11 // pred_region
          %s350 = ssub.s32 32, 32
          %351 = vsyncadd [#allocation9], %s350
          %s353 = sshll.u32 [#allocation8], 4
          %s354 = int_to_ptr.vmem [resolvable:$true] %s353
          %356 = dma.hbm_to_vmem [thread:$0]  %s3, 32, %s354, [#allocation9]
        $region20: #{tpu_custom_call.1} parent=11 // pred_fallthru
          _
        // Predicated region
        $region21: #{tpu_custom_call.1} parent=11 // pred_check
          %p357 = pneg %p147
        $region22: #{tpu_custom_call.1} parent=11 // pred_check_branch
          %359 = sbr.rel (%p357) target = $region24
        $region23: #{tpu_custom_call.1} parent=11 // pred_region
          %s361 = ssub.s32 24576, 24576
          %362 = vsyncadd [#allocation9], %s361
          %s363 = sshll.u32 [#allocation10], 4
          %s364 = int_to_ptr.vmem [resolvable:$true] %s363
          %369 = dma.hbm_to_vmem [thread:$0]  %s4, 24576, %s364, [#allocation9], 256, 256, 16
        $region24: #{tpu_custom_call.1} parent=11 // pred_fallthru
          _
        // Predicated region
        $region25: #{tpu_custom_call.1} parent=11 // pred_check
          %p370 = pneg %p168
        $region26: #{tpu_custom_call.1} parent=11 // pred_check_branch
          %372 = sbr.rel (%p370) target = $region28
        $region27: #{tpu_custom_call.1} parent=11 // pred_region
          %s374 = ssub.s32 64, 64
          %375 = vsyncadd [#allocation12], %s374
          %s377 = sshll.u32 [#allocation11], 4
          %s378 = int_to_ptr.vmem [resolvable:$true] %s377
          %380 = dma.hbm_to_vmem [thread:$0]  %s5, 64, %s378, [#allocation12]
        $region28: #{tpu_custom_call.1} parent=11 // pred_fallthru
          _
        // Predicated region
        $region29: #{tpu_custom_call.1} parent=11 // pred_check
          %p381 = pneg %p189
        $region30: #{tpu_custom_call.1} parent=11 // pred_check_branch
          %383 = sbr.rel (%p381) target = $region32
        $region31: #{tpu_custom_call.1} parent=11 // pred_region
          %s385 = ssub.s32 64, 64
          %386 = vsyncadd [#allocation12], %s385
          %s388 = sshll.u32 [#allocation13], 4
          %s389 = int_to_ptr.vmem [resolvable:$true] %s388
          %391 = dma.hbm_to_vmem [thread:$0]  %s6, 64, %s389, [#allocation12]
        $region32: #{tpu_custom_call.1} parent=11 // pred_fallthru
          _
        // Predicated region
        $region33: #{tpu_custom_call.1} parent=11 // pred_check
          %p392 = pneg %p210
        $region34: #{tpu_custom_call.1} parent=11 // pred_check_branch
          %394 = sbr.rel (%p392) target = $region36
        $region35: #{tpu_custom_call.1} parent=11 // pred_region
          %s396 = ssub.s32 64, 64
          %397 = vsyncadd [#allocation15], %s396
          %s399 = sshll.u32 [#allocation14], 4
          %s400 = int_to_ptr.vmem [resolvable:$true] %s399
          %402 = dma.hbm_to_vmem [thread:$0]  %s7, 64, %s400, [#allocation15]
        $region36: #{tpu_custom_call.1} parent=11 // pred_fallthru
          _
        // Predicated region
        $region37: #{tpu_custom_call.1} parent=11 // pred_check
          %p403 = pneg %p231
        $region38: #{tpu_custom_call.1} parent=11 // pred_check_branch
          %405 = sbr.rel (%p403) target = $region40
        $region39: #{tpu_custom_call.1} parent=11 // pred_region
          %s407 = ssub.s32 49152, 49152
          %408 = vsyncadd [#allocation15], %s407
          %s409 = sshll.u32 [#allocation16], 4
          %s410 = int_to_ptr.vmem [resolvable:$true] %s409
          %415 = dma.hbm_to_vmem [thread:$0]  %s8, 49152, %s410, [#allocation15], 256, 256, 16
        $region40: #{tpu_custom_call.1} parent=11 // pred_fallthru
          _
        // Predicated region
        $region41: #{tpu_custom_call.1} parent=11 // pred_check
          %p416 = pneg %p252
        $region42: #{tpu_custom_call.1} parent=11 // pred_check_branch
          %418 = sbr.rel (%p416) target = $region44
        $region43: #{tpu_custom_call.1} parent=11 // pred_region
          %s420 = ssub.s32 64, 64
          %421 = vsyncadd [#allocation18], %s420
          %s423 = sshll.u32 [#allocation17], 4
          %s424 = int_to_ptr.vmem [resolvable:$true] %s423
          %426 = dma.hbm_to_vmem [thread:$0]  %s9, 64, %s424, [#allocation18]
        $region44: #{tpu_custom_call.1} parent=11 // pred_fallthru
          _
        // Predicated region
        $region45: #{tpu_custom_call.1} parent=11 // pred_check
          %p427 = pneg %p273
        $region46: #{tpu_custom_call.1} parent=11 // pred_check_branch
          %429 = sbr.rel (%p427) target = $region48
        $region47: #{tpu_custom_call.1} parent=11 // pred_region
          %s431 = ssub.s32 8192, 8192
          %432 = vsyncadd [#allocation18], %s431
          %s433 = sshll.u32 [#allocation19], 4
          %s434 = int_to_ptr.vmem [resolvable:$true] %s433
          %439 = dma.hbm_to_vmem [thread:$0]  %s10, 8192, %s434, [#allocation18], 256, 256, 16
        $region48: #{tpu_custom_call.1} parent=11 // pred_fallthru
          _
        // Predicated region
        $region49: #{tpu_custom_call.1} parent=11 // pred_check
          %p440 = pneg %p294
        $region50: #{tpu_custom_call.1} parent=11 // pred_check_branch
          %442 = sbr.rel (%p440) target = $region52
        $region51: #{tpu_custom_call.1} parent=11 // pred_region
          %s444 = ssub.s32 64, 64
          %445 = vsyncadd [#allocation21], %s444
          %s447 = sshll.u32 [#allocation20], 4
          %s448 = int_to_ptr.vmem [resolvable:$true] %s447
          %450 = dma.hbm_to_vmem [thread:$0]  %s11, 64, %s448, [#allocation21]
        $region52: #{tpu_custom_call.1} parent=11 // pred_fallthru
          _
      $region12: #{tpu_custom_call.1} parent=5 // pred_fallthru
        _
      %p451 = scmp.lt.s32.totalorder %s32, 2
      // Predicated region
      $region53: #{tpu_custom_call.1} parent=5 // pred_check
        %p452 = pneg %p451
      $region54: #{tpu_custom_call.1} parent=5 // pred_check_branch
        %454 = sbr.rel (%p452) target = $region56
      $region55: #{tpu_custom_call.1} parent=5 // pred_region
        // Predicated region
        $region57: #{tpu_custom_call.1} parent=55 // pred_check
          %p455 = pneg %p52
        $region58: #{tpu_custom_call.1} parent=55 // pred_check_branch
          %457 = sbr.rel (%p455) target = $region60
        $region59: #{tpu_custom_call.1} parent=55 // pred_region
          %s458 = sand.u32 %s42, 1
          %s459 = scalar_lea.sflag [#allocation3], %s458
          %s460 = sand.u32 %s42, 1
          %s461 = smul.addr %s460, 64
          %s462 = scalar_lea.vmem [#allocation2], %s461
          %s463 = smul.u32 4, %s32
          %s465 = ssub.s32 1024, 1024
          %466 = vsyncadd %s459, %s465
          %s467 = smul.addr %s463, 2
          %s468 = smul.addr %s467, 128
          %s469 = scalar_lea.hbm %s0, %s468
          %s470 = sshll.u32 %s462, 4
          %s471 = int_to_ptr.vmem [resolvable:$true] %s470
          %476 = dma.hbm_to_vmem [thread:$0]  %s469, 1024, %s471, %s459, 256, 256, 16
        $region60: #{tpu_custom_call.1} parent=55 // pred_fallthru
          _
        // Predicated region
        $region61: #{tpu_custom_call.1} parent=55 // pred_check
          %p477 = pneg %p78
        $region62: #{tpu_custom_call.1} parent=55 // pred_check_branch
          %479 = sbr.rel (%p477) target = $region64
        $region63: #{tpu_custom_call.1} parent=55 // pred_region
          %s480 = sand.u32 %s32, 1
          %s481 = scalar_lea.sflag [#allocation6], %s480
          %s482 = sand.u32 %s68, 1
          %s483 = smul.addr %s482, 16
          %s484 = scalar_lea.vmem [#allocation5], %s483
          %s485 = smul.u32 4, %s32
          %s487 = ssub.s32 256, 256
          %488 = vsyncadd %s481, %s487
          %s489 = smul.addr %s485, 4
          %s490 = smul.addr %s489, 16
          %s491 = scalar_lea.hbm %s1, %s490
          %s492 = sshll.u32 %s484, 4
          %s493 = int_to_ptr.vmem [resolvable:$true] %s492
          %498 = dma.hbm_to_vmem [thread:$0]  %s491, 256, %s493, %s481, 64, 64, 4
        $region64: #{tpu_custom_call.1} parent=55 // pred_fallthru
          _
      $region56: #{tpu_custom_call.1} parent=5 // pred_fallthru
        _
      %p499 = scmp.le.s32.totalorder 1, %s32
      %p500 = scmp.lt.s32.totalorder %s32, 3
      %p501 = pnand %p499, %p500
      %p502 = pneg %p501
      // Predicated region
      $region65: #{tpu_custom_call.1} parent=5 // pred_check
        _
      $region66: #{tpu_custom_call.1} parent=5 // pred_check_branch
        %504 = sbr.rel (%p501) target = $region68
      $region67: #{tpu_custom_call.1} parent=5 // pred_region
        %s505 = ssub.s32 %s32, 1
        %s506 = sand.u32 %s45, 1
        %s507 = scalar_lea.sflag [#allocation3], %s506
        %s508 = sand.u32 %s45, 1
        %s509 = smul.addr %s508, 64
        %s510 = scalar_lea.vmem [#allocation2], %s509
        // Predicated region
        $region69: #{tpu_custom_call.1} parent=67 // pred_check
          %p511 = pneg %p58
        $region70: #{tpu_custom_call.1} parent=67 // pred_check_branch
          %513 = sbr.rel (%p511) target = $region72
        $region71: #{tpu_custom_call.1} parent=67 // pred_region
          %514 = dma.done %s507, 1024
        $region72: #{tpu_custom_call.1} parent=67 // pred_fallthru
          _
        %s515 = sand.u32 %s37, 1
        %s516 = scalar_lea.sflag [#allocation6], %s515
        %s517 = sand.u32 %s71, 1
        %s518 = smul.addr %s517, 16
        %s519 = scalar_lea.vmem [#allocation5], %s518
        // Predicated region
        $region73: #{tpu_custom_call.1} parent=67 // pred_check
          %p520 = pneg %p84
        $region74: #{tpu_custom_call.1} parent=67 // pred_check_branch
          %522 = sbr.rel (%p520) target = $region76
        $region75: #{tpu_custom_call.1} parent=67 // pred_region
          %523 = dma.done %s516, 256
        $region76: #{tpu_custom_call.1} parent=67 // pred_fallthru
          _
        // Predicated region
        $region77: #{tpu_custom_call.1} parent=67 // pred_check
          %p524 = pneg %p105
        $region78: #{tpu_custom_call.1} parent=67 // pred_check_branch
          %526 = sbr.rel (%p524) target = $region80
        $region79: #{tpu_custom_call.1} parent=67 // pred_region
          %527 = dma.done [#allocation6], 32
        $region80: #{tpu_custom_call.1} parent=67 // pred_fallthru
          _
        // Predicated region
        $region81: #{tpu_custom_call.1} parent=67 // pred_check
          %p528 = pneg %p126
        $region82: #{tpu_custom_call.1} parent=67 // pred_check_branch
          %530 = sbr.rel (%p528) target = $region84
        $region83: #{tpu_custom_call.1} parent=67 // pred_region
          %531 = dma.done [#allocation9], 32
        $region84: #{tpu_custom_call.1} parent=67 // pred_fallthru
          _
        // Predicated region
        $region85: #{tpu_custom_call.1} parent=67 // pred_check
          %p532 = pneg %p147
        $region86: #{tpu_custom_call.1} parent=67 // pred_check_branch
          %534 = sbr.rel (%p532) target = $region88
        $region87: #{tpu_custom_call.1} parent=67 // pred_region
          %535 = dma.done [#allocation9], 24576
        $region88: #{tpu_custom_call.1} parent=67 // pred_fallthru
          _
        // Predicated region
        $region89: #{tpu_custom_call.1} parent=67 // pred_check
          %p536 = pneg %p168
        $region90: #{tpu_custom_call.1} parent=67 // pred_check_branch
          %538 = sbr.rel (%p536) target = $region92
        $region91: #{tpu_custom_call.1} parent=67 // pred_region
          %539 = dma.done [#allocation12], 64
        $region92: #{tpu_custom_call.1} parent=67 // pred_fallthru
          _
        // Predicated region
        $region93: #{tpu_custom_call.1} parent=67 // pred_check
          %p540 = pneg %p189
        $region94: #{tpu_custom_call.1} parent=67 // pred_check_branch
          %542 = sbr.rel (%p540) target = $region96
        $region95: #{tpu_custom_call.1} parent=67 // pred_region
          %543 = dma.done [#allocation12], 64
        $region96: #{tpu_custom_call.1} parent=67 // pred_fallthru
          _
        // Predicated region
        $region97: #{tpu_custom_call.1} parent=67 // pred_check
          %p544 = pneg %p210
        $region98: #{tpu_custom_call.1} parent=67 // pred_check_branch
          %546 = sbr.rel (%p544) target = $region100
        $region99: #{tpu_custom_call.1} parent=67 // pred_region
          %547 = dma.done [#allocation15], 64
        $region100: #{tpu_custom_call.1} parent=67 // pred_fallthru
          _
        // Predicated region
        $region101: #{tpu_custom_call.1} parent=67 // pred_check
          %p548 = pneg %p231
        $region102: #{tpu_custom_call.1} parent=67 // pred_check_branch
          %550 = sbr.rel (%p548) target = $region104
        $region103: #{tpu_custom_call.1} parent=67 // pred_region
          %551 = dma.done [#allocation15], 49152
        $region104: #{tpu_custom_call.1} parent=67 // pred_fallthru
          _
        // Predicated region
        $region105: #{tpu_custom_call.1} parent=67 // pred_check
          %p552 = pneg %p252
        $region106: #{tpu_custom_call.1} parent=67 // pred_check_branch
          %554 = sbr.rel (%p552) target = $region108
        $region107: #{tpu_custom_call.1} parent=67 // pred_region
          %555 = dma.done [#allocation18], 64
        $region108: #{tpu_custom_call.1} parent=67 // pred_fallthru
          _
        // Predicated region
        $region109: #{tpu_custom_call.1} parent=67 // pred_check
          %p556 = pneg %p273
        $region110: #{tpu_custom_call.1} parent=67 // pred_check_branch
          %558 = sbr.rel (%p556) target = $region112
        $region111: #{tpu_custom_call.1} parent=67 // pred_region
          %559 = dma.done [#allocation18], 8192
        $region112: #{tpu_custom_call.1} parent=67 // pred_fallthru
          _
        // Predicated region
        $region113: #{tpu_custom_call.1} parent=67 // pred_check
          %p560 = pneg %p294
        $region114: #{tpu_custom_call.1} parent=67 // pred_check_branch
          %562 = sbr.rel (%p560) target = $region116
        $region115: #{tpu_custom_call.1} parent=67 // pred_region
          %563 = dma.done [#allocation21], 64
        $region116: #{tpu_custom_call.1} parent=67 // pred_fallthru
          _
        %s564 = sand.u32 %s45, 1
        %s565 = scalar_lea.sflag [#allocation3], %s564
        %s566 = sand.u32 %s45, 1
        %s567 = smul.addr %s566, 64
        %s568 = scalar_lea.vmem [#allocation2], %s567
        %p569 = pneg %p58
        %p570 = pneg %p55
        %s571 = sand.u32 %s37, 1
        %s572 = scalar_lea.sflag [#allocation6], %s571
        %s573 = sand.u32 %s71, 1
        %s574 = smul.addr %s573, 16
        %s575 = scalar_lea.vmem [#allocation5], %s574
        %p576 = pneg %p84
        %p577 = pneg %p81
        %p578 = pneg %p105
        %p579 = pneg %p102
        %p580 = pneg %p126
        %p581 = pneg %p123
        %p582 = pneg %p147
        %p583 = pneg %p144
        %p584 = pneg %p168
        %p585 = pneg %p165
        %p586 = pneg %p189
        %p587 = pneg %p186
        %p588 = pneg %p210
        %p589 = pneg %p207
        %p590 = pneg %p231
        %p591 = pneg %p228
        %p592 = pneg %p252
        %p593 = pneg %p249
        %p594 = pneg %p273
        %p595 = pneg %p270
        %p596 = pneg %p294
        %p597 = pneg %p291
        %p598 = pneg %p320
        %p599 = pneg %p317
        %s600 = sand.u32 %s307, 1
        %s601 = scalar_lea.sflag [#allocation4], %s600
        %s602 = sand.u32 %s307, 1
        %s603 = smul.addr %s602, 128
        %s604 = scalar_lea.vmem [#allocation22], %s603
        %s605 = smul.u32 4, %s37
        %s606 = smul.u32 4, %s37
        %s607 = smul.u32 4, %s37
        %v609 = vld [vmem:[%s510] sm:$0xff]
        %v610 = vld [vmem:[%s510 + $0x8] sm:$0xff]
        %v611 = vld [vmem:[%s510 + $0x10] sm:$0xff]
        %v612 = vld [vmem:[%s510 + $0x18] sm:$0xff]
        %v613 = vld [vmem:[%s510 + $0x20] sm:$0xff]
        %v614 = vld [vmem:[%s510 + $0x28] sm:$0xff]
        %v615 = vld [vmem:[%s510 + $0x30] sm:$0xff]
        %v616 = vld [vmem:[%s510 + $0x38] sm:$0xff]
        %v617 = vld [vmem:[#allocation7] sm:$0x3]
        %v618 = vld [vmem:[#allocation8] sm:$0x3]
        %v619 = vrot.slane %v609, 4
        %v620 = vadd.f32 %v609, %v619
        %v621 = vrot.slane %v620, 2
        %v622 = vadd.f32 %v620, %v621
        %v623 = vrot.slane %v622, 1
        %v624 = vadd.f32 %v622, %v623
        %v625 = vrot.slane %v610, 4
        %v626 = vadd.f32 %v610, %v625
        %v627 = vrot.slane %v626, 2
        %v628 = vadd.f32 %v626, %v627
        %v629 = vrot.slane %v628, 1
        %v630 = vadd.f32 %v628, %v629
        %v631 = vrot.slane %v611, 4
        %v632 = vadd.f32 %v611, %v631
        %v633 = vrot.slane %v632, 2
        %v634 = vadd.f32 %v632, %v633
        %v635 = vrot.slane %v634, 1
        %v636 = vadd.f32 %v634, %v635
        %v637 = vrot.slane %v612, 4
        %v638 = vadd.f32 %v612, %v637
        %v639 = vrot.slane %v638, 2
        %v640 = vadd.f32 %v638, %v639
        %v641 = vrot.slane %v640, 1
        %v642 = vadd.f32 %v640, %v641
        %v643 = vrot.slane %v613, 4
        %v644 = vadd.f32 %v613, %v643
        %v645 = vrot.slane %v644, 2
        %v646 = vadd.f32 %v644, %v645
        %v647 = vrot.slane %v646, 1
        %v648 = vadd.f32 %v646, %v647
        %v649 = vrot.slane %v614, 4
        %v650 = vadd.f32 %v614, %v649
        %v651 = vrot.slane %v650, 2
        %v652 = vadd.f32 %v650, %v651
        %v653 = vrot.slane %v652, 1
        %v654 = vadd.f32 %v652, %v653
        %v655 = vrot.slane %v615, 4
        %v656 = vadd.f32 %v615, %v655
        %v657 = vrot.slane %v656, 2
        %v658 = vadd.f32 %v656, %v657
        %v659 = vrot.slane %v658, 1
        %v660 = vadd.f32 %v658, %v659
        %v661 = vrot.slane %v616, 4
        %v662 = vadd.f32 %v616, %v661
        %v663 = vrot.slane %v662, 2
        %v664 = vadd.f32 %v662, %v663
        %v665 = vrot.slane %v664, 1
        %v666 = vadd.f32 %v664, %v665
        %671 = vrot.lane.b32.xlu0 %v624, 96
        %v672 = vpop.permute.xlu0 %671
        %673 = vrot.lane.b32.xlu0 %v636, 96
        %v674 = vpop.permute.xlu0 %673
        %675 = vrot.lane.b32.xlu0 %v648, 96
        %v676 = vpop.permute.xlu0 %675
        %677 = vrot.lane.b32.xlu0 %v660, 96
        %v678 = vpop.permute.xlu0 %677
        %679 = vrot.lane.b32.xlu0 %v624, 64
        %v680 = vpop.permute.xlu0 %679
        %681 = vrot.lane.b32.xlu0 %v636, 64
        %v682 = vpop.permute.xlu0 %681
        %683 = vrot.lane.b32.xlu0 %v648, 64
        %v684 = vpop.permute.xlu0 %683
        %685 = vrot.lane.b32.xlu0 %v660, 64
        %v686 = vpop.permute.xlu0 %685
        %687 = vrot.lane.b32.xlu0 %v624, 32
        %v688 = vpop.permute.xlu0 %687
        %689 = vrot.lane.b32.xlu0 %v636, 32
        %v690 = vpop.permute.xlu0 %689
        %691 = vrot.lane.b32.xlu0 %v648, 32
        %v692 = vpop.permute.xlu0 %691
        %693 = vrot.lane.b32.xlu0 %v660, 32
        %v694 = vpop.permute.xlu0 %693
        %699 = vrot.lane.b32.xlu0 %v630, 96
        %v700 = vpop.permute.xlu0 %699
        %701 = vrot.lane.b32.xlu0 %v642, 96
        %v702 = vpop.permute.xlu0 %701
        %703 = vrot.lane.b32.xlu0 %v654, 96
        %v704 = vpop.permute.xlu0 %703
        %705 = vrot.lane.b32.xlu0 %v666, 96
        %v706 = vpop.permute.xlu0 %705
        %707 = vrot.lane.b32.xlu0 %v630, 64
        %v708 = vpop.permute.xlu0 %707
        %709 = vrot.lane.b32.xlu0 %v642, 64
        %v710 = vpop.permute.xlu0 %709
        %711 = vrot.lane.b32.xlu0 %v654, 64
        %v712 = vpop.permute.xlu0 %711
        %713 = vrot.lane.b32.xlu0 %v666, 64
        %v714 = vpop.permute.xlu0 %713
        %715 = vrot.lane.b32.xlu0 %v630, 32
        %v716 = vpop.permute.xlu0 %715
        %717 = vrot.lane.b32.xlu0 %v642, 32
        %v718 = vpop.permute.xlu0 %717
        %719 = vrot.lane.b32.xlu0 %v654, 32
        %v720 = vpop.permute.xlu0 %719
        %721 = vrot.lane.b32.xlu0 %v666, 32
        %v722 = vpop.permute.xlu0 %721
        %v723 = vrot.slane %v636, 7
        %vm724 = vcmask 1041409
        %v725 = vsel %vm724, %v723, %v624
        %v726 = vrot.slane %v648, 6
        %vm727 = vcmask 1042434
        %v728 = vsel %vm727, %v726, %v725
        %v729 = vrot.slane %v660, 5
        %vm730 = vcmask 1043459
        %v731 = vsel %vm730, %v729, %v728
        %v732 = vrot.slane %v674, 7
        %v733 = vsel %vm724, %v732, %v672
        %v734 = vrot.slane %v676, 6
        %v735 = vsel %vm727, %v734, %v733
        %v736 = vrot.slane %v678, 5
        %v737 = vsel %vm730, %v736, %v735
        %v738 = vrot.slane %v682, 7
        %v739 = vsel %vm724, %v738, %v680
        %v740 = vrot.slane %v684, 6
        %v741 = vsel %vm727, %v740, %v739
        %v742 = vrot.slane %v686, 5
        %v743 = vsel %vm730, %v742, %v741
        %v744 = vrot.slane %v690, 7
        %v745 = vsel %vm724, %v744, %v688
        %v746 = vrot.slane %v692, 6
        %v747 = vsel %vm727, %v746, %v745
        %v748 = vrot.slane %v694, 5
        %v749 = vsel %vm730, %v748, %v747
        %v750 = vrot.slane %v642, 7
        %v751 = vsel %vm724, %v750, %v630
        %v752 = vrot.slane %v654, 6
        %v753 = vsel %vm727, %v752, %v751
        %v754 = vrot.slane %v666, 5
        %v755 = vsel %vm730, %v754, %v753
        %v756 = vrot.slane %v702, 7
        %v757 = vsel %vm724, %v756, %v700
        %v758 = vrot.slane %v704, 6
        %v759 = vsel %vm727, %v758, %v757
        %v760 = vrot.slane %v706, 5
        %v761 = vsel %vm730, %v760, %v759
        %v762 = vrot.slane %v710, 7
        %v763 = vsel %vm724, %v762, %v708
        %v764 = vrot.slane %v712, 6
        %v765 = vsel %vm727, %v764, %v763
        %v766 = vrot.slane %v714, 5
        %v767 = vsel %vm730, %v766, %v765
        %v768 = vrot.slane %v718, 7
        %v769 = vsel %vm724, %v768, %v716
        %v770 = vrot.slane %v720, 6
        %v771 = vsel %vm727, %v770, %v769
        %v772 = vrot.slane %v722, 5
        %v773 = vsel %vm730, %v772, %v771
        %v782 = vcombine.low %v731, %v743
        %v784 = vunpack.c.l.s4 1983009808
        %v785 = vunpack.c.0.s8 %v784
        %v786 = vlaneseq
        %v787 = vshrl.u32 %v786, 7
        %v788 = vsub.s32 %v785, %v787
        %v789 = vrot.slane %v782, %v788
        %v790 = vcombine.low %v737, %v749
        %v792 = vunpack.c.l.s4 1983009808
        %v793 = vunpack.c.0.s8 %v792
        %v794 = vlaneseq
        %v795 = vshrl.u32 %v794, 7
        %v796 = vsub.s32 %v793, %v795
        %v797 = vrot.slane %v790, %v796
        %v798 = vcombine.low %v755, %v767
        %v800 = vunpack.c.l.s4 1983009808
        %v801 = vunpack.c.0.s8 %v800
        %v802 = vlaneseq
        %v803 = vshrl.u32 %v802, 7
        %v804 = vsub.s32 %v801, %v803
        %v805 = vrot.slane %v798, %v804
        %v806 = vcombine.low %v761, %v773
        %v808 = vunpack.c.l.s4 1983009808
        %v809 = vunpack.c.0.s8 %v808
        %v810 = vlaneseq
        %v811 = vshrl.u32 %v810, 7
        %v812 = vsub.s32 %v809, %v811
        %v813 = vrot.slane %v806, %v812
        %v814 = vcombine.low %v789, %v797
        %v815 = vcombine.high %v789, %v797
        %v817 = vunpack.c.l.s4 1934713408
        %v818 = vunpack.c.0.s8 %v817
        %v819 = vlaneseq
        %v820 = vshrl.u32 %v819, 7
        %v821 = vsub.s32 %v818, %v820
        %v822 = vrot.slane %v814, %v821
        %v824 = vunpack.c.l.s4 1934713408
        %v825 = vunpack.c.0.s8 %v824
        %v826 = vlaneseq
        %v827 = vshrl.u32 %v826, 7
        %v828 = vsub.s32 %v825, %v827
        %v829 = vrot.slane %v815, %v828
        %v830 = vcombine.low %v805, %v813
        %v831 = vcombine.high %v805, %v813
        %v833 = vunpack.c.l.s4 1934713408
        %v834 = vunpack.c.0.s8 %v833
        %v835 = vlaneseq
        %v836 = vshrl.u32 %v835, 7
        %v837 = vsub.s32 %v834, %v836
        %v838 = vrot.slane %v830, %v837
        %v840 = vunpack.c.l.s4 1934713408
        %v841 = vunpack.c.0.s8 %v840
        %v842 = vlaneseq
        %v843 = vshrl.u32 %v842, 7
        %v844 = vsub.s32 %v841, %v843
        %v845 = vrot.slane %v831, %v844
        %v846 = vcombine.low %v822, %v838
        %v847 = vcombine.high %v822, %v838
        %v848 = vcombine.low %v829, %v845
        %v849 = vcombine.high %v829, %v845
        %vm850 = vcmask 261120
        %v851 = vsel %vm850, %v846, 0.0
        %v852 = vrot.slane %v851, 4
        %v853 = vadd.f32 %v851, %v852
        %v854 = vrot.slane %v853, 2
        %v855 = vadd.f32 %v853, %v854
        %v856 = vrot.slane %v855, 1
        %v857 = vadd.f32 %v855, %v856
        %v858 = vsel %vm850, %v847, 0.0
        %v859 = vrot.slane %v858, 4
        %v860 = vadd.f32 %v858, %v859
        %v861 = vrot.slane %v860, 2
        %v862 = vadd.f32 %v860, %v861
        %v863 = vrot.slane %v862, 1
        %v864 = vadd.f32 %v862, %v863
        %v865 = vsel %vm850, %v848, 0.0
        %v866 = vrot.slane %v865, 4
        %v867 = vadd.f32 %v865, %v866
        %v868 = vrot.slane %v867, 2
        %v869 = vadd.f32 %v867, %v868
        %v870 = vrot.slane %v869, 1
        %v871 = vadd.f32 %v869, %v870
        %v872 = vsel %vm850, %v849, 0.0
        %v873 = vrot.slane %v872, 4
        %v874 = vadd.f32 %v872, %v873
        %v875 = vrot.slane %v874, 2
        %v876 = vadd.f32 %v874, %v875
        %v877 = vrot.slane %v876, 1
        %v878 = vadd.f32 %v876, %v877
        %v879 = vadd.f32 %v857, 0.0
        %v880 = vadd.f32 %v864, 0.0
        %v881 = vadd.f32 %v871, 0.0
        %v882 = vadd.f32 %v878, 0.0
        %v883 = vmul.f32 %v879, 0.015625
        %v884 = vmul.f32 %v880, 0.015625
        %v885 = vmul.f32 %v881, 0.015625
        %v886 = vmul.f32 %v882, 0.015625
        %v891 = vsel %vm724, %v884, %v883
        %v892 = vsel %vm727, %v885, %v891
        %v893 = vsel %vm730, %v886, %v892
        %895 = vrot.lane.b32.xlu0 %v893, 32
        %v896 = vpop.permute.xlu0 %895
        %898 = vrot.lane.b32.xlu0 %v893, 64
        %v899 = vpop.permute.xlu0 %898
        %901 = vrot.lane.b32.xlu0 %v893, 96
        %v902 = vpop.permute.xlu0 %901
        %v904 = vsel %vm850, %v893, %v896
        %vm905 = vcmask 523264
        %v906 = vsel %vm905, %v904, %v899
        %vm907 = vcmask 785408
        %v908 = vsel %vm907, %v906, %v902
        %v910 = vcombine.low %v908, %v908
        %v912 = vunpack.c.l.s4 1966171168
        %v913 = vunpack.c.0.s8 %v912
        %v914 = vlaneseq
        %v915 = vshrl.u32 %v914, 7
        %v916 = vsub.s32 %v913, %v915
        %v917 = vrot.slane %v910, %v916
        %v918 = vcombine.high %v917, %v917
        %v920 = vunpack.c.l.s4 1966171168
        %v921 = vunpack.c.0.s8 %v920
        %v922 = vlaneseq
        %v923 = vshrl.u32 %v922, 7
        %v924 = vsub.s32 %v921, %v923
        %v925 = vrot.slane %v917, %v924
        %v927 = vunpack.c.l.s4 1966171168
        %v928 = vunpack.c.0.s8 %v927
        %v929 = vlaneseq
        %v930 = vshrl.u32 %v929, 7
        %v931 = vsub.s32 %v928, %v930
        %v932 = vrot.slane %v918, %v931
        %v933 = vcombine.high %v925, %v925
        %v934 = vcombine.high %v932, %v932
        %v935 = vlaneseq
        %v936 = vshrl.u32 %v935, 7
        %v937 = vsub.s32 0, %v936
        %v938 = vrot.slane %v925, %v937
        %v939 = vlaneseq
        %v940 = vshrl.u32 %v939, 7
        %v941 = vsub.s32 1, %v940
        %v942 = vrot.slane %v925, %v941
        %v943 = vlaneseq
        %v944 = vshrl.u32 %v943, 7
        %v945 = vsub.s32 0, %v944
        %v946 = vrot.slane %v932, %v945
        %v947 = vlaneseq
        %v948 = vshrl.u32 %v947, 7
        %v949 = vsub.s32 1, %v948
        %v950 = vrot.slane %v932, %v949
        %v951 = vlaneseq
        %v952 = vshrl.u32 %v951, 7
        %v953 = vsub.s32 0, %v952
        %v954 = vrot.slane %v933, %v953
        %v955 = vlaneseq
        %v956 = vshrl.u32 %v955, 7
        %v957 = vsub.s32 1, %v956
        %v958 = vrot.slane %v933, %v957
        %v959 = vlaneseq
        %v960 = vshrl.u32 %v959, 7
        %v961 = vsub.s32 0, %v960
        %v962 = vrot.slane %v934, %v961
        %v963 = vlaneseq
        %v964 = vshrl.u32 %v963, 7
        %v965 = vsub.s32 1, %v964
        %v966 = vrot.slane %v934, %v965
        %v975 = vsub.f32 %v609, %v938
        %v976 = vsub.f32 %v610, %v942
        %v977 = vsub.f32 %v611, %v946
        %v978 = vsub.f32 %v612, %v950
        %v979 = vsub.f32 %v613, %v954
        %v980 = vsub.f32 %v614, %v958
        %v981 = vsub.f32 %v615, %v962
        %v982 = vsub.f32 %v616, %v966
        %v983 = vmul.f32 %v975, %v975
        %v984 = vmul.f32 %v976, %v976
        %v985 = vmul.f32 %v977, %v977
        %v986 = vmul.f32 %v978, %v978
        %v987 = vmul.f32 %v979, %v979
        %v988 = vmul.f32 %v980, %v980
        %v989 = vmul.f32 %v981, %v981
        %v990 = vmul.f32 %v982, %v982
        %v991 = vrot.slane %v983, 4
        %v992 = vadd.f32 %v983, %v991
        %v993 = vrot.slane %v992, 2
        %v994 = vadd.f32 %v992, %v993
        %v995 = vrot.slane %v994, 1
        %v996 = vadd.f32 %v994, %v995
        %v997 = vrot.slane %v984, 4
        %v998 = vadd.f32 %v984, %v997
        %v999 = vrot.slane %v998, 2
        %v1000 = vadd.f32 %v998, %v999
        %v1001 = vrot.slane %v1000, 1
        %v1002 = vadd.f32 %v1000, %v1001
        %v1003 = vrot.slane %v985, 4
        %v1004 = vadd.f32 %v985, %v1003
        %v1005 = vrot.slane %v1004, 2
        %v1006 = vadd.f32 %v1004, %v1005
        %v1007 = vrot.slane %v1006, 1
        %v1008 = vadd.f32 %v1006, %v1007
        %v1009 = vrot.slane %v986, 4
        %v1010 = vadd.f32 %v986, %v1009
        %v1011 = vrot.slane %v1010, 2
        %v1012 = vadd.f32 %v1010, %v1011
        %v1013 = vrot.slane %v1012, 1
        %v1014 = vadd.f32 %v1012, %v1013
        %v1015 = vrot.slane %v987, 4
        %v1016 = vadd.f32 %v987, %v1015
        %v1017 = vrot.slane %v1016, 2
        %v1018 = vadd.f32 %v1016, %v1017
        %v1019 = vrot.slane %v1018, 1
        %v1020 = vadd.f32 %v1018, %v1019
        %v1021 = vrot.slane %v988, 4
        %v1022 = vadd.f32 %v988, %v1021
        %v1023 = vrot.slane %v1022, 2
        %v1024 = vadd.f32 %v1022, %v1023
        %v1025 = vrot.slane %v1024, 1
        %v1026 = vadd.f32 %v1024, %v1025
        %v1027 = vrot.slane %v989, 4
        %v1028 = vadd.f32 %v989, %v1027
        %v1029 = vrot.slane %v1028, 2
        %v1030 = vadd.f32 %v1028, %v1029
        %v1031 = vrot.slane %v1030, 1
        %v1032 = vadd.f32 %v1030, %v1031
        %v1033 = vrot.slane %v990, 4
        %v1034 = vadd.f32 %v990, %v1033
        %v1035 = vrot.slane %v1034, 2
        %v1036 = vadd.f32 %v1034, %v1035
        %v1037 = vrot.slane %v1036, 1
        %v1038 = vadd.f32 %v1036, %v1037
        %1043 = vrot.lane.b32.xlu0 %v996, 96
        %v1044 = vpop.permute.xlu0 %1043
        %1045 = vrot.lane.b32.xlu0 %v1008, 96
        %v1046 = vpop.permute.xlu0 %1045
        %1047 = vrot.lane.b32.xlu0 %v1020, 96
        %v1048 = vpop.permute.xlu0 %1047
        %1049 = vrot.lane.b32.xlu0 %v1032, 96
        %v1050 = vpop.permute.xlu0 %1049
        %1051 = vrot.lane.b32.xlu0 %v996, 64
        %v1052 = vpop.permute.xlu0 %1051
        %1053 = vrot.lane.b32.xlu0 %v1008, 64
        %v1054 = vpop.permute.xlu0 %1053
        %1055 = vrot.lane.b32.xlu0 %v1020, 64
        %v1056 = vpop.permute.xlu0 %1055
        %1057 = vrot.lane.b32.xlu0 %v1032, 64
        %v1058 = vpop.permute.xlu0 %1057
        %1059 = vrot.lane.b32.xlu0 %v996, 32
        %v1060 = vpop.permute.xlu0 %1059
        %1061 = vrot.lane.b32.xlu0 %v1008, 32
        %v1062 = vpop.permute.xlu0 %1061
        %1063 = vrot.lane.b32.xlu0 %v1020, 32
        %v1064 = vpop.permute.xlu0 %1063
        %1065 = vrot.lane.b32.xlu0 %v1032, 32
        %v1066 = vpop.permute.xlu0 %1065
        %1071 = vrot.lane.b32.xlu0 %v1002, 96
        %v1072 = vpop.permute.xlu0 %1071
        %1073 = vrot.lane.b32.xlu0 %v1014, 96
        %v1074 = vpop.permute.xlu0 %1073
        %1075 = vrot.lane.b32.xlu0 %v1026, 96
        %v1076 = vpop.permute.xlu0 %1075
        %1077 = vrot.lane.b32.xlu0 %v1038, 96
        %v1078 = vpop.permute.xlu0 %1077
        %1079 = vrot.lane.b32.xlu0 %v1002, 64
        %v1080 = vpop.permute.xlu0 %1079
        %1081 = vrot.lane.b32.xlu0 %v1014, 64
        %v1082 = vpop.permute.xlu0 %1081
        %1083 = vrot.lane.b32.xlu0 %v1026, 64
        %v1084 = vpop.permute.xlu0 %1083
        %1085 = vrot.lane.b32.xlu0 %v1038, 64
        %v1086 = vpop.permute.xlu0 %1085
        %1087 = vrot.lane.b32.xlu0 %v1002, 32
        %v1088 = vpop.permute.xlu0 %1087
        %1089 = vrot.lane.b32.xlu0 %v1014, 32
        %v1090 = vpop.permute.xlu0 %1089
        %1091 = vrot.lane.b32.xlu0 %v1026, 32
        %v1092 = vpop.permute.xlu0 %1091
        %1093 = vrot.lane.b32.xlu0 %v1038, 32
        %v1094 = vpop.permute.xlu0 %1093
        %v1095 = vrot.slane %v1008, 7
        %v1096 = vsel %vm724, %v1095, %v996
        %v1097 = vrot.slane %v1020, 6
        %v1098 = vsel %vm727, %v1097, %v1096
        %v1099 = vrot.slane %v1032, 5
        %v1100 = vsel %vm730, %v1099, %v1098
        %v1101 = vrot.slane %v1046, 7
        %v1102 = vsel %vm724, %v1101, %v1044
        %v1103 = vrot.slane %v1048, 6
        %v1104 = vsel %vm727, %v1103, %v1102
        %v1105 = vrot.slane %v1050, 5
        %v1106 = vsel %vm730, %v1105, %v1104
        %v1107 = vrot.slane %v1054, 7
        %v1108 = vsel %vm724, %v1107, %v1052
        %v1109 = vrot.slane %v1056, 6
        %v1110 = vsel %vm727, %v1109, %v1108
        %v1111 = vrot.slane %v1058, 5
        %v1112 = vsel %vm730, %v1111, %v1110
        %v1113 = vrot.slane %v1062, 7
        %v1114 = vsel %vm724, %v1113, %v1060
        %v1115 = vrot.slane %v1064, 6
        %v1116 = vsel %vm727, %v1115, %v1114
        %v1117 = vrot.slane %v1066, 5
        %v1118 = vsel %vm730, %v1117, %v1116
        %v1119 = vrot.slane %v1014, 7
        %v1120 = vsel %vm724, %v1119, %v1002
        %v1121 = vrot.slane %v1026, 6
        %v1122 = vsel %vm727, %v1121, %v1120
        %v1123 = vrot.slane %v1038, 5
        %v1124 = vsel %vm730, %v1123, %v1122
        %v1125 = vrot.slane %v1074, 7
        %v1126 = vsel %vm724, %v1125, %v1072
        %v1127 = vrot.slane %v1076, 6
        %v1128 = vsel %vm727, %v1127, %v1126
        %v1129 = vrot.slane %v1078, 5
        %v1130 = vsel %vm730, %v1129, %v1128
        %v1131 = vrot.slane %v1082, 7
        %v1132 = vsel %vm724, %v1131, %v1080
        %v1133 = vrot.slane %v1084, 6
        %v1134 = vsel %vm727, %v1133, %v1132
        %v1135 = vrot.slane %v1086, 5
        %v1136 = vsel %vm730, %v1135, %v1134
        %v1137 = vrot.slane %v1090, 7
        %v1138 = vsel %vm724, %v1137, %v1088
        %v1139 = vrot.slane %v1092, 6
        %v1140 = vsel %vm727, %v1139, %v1138
        %v1141 = vrot.slane %v1094, 5
        %v1142 = vsel %vm730, %v1141, %v1140
        %v1151 = vcombine.low %v1100, %v1112
        %v1153 = vunpack.c.l.s4 1983009808
        %v1154 = vunpack.c.0.s8 %v1153
        %v1155 = vlaneseq
        %v1156 = vshrl.u32 %v1155, 7
        %v1157 = vsub.s32 %v1154, %v1156
        %v1158 = vrot.slane %v1151, %v1157
        %v1159 = vcombine.low %v1106, %v1118
        %v1161 = vunpack.c.l.s4 1983009808
        %v1162 = vunpack.c.0.s8 %v1161
        %v1163 = vlaneseq
        %v1164 = vshrl.u32 %v1163, 7
        %v1165 = vsub.s32 %v1162, %v1164
        %v1166 = vrot.slane %v1159, %v1165
        %v1167 = vcombine.low %v1124, %v1136
        %v1169 = vunpack.c.l.s4 1983009808
        %v1170 = vunpack.c.0.s8 %v1169
        %v1171 = vlaneseq
        %v1172 = vshrl.u32 %v1171, 7
        %v1173 = vsub.s32 %v1170, %v1172
        %v1174 = vrot.slane %v1167, %v1173
        %v1175 = vcombine.low %v1130, %v1142
        %v1177 = vunpack.c.l.s4 1983009808
        %v1178 = vunpack.c.0.s8 %v1177
        %v1179 = vlaneseq
        %v1180 = vshrl.u32 %v1179, 7
        %v1181 = vsub.s32 %v1178, %v1180
        %v1182 = vrot.slane %v1175, %v1181
        %v1183 = vcombine.low %v1158, %v1166
        %v1184 = vcombine.high %v1158, %v1166
        %v1186 = vunpack.c.l.s4 1934713408
        %v1187 = vunpack.c.0.s8 %v1186
        %v1188 = vlaneseq
        %v1189 = vshrl.u32 %v1188, 7
        %v1190 = vsub.s32 %v1187, %v1189
        %v1191 = vrot.slane %v1183, %v1190
        %v1193 = vunpack.c.l.s4 1934713408
        %v1194 = vunpack.c.0.s8 %v1193
        %v1195 = vlaneseq
        %v1196 = vshrl.u32 %v1195, 7
        %v1197 = vsub.s32 %v1194, %v1196
        %v1198 = vrot.slane %v1184, %v1197
        %v1199 = vcombine.low %v1174, %v1182
        %v1200 = vcombine.high %v1174, %v1182
        %v1202 = vunpack.c.l.s4 1934713408
        %v1203 = vunpack.c.0.s8 %v1202
        %v1204 = vlaneseq
        %v1205 = vshrl.u32 %v1204, 7
        %v1206 = vsub.s32 %v1203, %v1205
        %v1207 = vrot.slane %v1199, %v1206
        %v1209 = vunpack.c.l.s4 1934713408
        %v1210 = vunpack.c.0.s8 %v1209
        %v1211 = vlaneseq
        %v1212 = vshrl.u32 %v1211, 7
        %v1213 = vsub.s32 %v1210, %v1212
        %v1214 = vrot.slane %v1200, %v1213
        %v1215 = vcombine.low %v1191, %v1207
        %v1216 = vcombine.high %v1191, %v1207
        %v1217 = vcombine.low %v1198, %v1214
        %v1218 = vcombine.high %v1198, %v1214
        %v1219 = vsel %vm850, %v1215, 0.0
        %v1220 = vrot.slane %v1219, 4
        %v1221 = vadd.f32 %v1219, %v1220
        %v1222 = vrot.slane %v1221, 2
        %v1223 = vadd.f32 %v1221, %v1222
        %v1224 = vrot.slane %v1223, 1
        %v1225 = vadd.f32 %v1223, %v1224
        %v1226 = vsel %vm850, %v1216, 0.0
        %v1227 = vrot.slane %v1226, 4
        %v1228 = vadd.f32 %v1226, %v1227
        %v1229 = vrot.slane %v1228, 2
        %v1230 = vadd.f32 %v1228, %v1229
        %v1231 = vrot.slane %v1230, 1
        %v1232 = vadd.f32 %v1230, %v1231
        %v1233 = vsel %vm850, %v1217, 0.0
        %v1234 = vrot.slane %v1233, 4
        %v1235 = vadd.f32 %v1233, %v1234
        %v1236 = vrot.slane %v1235, 2
        %v1237 = vadd.f32 %v1235, %v1236
        %v1238 = vrot.slane %v1237, 1
        %v1239 = vadd.f32 %v1237, %v1238
        %v1240 = vsel %vm850, %v1218, 0.0
        %v1241 = vrot.slane %v1240, 4
        %v1242 = vadd.f32 %v1240, %v1241
        %v1243 = vrot.slane %v1242, 2
        %v1244 = vadd.f32 %v1242, %v1243
        %v1245 = vrot.slane %v1244, 1
        %v1246 = vadd.f32 %v1244, %v1245
        %v1247 = vadd.f32 %v1225, 0.0
        %v1248 = vadd.f32 %v1232, 0.0
        %v1249 = vadd.f32 %v1239, 0.0
        %v1250 = vadd.f32 %v1246, 0.0
        %v1251 = vmul.f32 %v1247, 0.015625
        %v1252 = vmul.f32 %v1248, 0.015625
        %v1253 = vmul.f32 %v1249, 0.015625
        %v1254 = vmul.f32 %v1250, 0.015625
        %v1255 = vadd.f32 %v1251, 1e-06
        %v1256 = vadd.f32 %v1252, 1e-06
        %v1257 = vadd.f32 %v1253, 1e-06
        %v1258 = vadd.f32 %v1254, 1e-06
        %v1259 = vrsqrt.pop %v1255
        %v1260 = vrsqrt.pop %v1256
        %v1261 = vrsqrt.pop %v1257
        %v1262 = vrsqrt.pop %v1258
        %v1267 = vsel %vm724, %v1260, %v1259
        %v1268 = vsel %vm727, %v1261, %v1267
        %v1269 = vsel %vm730, %v1262, %v1268
        %1271 = vrot.lane.b32.xlu0 %v1269, 32
        %v1272 = vpop.permute.xlu0 %1271
        %1274 = vrot.lane.b32.xlu0 %v1269, 64
        %v1275 = vpop.permute.xlu0 %1274
        %1277 = vrot.lane.b32.xlu0 %v1269, 96
        %v1278 = vpop.permute.xlu0 %1277
        %v1280 = vsel %vm850, %v1269, %v1272
        %v1281 = vsel %vm905, %v1280, %v1275
        %v1282 = vsel %vm907, %v1281, %v1278
        %v1284 = vcombine.low %v1282, %v1282
        %v1286 = vunpack.c.l.s4 1966171168
        %v1287 = vunpack.c.0.s8 %v1286
        %v1288 = vlaneseq
        %v1289 = vshrl.u32 %v1288, 7
        %v1290 = vsub.s32 %v1287, %v1289
        %v1291 = vrot.slane %v1284, %v1290
        %v1292 = vcombine.high %v1291, %v1291
        %v1294 = vunpack.c.l.s4 1966171168
        %v1295 = vunpack.c.0.s8 %v1294
        %v1296 = vlaneseq
        %v1297 = vshrl.u32 %v1296, 7
        %v1298 = vsub.s32 %v1295, %v1297
        %v1299 = vrot.slane %v1291, %v1298
        %v1301 = vunpack.c.l.s4 1966171168
        %v1302 = vunpack.c.0.s8 %v1301
        %v1303 = vlaneseq
        %v1304 = vshrl.u32 %v1303, 7
        %v1305 = vsub.s32 %v1302, %v1304
        %v1306 = vrot.slane %v1292, %v1305
        %v1307 = vcombine.high %v1299, %v1299
        %v1308 = vcombine.high %v1306, %v1306
        %v1313 = vmul.f32 %v1299, %v617
        %v1314 = vmul.f32 %v1306, %v617
        %v1315 = vmul.f32 %v1307, %v617
        %v1316 = vmul.f32 %v1308, %v617
        %v1321 = vlaneseq
        %v1322 = vshrl.u32 %v1321, 7
        %v1323 = vsub.s32 0, %v1322
        %v1324 = vrot.slane %v1313, %v1323
        %v1325 = vlaneseq
        %v1326 = vshrl.u32 %v1325, 7
        %v1327 = vsub.s32 1, %v1326
        %v1328 = vrot.slane %v1313, %v1327
        %v1329 = vlaneseq
        %v1330 = vshrl.u32 %v1329, 7
        %v1331 = vsub.s32 0, %v1330
        %v1332 = vrot.slane %v1314, %v1331
        %v1333 = vlaneseq
        %v1334 = vshrl.u32 %v1333, 7
        %v1335 = vsub.s32 1, %v1334
        %v1336 = vrot.slane %v1314, %v1335
        %v1337 = vlaneseq
        %v1338 = vshrl.u32 %v1337, 7
        %v1339 = vsub.s32 0, %v1338
        %v1340 = vrot.slane %v1315, %v1339
        %v1341 = vlaneseq
        %v1342 = vshrl.u32 %v1341, 7
        %v1343 = vsub.s32 1, %v1342
        %v1344 = vrot.slane %v1315, %v1343
        %v1345 = vlaneseq
        %v1346 = vshrl.u32 %v1345, 7
        %v1347 = vsub.s32 0, %v1346
        %v1348 = vrot.slane %v1316, %v1347
        %v1349 = vlaneseq
        %v1350 = vshrl.u32 %v1349, 7
        %v1351 = vsub.s32 1, %v1350
        %v1352 = vrot.slane %v1316, %v1351
        %v1361 = vmul.f32 %v975, %v1324
        %v1362 = vmul.f32 %v976, %v1328
        %v1363 = vmul.f32 %v977, %v1332
        %v1364 = vmul.f32 %v978, %v1336
        %v1365 = vmul.f32 %v979, %v1340
        %v1366 = vmul.f32 %v980, %v1344
        %v1367 = vmul.f32 %v981, %v1348
        %v1368 = vmul.f32 %v982, %v1352
        %v1370 = vlaneseq
        %v1371 = vshrl.u32 %v1370, 7
        %v1372 = vsub.s32 0, %v1371
        %v1373 = vrot.slane %v618, %v1372
        %v1374 = vlaneseq
        %v1375 = vshrl.u32 %v1374, 7
        %v1376 = vsub.s32 1, %v1375
        %v1377 = vrot.slane %v618, %v1376
        %v1380 = vadd.f32 %v1361, %v1373
        %v1381 = vadd.f32 %v1362, %v1377
        %v1382 = vadd.f32 %v1363, %v1373
        %v1383 = vadd.f32 %v1364, %v1377
        %v1384 = vadd.f32 %v1365, %v1373
        %v1385 = vadd.f32 %v1366, %v1377
        %v1386 = vadd.f32 %v1367, %v1373
        %v1387 = vadd.f32 %v1368, %v1377
        %v1388 = vsub.f32 0.0, %v1380
        %v1389 = vsub.f32 0.0, %v1381
        %v1390 = vsub.f32 0.0, %v1382
        %v1391 = vsub.f32 0.0, %v1383
        %v1392 = vsub.f32 0.0, %v1384
        %v1393 = vsub.f32 0.0, %v1385
        %v1394 = vsub.f32 0.0, %v1386
        %v1395 = vsub.f32 0.0, %v1387
        %v1396 = vmin.f32 %v1388, 80.0
        %v1397 = vmin.f32 %v1389, 80.0
        %v1398 = vmin.f32 %v1390, 80.0
        %v1399 = vmin.f32 %v1391, 80.0
        %v1400 = vmin.f32 %v1392, 80.0
        %v1401 = vmin.f32 %v1393, 80.0
        %v1402 = vmin.f32 %v1394, 80.0
        %v1403 = vmin.f32 %v1395, 80.0
        %v1404 = vmul.f32 %v1396, 1.442695
        %v1405 = vpow.pop %v1404
        %v1406 = vmul.f32 %v1397, 1.442695
        %v1407 = vpow.pop %v1406
        %v1408 = vmul.f32 %v1398, 1.442695
        %v1409 = vpow.pop %v1408
        %v1410 = vmul.f32 %v1399, 1.442695
        %v1411 = vpow.pop %v1410
        %v1412 = vmul.f32 %v1400, 1.442695
        %v1413 = vpow.pop %v1412
        %v1414 = vmul.f32 %v1401, 1.442695
        %v1415 = vpow.pop %v1414
        %v1416 = vmul.f32 %v1402, 1.442695
        %v1417 = vpow.pop %v1416
        %v1418 = vmul.f32 %v1403, 1.442695
        %v1419 = vpow.pop %v1418
        %v1420 = vadd.f32 %v1405, 1.0
        %v1421 = vadd.f32 %v1407, 1.0
        %v1422 = vadd.f32 %v1409, 1.0
        %v1423 = vadd.f32 %v1411, 1.0
        %v1424 = vadd.f32 %v1413, 1.0
        %v1425 = vadd.f32 %v1415, 1.0
        %v1426 = vadd.f32 %v1417, 1.0
        %v1427 = vadd.f32 %v1419, 1.0
        %v1428 = vrcp.pop %v1420
        %v1429 = vrcp.pop %v1421
        %v1430 = vrcp.pop %v1422
        %v1431 = vrcp.pop %v1423
        %v1432 = vrcp.pop %v1424
        %v1433 = vrcp.pop %v1425
        %v1434 = vrcp.pop %v1426
        %v1435 = vrcp.pop %v1427
        %v1436 = vmul.f32 %v1380, %v1428
        %v1437 = vmul.f32 %v1381, %v1429
        %v1438 = vmul.f32 %v1382, %v1430
        %v1439 = vmul.f32 %v1383, %v1431
        %v1440 = vmul.f32 %v1384, %v1432
        %v1441 = vmul.f32 %v1385, %v1433
        %v1442 = vmul.f32 %v1386, %v1434
        %v1443 = vmul.f32 %v1387, %v1435
        %v1444 = vpack.c.bf16 %v1436, %v1436
        %v1445 = vpack.c.bf16 %v1437, %v1437
        %v1446 = vpack.c.bf16 %v1438, %v1438
        %v1447 = vpack.c.bf16 %v1439, %v1439
        %v1448 = vpack.c.bf16 %v1440, %v1440
        %v1449 = vpack.c.bf16 %v1441, %v1441
        %v1450 = vpack.c.bf16 %v1442, %v1442
        %v1451 = vpack.c.bf16 %v1443, %v1443
        %v1452 = vld [vmem:[#allocation11] sm:$0xf]
        %v1454 = vshrl.u32 %v1444, 16
        %v1456 = vrot.slane %v1454, 7
        %v1457 = vshll.u32 %v1444, 16
        %v1459 = vor.u32 %v1456, %v1457
        %v1461 = vshrl.u32 %v1445, 16
        %v1463 = vrot.slane %v1461, 7
        %v1464 = vshll.u32 %v1445, 16
        %v1466 = vor.u32 %v1463, %v1464
        %v1468 = vshrl.u32 %v1446, 16
        %v1470 = vrot.slane %v1468, 7
        %v1471 = vshll.u32 %v1446, 16
        %v1473 = vor.u32 %v1470, %v1471
        %v1475 = vshrl.u32 %v1447, 16
        %v1477 = vrot.slane %v1475, 7
        %v1478 = vshll.u32 %v1447, 16
        %v1480 = vor.u32 %v1477, %v1478
        %v1482 = vshrl.u32 %v1448, 16
        %v1484 = vrot.slane %v1482, 7
        %v1485 = vshll.u32 %v1448, 16
        %v1487 = vor.u32 %v1484, %v1485
        %v1489 = vshrl.u32 %v1449, 16
        %v1491 = vrot.slane %v1489, 7
        %v1492 = vshll.u32 %v1449, 16
        %v1494 = vor.u32 %v1491, %v1492
        %v1496 = vshrl.u32 %v1450, 16
        %v1498 = vrot.slane %v1496, 7
        %v1499 = vshll.u32 %v1450, 16
        %v1501 = vor.u32 %v1498, %v1499
        %v1503 = vshrl.u32 %v1451, 16
        %v1505 = vrot.slane %v1503, 7
        %v1506 = vshll.u32 %v1451, 16
        %v1508 = vor.u32 %v1505, %v1506
        %vm1517 = vcmask 1040384
        %vm1518 = vsmask.f32 256
        %vm1519 = vmand %vm1517, %vm1518
        %v1520 = vsel %vm1519, 0, %v1459
        %v1521 = vsel %vm1519, 0, %v1466
        %v1522 = vsel %vm1519, 0, %v1473
        %v1523 = vsel %vm1519, 0, %v1480
        %v1524 = vsel %vm1519, 0, %v1487
        %v1525 = vsel %vm1519, 0, %v1494
        %v1526 = vsel %vm1519, 0, %v1501
        %v1527 = vsel %vm1519, 0, %v1508
        %v1528 = vrot.slane %v1457, 1
        %v1529 = vor.u32 %v1454, %v1528
        %v1530 = vrot.slane %v1464, 1
        %v1531 = vor.u32 %v1461, %v1530
        %v1532 = vrot.slane %v1471, 1
        %v1533 = vor.u32 %v1468, %v1532
        %v1534 = vrot.slane %v1478, 1
        %v1535 = vor.u32 %v1475, %v1534
        %v1536 = vrot.slane %v1485, 1
        %v1537 = vor.u32 %v1482, %v1536
        %v1538 = vrot.slane %v1492, 1
        %v1539 = vor.u32 %v1489, %v1538
        %v1540 = vrot.slane %v1499, 1
        %v1541 = vor.u32 %v1496, %v1540
        %v1542 = vrot.slane %v1506, 1
        %v1543 = vor.u32 %v1503, %v1542
        %vm1552 = vcmask 1043456
        %vm1553 = vsmask.f32 3328
        %vm1554 = vmand %vm1552, %vm1553
        %v1555 = vsel %vm1554, %v1529, 0
        %v1556 = vsel %vm1554, %v1531, 0
        %v1557 = vsel %vm1554, %v1533, 0
        %v1558 = vsel %vm1554, %v1535, 0
        %v1559 = vsel %vm1554, %v1537, 0
        %v1560 = vsel %vm1554, %v1539, 0
        %v1561 = vsel %vm1554, %v1541, 0
        %v1562 = vsel %vm1554, %v1543, 0
        %v1571 = vunpack.c.l.b16 %v1520
        %v1572 = vunpack.c.l.b16 %v1521
        %v1573 = vunpack.c.l.b16 %v1522
        %v1574 = vunpack.c.l.b16 %v1523
        %v1575 = vunpack.c.l.b16 %v1524
        %v1576 = vunpack.c.l.b16 %v1525
        %v1577 = vunpack.c.l.b16 %v1526
        %v1578 = vunpack.c.l.b16 %v1527
        %v1579 = vld [vmem:[#allocation10] sm:$0xff]
        %v1580 = vld [vmem:[#allocation10 + $0x8] sm:$0xff]
        %v1581 = vld [vmem:[#allocation10 + $0x10] sm:$0xff]
        %v1582 = vld [vmem:[#allocation10 + $0x18] sm:$0xff]
        %v1583 = vld [vmem:[#allocation10 + $0x20] sm:$0xff]
        %v1584 = vld [vmem:[#allocation10 + $0x28] sm:$0xff]
        %v1585 = vld [vmem:[#allocation10 + $0x30] sm:$0xff]
        %v1586 = vld [vmem:[#allocation10 + $0x38] sm:$0xff]
        %v1587 = vld [vmem:[#allocation10 + $0x40] sm:$0xff]
        %v1588 = vld [vmem:[#allocation10 + $0x48] sm:$0xff]
        %v1589 = vld [vmem:[#allocation10 + $0x50] sm:$0xff]
        %v1590 = vld [vmem:[#allocation10 + $0x58] sm:$0xff]
        %v1591 = vld [vmem:[#allocation10 + $0x60] sm:$0xff]
        %v1592 = vld [vmem:[#allocation10 + $0x68] sm:$0xff]
        %v1593 = vld [vmem:[#allocation10 + $0x70] sm:$0xff]
        %v1594 = vld [vmem:[#allocation10 + $0x78] sm:$0xff]
        %v1595 = vld [vmem:[#allocation10 + $0x80] sm:$0xff]
        %v1596 = vld [vmem:[#allocation10 + $0x88] sm:$0xff]
        %v1597 = vld [vmem:[#allocation10 + $0x90] sm:$0xff]
        %v1598 = vld [vmem:[#allocation10 + $0x98] sm:$0xff]
        %v1599 = vld [vmem:[#allocation10 + $0xa0] sm:$0xff]
        %v1600 = vld [vmem:[#allocation10 + $0xa8] sm:$0xff]
        %v1601 = vld [vmem:[#allocation10 + $0xb0] sm:$0xff]
        %v1602 = vld [vmem:[#allocation10 + $0xb8] sm:$0xff]
        %v1603 = vld [vmem:[#allocation10 + $0xc0] sm:$0xff]
        %v1604 = vld [vmem:[#allocation10 + $0xc8] sm:$0xff]
        %v1605 = vld [vmem:[#allocation10 + $0xd0] sm:$0xff]
        %v1606 = vld [vmem:[#allocation10 + $0xd8] sm:$0xff]
        %v1607 = vld [vmem:[#allocation10 + $0xe0] sm:$0xff]
        %v1608 = vld [vmem:[#allocation10 + $0xe8] sm:$0xff]
        %v1609 = vld [vmem:[#allocation10 + $0xf0] sm:$0xff]
        %v1610 = vld [vmem:[#allocation10 + $0xf8] sm:$0xff]
        %v1611 = vld [vmem:[#allocation10 + $0x100] sm:$0xff]
        %v1612 = vld [vmem:[#allocation10 + $0x108] sm:$0xff]
        %v1613 = vld [vmem:[#allocation10 + $0x110] sm:$0xff]
        %v1614 = vld [vmem:[#allocation10 + $0x118] sm:$0xff]
        %v1615 = vld [vmem:[#allocation10 + $0x120] sm:$0xff]
        %v1616 = vld [vmem:[#allocation10 + $0x128] sm:$0xff]
        %v1617 = vld [vmem:[#allocation10 + $0x130] sm:$0xff]
        %v1618 = vld [vmem:[#allocation10 + $0x138] sm:$0xff]
        %v1619 = vld [vmem:[#allocation10 + $0x140] sm:$0xff]
        %v1620 = vld [vmem:[#allocation10 + $0x148] sm:$0xff]
        %v1621 = vld [vmem:[#allocation10 + $0x150] sm:$0xff]
        %v1622 = vld [vmem:[#allocation10 + $0x158] sm:$0xff]
        %v1623 = vld [vmem:[#allocation10 + $0x160] sm:$0xff]
        %v1624 = vld [vmem:[#allocation10 + $0x168] sm:$0xff]
        %v1625 = vld [vmem:[#allocation10 + $0x170] sm:$0xff]
        %v1626 = vld [vmem:[#allocation10 + $0x178] sm:$0xff]
        %v1627 = vld [vmem:[#allocation10 + $0x180] sm:$0xff]
        %v1628 = vld [vmem:[#allocation10 + $0x188] sm:$0xff]
        %v1629 = vld [vmem:[#allocation10 + $0x190] sm:$0xff]
        %v1630 = vld [vmem:[#allocation10 + $0x198] sm:$0xff]
        %v1631 = vld [vmem:[#allocation10 + $0x1a0] sm:$0xff]
        %v1632 = vld [vmem:[#allocation10 + $0x1a8] sm:$0xff]
        %v1633 = vld [vmem:[#allocation10 + $0x1b0] sm:$0xff]
        %v1634 = vld [vmem:[#allocation10 + $0x1b8] sm:$0xff]
        %v1635 = vld [vmem:[#allocation10 + $0x1c0] sm:$0xff]
        %v1636 = vld [vmem:[#allocation10 + $0x1c8] sm:$0xff]
        %v1637 = vld [vmem:[#allocation10 + $0x1d0] sm:$0xff]
        %v1638 = vld [vmem:[#allocation10 + $0x1d8] sm:$0xff]
        %v1639 = vld [vmem:[#allocation10 + $0x1e0] sm:$0xff]
        %v1640 = vld [vmem:[#allocation10 + $0x1e8] sm:$0xff]
        %v1641 = vld [vmem:[#allocation10 + $0x1f0] sm:$0xff]
        %v1642 = vld [vmem:[#allocation10 + $0x1f8] sm:$0xff]
        %v1651 = vunpack.c.l.b16 %v1444
        %v1652 = vunpack.c.l.b16 %v1445
        %v1653 = vunpack.c.l.b16 %v1446
        %v1654 = vunpack.c.l.b16 %v1447
        %v1655 = vunpack.c.l.b16 %v1448
        %v1656 = vunpack.c.l.b16 %v1449
        %v1657 = vunpack.c.l.b16 %v1450
        %v1658 = vunpack.c.l.b16 %v1451
        %s1659 = scalar_lea.vmem [#allocation10], 512
        %v1660 = vld [vmem:[%s1659] sm:$0xff]
        %v1661 = vld [vmem:[%s1659 + $0x8] sm:$0xff]
        %v1662 = vld [vmem:[%s1659 + $0x10] sm:$0xff]
        %v1663 = vld [vmem:[%s1659 + $0x18] sm:$0xff]
        %v1664 = vld [vmem:[%s1659 + $0x20] sm:$0xff]
        %v1665 = vld [vmem:[%s1659 + $0x28] sm:$0xff]
        %v1666 = vld [vmem:[%s1659 + $0x30] sm:$0xff]
        %v1667 = vld [vmem:[%s1659 + $0x38] sm:$0xff]
        %v1668 = vld [vmem:[%s1659 + $0x40] sm:$0xff]
        %v1669 = vld [vmem:[%s1659 + $0x48] sm:$0xff]
        %v1670 = vld [vmem:[%s1659 + $0x50] sm:$0xff]
        %v1671 = vld [vmem:[%s1659 + $0x58] sm:$0xff]
        %v1672 = vld [vmem:[%s1659 + $0x60] sm:$0xff]
        %v1673 = vld [vmem:[%s1659 + $0x68] sm:$0xff]
        %v1674 = vld [vmem:[%s1659 + $0x70] sm:$0xff]
        %v1675 = vld [vmem:[%s1659 + $0x78] sm:$0xff]
        %v1676 = vld [vmem:[%s1659 + $0x80] sm:$0xff]
        %v1677 = vld [vmem:[%s1659 + $0x88] sm:$0xff]
        %v1678 = vld [vmem:[%s1659 + $0x90] sm:$0xff]
        %v1679 = vld [vmem:[%s1659 + $0x98] sm:$0xff]
        %v1680 = vld [vmem:[%s1659 + $0xa0] sm:$0xff]
        %v1681 = vld [vmem:[%s1659 + $0xa8] sm:$0xff]
        %v1682 = vld [vmem:[%s1659 + $0xb0] sm:$0xff]
        %v1683 = vld [vmem:[%s1659 + $0xb8] sm:$0xff]
        %v1684 = vld [vmem:[%s1659 + $0xc0] sm:$0xff]
        %v1685 = vld [vmem:[%s1659 + $0xc8] sm:$0xff]
        %v1686 = vld [vmem:[%s1659 + $0xd0] sm:$0xff]
        %v1687 = vld [vmem:[%s1659 + $0xd8] sm:$0xff]
        %v1688 = vld [vmem:[%s1659 + $0xe0] sm:$0xff]
        %v1689 = vld [vmem:[%s1659 + $0xe8] sm:$0xff]
        %v1690 = vld [vmem:[%s1659 + $0xf0] sm:$0xff]
        %v1691 = vld [vmem:[%s1659 + $0xf8] sm:$0xff]
        %v1692 = vld [vmem:[%s1659 + $0x100] sm:$0xff]
        %v1693 = vld [vmem:[%s1659 + $0x108] sm:$0xff]
        %v1694 = vld [vmem:[%s1659 + $0x110] sm:$0xff]
        %v1695 = vld [vmem:[%s1659 + $0x118] sm:$0xff]
        %v1696 = vld [vmem:[%s1659 + $0x120] sm:$0xff]
        %v1697 = vld [vmem:[%s1659 + $0x128] sm:$0xff]
        %v1698 = vld [vmem:[%s1659 + $0x130] sm:$0xff]
        %v1699 = vld [vmem:[%s1659 + $0x138] sm:$0xff]
        %v1700 = vld [vmem:[%s1659 + $0x140] sm:$0xff]
        %v1701 = vld [vmem:[%s1659 + $0x148] sm:$0xff]
        %v1702 = vld [vmem:[%s1659 + $0x150] sm:$0xff]
        %v1703 = vld [vmem:[%s1659 + $0x158] sm:$0xff]
        %v1704 = vld [vmem:[%s1659 + $0x160] sm:$0xff]
        %v1705 = vld [vmem:[%s1659 + $0x168] sm:$0xff]
        %v1706 = vld [vmem:[%s1659 + $0x170] sm:$0xff]
        %v1707 = vld [vmem:[%s1659 + $0x178] sm:$0xff]
        %v1708 = vld [vmem:[%s1659 + $0x180] sm:$0xff]
        %v1709 = vld [vmem:[%s1659 + $0x188] sm:$0xff]
        %v1710 = vld [vmem:[%s1659 + $0x190] sm:$0xff]
        %v1711 = vld [vmem:[%s1659 + $0x198] sm:$0xff]
        %v1712 = vld [vmem:[%s1659 + $0x1a0] sm:$0xff]
        %v1713 = vld [vmem:[%s1659 + $0x1a8] sm:$0xff]
        %v1714 = vld [vmem:[%s1659 + $0x1b0] sm:$0xff]
        %v1715 = vld [vmem:[%s1659 + $0x1b8] sm:$0xff]
        %v1716 = vld [vmem:[%s1659 + $0x1c0] sm:$0xff]
        %v1717 = vld [vmem:[%s1659 + $0x1c8] sm:$0xff]
        %v1718 = vld [vmem:[%s1659 + $0x1d0] sm:$0xff]
        %v1719 = vld [vmem:[%s1659 + $0x1d8] sm:$0xff]
        %v1720 = vld [vmem:[%s1659 + $0x1e0] sm:$0xff]
        %v1721 = vld [vmem:[%s1659 + $0x1e8] sm:$0xff]
        %v1722 = vld [vmem:[%s1659 + $0x1f0] sm:$0xff]
        %v1723 = vld [vmem:[%s1659 + $0x1f8] sm:$0xff]
        %v1724 = vpack.c.b16 %v1653, %v1651
        %v1725 = vpack.c.b16 %v1654, %v1652
        %v1726 = vpack.c.b16 %v1657, %v1655
        %v1727 = vpack.c.b16 %v1658, %v1656
        %v1796 = vunpack.c.l.b16 %v1660
        %v1797 = vunpack.c.h.b16 %v1660
        %v1798 = vunpack.c.l.b16 %v1661
        %v1799 = vunpack.c.h.b16 %v1661
        %v1800 = vunpack.c.l.b16 %v1662
        %v1801 = vunpack.c.h.b16 %v1662
        %v1802 = vunpack.c.l.b16 %v1663
        %v1803 = vunpack.c.h.b16 %v1663
        %v1804 = vunpack.c.l.b16 %v1664
        %v1805 = vunpack.c.h.b16 %v1664
        %v1806 = vunpack.c.l.b16 %v1665
        %v1807 = vunpack.c.h.b16 %v1665
        %v1808 = vunpack.c.l.b16 %v1666
        %v1809 = vunpack.c.h.b16 %v1666
        %v1810 = vunpack.c.l.b16 %v1667
        %v1811 = vunpack.c.h.b16 %v1667
        %v1812 = vunpack.c.l.b16 %v1668
        %v1813 = vunpack.c.h.b16 %v1668
        %v1814 = vunpack.c.l.b16 %v1669
        %v1815 = vunpack.c.h.b16 %v1669
        %v1816 = vunpack.c.l.b16 %v1670
        %v1817 = vunpack.c.h.b16 %v1670
        %v1818 = vunpack.c.l.b16 %v1671
        %v1819 = vunpack.c.h.b16 %v1671
        %v1820 = vunpack.c.l.b16 %v1672
        %v1821 = vunpack.c.h.b16 %v1672
        %v1822 = vunpack.c.l.b16 %v1673
        %v1823 = vunpack.c.h.b16 %v1673
        %v1824 = vunpack.c.l.b16 %v1674
        %v1825 = vunpack.c.h.b16 %v1674
        %v1826 = vunpack.c.l.b16 %v1675
        %v1827 = vunpack.c.h.b16 %v1675
        %v1828 = vunpack.c.l.b16 %v1676
        %v1829 = vunpack.c.h.b16 %v1676
        %v1830 = vunpack.c.l.b16 %v1677
        %v1831 = vunpack.c.h.b16 %v1677
        %v1832 = vunpack.c.l.b16 %v1678
        %v1833 = vunpack.c.h.b16 %v1678
        %v1834 = vunpack.c.l.b16 %v1679
        %v1835 = vunpack.c.h.b16 %v1679
        %v1836 = vunpack.c.l.b16 %v1680
        %v1837 = vunpack.c.h.b16 %v1680
        %v1838 = vunpack.c.l.b16 %v1681
        %v1839 = vunpack.c.h.b16 %v1681
        %v1840 = vunpack.c.l.b16 %v1682
        %v1841 = vunpack.c.h.b16 %v1682
        %v1842 = vunpack.c.l.b16 %v1683
        %v1843 = vunpack.c.h.b16 %v1683
        %v1844 = vunpack.c.l.b16 %v1684
        %v1845 = vunpack.c.h.b16 %v1684
        %v1846 = vunpack.c.l.b16 %v1685
        %v1847 = vunpack.c.h.b16 %v1685
        %v1848 = vunpack.c.l.b16 %v1686
        %v1849 = vunpack.c.h.b16 %v1686
        %v1850 = vunpack.c.l.b16 %v1687
        %v1851 = vunpack.c.h.b16 %v1687
        %v1852 = vunpack.c.l.b16 %v1688
        %v1853 = vunpack.c.h.b16 %v1688
        %v1854 = vunpack.c.l.b16 %v1689
        %v1855 = vunpack.c.h.b16 %v1689
        %v1856 = vunpack.c.l.b16 %v1690
        %v1857 = vunpack.c.h.b16 %v1690
        %v1858 = vunpack.c.l.b16 %v1691
        %v1859 = vunpack.c.h.b16 %v1691
        %v1860 = vunpack.c.l.b16 %v1692
        %v1861 = vunpack.c.h.b16 %v1692
        %v1862 = vunpack.c.l.b16 %v1693
        %v1863 = vunpack.c.h.b16 %v1693
        %v1864 = vunpack.c.l.b16 %v1694
        %v1865 = vunpack.c.h.b16 %v1694
        %v1866 = vunpack.c.l.b16 %v1695
        %v1867 = vunpack.c.h.b16 %v1695
        %v1868 = vunpack.c.l.b16 %v1696
        %v1869 = vunpack.c.h.b16 %v1696
        %v1870 = vunpack.c.l.b16 %v1697
        %v1871 = vunpack.c.h.b16 %v1697
        %v1872 = vunpack.c.l.b16 %v1698
        %v1873 = vunpack.c.h.b16 %v1698
        %v1874 = vunpack.c.l.b16 %v1699
        %v1875 = vunpack.c.h.b16 %v1699
        %v1876 = vunpack.c.l.b16 %v1700
        %v1877 = vunpack.c.h.b16 %v1700
        %v1878 = vunpack.c.l.b16 %v1701
        %v1879 = vunpack.c.h.b16 %v1701
        %v1880 = vunpack.c.l.b16 %v1702
        %v1881 = vunpack.c.h.b16 %v1702
        %v1882 = vunpack.c.l.b16 %v1703
        %v1883 = vunpack.c.h.b16 %v1703
        %v1884 = vunpack.c.l.b16 %v1704
        %v1885 = vunpack.c.h.b16 %v1704
        %v1886 = vunpack.c.l.b16 %v1705
        %v1887 = vunpack.c.h.b16 %v1705
        %v1888 = vunpack.c.l.b16 %v1706
        %v1889 = vunpack.c.h.b16 %v1706
        %v1890 = vunpack.c.l.b16 %v1707
        %v1891 = vunpack.c.h.b16 %v1707
        %v1892 = vunpack.c.l.b16 %v1708
        %v1893 = vunpack.c.h.b16 %v1708
        %v1894 = vunpack.c.l.b16 %v1709
        %v1895 = vunpack.c.h.b16 %v1709
        %v1896 = vunpack.c.l.b16 %v1710
        %v1897 = vunpack.c.h.b16 %v1710
        %v1898 = vunpack.c.l.b16 %v1711
        %v1899 = vunpack.c.h.b16 %v1711
        %v1900 = vunpack.c.l.b16 %v1712
        %v1901 = vunpack.c.h.b16 %v1712
        %v1902 = vunpack.c.l.b16 %v1713
        %v1903 = vunpack.c.h.b16 %v1713
        %v1904 = vunpack.c.l.b16 %v1714
        %v1905 = vunpack.c.h.b16 %v1714
        %v1906 = vunpack.c.l.b16 %v1715
        %v1907 = vunpack.c.h.b16 %v1715
        %v1908 = vunpack.c.l.b16 %v1716
        %v1909 = vunpack.c.h.b16 %v1716
        %v1910 = vunpack.c.l.b16 %v1717
        %v1911 = vunpack.c.h.b16 %v1717
        %v1912 = vunpack.c.l.b16 %v1718
        %v1913 = vunpack.c.h.b16 %v1718
        %v1914 = vunpack.c.l.b16 %v1719
        %v1915 = vunpack.c.h.b16 %v1719
        %v1916 = vunpack.c.l.b16 %v1720
        %v1917 = vunpack.c.h.b16 %v1720
        %v1918 = vunpack.c.l.b16 %v1721
        %v1919 = vunpack.c.h.b16 %v1721
        %v1920 = vunpack.c.l.b16 %v1722
        %v1921 = vunpack.c.h.b16 %v1722
        %v1922 = vunpack.c.l.b16 %v1723
        %v1923 = vunpack.c.h.b16 %v1723
        %v1924 = vpack.c.b16 %v1800, %v1796
        %v1925 = vpack.c.b16 %v1801, %v1797
        %v1926 = vpack.c.b16 %v1802, %v1798
        %v1927 = vpack.c.b16 %v1803, %v1799
        %v1928 = vpack.c.b16 %v1808, %v1804
        %v1929 = vpack.c.b16 %v1809, %v1805
        %v1930 = vpack.c.b16 %v1810, %v1806
        %v1931 = vpack.c.b16 %v1811, %v1807
        %v1932 = vpack.c.b16 %v1816, %v1812
        %v1933 = vpack.c.b16 %v1817, %v1813
        %v1934 = vpack.c.b16 %v1818, %v1814
        %v1935 = vpack.c.b16 %v1819, %v1815
        %v1936 = vpack.c.b16 %v1824, %v1820
        %v1937 = vpack.c.b16 %v1825, %v1821
        %v1938 = vpack.c.b16 %v1826, %v1822
        %v1939 = vpack.c.b16 %v1827, %v1823
        %v1940 = vpack.c.b16 %v1832, %v1828
        %v1941 = vpack.c.b16 %v1833, %v1829
        %v1942 = vpack.c.b16 %v1834, %v1830
        %v1943 = vpack.c.b16 %v1835, %v1831
        %v1944 = vpack.c.b16 %v1840, %v1836
        %v1945 = vpack.c.b16 %v1841, %v1837
        %v1946 = vpack.c.b16 %v1842, %v1838
        %v1947 = vpack.c.b16 %v1843, %v1839
        %v1948 = vpack.c.b16 %v1848, %v1844
        %v1949 = vpack.c.b16 %v1849, %v1845
        %v1950 = vpack.c.b16 %v1850, %v1846
        %v1951 = vpack.c.b16 %v1851, %v1847
        %v1952 = vpack.c.b16 %v1856, %v1852
        %v1953 = vpack.c.b16 %v1857, %v1853
        %v1954 = vpack.c.b16 %v1858, %v1854
        %v1955 = vpack.c.b16 %v1859, %v1855
        %v1956 = vpack.c.b16 %v1864, %v1860
        %v1957 = vpack.c.b16 %v1865, %v1861
        %v1958 = vpack.c.b16 %v1866, %v1862
        %v1959 = vpack.c.b16 %v1867, %v1863
        %v1960 = vpack.c.b16 %v1872, %v1868
        %v1961 = vpack.c.b16 %v1873, %v1869
        %v1962 = vpack.c.b16 %v1874, %v1870
        %v1963 = vpack.c.b16 %v1875, %v1871
        %v1964 = vpack.c.b16 %v1880, %v1876
        %v1965 = vpack.c.b16 %v1881, %v1877
        %v1966 = vpack.c.b16 %v1882, %v1878
        %v1967 = vpack.c.b16 %v1883, %v1879
        %v1968 = vpack.c.b16 %v1888, %v1884
        %v1969 = vpack.c.b16 %v1889, %v1885
        %v1970 = vpack.c.b16 %v1890, %v1886
        %v1971 = vpack.c.b16 %v1891, %v1887
        %v1972 = vpack.c.b16 %v1896, %v1892
        %v1973 = vpack.c.b16 %v1897, %v1893
        %v1974 = vpack.c.b16 %v1898, %v1894
        %v1975 = vpack.c.b16 %v1899, %v1895
        %v1976 = vpack.c.b16 %v1904, %v1900
        %v1977 = vpack.c.b16 %v1905, %v1901
        %v1978 = vpack.c.b16 %v1906, %v1902
        %v1979 = vpack.c.b16 %v1907, %v1903
        %v1980 = vpack.c.b16 %v1912, %v1908
        %v1981 = vpack.c.b16 %v1913, %v1909
        %v1982 = vpack.c.b16 %v1914, %v1910
        %v1983 = vpack.c.b16 %v1915, %v1911
        %v1984 = vpack.c.b16 %v1920, %v1916
        %v1985 = vpack.c.b16 %v1921, %v1917
        %v1986 = vpack.c.b16 %v1922, %v1918
        %v1987 = vpack.c.b16 %v1923, %v1919
        %2052 = vmatprep.subr.bf16.mxu0 %v1953
        %2053 = vmatpush1.bf16.msra.mxu0 %v1952
        %2054 = vmatprep.subr.bf16.mxu0 %v1949
        %2055 = vmatpush1.bf16.msra.mxu0 %v1948
        %2056 = vmatprep.subr.bf16.mxu0 %v1945
        %2057 = vmatpush1.bf16.msra.mxu0 %v1944
        %2058 = vmatprep.subr.bf16.mxu0 %v1941
        %2059 = vmatpush1.bf16.msra.mxu0 %v1940
        %2060 = vmatprep.subr.bf16.mxu0 %v1937
        %2061 = vmatpush1.bf16.msra.mxu0 %v1936
        %2062 = vmatprep.subr.bf16.mxu0 %v1933
        %2063 = vmatpush1.bf16.msra.mxu0 %v1932
        %2064 = vmatprep.subr.bf16.mxu0 %v1929
        %2065 = vmatpush1.bf16.msra.mxu0 %v1928
        %2066 = vmatprep.subr.bf16.mxu0 %v1925
        %2067 = vmatpush1.bf16.msra.mxu0 %v1924
        %2068 = vmatprep.subr.bf16.mxu0 %v1985
        %2069 = vmatpush2.bf16.msra.mxu0 %v1984
        %2070 = vmatprep.subr.bf16.mxu0 %v1981
        %2071 = vmatpush2.bf16.msra.mxu0 %v1980
        %2072 = vmatprep.subr.bf16.mxu0 %v1977
        %2073 = vmatpush2.bf16.msra.mxu0 %v1976
        %2074 = vmatprep.subr.bf16.mxu0 %v1973
        %2075 = vmatpush2.bf16.msra.mxu0 %v1972
        %2076 = vmatprep.subr.bf16.mxu0 %v1969
        %2077 = vmatpush2.bf16.msra.mxu0 %v1968
        %2078 = vmatprep.subr.bf16.mxu0 %v1965
        %2079 = vmatpush2.bf16.msra.mxu0 %v1964
        %2080 = vmatprep.subr.bf16.mxu0 %v1961
        %2081 = vmatpush2.bf16.msra.mxu0 %v1960
        %2082 = vmatprep.subr.bf16.mxu0 %v1957
        %2083 = vmatpush2.bf16.msra.mxu0 %v1956
        %2084 = vmatprep.mubr.bf16.mxu0 %v1725
        %2085 = vmatmul.mubr.bf16.gmra.mxu0 %v1724
        %v2086 = vpop.f32.mrf.mxu0
        %v2087 = vadd.f32 0.0, %v2086
        %v2088 = vpop.f32.mrf.mxu0
        %v2089 = vadd.f32 0.0, %v2088
        %v2090 = vpop.f32.mrf.mxu0
        %v2091 = vadd.f32 0.0, %v2090
        %v2092 = vpop.f32.mrf.mxu0
        %v2093 = vadd.f32 0.0, %v2092
        %2094 = vmatprep.mubr.bf16.mxu0 %v1727
        %2095 = vmatmul.mubr.bf16.gmra.mxu0 %v1726
        %v2096 = vpop.f32.mrf.mxu0
        %v2097 = vadd.f32 0.0, %v2096
        %v2098 = vpop.f32.mrf.mxu0
        %v2099 = vadd.f32 0.0, %v2098
        %v2100 = vpop.f32.mrf.mxu0
        %v2101 = vadd.f32 0.0, %v2100
        %v2102 = vpop.f32.mrf.mxu0
        %v2103 = vadd.f32 0.0, %v2102
        %2104 = vdwg.mxu0
        %2105 = vmatprep.subr.bf16.mxu0 %v1955
        %2106 = vmatpush1.bf16.msra.mxu0 %v1954
        %2107 = vmatprep.subr.bf16.mxu0 %v1951
        %2108 = vmatpush1.bf16.msra.mxu0 %v1950
        %2109 = vmatprep.subr.bf16.mxu0 %v1947
        %2110 = vmatpush1.bf16.msra.mxu0 %v1946
        %2111 = vmatprep.subr.bf16.mxu0 %v1943
        %2112 = vmatpush1.bf16.msra.mxu0 %v1942
        %2113 = vmatprep.subr.bf16.mxu0 %v1939
        %2114 = vmatpush1.bf16.msra.mxu0 %v1938
        %2115 = vmatprep.subr.bf16.mxu0 %v1935
        %2116 = vmatpush1.bf16.msra.mxu0 %v1934
        %2117 = vmatprep.subr.bf16.mxu0 %v1931
        %2118 = vmatpush1.bf16.msra.mxu0 %v1930
        %2119 = vmatprep.subr.bf16.mxu0 %v1927
        %2120 = vmatpush1.bf16.msra.mxu0 %v1926
        %2121 = vmatprep.subr.bf16.mxu0 %v1987
        %2122 = vmatpush2.bf16.msra.mxu0 %v1986
        %2123 = vmatprep.subr.bf16.mxu0 %v1983
        %2124 = vmatpush2.bf16.msra.mxu0 %v1982
        %2125 = vmatprep.subr.bf16.mxu0 %v1979
        %2126 = vmatpush2.bf16.msra.mxu0 %v1978
        %2127 = vmatprep.subr.bf16.mxu0 %v1975
        %2128 = vmatpush2.bf16.msra.mxu0 %v1974
        %2129 = vmatprep.subr.bf16.mxu0 %v1971
        %2130 = vmatpush2.bf16.msra.mxu0 %v1970
        %2131 = vmatprep.subr.bf16.mxu0 %v1967
        %2132 = vmatpush2.bf16.msra.mxu0 %v1966
        %2133 = vmatprep.subr.bf16.mxu0 %v1963
        %2134 = vmatpush2.bf16.msra.mxu0 %v1962
        %2135 = vmatprep.subr.bf16.mxu0 %v1959
        %2136 = vmatpush2.bf16.msra.mxu0 %v1958
        %2137 = vmatprep.mubr.bf16.mxu0 %v1725
        %2138 = vmatmul.mubr.bf16.gmra.mxu0 %v1724
        %v2139 = vpop.f32.mrf.mxu0
        %v2140 = vadd.f32 0.0, %v2139
        %v2141 = vpop.f32.mrf.mxu0
        %v2142 = vadd.f32 0.0, %v2141
        %v2143 = vpop.f32.mrf.mxu0
        %v2144 = vadd.f32 0.0, %v2143
        %v2145 = vpop.f32.mrf.mxu0
        %v2146 = vadd.f32 0.0, %v2145
        %2147 = vmatprep.mubr.bf16.mxu0 %v1727
        %2148 = vmatmul.mubr.bf16.gmra.mxu0 %v1726
        %v2149 = vpop.f32.mrf.mxu0
        %v2150 = vadd.f32 0.0, %v2149
        %v2151 = vpop.f32.mrf.mxu0
        %v2152 = vadd.f32 0.0, %v2151
        %v2153 = vpop.f32.mrf.mxu0
        %v2154 = vadd.f32 0.0, %v2153
        %v2155 = vpop.f32.mrf.mxu0
        %v2156 = vadd.f32 0.0, %v2155
        %2157 = vdwg.mxu0
        %v2158 = vpack.c.b16 %v1573, %v1571
        %v2159 = vpack.c.b16 %v1574, %v1572
        %v2160 = vpack.c.b16 %v1577, %v1575
        %v2161 = vpack.c.b16 %v1578, %v1576
        %v2230 = vunpack.c.l.b16 %v1579
        %v2231 = vunpack.c.h.b16 %v1579
        %v2232 = vunpack.c.l.b16 %v1580
        %v2233 = vunpack.c.h.b16 %v1580
        %v2234 = vunpack.c.l.b16 %v1581
        %v2235 = vunpack.c.h.b16 %v1581
        %v2236 = vunpack.c.l.b16 %v1582
        %v2237 = vunpack.c.h.b16 %v1582
        %v2238 = vunpack.c.l.b16 %v1583
        %v2239 = vunpack.c.h.b16 %v1583
        %v2240 = vunpack.c.l.b16 %v1584
        %v2241 = vunpack.c.h.b16 %v1584
        %v2242 = vunpack.c.l.b16 %v1585
        %v2243 = vunpack.c.h.b16 %v1585
        %v2244 = vunpack.c.l.b16 %v1586
        %v2245 = vunpack.c.h.b16 %v1586
        %v2246 = vunpack.c.l.b16 %v1587
        %v2247 = vunpack.c.h.b16 %v1587
        %v2248 = vunpack.c.l.b16 %v1588
        %v2249 = vunpack.c.h.b16 %v1588
        %v2250 = vunpack.c.l.b16 %v1589
        %v2251 = vunpack.c.h.b16 %v1589
        %v2252 = vunpack.c.l.b16 %v1590
        %v2253 = vunpack.c.h.b16 %v1590
        %v2254 = vunpack.c.l.b16 %v1591
        %v2255 = vunpack.c.h.b16 %v1591
        %v2256 = vunpack.c.l.b16 %v1592
        %v2257 = vunpack.c.h.b16 %v1592
        %v2258 = vunpack.c.l.b16 %v1593
        %v2259 = vunpack.c.h.b16 %v1593
        %v2260 = vunpack.c.l.b16 %v1594
        %v2261 = vunpack.c.h.b16 %v1594
        %v2262 = vunpack.c.l.b16 %v1595
        %v2263 = vunpack.c.h.b16 %v1595
        %v2264 = vunpack.c.l.b16 %v1596
        %v2265 = vunpack.c.h.b16 %v1596
        %v2266 = vunpack.c.l.b16 %v1597
        %v2267 = vunpack.c.h.b16 %v1597
        %v2268 = vunpack.c.l.b16 %v1598
        %v2269 = vunpack.c.h.b16 %v1598
        %v2270 = vunpack.c.l.b16 %v1599
        %v2271 = vunpack.c.h.b16 %v1599
        %v2272 = vunpack.c.l.b16 %v1600
        %v2273 = vunpack.c.h.b16 %v1600
        %v2274 = vunpack.c.l.b16 %v1601
        %v2275 = vunpack.c.h.b16 %v1601
        %v2276 = vunpack.c.l.b16 %v1602
        %v2277 = vunpack.c.h.b16 %v1602
        %v2278 = vunpack.c.l.b16 %v1603
        %v2279 = vunpack.c.h.b16 %v1603
        %v2280 = vunpack.c.l.b16 %v1604
        %v2281 = vunpack.c.h.b16 %v1604
        %v2282 = vunpack.c.l.b16 %v1605
        %v2283 = vunpack.c.h.b16 %v1605
        %v2284 = vunpack.c.l.b16 %v1606
        %v2285 = vunpack.c.h.b16 %v1606
        %v2286 = vunpack.c.l.b16 %v1607
        %v2287 = vunpack.c.h.b16 %v1607
        %v2288 = vunpack.c.l.b16 %v1608
        %v2289 = vunpack.c.h.b16 %v1608
        %v2290 = vunpack.c.l.b16 %v1609
        %v2291 = vunpack.c.h.b16 %v1609
        %v2292 = vunpack.c.l.b16 %v1610
        %v2293 = vunpack.c.h.b16 %v1610
        %v2294 = vunpack.c.l.b16 %v1611
        %v2295 = vunpack.c.h.b16 %v1611
        %v2296 = vunpack.c.l.b16 %v1612
        %v2297 = vunpack.c.h.b16 %v1612
        %v2298 = vunpack.c.l.b16 %v1613
        %v2299 = vunpack.c.h.b16 %v1613
        %v2300 = vunpack.c.l.b16 %v1614
        %v2301 = vunpack.c.h.b16 %v1614
        %v2302 = vunpack.c.l.b16 %v1615
        %v2303 = vunpack.c.h.b16 %v1615
        %v2304 = vunpack.c.l.b16 %v1616
        %v2305 = vunpack.c.h.b16 %v1616
        %v2306 = vunpack.c.l.b16 %v1617
        %v2307 = vunpack.c.h.b16 %v1617
        %v2308 = vunpack.c.l.b16 %v1618
        %v2309 = vunpack.c.h.b16 %v1618
        %v2310 = vunpack.c.l.b16 %v1619
        %v2311 = vunpack.c.h.b16 %v1619
        %v2312 = vunpack.c.l.b16 %v1620
        %v2313 = vunpack.c.h.b16 %v1620
        %v2314 = vunpack.c.l.b16 %v1621
        %v2315 = vunpack.c.h.b16 %v1621
        %v2316 = vunpack.c.l.b16 %v1622
        %v2317 = vunpack.c.h.b16 %v1622
        %v2318 = vunpack.c.l.b16 %v1623
        %v2319 = vunpack.c.h.b16 %v1623
        %v2320 = vunpack.c.l.b16 %v1624
        %v2321 = vunpack.c.h.b16 %v1624
        %v2322 = vunpack.c.l.b16 %v1625
        %v2323 = vunpack.c.h.b16 %v1625
        %v2324 = vunpack.c.l.b16 %v1626
        %v2325 = vunpack.c.h.b16 %v1626
        %v2326 = vunpack.c.l.b16 %v1627
        %v2327 = vunpack.c.h.b16 %v1627
        %v2328 = vunpack.c.l.b16 %v1628
        %v2329 = vunpack.c.h.b16 %v1628
        %v2330 = vunpack.c.l.b16 %v1629
        %v2331 = vunpack.c.h.b16 %v1629
        %v2332 = vunpack.c.l.b16 %v1630
        %v2333 = vunpack.c.h.b16 %v1630
        %v2334 = vunpack.c.l.b16 %v1631
        %v2335 = vunpack.c.h.b16 %v1631
        %v2336 = vunpack.c.l.b16 %v1632
        %v2337 = vunpack.c.h.b16 %v1632
        %v2338 = vunpack.c.l.b16 %v1633
        %v2339 = vunpack.c.h.b16 %v1633
        %v2340 = vunpack.c.l.b16 %v1634
        %v2341 = vunpack.c.h.b16 %v1634
        %v2342 = vunpack.c.l.b16 %v1635
        %v2343 = vunpack.c.h.b16 %v1635
        %v2344 = vunpack.c.l.b16 %v1636
        %v2345 = vunpack.c.h.b16 %v1636
        %v2346 = vunpack.c.l.b16 %v1637
        %v2347 = vunpack.c.h.b16 %v1637
        %v2348 = vunpack.c.l.b16 %v1638
        %v2349 = vunpack.c.h.b16 %v1638
        %v2350 = vunpack.c.l.b16 %v1639
        %v2351 = vunpack.c.h.b16 %v1639
        %v2352 = vunpack.c.l.b16 %v1640
        %v2353 = vunpack.c.h.b16 %v1640
        %v2354 = vunpack.c.l.b16 %v1641
        %v2355 = vunpack.c.h.b16 %v1641
        %v2356 = vunpack.c.l.b16 %v1642
        %v2357 = vunpack.c.h.b16 %v1642
        %v2358 = vpack.c.b16 %v2234, %v2230
        %v2359 = vpack.c.b16 %v2235, %v2231
        %v2360 = vpack.c.b16 %v2236, %v2232
        %v2361 = vpack.c.b16 %v2237, %v2233
        %v2362 = vpack.c.b16 %v2242, %v2238
        %v2363 = vpack.c.b16 %v2243, %v2239
        %v2364 = vpack.c.b16 %v2244, %v2240
        %v2365 = vpack.c.b16 %v2245, %v2241
        %v2366 = vpack.c.b16 %v2250, %v2246
        %v2367 = vpack.c.b16 %v2251, %v2247
        %v2368 = vpack.c.b16 %v2252, %v2248
        %v2369 = vpack.c.b16 %v2253, %v2249
        %v2370 = vpack.c.b16 %v2258, %v2254
        %v2371 = vpack.c.b16 %v2259, %v2255
        %v2372 = vpack.c.b16 %v2260, %v2256
        %v2373 = vpack.c.b16 %v2261, %v2257
        %v2374 = vpack.c.b16 %v2266, %v2262
        %v2375 = vpack.c.b16 %v2267, %v2263
        %v2376 = vpack.c.b16 %v2268, %v2264
        %v2377 = vpack.c.b16 %v2269, %v2265
        %v2378 = vpack.c.b16 %v2274, %v2270
        %v2379 = vpack.c.b16 %v2275, %v2271
        %v2380 = vpack.c.b16 %v2276, %v2272
        %v2381 = vpack.c.b16 %v2277, %v2273
        %v2382 = vpack.c.b16 %v2282, %v2278
        %v2383 = vpack.c.b16 %v2283, %v2279
        %v2384 = vpack.c.b16 %v2284, %v2280
        %v2385 = vpack.c.b16 %v2285, %v2281
        %v2386 = vpack.c.b16 %v2290, %v2286
        %v2387 = vpack.c.b16 %v2291, %v2287
        %v2388 = vpack.c.b16 %v2292, %v2288
        %v2389 = vpack.c.b16 %v2293, %v2289
        %v2390 = vpack.c.b16 %v2298, %v2294
        %v2391 = vpack.c.b16 %v2299, %v2295
        %v2392 = vpack.c.b16 %v2300, %v2296
        %v2393 = vpack.c.b16 %v2301, %v2297
        %v2394 = vpack.c.b16 %v2306, %v2302
        %v2395 = vpack.c.b16 %v2307, %v2303
        %v2396 = vpack.c.b16 %v2308, %v2304
        %v2397 = vpack.c.b16 %v2309, %v2305
        %v2398 = vpack.c.b16 %v2314, %v2310
        %v2399 = vpack.c.b16 %v2315, %v2311
        %v2400 = vpack.c.b16 %v2316, %v2312
        %v2401 = vpack.c.b16 %v2317, %v2313
        %v2402 = vpack.c.b16 %v2322, %v2318
        %v2403 = vpack.c.b16 %v2323, %v2319
        %v2404 = vpack.c.b16 %v2324, %v2320
        %v2405 = vpack.c.b16 %v2325, %v2321
        %v2406 = vpack.c.b16 %v2330, %v2326
        %v2407 = vpack.c.b16 %v2331, %v2327
        %v2408 = vpack.c.b16 %v2332, %v2328
        %v2409 = vpack.c.b16 %v2333, %v2329
        %v2410 = vpack.c.b16 %v2338, %v2334
        %v2411 = vpack.c.b16 %v2339, %v2335
        %v2412 = vpack.c.b16 %v2340, %v2336
        %v2413 = vpack.c.b16 %v2341, %v2337
        %v2414 = vpack.c.b16 %v2346, %v2342
        %v2415 = vpack.c.b16 %v2347, %v2343
        %v2416 = vpack.c.b16 %v2348, %v2344
        %v2417 = vpack.c.b16 %v2349, %v2345
        %v2418 = vpack.c.b16 %v2354, %v2350
        %v2419 = vpack.c.b16 %v2355, %v2351
        %v2420 = vpack.c.b16 %v2356, %v2352
        %v2421 = vpack.c.b16 %v2357, %v2353
        %2486 = vmatprep.subr.bf16.mxu0 %v2387
        %2487 = vmatpush1.bf16.msra.mxu0 %v2386
        %2488 = vmatprep.subr.bf16.mxu0 %v2383
        %2489 = vmatpush1.bf16.msra.mxu0 %v2382
        %2490 = vmatprep.subr.bf16.mxu0 %v2379
        %2491 = vmatpush1.bf16.msra.mxu0 %v2378
        %2492 = vmatprep.subr.bf16.mxu0 %v2375
        %2493 = vmatpush1.bf16.msra.mxu0 %v2374
        %2494 = vmatprep.subr.bf16.mxu0 %v2371
        %2495 = vmatpush1.bf16.msra.mxu0 %v2370
        %2496 = vmatprep.subr.bf16.mxu0 %v2367
        %2497 = vmatpush1.bf16.msra.mxu0 %v2366
        %2498 = vmatprep.subr.bf16.mxu0 %v2363
        %2499 = vmatpush1.bf16.msra.mxu0 %v2362
        %2500 = vmatprep.subr.bf16.mxu0 %v2359
        %2501 = vmatpush1.bf16.msra.mxu0 %v2358
        %2502 = vmatprep.subr.bf16.mxu0 %v2419
        %2503 = vmatpush2.bf16.msra.mxu0 %v2418
        %2504 = vmatprep.subr.bf16.mxu0 %v2415
        %2505 = vmatpush2.bf16.msra.mxu0 %v2414
        %2506 = vmatprep.subr.bf16.mxu0 %v2411
        %2507 = vmatpush2.bf16.msra.mxu0 %v2410
        %2508 = vmatprep.subr.bf16.mxu0 %v2407
        %2509 = vmatpush2.bf16.msra.mxu0 %v2406
        %2510 = vmatprep.subr.bf16.mxu0 %v2403
        %2511 = vmatpush2.bf16.msra.mxu0 %v2402
        %2512 = vmatprep.subr.bf16.mxu0 %v2399
        %2513 = vmatpush2.bf16.msra.mxu0 %v2398
        %2514 = vmatprep.subr.bf16.mxu0 %v2395
        %2515 = vmatpush2.bf16.msra.mxu0 %v2394
        %2516 = vmatprep.subr.bf16.mxu0 %v2391
        %2517 = vmatpush2.bf16.msra.mxu0 %v2390
        %2518 = vmatprep.mubr.bf16.mxu0 %v2159
        %2519 = vmatmul.mubr.bf16.gmra.mxu0 %v2158
        %v2520 = vpop.f32.mrf.mxu0
        %v2521 = vadd.f32 %v2087, %v2520
        %v2522 = vpop.f32.mrf.mxu0
        %v2523 = vadd.f32 %v2089, %v2522
        %v2524 = vpop.f32.mrf.mxu0
        %v2525 = vadd.f32 %v2091, %v2524
        %v2526 = vpop.f32.mrf.mxu0
        %v2527 = vadd.f32 %v2093, %v2526
        %2528 = vmatprep.mubr.bf16.mxu0 %v2161
        %2529 = vmatmul.mubr.bf16.gmra.mxu0 %v2160
        %v2530 = vpop.f32.mrf.mxu0
        %v2531 = vadd.f32 %v2097, %v2530
        %v2532 = vpop.f32.mrf.mxu0
        %v2533 = vadd.f32 %v2099, %v2532
        %v2534 = vpop.f32.mrf.mxu0
        %v2535 = vadd.f32 %v2101, %v2534
        %v2536 = vpop.f32.mrf.mxu0
        %v2537 = vadd.f32 %v2103, %v2536
        %2538 = vdwg.mxu0
        %2539 = vmatprep.subr.bf16.mxu0 %v2389
        %2540 = vmatpush1.bf16.msra.mxu0 %v2388
        %2541 = vmatprep.subr.bf16.mxu0 %v2385
        %2542 = vmatpush1.bf16.msra.mxu0 %v2384
        %2543 = vmatprep.subr.bf16.mxu0 %v2381
        %2544 = vmatpush1.bf16.msra.mxu0 %v2380
        %2545 = vmatprep.subr.bf16.mxu0 %v2377
        %2546 = vmatpush1.bf16.msra.mxu0 %v2376
        %2547 = vmatprep.subr.bf16.mxu0 %v2373
        %2548 = vmatpush1.bf16.msra.mxu0 %v2372
        %2549 = vmatprep.subr.bf16.mxu0 %v2369
        %2550 = vmatpush1.bf16.msra.mxu0 %v2368
        %2551 = vmatprep.subr.bf16.mxu0 %v2365
        %2552 = vmatpush1.bf16.msra.mxu0 %v2364
        %2553 = vmatprep.subr.bf16.mxu0 %v2361
        %2554 = vmatpush1.bf16.msra.mxu0 %v2360
        %2555 = vmatprep.subr.bf16.mxu0 %v2421
        %2556 = vmatpush2.bf16.msra.mxu0 %v2420
        %2557 = vmatprep.subr.bf16.mxu0 %v2417
        %2558 = vmatpush2.bf16.msra.mxu0 %v2416
        %2559 = vmatprep.subr.bf16.mxu0 %v2413
        %2560 = vmatpush2.bf16.msra.mxu0 %v2412
        %2561 = vmatprep.subr.bf16.mxu0 %v2409
        %2562 = vmatpush2.bf16.msra.mxu0 %v2408
        %2563 = vmatprep.subr.bf16.mxu0 %v2405
        %2564 = vmatpush2.bf16.msra.mxu0 %v2404
        %2565 = vmatprep.subr.bf16.mxu0 %v2401
        %2566 = vmatpush2.bf16.msra.mxu0 %v2400
        %2567 = vmatprep.subr.bf16.mxu0 %v2397
        %2568 = vmatpush2.bf16.msra.mxu0 %v2396
        %2569 = vmatprep.subr.bf16.mxu0 %v2393
        %2570 = vmatpush2.bf16.msra.mxu0 %v2392
        %2571 = vmatprep.mubr.bf16.mxu0 %v2159
        %2572 = vmatmul.mubr.bf16.gmra.mxu0 %v2158
        %v2573 = vpop.f32.mrf.mxu0
        %v2574 = vadd.f32 %v2140, %v2573
        %v2575 = vpop.f32.mrf.mxu0
        %v2576 = vadd.f32 %v2142, %v2575
        %v2577 = vpop.f32.mrf.mxu0
        %v2578 = vadd.f32 %v2144, %v2577
        %v2579 = vpop.f32.mrf.mxu0
        %v2580 = vadd.f32 %v2146, %v2579
        %2581 = vmatprep.mubr.bf16.mxu0 %v2161
        %2582 = vmatmul.mubr.bf16.gmra.mxu0 %v2160
        %v2583 = vpop.f32.mrf.mxu0
        %v2584 = vadd.f32 %v2150, %v2583
        %v2585 = vpop.f32.mrf.mxu0
        %v2586 = vadd.f32 %v2152, %v2585
        %v2587 = vpop.f32.mrf.mxu0
        %v2588 = vadd.f32 %v2154, %v2587
        %v2589 = vpop.f32.mrf.mxu0
        %v2590 = vadd.f32 %v2156, %v2589
        %2591 = vdwg.mxu0
        %v2600 = vunpack.c.l.b16 %v1555
        %v2601 = vunpack.c.l.b16 %v1556
        %v2602 = vunpack.c.l.b16 %v1557
        %v2603 = vunpack.c.l.b16 %v1558
        %v2604 = vunpack.c.l.b16 %v1559
        %v2605 = vunpack.c.l.b16 %v1560
        %v2606 = vunpack.c.l.b16 %v1561
        %v2607 = vunpack.c.l.b16 %v1562
        %s2608 = scalar_lea.vmem [#allocation10], 1024
        %v2609 = vld [vmem:[%s2608] sm:$0xff]
        %v2610 = vld [vmem:[%s2608 + $0x8] sm:$0xff]
        %v2611 = vld [vmem:[%s2608 + $0x10] sm:$0xff]
        %v2612 = vld [vmem:[%s2608 + $0x18] sm:$0xff]
        %v2613 = vld [vmem:[%s2608 + $0x20] sm:$0xff]
        %v2614 = vld [vmem:[%s2608 + $0x28] sm:$0xff]
        %v2615 = vld [vmem:[%s2608 + $0x30] sm:$0xff]
        %v2616 = vld [vmem:[%s2608 + $0x38] sm:$0xff]
        %v2617 = vld [vmem:[%s2608 + $0x40] sm:$0xff]
        %v2618 = vld [vmem:[%s2608 + $0x48] sm:$0xff]
        %v2619 = vld [vmem:[%s2608 + $0x50] sm:$0xff]
        %v2620 = vld [vmem:[%s2608 + $0x58] sm:$0xff]
        %v2621 = vld [vmem:[%s2608 + $0x60] sm:$0xff]
        %v2622 = vld [vmem:[%s2608 + $0x68] sm:$0xff]
        %v2623 = vld [vmem:[%s2608 + $0x70] sm:$0xff]
        %v2624 = vld [vmem:[%s2608 + $0x78] sm:$0xff]
        %v2625 = vld [vmem:[%s2608 + $0x80] sm:$0xff]
        %v2626 = vld [vmem:[%s2608 + $0x88] sm:$0xff]
        %v2627 = vld [vmem:[%s2608 + $0x90] sm:$0xff]
        %v2628 = vld [vmem:[%s2608 + $0x98] sm:$0xff]
        %v2629 = vld [vmem:[%s2608 + $0xa0] sm:$0xff]
        %v2630 = vld [vmem:[%s2608 + $0xa8] sm:$0xff]
        %v2631 = vld [vmem:[%s2608 + $0xb0] sm:$0xff]
        %v2632 = vld [vmem:[%s2608 + $0xb8] sm:$0xff]
        %v2633 = vld [vmem:[%s2608 + $0xc0] sm:$0xff]
        %v2634 = vld [vmem:[%s2608 + $0xc8] sm:$0xff]
        %v2635 = vld [vmem:[%s2608 + $0xd0] sm:$0xff]
        %v2636 = vld [vmem:[%s2608 + $0xd8] sm:$0xff]
        %v2637 = vld [vmem:[%s2608 + $0xe0] sm:$0xff]
        %v2638 = vld [vmem:[%s2608 + $0xe8] sm:$0xff]
        %v2639 = vld [vmem:[%s2608 + $0xf0] sm:$0xff]
        %v2640 = vld [vmem:[%s2608 + $0xf8] sm:$0xff]
        %v2641 = vld [vmem:[%s2608 + $0x100] sm:$0xff]
        %v2642 = vld [vmem:[%s2608 + $0x108] sm:$0xff]
        %v2643 = vld [vmem:[%s2608 + $0x110] sm:$0xff]
        %v2644 = vld [vmem:[%s2608 + $0x118] sm:$0xff]
        %v2645 = vld [vmem:[%s2608 + $0x120] sm:$0xff]
        %v2646 = vld [vmem:[%s2608 + $0x128] sm:$0xff]
        %v2647 = vld [vmem:[%s2608 + $0x130] sm:$0xff]
        %v2648 = vld [vmem:[%s2608 + $0x138] sm:$0xff]
        %v2649 = vld [vmem:[%s2608 + $0x140] sm:$0xff]
        %v2650 = vld [vmem:[%s2608 + $0x148] sm:$0xff]
        %v2651 = vld [vmem:[%s2608 + $0x150] sm:$0xff]
        %v2652 = vld [vmem:[%s2608 + $0x158] sm:$0xff]
        %v2653 = vld [vmem:[%s2608 + $0x160] sm:$0xff]
        %v2654 = vld [vmem:[%s2608 + $0x168] sm:$0xff]
        %v2655 = vld [vmem:[%s2608 + $0x170] sm:$0xff]
        %v2656 = vld [vmem:[%s2608 + $0x178] sm:$0xff]
        %v2657 = vld [vmem:[%s2608 + $0x180] sm:$0xff]
        %v2658 = vld [vmem:[%s2608 + $0x188] sm:$0xff]
        %v2659 = vld [vmem:[%s2608 + $0x190] sm:$0xff]
        %v2660 = vld [vmem:[%s2608 + $0x198] sm:$0xff]
        %v2661 = vld [vmem:[%s2608 + $0x1a0] sm:$0xff]
        %v2662 = vld [vmem:[%s2608 + $0x1a8] sm:$0xff]
        %v2663 = vld [vmem:[%s2608 + $0x1b0] sm:$0xff]
        %v2664 = vld [vmem:[%s2608 + $0x1b8] sm:$0xff]
        %v2665 = vld [vmem:[%s2608 + $0x1c0] sm:$0xff]
        %v2666 = vld [vmem:[%s2608 + $0x1c8] sm:$0xff]
        %v2667 = vld [vmem:[%s2608 + $0x1d0] sm:$0xff]
        %v2668 = vld [vmem:[%s2608 + $0x1d8] sm:$0xff]
        %v2669 = vld [vmem:[%s2608 + $0x1e0] sm:$0xff]
        %v2670 = vld [vmem:[%s2608 + $0x1e8] sm:$0xff]
        %v2671 = vld [vmem:[%s2608 + $0x1f0] sm:$0xff]
        %v2672 = vld [vmem:[%s2608 + $0x1f8] sm:$0xff]
        %v2673 = vpack.c.b16 %v2602, %v2600
        %v2674 = vpack.c.b16 %v2603, %v2601
        %v2675 = vpack.c.b16 %v2606, %v2604
        %v2676 = vpack.c.b16 %v2607, %v2605
        %v2745 = vunpack.c.l.b16 %v2609
        %v2746 = vunpack.c.h.b16 %v2609
        %v2747 = vunpack.c.l.b16 %v2610
        %v2748 = vunpack.c.h.b16 %v2610
        %v2749 = vunpack.c.l.b16 %v2611
        %v2750 = vunpack.c.h.b16 %v2611
        %v2751 = vunpack.c.l.b16 %v2612
        %v2752 = vunpack.c.h.b16 %v2612
        %v2753 = vunpack.c.l.b16 %v2613
        %v2754 = vunpack.c.h.b16 %v2613
        %v2755 = vunpack.c.l.b16 %v2614
        %v2756 = vunpack.c.h.b16 %v2614
        %v2757 = vunpack.c.l.b16 %v2615
        %v2758 = vunpack.c.h.b16 %v2615
        %v2759 = vunpack.c.l.b16 %v2616
        %v2760 = vunpack.c.h.b16 %v2616
        %v2761 = vunpack.c.l.b16 %v2617
        %v2762 = vunpack.c.h.b16 %v2617
        %v2763 = vunpack.c.l.b16 %v2618
        %v2764 = vunpack.c.h.b16 %v2618
        %v2765 = vunpack.c.l.b16 %v2619
        %v2766 = vunpack.c.h.b16 %v2619
        %v2767 = vunpack.c.l.b16 %v2620
        %v2768 = vunpack.c.h.b16 %v2620
        %v2769 = vunpack.c.l.b16 %v2621
        %v2770 = vunpack.c.h.b16 %v2621
        %v2771 = vunpack.c.l.b16 %v2622
        %v2772 = vunpack.c.h.b16 %v2622
        %v2773 = vunpack.c.l.b16 %v2623
        %v2774 = vunpack.c.h.b16 %v2623
        %v2775 = vunpack.c.l.b16 %v2624
        %v2776 = vunpack.c.h.b16 %v2624
        %v2777 = vunpack.c.l.b16 %v2625
        %v2778 = vunpack.c.h.b16 %v2625
        %v2779 = vunpack.c.l.b16 %v2626
        %v2780 = vunpack.c.h.b16 %v2626
        %v2781 = vunpack.c.l.b16 %v2627
        %v2782 = vunpack.c.h.b16 %v2627
        %v2783 = vunpack.c.l.b16 %v2628
        %v2784 = vunpack.c.h.b16 %v2628
        %v2785 = vunpack.c.l.b16 %v2629
        %v2786 = vunpack.c.h.b16 %v2629
        %v2787 = vunpack.c.l.b16 %v2630
        %v2788 = vunpack.c.h.b16 %v2630
        %v2789 = vunpack.c.l.b16 %v2631
        %v2790 = vunpack.c.h.b16 %v2631
        %v2791 = vunpack.c.l.b16 %v2632
        %v2792 = vunpack.c.h.b16 %v2632
        %v2793 = vunpack.c.l.b16 %v2633
        %v2794 = vunpack.c.h.b16 %v2633
        %v2795 = vunpack.c.l.b16 %v2634
        %v2796 = vunpack.c.h.b16 %v2634
        %v2797 = vunpack.c.l.b16 %v2635
        %v2798 = vunpack.c.h.b16 %v2635
        %v2799 = vunpack.c.l.b16 %v2636
        %v2800 = vunpack.c.h.b16 %v2636
        %v2801 = vunpack.c.l.b16 %v2637
        %v2802 = vunpack.c.h.b16 %v2637
        %v2803 = vunpack.c.l.b16 %v2638
        %v2804 = vunpack.c.h.b16 %v2638
        %v2805 = vunpack.c.l.b16 %v2639
        %v2806 = vunpack.c.h.b16 %v2639
        %v2807 = vunpack.c.l.b16 %v2640
        %v2808 = vunpack.c.h.b16 %v2640
        %v2809 = vunpack.c.l.b16 %v2641
        %v2810 = vunpack.c.h.b16 %v2641
        %v2811 = vunpack.c.l.b16 %v2642
        %v2812 = vunpack.c.h.b16 %v2642
        %v2813 = vunpack.c.l.b16 %v2643
        %v2814 = vunpack.c.h.b16 %v2643
        %v2815 = vunpack.c.l.b16 %v2644
        %v2816 = vunpack.c.h.b16 %v2644
        %v2817 = vunpack.c.l.b16 %v2645
        %v2818 = vunpack.c.h.b16 %v2645
        %v2819 = vunpack.c.l.b16 %v2646
        %v2820 = vunpack.c.h.b16 %v2646
        %v2821 = vunpack.c.l.b16 %v2647
        %v2822 = vunpack.c.h.b16 %v2647
        %v2823 = vunpack.c.l.b16 %v2648
        %v2824 = vunpack.c.h.b16 %v2648
        %v2825 = vunpack.c.l.b16 %v2649
        %v2826 = vunpack.c.h.b16 %v2649
        %v2827 = vunpack.c.l.b16 %v2650
        %v2828 = vunpack.c.h.b16 %v2650
        %v2829 = vunpack.c.l.b16 %v2651
        %v2830 = vunpack.c.h.b16 %v2651
        %v2831 = vunpack.c.l.b16 %v2652
        %v2832 = vunpack.c.h.b16 %v2652
        %v2833 = vunpack.c.l.b16 %v2653
        %v2834 = vunpack.c.h.b16 %v2653
        %v2835 = vunpack.c.l.b16 %v2654
        %v2836 = vunpack.c.h.b16 %v2654
        %v2837 = vunpack.c.l.b16 %v2655
        %v2838 = vunpack.c.h.b16 %v2655
        %v2839 = vunpack.c.l.b16 %v2656
        %v2840 = vunpack.c.h.b16 %v2656
        %v2841 = vunpack.c.l.b16 %v2657
        %v2842 = vunpack.c.h.b16 %v2657
        %v2843 = vunpack.c.l.b16 %v2658
        %v2844 = vunpack.c.h.b16 %v2658
        %v2845 = vunpack.c.l.b16 %v2659
        %v2846 = vunpack.c.h.b16 %v2659
        %v2847 = vunpack.c.l.b16 %v2660
        %v2848 = vunpack.c.h.b16 %v2660
        %v2849 = vunpack.c.l.b16 %v2661
        %v2850 = vunpack.c.h.b16 %v2661
        %v2851 = vunpack.c.l.b16 %v2662
        %v2852 = vunpack.c.h.b16 %v2662
        %v2853 = vunpack.c.l.b16 %v2663
        %v2854 = vunpack.c.h.b16 %v2663
        %v2855 = vunpack.c.l.b16 %v2664
        %v2856 = vunpack.c.h.b16 %v2664
        %v2857 = vunpack.c.l.b16 %v2665
        %v2858 = vunpack.c.h.b16 %v2665
        %v2859 = vunpack.c.l.b16 %v2666
        %v2860 = vunpack.c.h.b16 %v2666
        %v2861 = vunpack.c.l.b16 %v2667
        %v2862 = vunpack.c.h.b16 %v2667
        %v2863 = vunpack.c.l.b16 %v2668
        %v2864 = vunpack.c.h.b16 %v2668
        %v2865 = vunpack.c.l.b16 %v2669
        %v2866 = vunpack.c.h.b16 %v2669
        %v2867 = vunpack.c.l.b16 %v2670
        %v2868 = vunpack.c.h.b16 %v2670
        %v2869 = vunpack.c.l.b16 %v2671
        %v2870 = vunpack.c.h.b16 %v2671
        %v2871 = vunpack.c.l.b16 %v2672
        %v2872 = vunpack.c.h.b16 %v2672
        %v2873 = vpack.c.b16 %v2749, %v2745
        %v2874 = vpack.c.b16 %v2750, %v2746
        %v2875 = vpack.c.b16 %v2751, %v2747
        %v2876 = vpack.c.b16 %v2752, %v2748
        %v2877 = vpack.c.b16 %v2757, %v2753
        %v2878 = vpack.c.b16 %v2758, %v2754
        %v2879 = vpack.c.b16 %v2759, %v2755
        %v2880 = vpack.c.b16 %v2760, %v2756
        %v2881 = vpack.c.b16 %v2765, %v2761
        %v2882 = vpack.c.b16 %v2766, %v2762
        %v2883 = vpack.c.b16 %v2767, %v2763
        %v2884 = vpack.c.b16 %v2768, %v2764
        %v2885 = vpack.c.b16 %v2773, %v2769
        %v2886 = vpack.c.b16 %v2774, %v2770
        %v2887 = vpack.c.b16 %v2775, %v2771
        %v2888 = vpack.c.b16 %v2776, %v2772
        %v2889 = vpack.c.b16 %v2781, %v2777
        %v2890 = vpack.c.b16 %v2782, %v2778
        %v2891 = vpack.c.b16 %v2783, %v2779
        %v2892 = vpack.c.b16 %v2784, %v2780
        %v2893 = vpack.c.b16 %v2789, %v2785
        %v2894 = vpack.c.b16 %v2790, %v2786
        %v2895 = vpack.c.b16 %v2791, %v2787
        %v2896 = vpack.c.b16 %v2792, %v2788
        %v2897 = vpack.c.b16 %v2797, %v2793
        %v2898 = vpack.c.b16 %v2798, %v2794
        %v2899 = vpack.c.b16 %v2799, %v2795
        %v2900 = vpack.c.b16 %v2800, %v2796
        %v2901 = vpack.c.b16 %v2805, %v2801
        %v2902 = vpack.c.b16 %v2806, %v2802
        %v2903 = vpack.c.b16 %v2807, %v2803
        %v2904 = vpack.c.b16 %v2808, %v2804
        %v2905 = vpack.c.b16 %v2813, %v2809
        %v2906 = vpack.c.b16 %v2814, %v2810
        %v2907 = vpack.c.b16 %v2815, %v2811
        %v2908 = vpack.c.b16 %v2816, %v2812
        %v2909 = vpack.c.b16 %v2821, %v2817
        %v2910 = vpack.c.b16 %v2822, %v2818
        %v2911 = vpack.c.b16 %v2823, %v2819
        %v2912 = vpack.c.b16 %v2824, %v2820
        %v2913 = vpack.c.b16 %v2829, %v2825
        %v2914 = vpack.c.b16 %v2830, %v2826
        %v2915 = vpack.c.b16 %v2831, %v2827
        %v2916 = vpack.c.b16 %v2832, %v2828
        %v2917 = vpack.c.b16 %v2837, %v2833
        %v2918 = vpack.c.b16 %v2838, %v2834
        %v2919 = vpack.c.b16 %v2839, %v2835
        %v2920 = vpack.c.b16 %v2840, %v2836
        %v2921 = vpack.c.b16 %v2845, %v2841
        %v2922 = vpack.c.b16 %v2846, %v2842
        %v2923 = vpack.c.b16 %v2847, %v2843
        %v2924 = vpack.c.b16 %v2848, %v2844
        %v2925 = vpack.c.b16 %v2853, %v2849
        %v2926 = vpack.c.b16 %v2854, %v2850
        %v2927 = vpack.c.b16 %v2855, %v2851
        %v2928 = vpack.c.b16 %v2856, %v2852
        %v2929 = vpack.c.b16 %v2861, %v2857
        %v2930 = vpack.c.b16 %v2862, %v2858
        %v2931 = vpack.c.b16 %v2863, %v2859
        %v2932 = vpack.c.b16 %v2864, %v2860
        %v2933 = vpack.c.b16 %v2869, %v2865
        %v2934 = vpack.c.b16 %v2870, %v2866
        %v2935 = vpack.c.b16 %v2871, %v2867
        %v2936 = vpack.c.b16 %v2872, %v2868
        %3001 = vmatprep.subr.bf16.mxu0 %v2902
        %3002 = vmatpush1.bf16.msra.mxu0 %v2901
        %3003 = vmatprep.subr.bf16.mxu0 %v2898
        %3004 = vmatpush1.bf16.msra.mxu0 %v2897
        %3005 = vmatprep.subr.bf16.mxu0 %v2894
        %3006 = vmatpush1.bf16.msra.mxu0 %v2893
        %3007 = vmatprep.subr.bf16.mxu0 %v2890
        %3008 = vmatpush1.bf16.msra.mxu0 %v2889
        %3009 = vmatprep.subr.bf16.mxu0 %v2886
        %3010 = vmatpush1.bf16.msra.mxu0 %v2885
        %3011 = vmatprep.subr.bf16.mxu0 %v2882
        %3012 = vmatpush1.bf16.msra.mxu0 %v2881
        %3013 = vmatprep.subr.bf16.mxu0 %v2878
        %3014 = vmatpush1.bf16.msra.mxu0 %v2877
        %3015 = vmatprep.subr.bf16.mxu0 %v2874
        %3016 = vmatpush1.bf16.msra.mxu0 %v2873
        %3017 = vmatprep.subr.bf16.mxu0 %v2934
        %3018 = vmatpush2.bf16.msra.mxu0 %v2933
        %3019 = vmatprep.subr.bf16.mxu0 %v2930
        %3020 = vmatpush2.bf16.msra.mxu0 %v2929
        %3021 = vmatprep.subr.bf16.mxu0 %v2926
        %3022 = vmatpush2.bf16.msra.mxu0 %v2925
        %3023 = vmatprep.subr.bf16.mxu0 %v2922
        %3024 = vmatpush2.bf16.msra.mxu0 %v2921
        %3025 = vmatprep.subr.bf16.mxu0 %v2918
        %3026 = vmatpush2.bf16.msra.mxu0 %v2917
        %3027 = vmatprep.subr.bf16.mxu0 %v2914
        %3028 = vmatpush2.bf16.msra.mxu0 %v2913
        %3029 = vmatprep.subr.bf16.mxu0 %v2910
        %3030 = vmatpush2.bf16.msra.mxu0 %v2909
        %3031 = vmatprep.subr.bf16.mxu0 %v2906
        %3032 = vmatpush2.bf16.msra.mxu0 %v2905
        %3033 = vmatprep.mubr.bf16.mxu0 %v2674
        %3034 = vmatmul.mubr.bf16.gmra.mxu0 %v2673
        %v3035 = vpop.f32.mrf.mxu0
        %v3036 = vadd.f32 0.0, %v3035
        %v3037 = vpop.f32.mrf.mxu0
        %v3038 = vadd.f32 0.0, %v3037
        %v3039 = vpop.f32.mrf.mxu0
        %v3040 = vadd.f32 0.0, %v3039
        %v3041 = vpop.f32.mrf.mxu0
        %v3042 = vadd.f32 0.0, %v3041
        %3043 = vmatprep.mubr.bf16.mxu0 %v2676
        %3044 = vmatmul.mubr.bf16.gmra.mxu0 %v2675
        %v3045 = vpop.f32.mrf.mxu0
        %v3046 = vadd.f32 0.0, %v3045
        %v3047 = vpop.f32.mrf.mxu0
        %v3048 = vadd.f32 0.0, %v3047
        %v3049 = vpop.f32.mrf.mxu0
        %v3050 = vadd.f32 0.0, %v3049
        %v3051 = vpop.f32.mrf.mxu0
        %v3052 = vadd.f32 0.0, %v3051
        %3053 = vdwg.mxu0
        %3054 = vmatprep.subr.bf16.mxu0 %v2904
        %3055 = vmatpush1.bf16.msra.mxu0 %v2903
        %3056 = vmatprep.subr.bf16.mxu0 %v2900
        %3057 = vmatpush1.bf16.msra.mxu0 %v2899
        %3058 = vmatprep.subr.bf16.mxu0 %v2896
        %3059 = vmatpush1.bf16.msra.mxu0 %v2895
        %3060 = vmatprep.subr.bf16.mxu0 %v2892
        %3061 = vmatpush1.bf16.msra.mxu0 %v2891
        %3062 = vmatprep.subr.bf16.mxu0 %v2888
        %3063 = vmatpush1.bf16.msra.mxu0 %v2887
        %3064 = vmatprep.subr.bf16.mxu0 %v2884
        %3065 = vmatpush1.bf16.msra.mxu0 %v2883
        %3066 = vmatprep.subr.bf16.mxu0 %v2880
        %3067 = vmatpush1.bf16.msra.mxu0 %v2879
        %3068 = vmatprep.subr.bf16.mxu0 %v2876
        %3069 = vmatpush1.bf16.msra.mxu0 %v2875
        %3070 = vmatprep.subr.bf16.mxu0 %v2936
        %3071 = vmatpush2.bf16.msra.mxu0 %v2935
        %3072 = vmatprep.subr.bf16.mxu0 %v2932
        %3073 = vmatpush2.bf16.msra.mxu0 %v2931
        %3074 = vmatprep.subr.bf16.mxu0 %v2928
        %3075 = vmatpush2.bf16.msra.mxu0 %v2927
        %3076 = vmatprep.subr.bf16.mxu0 %v2924
        %3077 = vmatpush2.bf16.msra.mxu0 %v2923
        %3078 = vmatprep.subr.bf16.mxu0 %v2920
        %3079 = vmatpush2.bf16.msra.mxu0 %v2919
        %3080 = vmatprep.subr.bf16.mxu0 %v2916
        %3081 = vmatpush2.bf16.msra.mxu0 %v2915
        %3082 = vmatprep.subr.bf16.mxu0 %v2912
        %3083 = vmatpush2.bf16.msra.mxu0 %v2911
        %3084 = vmatprep.subr.bf16.mxu0 %v2908
        %3085 = vmatpush2.bf16.msra.mxu0 %v2907
        %3086 = vmatprep.mubr.bf16.mxu0 %v2674
        %3087 = vmatmul.mubr.bf16.gmra.mxu0 %v2673
        %v3088 = vpop.f32.mrf.mxu0
        %v3089 = vadd.f32 0.0, %v3088
        %v3090 = vpop.f32.mrf.mxu0
        %v3091 = vadd.f32 0.0, %v3090
        %v3092 = vpop.f32.mrf.mxu0
        %v3093 = vadd.f32 0.0, %v3092
        %v3094 = vpop.f32.mrf.mxu0
        %v3095 = vadd.f32 0.0, %v3094
        %3096 = vmatprep.mubr.bf16.mxu0 %v2676
        %3097 = vmatmul.mubr.bf16.gmra.mxu0 %v2675
        %v3098 = vpop.f32.mrf.mxu0
        %v3099 = vadd.f32 0.0, %v3098
        %v3100 = vpop.f32.mrf.mxu0
        %v3101 = vadd.f32 0.0, %v3100
        %v3102 = vpop.f32.mrf.mxu0
        %v3103 = vadd.f32 0.0, %v3102
        %v3104 = vpop.f32.mrf.mxu0
        %v3105 = vadd.f32 0.0, %v3104
        %3106 = vdwg.mxu0
        %v3107 = vadd.f32 %v2521, %v3036
        %v3108 = vadd.f32 %v2523, %v3038
        %v3109 = vadd.f32 %v2574, %v3089
        %v3110 = vadd.f32 %v2576, %v3091
        %v3111 = vadd.f32 %v2525, %v3040
        %v3112 = vadd.f32 %v2527, %v3042
        %v3113 = vadd.f32 %v2578, %v3093
        %v3114 = vadd.f32 %v2580, %v3095
        %v3115 = vadd.f32 %v2531, %v3046
        %v3116 = vadd.f32 %v2533, %v3048
        %v3117 = vadd.f32 %v2584, %v3099
        %v3118 = vadd.f32 %v2586, %v3101
        %v3119 = vadd.f32 %v2535, %v3050
        %v3120 = vadd.f32 %v2537, %v3052
        %v3121 = vadd.f32 %v2588, %v3103
        %v3122 = vadd.f32 %v2590, %v3105
        %v3124 = vlaneseq
        %v3125 = vshrl.u32 %v3124, 7
        %v3126 = vsub.s32 0, %v3125
        %v3127 = vrot.slane %v1452, %v3126
        %v3128 = vlaneseq
        %v3129 = vshrl.u32 %v3128, 7
        %v3130 = vsub.s32 1, %v3129
        %v3131 = vrot.slane %v1452, %v3130
        %v3132 = vlaneseq
        %v3133 = vshrl.u32 %v3132, 7
        %v3134 = vsub.s32 2, %v3133
        %v3135 = vrot.slane %v1452, %v3134
        %v3136 = vlaneseq
        %v3137 = vshrl.u32 %v3136, 7
        %v3138 = vsub.s32 3, %v3137
        %v3139 = vrot.slane %v1452, %v3138
        %v3144 = vadd.f32 %v3107, %v3127
        %v3145 = vadd.f32 %v3108, %v3131
        %v3146 = vadd.f32 %v3109, %v3135
        %v3147 = vadd.f32 %v3110, %v3139
        %v3148 = vadd.f32 %v3111, %v3127
        %v3149 = vadd.f32 %v3112, %v3131
        %v3150 = vadd.f32 %v3113, %v3135
        %v3151 = vadd.f32 %v3114, %v3139
        %v3152 = vadd.f32 %v3115, %v3127
        %v3153 = vadd.f32 %v3116, %v3131
        %v3154 = vadd.f32 %v3117, %v3135
        %v3155 = vadd.f32 %v3118, %v3139
        %v3156 = vadd.f32 %v3119, %v3127
        %v3157 = vadd.f32 %v3120, %v3131
        %v3158 = vadd.f32 %v3121, %v3135
        %v3159 = vadd.f32 %v3122, %v3139
        %v3160 = vld [vmem:[%s519] sm:$0xf]
        %v3161 = vld [vmem:[%s519 + $0x4] sm:$0xf]
        %v3162 = vld [vmem:[%s519 + $0x8] sm:$0xf]
        %v3163 = vld [vmem:[%s519 + $0xc] sm:$0xf]
        %v3168 = vlaneseq
        %v3169 = vshrl.u32 %v3168, 7
        %v3170 = vsub.s32 0, %v3169
        %v3171 = vrot.slane %v3160, %v3170
        %v3172 = vlaneseq
        %v3173 = vshrl.u32 %v3172, 7
        %v3174 = vsub.s32 1, %v3173
        %v3175 = vrot.slane %v3160, %v3174
        %v3176 = vlaneseq
        %v3177 = vshrl.u32 %v3176, 7
        %v3178 = vsub.s32 2, %v3177
        %v3179 = vrot.slane %v3160, %v3178
        %v3180 = vlaneseq
        %v3181 = vshrl.u32 %v3180, 7
        %v3182 = vsub.s32 3, %v3181
        %v3183 = vrot.slane %v3160, %v3182
        %v3184 = vlaneseq
        %v3185 = vshrl.u32 %v3184, 7
        %v3186 = vsub.s32 0, %v3185
        %v3187 = vrot.slane %v3161, %v3186
        %v3188 = vlaneseq
        %v3189 = vshrl.u32 %v3188, 7
        %v3190 = vsub.s32 1, %v3189
        %v3191 = vrot.slane %v3161, %v3190
        %v3192 = vlaneseq
        %v3193 = vshrl.u32 %v3192, 7
        %v3194 = vsub.s32 2, %v3193
        %v3195 = vrot.slane %v3161, %v3194
        %v3196 = vlaneseq
        %v3197 = vshrl.u32 %v3196, 7
        %v3198 = vsub.s32 3, %v3197
        %v3199 = vrot.slane %v3161, %v3198
        %v3200 = vlaneseq
        %v3201 = vshrl.u32 %v3200, 7
        %v3202 = vsub.s32 0, %v3201
        %v3203 = vrot.slane %v3162, %v3202
        %v3204 = vlaneseq
        %v3205 = vshrl.u32 %v3204, 7
        %v3206 = vsub.s32 1, %v3205
        %v3207 = vrot.slane %v3162, %v3206
        %v3208 = vlaneseq
        %v3209 = vshrl.u32 %v3208, 7
        %v3210 = vsub.s32 2, %v3209
        %v3211 = vrot.slane %v3162, %v3210
        %v3212 = vlaneseq
        %v3213 = vshrl.u32 %v3212, 7
        %v3214 = vsub.s32 3, %v3213
        %v3215 = vrot.slane %v3162, %v3214
        %v3216 = vlaneseq
        %v3217 = vshrl.u32 %v3216, 7
        %v3218 = vsub.s32 0, %v3217
        %v3219 = vrot.slane %v3163, %v3218
        %v3220 = vlaneseq
        %v3221 = vshrl.u32 %v3220, 7
        %v3222 = vsub.s32 1, %v3221
        %v3223 = vrot.slane %v3163, %v3222
        %v3224 = vlaneseq
        %v3225 = vshrl.u32 %v3224, 7
        %v3226 = vsub.s32 2, %v3225
        %v3227 = vrot.slane %v3163, %v3226
        %v3228 = vlaneseq
        %v3229 = vshrl.u32 %v3228, 7
        %v3230 = vsub.s32 3, %v3229
        %v3231 = vrot.slane %v3163, %v3230
        %v3248 = vadd.f32 %v3144, %v3171
        %v3249 = vadd.f32 %v3145, %v3175
        %v3250 = vadd.f32 %v3146, %v3179
        %v3251 = vadd.f32 %v3147, %v3183
        %v3252 = vadd.f32 %v3148, %v3187
        %v3253 = vadd.f32 %v3149, %v3191
        %v3254 = vadd.f32 %v3150, %v3195
        %v3255 = vadd.f32 %v3151, %v3199
        %v3256 = vadd.f32 %v3152, %v3203
        %v3257 = vadd.f32 %v3153, %v3207
        %v3258 = vadd.f32 %v3154, %v3211
        %v3259 = vadd.f32 %v3155, %v3215
        %v3260 = vadd.f32 %v3156, %v3219
        %v3261 = vadd.f32 %v3157, %v3223
        %v3262 = vadd.f32 %v3158, %v3227
        %v3263 = vadd.f32 %v3159, %v3231
        %v3264 = vld [vmem:[#allocation13] sm:$0xf]
        %v3265 = vld [vmem:[#allocation14] sm:$0xf]
        %v3266 = vrot.slane %v3248, 4
        %v3267 = vadd.f32 %v3248, %v3266
        %v3268 = vrot.slane %v3267, 2
        %v3269 = vadd.f32 %v3267, %v3268
        %v3270 = vrot.slane %v3269, 1
        %v3271 = vadd.f32 %v3269, %v3270
        %v3272 = vrot.slane %v3249, 4
        %v3273 = vadd.f32 %v3249, %v3272
        %v3274 = vrot.slane %v3273, 2
        %v3275 = vadd.f32 %v3273, %v3274
        %v3276 = vrot.slane %v3275, 1
        %v3277 = vadd.f32 %v3275, %v3276
        %v3278 = vrot.slane %v3250, 4
        %v3279 = vadd.f32 %v3250, %v3278
        %v3280 = vrot.slane %v3279, 2
        %v3281 = vadd.f32 %v3279, %v3280
        %v3282 = vrot.slane %v3281, 1
        %v3283 = vadd.f32 %v3281, %v3282
        %v3284 = vrot.slane %v3251, 4
        %v3285 = vadd.f32 %v3251, %v3284
        %v3286 = vrot.slane %v3285, 2
        %v3287 = vadd.f32 %v3285, %v3286
        %v3288 = vrot.slane %v3287, 1
        %v3289 = vadd.f32 %v3287, %v3288
        %v3290 = vrot.slane %v3252, 4
        %v3291 = vadd.f32 %v3252, %v3290
        %v3292 = vrot.slane %v3291, 2
        %v3293 = vadd.f32 %v3291, %v3292
        %v3294 = vrot.slane %v3293, 1
        %v3295 = vadd.f32 %v3293, %v3294
        %v3296 = vrot.slane %v3253, 4
        %v3297 = vadd.f32 %v3253, %v3296
        %v3298 = vrot.slane %v3297, 2
        %v3299 = vadd.f32 %v3297, %v3298
        %v3300 = vrot.slane %v3299, 1
        %v3301 = vadd.f32 %v3299, %v3300
        %v3302 = vrot.slane %v3254, 4
        %v3303 = vadd.f32 %v3254, %v3302
        %v3304 = vrot.slane %v3303, 2
        %v3305 = vadd.f32 %v3303, %v3304
        %v3306 = vrot.slane %v3305, 1
        %v3307 = vadd.f32 %v3305, %v3306
        %v3308 = vrot.slane %v3255, 4
        %v3309 = vadd.f32 %v3255, %v3308
        %v3310 = vrot.slane %v3309, 2
        %v3311 = vadd.f32 %v3309, %v3310
        %v3312 = vrot.slane %v3311, 1
        %v3313 = vadd.f32 %v3311, %v3312
        %v3314 = vrot.slane %v3256, 4
        %v3315 = vadd.f32 %v3256, %v3314
        %v3316 = vrot.slane %v3315, 2
        %v3317 = vadd.f32 %v3315, %v3316
        %v3318 = vrot.slane %v3317, 1
        %v3319 = vadd.f32 %v3317, %v3318
        %v3320 = vrot.slane %v3257, 4
        %v3321 = vadd.f32 %v3257, %v3320
        %v3322 = vrot.slane %v3321, 2
        %v3323 = vadd.f32 %v3321, %v3322
        %v3324 = vrot.slane %v3323, 1
        %v3325 = vadd.f32 %v3323, %v3324
        %v3326 = vrot.slane %v3258, 4
        %v3327 = vadd.f32 %v3258, %v3326
        %v3328 = vrot.slane %v3327, 2
        %v3329 = vadd.f32 %v3327, %v3328
        %v3330 = vrot.slane %v3329, 1
        %v3331 = vadd.f32 %v3329, %v3330
        %v3332 = vrot.slane %v3259, 4
        %v3333 = vadd.f32 %v3259, %v3332
        %v3334 = vrot.slane %v3333, 2
        %v3335 = vadd.f32 %v3333, %v3334
        %v3336 = vrot.slane %v3335, 1
        %v3337 = vadd.f32 %v3335, %v3336
        %v3338 = vrot.slane %v3260, 4
        %v3339 = vadd.f32 %v3260, %v3338
        %v3340 = vrot.slane %v3339, 2
        %v3341 = vadd.f32 %v3339, %v3340
        %v3342 = vrot.slane %v3341, 1
        %v3343 = vadd.f32 %v3341, %v3342
        %v3344 = vrot.slane %v3261, 4
        %v3345 = vadd.f32 %v3261, %v3344
        %v3346 = vrot.slane %v3345, 2
        %v3347 = vadd.f32 %v3345, %v3346
        %v3348 = vrot.slane %v3347, 1
        %v3349 = vadd.f32 %v3347, %v3348
        %v3350 = vrot.slane %v3262, 4
        %v3351 = vadd.f32 %v3262, %v3350
        %v3352 = vrot.slane %v3351, 2
        %v3353 = vadd.f32 %v3351, %v3352
        %v3354 = vrot.slane %v3353, 1
        %v3355 = vadd.f32 %v3353, %v3354
        %v3356 = vrot.slane %v3263, 4
        %v3357 = vadd.f32 %v3263, %v3356
        %v3358 = vrot.slane %v3357, 2
        %v3359 = vadd.f32 %v3357, %v3358
        %v3360 = vrot.slane %v3359, 1
        %v3361 = vadd.f32 %v3359, %v3360
        %3366 = vrot.lane.b32.xlu0 %v3271, 64
        %v3367 = vpop.permute.xlu0 %3366
        %3368 = vrot.lane.b32.xlu0 %v3295, 64
        %v3369 = vpop.permute.xlu0 %3368
        %3370 = vrot.lane.b32.xlu0 %v3319, 64
        %v3371 = vpop.permute.xlu0 %3370
        %3372 = vrot.lane.b32.xlu0 %v3343, 64
        %v3373 = vpop.permute.xlu0 %3372
        %3378 = vrot.lane.b32.xlu0 %v3277, 64
        %v3379 = vpop.permute.xlu0 %3378
        %3380 = vrot.lane.b32.xlu0 %v3301, 64
        %v3381 = vpop.permute.xlu0 %3380
        %3382 = vrot.lane.b32.xlu0 %v3325, 64
        %v3383 = vpop.permute.xlu0 %3382
        %3384 = vrot.lane.b32.xlu0 %v3349, 64
        %v3385 = vpop.permute.xlu0 %3384
        %3390 = vrot.lane.b32.xlu0 %v3283, 64
        %v3391 = vpop.permute.xlu0 %3390
        %3392 = vrot.lane.b32.xlu0 %v3307, 64
        %v3393 = vpop.permute.xlu0 %3392
        %3394 = vrot.lane.b32.xlu0 %v3331, 64
        %v3395 = vpop.permute.xlu0 %3394
        %3396 = vrot.lane.b32.xlu0 %v3355, 64
        %v3397 = vpop.permute.xlu0 %3396
        %3402 = vrot.lane.b32.xlu0 %v3289, 64
        %v3403 = vpop.permute.xlu0 %3402
        %3404 = vrot.lane.b32.xlu0 %v3313, 64
        %v3405 = vpop.permute.xlu0 %3404
        %3406 = vrot.lane.b32.xlu0 %v3337, 64
        %v3407 = vpop.permute.xlu0 %3406
        %3408 = vrot.lane.b32.xlu0 %v3361, 64
        %v3409 = vpop.permute.xlu0 %3408
        %v3410 = vrot.slane %v3295, 7
        %v3411 = vsel %vm724, %v3410, %v3271
        %v3412 = vrot.slane %v3319, 6
        %v3413 = vsel %vm727, %v3412, %v3411
        %v3414 = vrot.slane %v3343, 5
        %v3415 = vsel %vm730, %v3414, %v3413
        %v3416 = vrot.slane %v3369, 7
        %v3417 = vsel %vm724, %v3416, %v3367
        %v3418 = vrot.slane %v3371, 6
        %v3419 = vsel %vm727, %v3418, %v3417
        %v3420 = vrot.slane %v3373, 5
        %v3421 = vsel %vm730, %v3420, %v3419
        %v3422 = vrot.slane %v3301, 7
        %v3423 = vsel %vm724, %v3422, %v3277
        %v3424 = vrot.slane %v3325, 6
        %v3425 = vsel %vm727, %v3424, %v3423
        %v3426 = vrot.slane %v3349, 5
        %v3427 = vsel %vm730, %v3426, %v3425
        %v3428 = vrot.slane %v3381, 7
        %v3429 = vsel %vm724, %v3428, %v3379
        %v3430 = vrot.slane %v3383, 6
        %v3431 = vsel %vm727, %v3430, %v3429
        %v3432 = vrot.slane %v3385, 5
        %v3433 = vsel %vm730, %v3432, %v3431
        %v3434 = vrot.slane %v3307, 7
        %v3435 = vsel %vm724, %v3434, %v3283
        %v3436 = vrot.slane %v3331, 6
        %v3437 = vsel %vm727, %v3436, %v3435
        %v3438 = vrot.slane %v3355, 5
        %v3439 = vsel %vm730, %v3438, %v3437
        %v3440 = vrot.slane %v3393, 7
        %v3441 = vsel %vm724, %v3440, %v3391
        %v3442 = vrot.slane %v3395, 6
        %v3443 = vsel %vm727, %v3442, %v3441
        %v3444 = vrot.slane %v3397, 5
        %v3445 = vsel %vm730, %v3444, %v3443
        %v3446 = vrot.slane %v3313, 7
        %v3447 = vsel %vm724, %v3446, %v3289
        %v3448 = vrot.slane %v3337, 6
        %v3449 = vsel %vm727, %v3448, %v3447
        %v3450 = vrot.slane %v3361, 5
        %v3451 = vsel %vm730, %v3450, %v3449
        %v3452 = vrot.slane %v3405, 7
        %v3453 = vsel %vm724, %v3452, %v3403
        %v3454 = vrot.slane %v3407, 6
        %v3455 = vsel %vm727, %v3454, %v3453
        %v3456 = vrot.slane %v3409, 5
        %v3457 = vsel %vm730, %v3456, %v3455
        %v3466 = vcombine.low %v3415, %v3427
        %v3468 = vunpack.c.l.s4 1983009808
        %v3469 = vunpack.c.0.s8 %v3468
        %v3470 = vlaneseq
        %v3471 = vshrl.u32 %v3470, 7
        %v3472 = vsub.s32 %v3469, %v3471
        %v3473 = vrot.slane %v3466, %v3472
        %v3474 = vcombine.low %v3421, %v3433
        %v3476 = vunpack.c.l.s4 1983009808
        %v3477 = vunpack.c.0.s8 %v3476
        %v3478 = vlaneseq
        %v3479 = vshrl.u32 %v3478, 7
        %v3480 = vsub.s32 %v3477, %v3479
        %v3481 = vrot.slane %v3474, %v3480
        %v3482 = vcombine.low %v3439, %v3451
        %v3484 = vunpack.c.l.s4 1983009808
        %v3485 = vunpack.c.0.s8 %v3484
        %v3486 = vlaneseq
        %v3487 = vshrl.u32 %v3486, 7
        %v3488 = vsub.s32 %v3485, %v3487
        %v3489 = vrot.slane %v3482, %v3488
        %v3490 = vcombine.low %v3445, %v3457
        %v3492 = vunpack.c.l.s4 1983009808
        %v3493 = vunpack.c.0.s8 %v3492
        %v3494 = vlaneseq
        %v3495 = vshrl.u32 %v3494, 7
        %v3496 = vsub.s32 %v3493, %v3495
        %v3497 = vrot.slane %v3490, %v3496
        %v3498 = vcombine.low %v3473, %v3481
        %v3499 = vcombine.high %v3473, %v3481
        %v3501 = vunpack.c.l.s4 1934713408
        %v3502 = vunpack.c.0.s8 %v3501
        %v3503 = vlaneseq
        %v3504 = vshrl.u32 %v3503, 7
        %v3505 = vsub.s32 %v3502, %v3504
        %v3506 = vrot.slane %v3498, %v3505
        %v3508 = vunpack.c.l.s4 1934713408
        %v3509 = vunpack.c.0.s8 %v3508
        %v3510 = vlaneseq
        %v3511 = vshrl.u32 %v3510, 7
        %v3512 = vsub.s32 %v3509, %v3511
        %v3513 = vrot.slane %v3499, %v3512
        %v3514 = vcombine.low %v3489, %v3497
        %v3515 = vcombine.high %v3489, %v3497
        %v3517 = vunpack.c.l.s4 1934713408
        %v3518 = vunpack.c.0.s8 %v3517
        %v3519 = vlaneseq
        %v3520 = vshrl.u32 %v3519, 7
        %v3521 = vsub.s32 %v3518, %v3520
        %v3522 = vrot.slane %v3514, %v3521
        %v3524 = vunpack.c.l.s4 1934713408
        %v3525 = vunpack.c.0.s8 %v3524
        %v3526 = vlaneseq
        %v3527 = vshrl.u32 %v3526, 7
        %v3528 = vsub.s32 %v3525, %v3527
        %v3529 = vrot.slane %v3515, %v3528
        %v3530 = vcombine.low %v3506, %v3522
        %v3531 = vcombine.high %v3506, %v3522
        %v3532 = vcombine.low %v3513, %v3529
        %v3533 = vcombine.high %v3513, %v3529
        %v3534 = vsel %vm905, %v3530, 0.0
        %v3535 = vrot.slane %v3534, 4
        %v3536 = vadd.f32 %v3534, %v3535
        %v3537 = vrot.slane %v3536, 2
        %v3538 = vadd.f32 %v3536, %v3537
        %v3539 = vrot.slane %v3538, 1
        %v3540 = vadd.f32 %v3538, %v3539
        %v3541 = vsel %vm905, %v3531, 0.0
        %v3542 = vrot.slane %v3541, 4
        %v3543 = vadd.f32 %v3541, %v3542
        %v3544 = vrot.slane %v3543, 2
        %v3545 = vadd.f32 %v3543, %v3544
        %v3546 = vrot.slane %v3545, 1
        %v3547 = vadd.f32 %v3545, %v3546
        %v3548 = vsel %vm905, %v3532, 0.0
        %v3549 = vrot.slane %v3548, 4
        %v3550 = vadd.f32 %v3548, %v3549
        %v3551 = vrot.slane %v3550, 2
        %v3552 = vadd.f32 %v3550, %v3551
        %v3553 = vrot.slane %v3552, 1
        %v3554 = vadd.f32 %v3552, %v3553
        %v3555 = vsel %vm905, %v3533, 0.0
        %v3556 = vrot.slane %v3555, 4
        %v3557 = vadd.f32 %v3555, %v3556
        %v3558 = vrot.slane %v3557, 2
        %v3559 = vadd.f32 %v3557, %v3558
        %v3560 = vrot.slane %v3559, 1
        %v3561 = vadd.f32 %v3559, %v3560
        %3566 = vrot.lane.b32.xlu0 %v3540, 126
        %v3567 = vpop.permute.xlu0 %3566
        %3568 = vrot.lane.b32.xlu0 %v3547, 126
        %v3569 = vpop.permute.xlu0 %3568
        %3570 = vrot.lane.b32.xlu0 %v3554, 126
        %v3571 = vpop.permute.xlu0 %3570
        %3572 = vrot.lane.b32.xlu0 %v3561, 126
        %v3573 = vpop.permute.xlu0 %3572
        %3574 = vrot.lane.b32.xlu0 %v3540, 124
        %v3575 = vpop.permute.xlu0 %3574
        %3576 = vrot.lane.b32.xlu0 %v3547, 124
        %v3577 = vpop.permute.xlu0 %3576
        %3578 = vrot.lane.b32.xlu0 %v3554, 124
        %v3579 = vpop.permute.xlu0 %3578
        %3580 = vrot.lane.b32.xlu0 %v3561, 124
        %v3581 = vpop.permute.xlu0 %3580
        %3582 = vrot.lane.b32.xlu0 %v3540, 122
        %v3583 = vpop.permute.xlu0 %3582
        %3584 = vrot.lane.b32.xlu0 %v3547, 122
        %v3585 = vpop.permute.xlu0 %3584
        %3586 = vrot.lane.b32.xlu0 %v3554, 122
        %v3587 = vpop.permute.xlu0 %3586
        %3588 = vrot.lane.b32.xlu0 %v3561, 122
        %v3589 = vpop.permute.xlu0 %3588
        %3590 = vrot.lane.b32.xlu0 %v3540, 120
        %v3591 = vpop.permute.xlu0 %3590
        %3592 = vrot.lane.b32.xlu0 %v3547, 120
        %v3593 = vpop.permute.xlu0 %3592
        %3594 = vrot.lane.b32.xlu0 %v3554, 120
        %v3595 = vpop.permute.xlu0 %3594
        %3596 = vrot.lane.b32.xlu0 %v3561, 120
        %v3597 = vpop.permute.xlu0 %3596
        %3598 = vrot.lane.b32.xlu0 %v3540, 118
        %v3599 = vpop.permute.xlu0 %3598
        %3600 = vrot.lane.b32.xlu0 %v3547, 118
        %v3601 = vpop.permute.xlu0 %3600
        %3602 = vrot.lane.b32.xlu0 %v3554, 118
        %v3603 = vpop.permute.xlu0 %3602
        %3604 = vrot.lane.b32.xlu0 %v3561, 118
        %v3605 = vpop.permute.xlu0 %3604
        %3606 = vrot.lane.b32.xlu0 %v3540, 116
        %v3607 = vpop.permute.xlu0 %3606
        %3608 = vrot.lane.b32.xlu0 %v3547, 116
        %v3609 = vpop.permute.xlu0 %3608
        %3610 = vrot.lane.b32.xlu0 %v3554, 116
        %v3611 = vpop.permute.xlu0 %3610
        %3612 = vrot.lane.b32.xlu0 %v3561, 116
        %v3613 = vpop.permute.xlu0 %3612
        %3614 = vrot.lane.b32.xlu0 %v3540, 114
        %v3615 = vpop.permute.xlu0 %3614
        %3616 = vrot.lane.b32.xlu0 %v3547, 114
        %v3617 = vpop.permute.xlu0 %3616
        %3618 = vrot.lane.b32.xlu0 %v3554, 114
        %v3619 = vpop.permute.xlu0 %3618
        %3620 = vrot.lane.b32.xlu0 %v3561, 114
        %v3621 = vpop.permute.xlu0 %3620
        %3622 = vrot.lane.b32.xlu0 %v3540, 112
        %v3623 = vpop.permute.xlu0 %3622
        %3624 = vrot.lane.b32.xlu0 %v3547, 112
        %v3625 = vpop.permute.xlu0 %3624
        %3626 = vrot.lane.b32.xlu0 %v3554, 112
        %v3627 = vpop.permute.xlu0 %3626
        %3628 = vrot.lane.b32.xlu0 %v3561, 112
        %v3629 = vpop.permute.xlu0 %3628
        %3630 = vrot.lane.b32.xlu0 %v3540, 110
        %v3631 = vpop.permute.xlu0 %3630
        %3632 = vrot.lane.b32.xlu0 %v3547, 110
        %v3633 = vpop.permute.xlu0 %3632
        %3634 = vrot.lane.b32.xlu0 %v3554, 110
        %v3635 = vpop.permute.xlu0 %3634
        %3636 = vrot.lane.b32.xlu0 %v3561, 110
        %v3637 = vpop.permute.xlu0 %3636
        %3638 = vrot.lane.b32.xlu0 %v3540, 108
        %v3639 = vpop.permute.xlu0 %3638
        %3640 = vrot.lane.b32.xlu0 %v3547, 108
        %v3641 = vpop.permute.xlu0 %3640
        %3642 = vrot.lane.b32.xlu0 %v3554, 108
        %v3643 = vpop.permute.xlu0 %3642
        %3644 = vrot.lane.b32.xlu0 %v3561, 108
        %v3645 = vpop.permute.xlu0 %3644
        %3646 = vrot.lane.b32.xlu0 %v3540, 106
        %v3647 = vpop.permute.xlu0 %3646
        %3648 = vrot.lane.b32.xlu0 %v3547, 106
        %v3649 = vpop.permute.xlu0 %3648
        %3650 = vrot.lane.b32.xlu0 %v3554, 106
        %v3651 = vpop.permute.xlu0 %3650
        %3652 = vrot.lane.b32.xlu0 %v3561, 106
        %v3653 = vpop.permute.xlu0 %3652
        %3654 = vrot.lane.b32.xlu0 %v3540, 104
        %v3655 = vpop.permute.xlu0 %3654
        %3656 = vrot.lane.b32.xlu0 %v3547, 104
        %v3657 = vpop.permute.xlu0 %3656
        %3658 = vrot.lane.b32.xlu0 %v3554, 104
        %v3659 = vpop.permute.xlu0 %3658
        %3660 = vrot.lane.b32.xlu0 %v3561, 104
        %v3661 = vpop.permute.xlu0 %3660
        %3662 = vrot.lane.b32.xlu0 %v3540, 102
        %v3663 = vpop.permute.xlu0 %3662
        %3664 = vrot.lane.b32.xlu0 %v3547, 102
        %v3665 = vpop.permute.xlu0 %3664
        %3666 = vrot.lane.b32.xlu0 %v3554, 102
        %v3667 = vpop.permute.xlu0 %3666
        %3668 = vrot.lane.b32.xlu0 %v3561, 102
        %v3669 = vpop.permute.xlu0 %3668
        %3670 = vrot.lane.b32.xlu0 %v3540, 100
        %v3671 = vpop.permute.xlu0 %3670
        %3672 = vrot.lane.b32.xlu0 %v3547, 100
        %v3673 = vpop.permute.xlu0 %3672
        %3674 = vrot.lane.b32.xlu0 %v3554, 100
        %v3675 = vpop.permute.xlu0 %3674
        %3676 = vrot.lane.b32.xlu0 %v3561, 100
        %v3677 = vpop.permute.xlu0 %3676
        %3678 = vrot.lane.b32.xlu0 %v3540, 98
        %v3679 = vpop.permute.xlu0 %3678
        %3680 = vrot.lane.b32.xlu0 %v3547, 98
        %v3681 = vpop.permute.xlu0 %3680
        %3682 = vrot.lane.b32.xlu0 %v3554, 98
        %v3683 = vpop.permute.xlu0 %3682
        %3684 = vrot.lane.b32.xlu0 %v3561, 98
        %v3685 = vpop.permute.xlu0 %3684
        %3686 = vrot.lane.b32.xlu0 %v3540, 96
        %v3687 = vpop.permute.xlu0 %3686
        %3688 = vrot.lane.b32.xlu0 %v3547, 96
        %v3689 = vpop.permute.xlu0 %3688
        %3690 = vrot.lane.b32.xlu0 %v3554, 96
        %v3691 = vpop.permute.xlu0 %3690
        %3692 = vrot.lane.b32.xlu0 %v3561, 96
        %v3693 = vpop.permute.xlu0 %3692
        %3694 = vrot.lane.b32.xlu0 %v3540, 94
        %v3695 = vpop.permute.xlu0 %3694
        %3696 = vrot.lane.b32.xlu0 %v3547, 94
        %v3697 = vpop.permute.xlu0 %3696
        %3698 = vrot.lane.b32.xlu0 %v3554, 94
        %v3699 = vpop.permute.xlu0 %3698
        %3700 = vrot.lane.b32.xlu0 %v3561, 94
        %v3701 = vpop.permute.xlu0 %3700
        %3702 = vrot.lane.b32.xlu0 %v3540, 92
        %v3703 = vpop.permute.xlu0 %3702
        %3704 = vrot.lane.b32.xlu0 %v3547, 92
        %v3705 = vpop.permute.xlu0 %3704
        %3706 = vrot.lane.b32.xlu0 %v3554, 92
        %v3707 = vpop.permute.xlu0 %3706
        %3708 = vrot.lane.b32.xlu0 %v3561, 92
        %v3709 = vpop.permute.xlu0 %3708
        %3710 = vrot.lane.b32.xlu0 %v3540, 90
        %v3711 = vpop.permute.xlu0 %3710
        %3712 = vrot.lane.b32.xlu0 %v3547, 90
        %v3713 = vpop.permute.xlu0 %3712
        %3714 = vrot.lane.b32.xlu0 %v3554, 90
        %v3715 = vpop.permute.xlu0 %3714
        %3716 = vrot.lane.b32.xlu0 %v3561, 90
        %v3717 = vpop.permute.xlu0 %3716
        %3718 = vrot.lane.b32.xlu0 %v3540, 88
        %v3719 = vpop.permute.xlu0 %3718
        %3720 = vrot.lane.b32.xlu0 %v3547, 88
        %v3721 = vpop.permute.xlu0 %3720
        %3722 = vrot.lane.b32.xlu0 %v3554, 88
        %v3723 = vpop.permute.xlu0 %3722
        %3724 = vrot.lane.b32.xlu0 %v3561, 88
        %v3725 = vpop.permute.xlu0 %3724
        %3726 = vrot.lane.b32.xlu0 %v3540, 86
        %v3727 = vpop.permute.xlu0 %3726
        %3728 = vrot.lane.b32.xlu0 %v3547, 86
        %v3729 = vpop.permute.xlu0 %3728
        %3730 = vrot.lane.b32.xlu0 %v3554, 86
        %v3731 = vpop.permute.xlu0 %3730
        %3732 = vrot.lane.b32.xlu0 %v3561, 86
        %v3733 = vpop.permute.xlu0 %3732
        %3734 = vrot.lane.b32.xlu0 %v3540, 84
        %v3735 = vpop.permute.xlu0 %3734
        %3736 = vrot.lane.b32.xlu0 %v3547, 84
        %v3737 = vpop.permute.xlu0 %3736
        %3738 = vrot.lane.b32.xlu0 %v3554, 84
        %v3739 = vpop.permute.xlu0 %3738
        %3740 = vrot.lane.b32.xlu0 %v3561, 84
        %v3741 = vpop.permute.xlu0 %3740
        %3742 = vrot.lane.b32.xlu0 %v3540, 82
        %v3743 = vpop.permute.xlu0 %3742
        %3744 = vrot.lane.b32.xlu0 %v3547, 82
        %v3745 = vpop.permute.xlu0 %3744
        %3746 = vrot.lane.b32.xlu0 %v3554, 82
        %v3747 = vpop.permute.xlu0 %3746
        %3748 = vrot.lane.b32.xlu0 %v3561, 82
        %v3749 = vpop.permute.xlu0 %3748
        %3750 = vrot.lane.b32.xlu0 %v3540, 80
        %v3751 = vpop.permute.xlu0 %3750
        %3752 = vrot.lane.b32.xlu0 %v3547, 80
        %v3753 = vpop.permute.xlu0 %3752
        %3754 = vrot.lane.b32.xlu0 %v3554, 80
        %v3755 = vpop.permute.xlu0 %3754
        %3756 = vrot.lane.b32.xlu0 %v3561, 80
        %v3757 = vpop.permute.xlu0 %3756
        %3758 = vrot.lane.b32.xlu0 %v3540, 78
        %v3759 = vpop.permute.xlu0 %3758
        %3760 = vrot.lane.b32.xlu0 %v3547, 78
        %v3761 = vpop.permute.xlu0 %3760
        %3762 = vrot.lane.b32.xlu0 %v3554, 78
        %v3763 = vpop.permute.xlu0 %3762
        %3764 = vrot.lane.b32.xlu0 %v3561, 78
        %v3765 = vpop.permute.xlu0 %3764
        %3766 = vrot.lane.b32.xlu0 %v3540, 76
        %v3767 = vpop.permute.xlu0 %3766
        %3768 = vrot.lane.b32.xlu0 %v3547, 76
        %v3769 = vpop.permute.xlu0 %3768
        %3770 = vrot.lane.b32.xlu0 %v3554, 76
        %v3771 = vpop.permute.xlu0 %3770
        %3772 = vrot.lane.b32.xlu0 %v3561, 76
        %v3773 = vpop.permute.xlu0 %3772
        %3774 = vrot.lane.b32.xlu0 %v3540, 74
        %v3775 = vpop.permute.xlu0 %3774
        %3776 = vrot.lane.b32.xlu0 %v3547, 74
        %v3777 = vpop.permute.xlu0 %3776
        %3778 = vrot.lane.b32.xlu0 %v3554, 74
        %v3779 = vpop.permute.xlu0 %3778
        %3780 = vrot.lane.b32.xlu0 %v3561, 74
        %v3781 = vpop.permute.xlu0 %3780
        %3782 = vrot.lane.b32.xlu0 %v3540, 72
        %v3783 = vpop.permute.xlu0 %3782
        %3784 = vrot.lane.b32.xlu0 %v3547, 72
        %v3785 = vpop.permute.xlu0 %3784
        %3786 = vrot.lane.b32.xlu0 %v3554, 72
        %v3787 = vpop.permute.xlu0 %3786
        %3788 = vrot.lane.b32.xlu0 %v3561, 72
        %v3789 = vpop.permute.xlu0 %3788
        %3790 = vrot.lane.b32.xlu0 %v3540, 70
        %v3791 = vpop.permute.xlu0 %3790
        %3792 = vrot.lane.b32.xlu0 %v3547, 70
        %v3793 = vpop.permute.xlu0 %3792
        %3794 = vrot.lane.b32.xlu0 %v3554, 70
        %v3795 = vpop.permute.xlu0 %3794
        %3796 = vrot.lane.b32.xlu0 %v3561, 70
        %v3797 = vpop.permute.xlu0 %3796
        %3798 = vrot.lane.b32.xlu0 %v3540, 68
        %v3799 = vpop.permute.xlu0 %3798
        %3800 = vrot.lane.b32.xlu0 %v3547, 68
        %v3801 = vpop.permute.xlu0 %3800
        %3802 = vrot.lane.b32.xlu0 %v3554, 68
        %v3803 = vpop.permute.xlu0 %3802
        %3804 = vrot.lane.b32.xlu0 %v3561, 68
        %v3805 = vpop.permute.xlu0 %3804
        %3806 = vrot.lane.b32.xlu0 %v3540, 66
        %v3807 = vpop.permute.xlu0 %3806
        %3808 = vrot.lane.b32.xlu0 %v3547, 66
        %v3809 = vpop.permute.xlu0 %3808
        %3810 = vrot.lane.b32.xlu0 %v3554, 66
        %v3811 = vpop.permute.xlu0 %3810
        %3812 = vrot.lane.b32.xlu0 %v3561, 66
        %v3813 = vpop.permute.xlu0 %3812
        %v3814 = vrot.slane %v3547, 7
        %v3815 = vsel %vm724, %v3814, %v3540
        %v3816 = vrot.slane %v3554, 6
        %v3817 = vsel %vm727, %v3816, %v3815
        %v3818 = vrot.slane %v3561, 5
        %v3819 = vsel %vm730, %v3818, %v3817
        %v3820 = vrot.slane %v3569, 7
        %v3821 = vsel %vm724, %v3820, %v3567
        %v3822 = vrot.slane %v3571, 6
        %v3823 = vsel %vm727, %v3822, %v3821
        %v3824 = vrot.slane %v3573, 5
        %v3825 = vsel %vm730, %v3824, %v3823
        %v3826 = vrot.slane %v3577, 7
        %v3827 = vsel %vm724, %v3826, %v3575
        %v3828 = vrot.slane %v3579, 6
        %v3829 = vsel %vm727, %v3828, %v3827
        %v3830 = vrot.slane %v3581, 5
        %v3831 = vsel %vm730, %v3830, %v3829
        %v3832 = vrot.slane %v3585, 7
        %v3833 = vsel %vm724, %v3832, %v3583
        %v3834 = vrot.slane %v3587, 6
        %v3835 = vsel %vm727, %v3834, %v3833
        %v3836 = vrot.slane %v3589, 5
        %v3837 = vsel %vm730, %v3836, %v3835
        %v3838 = vrot.slane %v3593, 7
        %v3839 = vsel %vm724, %v3838, %v3591
        %v3840 = vrot.slane %v3595, 6
        %v3841 = vsel %vm727, %v3840, %v3839
        %v3842 = vrot.slane %v3597, 5
        %v3843 = vsel %vm730, %v3842, %v3841
        %v3844 = vrot.slane %v3601, 7
        %v3845 = vsel %vm724, %v3844, %v3599
        %v3846 = vrot.slane %v3603, 6
        %v3847 = vsel %vm727, %v3846, %v3845
        %v3848 = vrot.slane %v3605, 5
        %v3849 = vsel %vm730, %v3848, %v3847
        %v3850 = vrot.slane %v3609, 7
        %v3851 = vsel %vm724, %v3850, %v3607
        %v3852 = vrot.slane %v3611, 6
        %v3853 = vsel %vm727, %v3852, %v3851
        %v3854 = vrot.slane %v3613, 5
        %v3855 = vsel %vm730, %v3854, %v3853
        %v3856 = vrot.slane %v3617, 7
        %v3857 = vsel %vm724, %v3856, %v3615
        %v3858 = vrot.slane %v3619, 6
        %v3859 = vsel %vm727, %v3858, %v3857
        %v3860 = vrot.slane %v3621, 5
        %v3861 = vsel %vm730, %v3860, %v3859
        %v3862 = vrot.slane %v3625, 7
        %v3863 = vsel %vm724, %v3862, %v3623
        %v3864 = vrot.slane %v3627, 6
        %v3865 = vsel %vm727, %v3864, %v3863
        %v3866 = vrot.slane %v3629, 5
        %v3867 = vsel %vm730, %v3866, %v3865
        %v3868 = vrot.slane %v3633, 7
        %v3869 = vsel %vm724, %v3868, %v3631
        %v3870 = vrot.slane %v3635, 6
        %v3871 = vsel %vm727, %v3870, %v3869
        %v3872 = vrot.slane %v3637, 5
        %v3873 = vsel %vm730, %v3872, %v3871
        %v3874 = vrot.slane %v3641, 7
        %v3875 = vsel %vm724, %v3874, %v3639
        %v3876 = vrot.slane %v3643, 6
        %v3877 = vsel %vm727, %v3876, %v3875
        %v3878 = vrot.slane %v3645, 5
        %v3879 = vsel %vm730, %v3878, %v3877
        %v3880 = vrot.slane %v3649, 7
        %v3881 = vsel %vm724, %v3880, %v3647
        %v3882 = vrot.slane %v3651, 6
        %v3883 = vsel %vm727, %v3882, %v3881
        %v3884 = vrot.slane %v3653, 5
        %v3885 = vsel %vm730, %v3884, %v3883
        %v3886 = vrot.slane %v3657, 7
        %v3887 = vsel %vm724, %v3886, %v3655
        %v3888 = vrot.slane %v3659, 6
        %v3889 = vsel %vm727, %v3888, %v3887
        %v3890 = vrot.slane %v3661, 5
        %v3891 = vsel %vm730, %v3890, %v3889
        %v3892 = vrot.slane %v3665, 7
        %v3893 = vsel %vm724, %v3892, %v3663
        %v3894 = vrot.slane %v3667, 6
        %v3895 = vsel %vm727, %v3894, %v3893
        %v3896 = vrot.slane %v3669, 5
        %v3897 = vsel %vm730, %v3896, %v3895
        %v3898 = vrot.slane %v3673, 7
        %v3899 = vsel %vm724, %v3898, %v3671
        %v3900 = vrot.slane %v3675, 6
        %v3901 = vsel %vm727, %v3900, %v3899
        %v3902 = vrot.slane %v3677, 5
        %v3903 = vsel %vm730, %v3902, %v3901
        %v3904 = vrot.slane %v3681, 7
        %v3905 = vsel %vm724, %v3904, %v3679
        %v3906 = vrot.slane %v3683, 6
        %v3907 = vsel %vm727, %v3906, %v3905
        %v3908 = vrot.slane %v3685, 5
        %v3909 = vsel %vm730, %v3908, %v3907
        %v3910 = vrot.slane %v3689, 7
        %v3911 = vsel %vm724, %v3910, %v3687
        %v3912 = vrot.slane %v3691, 6
        %v3913 = vsel %vm727, %v3912, %v3911
        %v3914 = vrot.slane %v3693, 5
        %v3915 = vsel %vm730, %v3914, %v3913
        %v3916 = vrot.slane %v3697, 7
        %v3917 = vsel %vm724, %v3916, %v3695
        %v3918 = vrot.slane %v3699, 6
        %v3919 = vsel %vm727, %v3918, %v3917
        %v3920 = vrot.slane %v3701, 5
        %v3921 = vsel %vm730, %v3920, %v3919
        %v3922 = vrot.slane %v3705, 7
        %v3923 = vsel %vm724, %v3922, %v3703
        %v3924 = vrot.slane %v3707, 6
        %v3925 = vsel %vm727, %v3924, %v3923
        %v3926 = vrot.slane %v3709, 5
        %v3927 = vsel %vm730, %v3926, %v3925
        %v3928 = vrot.slane %v3713, 7
        %v3929 = vsel %vm724, %v3928, %v3711
        %v3930 = vrot.slane %v3715, 6
        %v3931 = vsel %vm727, %v3930, %v3929
        %v3932 = vrot.slane %v3717, 5
        %v3933 = vsel %vm730, %v3932, %v3931
        %v3934 = vrot.slane %v3721, 7
        %v3935 = vsel %vm724, %v3934, %v3719
        %v3936 = vrot.slane %v3723, 6
        %v3937 = vsel %vm727, %v3936, %v3935
        %v3938 = vrot.slane %v3725, 5
        %v3939 = vsel %vm730, %v3938, %v3937
        %v3940 = vrot.slane %v3729, 7
        %v3941 = vsel %vm724, %v3940, %v3727
        %v3942 = vrot.slane %v3731, 6
        %v3943 = vsel %vm727, %v3942, %v3941
        %v3944 = vrot.slane %v3733, 5
        %v3945 = vsel %vm730, %v3944, %v3943
        %v3946 = vrot.slane %v3737, 7
        %v3947 = vsel %vm724, %v3946, %v3735
        %v3948 = vrot.slane %v3739, 6
        %v3949 = vsel %vm727, %v3948, %v3947
        %v3950 = vrot.slane %v3741, 5
        %v3951 = vsel %vm730, %v3950, %v3949
        %v3952 = vrot.slane %v3745, 7
        %v3953 = vsel %vm724, %v3952, %v3743
        %v3954 = vrot.slane %v3747, 6
        %v3955 = vsel %vm727, %v3954, %v3953
        %v3956 = vrot.slane %v3749, 5
        %v3957 = vsel %vm730, %v3956, %v3955
        %v3958 = vrot.slane %v3753, 7
        %v3959 = vsel %vm724, %v3958, %v3751
        %v3960 = vrot.slane %v3755, 6
        %v3961 = vsel %vm727, %v3960, %v3959
        %v3962 = vrot.slane %v3757, 5
        %v3963 = vsel %vm730, %v3962, %v3961
        %v3964 = vrot.slane %v3761, 7
        %v3965 = vsel %vm724, %v3964, %v3759
        %v3966 = vrot.slane %v3763, 6
        %v3967 = vsel %vm727, %v3966, %v3965
        %v3968 = vrot.slane %v3765, 5
        %v3969 = vsel %vm730, %v3968, %v3967
        %v3970 = vrot.slane %v3769, 7
        %v3971 = vsel %vm724, %v3970, %v3767
        %v3972 = vrot.slane %v3771, 6
        %v3973 = vsel %vm727, %v3972, %v3971
        %v3974 = vrot.slane %v3773, 5
        %v3975 = vsel %vm730, %v3974, %v3973
        %v3976 = vrot.slane %v3777, 7
        %v3977 = vsel %vm724, %v3976, %v3775
        %v3978 = vrot.slane %v3779, 6
        %v3979 = vsel %vm727, %v3978, %v3977
        %v3980 = vrot.slane %v3781, 5
        %v3981 = vsel %vm730, %v3980, %v3979
        %v3982 = vrot.slane %v3785, 7
        %v3983 = vsel %vm724, %v3982, %v3783
        %v3984 = vrot.slane %v3787, 6
        %v3985 = vsel %vm727, %v3984, %v3983
        %v3986 = vrot.slane %v3789, 5
        %v3987 = vsel %vm730, %v3986, %v3985
        %v3988 = vrot.slane %v3793, 7
        %v3989 = vsel %vm724, %v3988, %v3791
        %v3990 = vrot.slane %v3795, 6
        %v3991 = vsel %vm727, %v3990, %v3989
        %v3992 = vrot.slane %v3797, 5
        %v3993 = vsel %vm730, %v3992, %v3991
        %v3994 = vrot.slane %v3801, 7
        %v3995 = vsel %vm724, %v3994, %v3799
        %v3996 = vrot.slane %v3803, 6
        %v3997 = vsel %vm727, %v3996, %v3995
        %v3998 = vrot.slane %v3805, 5
        %v3999 = vsel %vm730, %v3998, %v3997
        %v4000 = vrot.slane %v3809, 7
        %v4001 = vsel %vm724, %v4000, %v3807
        %v4002 = vrot.slane %v3811, 6
        %v4003 = vsel %vm727, %v4002, %v4001
        %v4004 = vrot.slane %v3813, 5
        %v4005 = vsel %vm730, %v4004, %v4003
        %v4038 = vcombine.low %v3819, %v3831
        %v4040 = vunpack.c.l.s4 1983009808
        %v4041 = vunpack.c.0.s8 %v4040
        %v4042 = vlaneseq
        %v4043 = vshrl.u32 %v4042, 7
        %v4044 = vsub.s32 %v4041, %v4043
        %v4045 = vrot.slane %v4038, %v4044
        %v4046 = vcombine.low %v3825, %v3837
        %v4048 = vunpack.c.l.s4 1983009808
        %v4049 = vunpack.c.0.s8 %v4048
        %v4050 = vlaneseq
        %v4051 = vshrl.u32 %v4050, 7
        %v4052 = vsub.s32 %v4049, %v4051
        %v4053 = vrot.slane %v4046, %v4052
        %v4054 = vcombine.low %v3843, %v3855
        %v4056 = vunpack.c.l.s4 1983009808
        %v4057 = vunpack.c.0.s8 %v4056
        %v4058 = vlaneseq
        %v4059 = vshrl.u32 %v4058, 7
        %v4060 = vsub.s32 %v4057, %v4059
        %v4061 = vrot.slane %v4054, %v4060
        %v4062 = vcombine.low %v3849, %v3861
        %v4064 = vunpack.c.l.s4 1983009808
        %v4065 = vunpack.c.0.s8 %v4064
        %v4066 = vlaneseq
        %v4067 = vshrl.u32 %v4066, 7
        %v4068 = vsub.s32 %v4065, %v4067
        %v4069 = vrot.slane %v4062, %v4068
        %v4070 = vcombine.low %v4045, %v4053
        %v4071 = vcombine.high %v4045, %v4053
        %v4073 = vunpack.c.l.s4 1934713408
        %v4074 = vunpack.c.0.s8 %v4073
        %v4075 = vlaneseq
        %v4076 = vshrl.u32 %v4075, 7
        %v4077 = vsub.s32 %v4074, %v4076
        %v4078 = vrot.slane %v4070, %v4077
        %v4080 = vunpack.c.l.s4 1934713408
        %v4081 = vunpack.c.0.s8 %v4080
        %v4082 = vlaneseq
        %v4083 = vshrl.u32 %v4082, 7
        %v4084 = vsub.s32 %v4081, %v4083
        %v4085 = vrot.slane %v4071, %v4084
        %v4086 = vcombine.low %v4061, %v4069
        %v4087 = vcombine.high %v4061, %v4069
        %v4089 = vunpack.c.l.s4 1934713408
        %v4090 = vunpack.c.0.s8 %v4089
        %v4091 = vlaneseq
        %v4092 = vshrl.u32 %v4091, 7
        %v4093 = vsub.s32 %v4090, %v4092
        %v4094 = vrot.slane %v4086, %v4093
        %v4096 = vunpack.c.l.s4 1934713408
        %v4097 = vunpack.c.0.s8 %v4096
        %v4098 = vlaneseq
        %v4099 = vshrl.u32 %v4098, 7
        %v4100 = vsub.s32 %v4097, %v4099
        %v4101 = vrot.slane %v4087, %v4100
        %v4102 = vcombine.low %v4078, %v4094
        %v4103 = vcombine.high %v4078, %v4094
        %v4104 = vcombine.low %v4085, %v4101
        %v4105 = vcombine.high %v4085, %v4101
        %v4106 = vcombine.low %v3867, %v3879
        %v4108 = vunpack.c.l.s4 1983009808
        %v4109 = vunpack.c.0.s8 %v4108
        %v4110 = vlaneseq
        %v4111 = vshrl.u32 %v4110, 7
        %v4112 = vsub.s32 %v4109, %v4111
        %v4113 = vrot.slane %v4106, %v4112
        %v4114 = vcombine.low %v3873, %v3885
        %v4116 = vunpack.c.l.s4 1983009808
        %v4117 = vunpack.c.0.s8 %v4116
        %v4118 = vlaneseq
        %v4119 = vshrl.u32 %v4118, 7
        %v4120 = vsub.s32 %v4117, %v4119
        %v4121 = vrot.slane %v4114, %v4120
        %v4122 = vcombine.low %v3891, %v3903
        %v4124 = vunpack.c.l.s4 1983009808
        %v4125 = vunpack.c.0.s8 %v4124
        %v4126 = vlaneseq
        %v4127 = vshrl.u32 %v4126, 7
        %v4128 = vsub.s32 %v4125, %v4127
        %v4129 = vrot.slane %v4122, %v4128
        %v4130 = vcombine.low %v3897, %v3909
        %v4132 = vunpack.c.l.s4 1983009808
        %v4133 = vunpack.c.0.s8 %v4132
        %v4134 = vlaneseq
        %v4135 = vshrl.u32 %v4134, 7
        %v4136 = vsub.s32 %v4133, %v4135
        %v4137 = vrot.slane %v4130, %v4136
        %v4138 = vcombine.low %v4113, %v4121
        %v4139 = vcombine.high %v4113, %v4121
        %v4141 = vunpack.c.l.s4 1934713408
        %v4142 = vunpack.c.0.s8 %v4141
        %v4143 = vlaneseq
        %v4144 = vshrl.u32 %v4143, 7
        %v4145 = vsub.s32 %v4142, %v4144
        %v4146 = vrot.slane %v4138, %v4145
        %v4148 = vunpack.c.l.s4 1934713408
        %v4149 = vunpack.c.0.s8 %v4148
        %v4150 = vlaneseq
        %v4151 = vshrl.u32 %v4150, 7
        %v4152 = vsub.s32 %v4149, %v4151
        %v4153 = vrot.slane %v4139, %v4152
        %v4154 = vcombine.low %v4129, %v4137
        %v4155 = vcombine.high %v4129, %v4137
        %v4157 = vunpack.c.l.s4 1934713408
        %v4158 = vunpack.c.0.s8 %v4157
        %v4159 = vlaneseq
        %v4160 = vshrl.u32 %v4159, 7
        %v4161 = vsub.s32 %v4158, %v4160
        %v4162 = vrot.slane %v4154, %v4161
        %v4164 = vunpack.c.l.s4 1934713408
        %v4165 = vunpack.c.0.s8 %v4164
        %v4166 = vlaneseq
        %v4167 = vshrl.u32 %v4166, 7
        %v4168 = vsub.s32 %v4165, %v4167
        %v4169 = vrot.slane %v4155, %v4168
        %v4170 = vcombine.low %v4146, %v4162
        %v4171 = vcombine.high %v4146, %v4162
        %v4172 = vcombine.low %v4153, %v4169
        %v4173 = vcombine.high %v4153, %v4169
        %v4174 = vcombine.low %v3915, %v3927
        %v4176 = vunpack.c.l.s4 1983009808
        %v4177 = vunpack.c.0.s8 %v4176
        %v4178 = vlaneseq
        %v4179 = vshrl.u32 %v4178, 7
        %v4180 = vsub.s32 %v4177, %v4179
        %v4181 = vrot.slane %v4174, %v4180
        %v4182 = vcombine.low %v3921, %v3933
        %v4184 = vunpack.c.l.s4 1983009808
        %v4185 = vunpack.c.0.s8 %v4184
        %v4186 = vlaneseq
        %v4187 = vshrl.u32 %v4186, 7
        %v4188 = vsub.s32 %v4185, %v4187
        %v4189 = vrot.slane %v4182, %v4188
        %v4190 = vcombine.low %v3939, %v3951
        %v4192 = vunpack.c.l.s4 1983009808
        %v4193 = vunpack.c.0.s8 %v4192
        %v4194 = vlaneseq
        %v4195 = vshrl.u32 %v4194, 7
        %v4196 = vsub.s32 %v4193, %v4195
        %v4197 = vrot.slane %v4190, %v4196
        %v4198 = vcombine.low %v3945, %v3957
        %v4200 = vunpack.c.l.s4 1983009808
        %v4201 = vunpack.c.0.s8 %v4200
        %v4202 = vlaneseq
        %v4203 = vshrl.u32 %v4202, 7
        %v4204 = vsub.s32 %v4201, %v4203
        %v4205 = vrot.slane %v4198, %v4204
        %v4206 = vcombine.low %v4181, %v4189
        %v4207 = vcombine.high %v4181, %v4189
        %v4209 = vunpack.c.l.s4 1934713408
        %v4210 = vunpack.c.0.s8 %v4209
        %v4211 = vlaneseq
        %v4212 = vshrl.u32 %v4211, 7
        %v4213 = vsub.s32 %v4210, %v4212
        %v4214 = vrot.slane %v4206, %v4213
        %v4216 = vunpack.c.l.s4 1934713408
        %v4217 = vunpack.c.0.s8 %v4216
        %v4218 = vlaneseq
        %v4219 = vshrl.u32 %v4218, 7
        %v4220 = vsub.s32 %v4217, %v4219
        %v4221 = vrot.slane %v4207, %v4220
        %v4222 = vcombine.low %v4197, %v4205
        %v4223 = vcombine.high %v4197, %v4205
        %v4225 = vunpack.c.l.s4 1934713408
        %v4226 = vunpack.c.0.s8 %v4225
        %v4227 = vlaneseq
        %v4228 = vshrl.u32 %v4227, 7
        %v4229 = vsub.s32 %v4226, %v4228
        %v4230 = vrot.slane %v4222, %v4229
        %v4232 = vunpack.c.l.s4 1934713408
        %v4233 = vunpack.c.0.s8 %v4232
        %v4234 = vlaneseq
        %v4235 = vshrl.u32 %v4234, 7
        %v4236 = vsub.s32 %v4233, %v4235
        %v4237 = vrot.slane %v4223, %v4236
        %v4238 = vcombine.low %v4214, %v4230
        %v4239 = vcombine.high %v4214, %v4230
        %v4240 = vcombine.low %v4221, %v4237
        %v4241 = vcombine.high %v4221, %v4237
        %v4242 = vcombine.low %v3963, %v3975
        %v4244 = vunpack.c.l.s4 1983009808
        %v4245 = vunpack.c.0.s8 %v4244
        %v4246 = vlaneseq
        %v4247 = vshrl.u32 %v4246, 7
        %v4248 = vsub.s32 %v4245, %v4247
        %v4249 = vrot.slane %v4242, %v4248
        %v4250 = vcombine.low %v3969, %v3981
        %v4252 = vunpack.c.l.s4 1983009808
        %v4253 = vunpack.c.0.s8 %v4252
        %v4254 = vlaneseq
        %v4255 = vshrl.u32 %v4254, 7
        %v4256 = vsub.s32 %v4253, %v4255
        %v4257 = vrot.slane %v4250, %v4256
        %v4258 = vcombine.low %v3987, %v3999
        %v4260 = vunpack.c.l.s4 1983009808
        %v4261 = vunpack.c.0.s8 %v4260
        %v4262 = vlaneseq
        %v4263 = vshrl.u32 %v4262, 7
        %v4264 = vsub.s32 %v4261, %v4263
        %v4265 = vrot.slane %v4258, %v4264
        %v4266 = vcombine.low %v3993, %v4005
        %v4268 = vunpack.c.l.s4 1983009808
        %v4269 = vunpack.c.0.s8 %v4268
        %v4270 = vlaneseq
        %v4271 = vshrl.u32 %v4270, 7
        %v4272 = vsub.s32 %v4269, %v4271
        %v4273 = vrot.slane %v4266, %v4272
        %v4274 = vcombine.low %v4249, %v4257
        %v4275 = vcombine.high %v4249, %v4257
        %v4277 = vunpack.c.l.s4 1934713408
        %v4278 = vunpack.c.0.s8 %v4277
        %v4279 = vlaneseq
        %v4280 = vshrl.u32 %v4279, 7
        %v4281 = vsub.s32 %v4278, %v4280
        %v4282 = vrot.slane %v4274, %v4281
        %v4284 = vunpack.c.l.s4 1934713408
        %v4285 = vunpack.c.0.s8 %v4284
        %v4286 = vlaneseq
        %v4287 = vshrl.u32 %v4286, 7
        %v4288 = vsub.s32 %v4285, %v4287
        %v4289 = vrot.slane %v4275, %v4288
        %v4290 = vcombine.low %v4265, %v4273
        %v4291 = vcombine.high %v4265, %v4273
        %v4293 = vunpack.c.l.s4 1934713408
        %v4294 = vunpack.c.0.s8 %v4293
        %v4295 = vlaneseq
        %v4296 = vshrl.u32 %v4295, 7
        %v4297 = vsub.s32 %v4294, %v4296
        %v4298 = vrot.slane %v4290, %v4297
        %v4300 = vunpack.c.l.s4 1934713408
        %v4301 = vunpack.c.0.s8 %v4300
        %v4302 = vlaneseq
        %v4303 = vshrl.u32 %v4302, 7
        %v4304 = vsub.s32 %v4301, %v4303
        %v4305 = vrot.slane %v4291, %v4304
        %v4306 = vcombine.low %v4282, %v4298
        %v4307 = vcombine.high %v4282, %v4298
        %v4308 = vcombine.low %v4289, %v4305
        %v4309 = vcombine.high %v4289, %v4305
        %vm4310 = vcmask 15360
        %v4311 = vsel %vm4310, %v4102, 0.0
        %4312 = vadd.xlane.f32.xlu0 %v4311
        %v4313 = vpop.xlane.xlu0 %4312
        %v4314 = vsel %vm4310, %v4170, 0.0
        %4315 = vadd.xlane.f32.xlu0 %v4314
        %v4316 = vpop.xlane.xlu0 %4315
        %v4317 = vsel %vm4310, %v4238, 0.0
        %4318 = vadd.xlane.f32.xlu0 %v4317
        %v4319 = vpop.xlane.xlu0 %4318
        %v4320 = vsel %vm4310, %v4306, 0.0
        %4321 = vadd.xlane.f32.xlu0 %v4320
        %v4322 = vpop.xlane.xlu0 %4321
        %v4323 = vsel %vm4310, %v4103, 0.0
        %4324 = vadd.xlane.f32.xlu0 %v4323
        %v4325 = vpop.xlane.xlu0 %4324
        %v4326 = vsel %vm4310, %v4171, 0.0
        %4327 = vadd.xlane.f32.xlu0 %v4326
        %v4328 = vpop.xlane.xlu0 %4327
        %v4329 = vsel %vm4310, %v4239, 0.0
        %4330 = vadd.xlane.f32.xlu0 %v4329
        %v4331 = vpop.xlane.xlu0 %4330
        %v4332 = vsel %vm4310, %v4307, 0.0
        %4333 = vadd.xlane.f32.xlu0 %v4332
        %v4334 = vpop.xlane.xlu0 %4333
        %v4335 = vsel %vm4310, %v4104, 0.0
        %4336 = vadd.xlane.f32.xlu0 %v4335
        %v4337 = vpop.xlane.xlu0 %4336
        %v4338 = vsel %vm4310, %v4172, 0.0
        %4339 = vadd.xlane.f32.xlu0 %v4338
        %v4340 = vpop.xlane.xlu0 %4339
        %v4341 = vsel %vm4310, %v4240, 0.0
        %4342 = vadd.xlane.f32.xlu0 %v4341
        %v4343 = vpop.xlane.xlu0 %4342
        %v4344 = vsel %vm4310, %v4308, 0.0
        %4345 = vadd.xlane.f32.xlu0 %v4344
        %v4346 = vpop.xlane.xlu0 %4345
        %v4347 = vsel %vm4310, %v4105, 0.0
        %4348 = vadd.xlane.f32.xlu0 %v4347
        %v4349 = vpop.xlane.xlu0 %4348
        %v4350 = vsel %vm4310, %v4173, 0.0
        %4351 = vadd.xlane.f32.xlu0 %v4350
        %v4352 = vpop.xlane.xlu0 %4351
        %v4353 = vsel %vm4310, %v4241, 0.0
        %4354 = vadd.xlane.f32.xlu0 %v4353
        %v4355 = vpop.xlane.xlu0 %4354
        %v4356 = vsel %vm4310, %v4309, 0.0
        %4357 = vadd.xlane.f32.xlu0 %v4356
        %v4358 = vpop.xlane.xlu0 %4357
        %v4359 = vmul.f32 %v4313, 0.0078125
        %v4360 = vmul.f32 %v4316, 0.0078125
        %v4361 = vmul.f32 %v4319, 0.0078125
        %v4362 = vmul.f32 %v4322, 0.0078125
        %v4363 = vmul.f32 %v4325, 0.0078125
        %v4364 = vmul.f32 %v4328, 0.0078125
        %v4365 = vmul.f32 %v4331, 0.0078125
        %v4366 = vmul.f32 %v4334, 0.0078125
        %v4367 = vmul.f32 %v4337, 0.0078125
        %v4368 = vmul.f32 %v4340, 0.0078125
        %v4369 = vmul.f32 %v4343, 0.0078125
        %v4370 = vmul.f32 %v4346, 0.0078125
        %v4371 = vmul.f32 %v4349, 0.0078125
        %v4372 = vmul.f32 %v4352, 0.0078125
        %v4373 = vmul.f32 %v4355, 0.0078125
        %v4374 = vmul.f32 %v4358, 0.0078125
        %v4375 = vcombine.low %v4359, %v4367
        %v4376 = vcombine.high %v4359, %v4367
        %v4378 = vunpack.c.l.s4 1983009808
        %v4379 = vunpack.c.0.s8 %v4378
        %v4380 = vlaneseq
        %v4381 = vshrl.u32 %v4380, 7
        %v4382 = vsub.s32 %v4379, %v4381
        %v4383 = vrot.slane %v4375, %v4382
        %v4385 = vunpack.c.l.s4 1983009808
        %v4386 = vunpack.c.0.s8 %v4385
        %v4387 = vlaneseq
        %v4388 = vshrl.u32 %v4387, 7
        %v4389 = vsub.s32 %v4386, %v4388
        %v4390 = vrot.slane %v4376, %v4389
        %v4391 = vcombine.low %v4363, %v4371
        %v4392 = vcombine.high %v4363, %v4371
        %v4394 = vunpack.c.l.s4 1983009808
        %v4395 = vunpack.c.0.s8 %v4394
        %v4396 = vlaneseq
        %v4397 = vshrl.u32 %v4396, 7
        %v4398 = vsub.s32 %v4395, %v4397
        %v4399 = vrot.slane %v4391, %v4398
        %v4401 = vunpack.c.l.s4 1983009808
        %v4402 = vunpack.c.0.s8 %v4401
        %v4403 = vlaneseq
        %v4404 = vshrl.u32 %v4403, 7
        %v4405 = vsub.s32 %v4402, %v4404
        %v4406 = vrot.slane %v4392, %v4405
        %v4407 = vcombine.low %v4383, %v4399
        %v4408 = vcombine.high %v4383, %v4399
        %v4410 = vunpack.c.l.s4 1934713408
        %v4411 = vunpack.c.0.s8 %v4410
        %v4412 = vlaneseq
        %v4413 = vshrl.u32 %v4412, 7
        %v4414 = vsub.s32 %v4411, %v4413
        %v4415 = vrot.slane %v4407, %v4414
        %v4417 = vunpack.c.l.s4 1934713408
        %v4418 = vunpack.c.0.s8 %v4417
        %v4419 = vlaneseq
        %v4420 = vshrl.u32 %v4419, 7
        %v4421 = vsub.s32 %v4418, %v4420
        %v4422 = vrot.slane %v4408, %v4421
        %v4423 = vcombine.low %v4390, %v4406
        %v4424 = vcombine.high %v4390, %v4406
        %v4426 = vunpack.c.l.s4 1934713408
        %v4427 = vunpack.c.0.s8 %v4426
        %v4428 = vlaneseq
        %v4429 = vshrl.u32 %v4428, 7
        %v4430 = vsub.s32 %v4427, %v4429
        %v4431 = vrot.slane %v4423, %v4430
        %v4433 = vunpack.c.l.s4 1934713408
        %v4434 = vunpack.c.0.s8 %v4433
        %v4435 = vlaneseq
        %v4436 = vshrl.u32 %v4435, 7
        %v4437 = vsub.s32 %v4434, %v4436
        %v4438 = vrot.slane %v4424, %v4437
        %v4439 = vcombine.high %v4415, 0.0
        %v4440 = vcombine.high %v4422, 0.0
        %v4441 = vcombine.high %v4431, 0.0
        %v4442 = vcombine.high %v4438, 0.0
        %v4443 = vcombine.low %v4360, %v4368
        %v4444 = vcombine.high %v4360, %v4368
        %v4446 = vunpack.c.l.s4 1983009808
        %v4447 = vunpack.c.0.s8 %v4446
        %v4448 = vlaneseq
        %v4449 = vshrl.u32 %v4448, 7
        %v4450 = vsub.s32 %v4447, %v4449
        %v4451 = vrot.slane %v4443, %v4450
        %v4453 = vunpack.c.l.s4 1983009808
        %v4454 = vunpack.c.0.s8 %v4453
        %v4455 = vlaneseq
        %v4456 = vshrl.u32 %v4455, 7
        %v4457 = vsub.s32 %v4454, %v4456
        %v4458 = vrot.slane %v4444, %v4457
        %v4459 = vcombine.low %v4364, %v4372
        %v4460 = vcombine.high %v4364, %v4372
        %v4462 = vunpack.c.l.s4 1983009808
        %v4463 = vunpack.c.0.s8 %v4462
        %v4464 = vlaneseq
        %v4465 = vshrl.u32 %v4464, 7
        %v4466 = vsub.s32 %v4463, %v4465
        %v4467 = vrot.slane %v4459, %v4466
        %v4469 = vunpack.c.l.s4 1983009808
        %v4470 = vunpack.c.0.s8 %v4469
        %v4471 = vlaneseq
        %v4472 = vshrl.u32 %v4471, 7
        %v4473 = vsub.s32 %v4470, %v4472
        %v4474 = vrot.slane %v4460, %v4473
        %v4475 = vcombine.low %v4451, %v4467
        %v4476 = vcombine.high %v4451, %v4467
        %v4478 = vunpack.c.l.s4 1934713408
        %v4479 = vunpack.c.0.s8 %v4478
        %v4480 = vlaneseq
        %v4481 = vshrl.u32 %v4480, 7
        %v4482 = vsub.s32 %v4479, %v4481
        %v4483 = vrot.slane %v4475, %v4482
        %v4485 = vunpack.c.l.s4 1934713408
        %v4486 = vunpack.c.0.s8 %v4485
        %v4487 = vlaneseq
        %v4488 = vshrl.u32 %v4487, 7
        %v4489 = vsub.s32 %v4486, %v4488
        %v4490 = vrot.slane %v4476, %v4489
        %v4491 = vcombine.low %v4458, %v4474
        %v4492 = vcombine.high %v4458, %v4474
        %v4494 = vunpack.c.l.s4 1934713408
        %v4495 = vunpack.c.0.s8 %v4494
        %v4496 = vlaneseq
        %v4497 = vshrl.u32 %v4496, 7
        %v4498 = vsub.s32 %v4495, %v4497
        %v4499 = vrot.slane %v4491, %v4498
        %v4501 = vunpack.c.l.s4 1934713408
        %v4502 = vunpack.c.0.s8 %v4501
        %v4503 = vlaneseq
        %v4504 = vshrl.u32 %v4503, 7
        %v4505 = vsub.s32 %v4502, %v4504
        %v4506 = vrot.slane %v4492, %v4505
        %v4507 = vcombine.high %v4483, 0.0
        %v4508 = vcombine.high %v4490, 0.0
        %v4509 = vcombine.high %v4499, 0.0
        %v4510 = vcombine.high %v4506, 0.0
        %v4511 = vcombine.low %v4361, %v4369
        %v4512 = vcombine.high %v4361, %v4369
        %v4514 = vunpack.c.l.s4 1983009808
        %v4515 = vunpack.c.0.s8 %v4514
        %v4516 = vlaneseq
        %v4517 = vshrl.u32 %v4516, 7
        %v4518 = vsub.s32 %v4515, %v4517
        %v4519 = vrot.slane %v4511, %v4518
        %v4521 = vunpack.c.l.s4 1983009808
        %v4522 = vunpack.c.0.s8 %v4521
        %v4523 = vlaneseq
        %v4524 = vshrl.u32 %v4523, 7
        %v4525 = vsub.s32 %v4522, %v4524
        %v4526 = vrot.slane %v4512, %v4525
        %v4527 = vcombine.low %v4365, %v4373
        %v4528 = vcombine.high %v4365, %v4373
        %v4530 = vunpack.c.l.s4 1983009808
        %v4531 = vunpack.c.0.s8 %v4530
        %v4532 = vlaneseq
        %v4533 = vshrl.u32 %v4532, 7
        %v4534 = vsub.s32 %v4531, %v4533
        %v4535 = vrot.slane %v4527, %v4534
        %v4537 = vunpack.c.l.s4 1983009808
        %v4538 = vunpack.c.0.s8 %v4537
        %v4539 = vlaneseq
        %v4540 = vshrl.u32 %v4539, 7
        %v4541 = vsub.s32 %v4538, %v4540
        %v4542 = vrot.slane %v4528, %v4541
        %v4543 = vcombine.low %v4519, %v4535
        %v4544 = vcombine.high %v4519, %v4535
        %v4546 = vunpack.c.l.s4 1934713408
        %v4547 = vunpack.c.0.s8 %v4546
        %v4548 = vlaneseq
        %v4549 = vshrl.u32 %v4548, 7
        %v4550 = vsub.s32 %v4547, %v4549
        %v4551 = vrot.slane %v4543, %v4550
        %v4553 = vunpack.c.l.s4 1934713408
        %v4554 = vunpack.c.0.s8 %v4553
        %v4555 = vlaneseq
        %v4556 = vshrl.u32 %v4555, 7
        %v4557 = vsub.s32 %v4554, %v4556
        %v4558 = vrot.slane %v4544, %v4557
        %v4559 = vcombine.low %v4526, %v4542
        %v4560 = vcombine.high %v4526, %v4542
        %v4562 = vunpack.c.l.s4 1934713408
        %v4563 = vunpack.c.0.s8 %v4562
        %v4564 = vlaneseq
        %v4565 = vshrl.u32 %v4564, 7
        %v4566 = vsub.s32 %v4563, %v4565
        %v4567 = vrot.slane %v4559, %v4566
        %v4569 = vunpack.c.l.s4 1934713408
        %v4570 = vunpack.c.0.s8 %v4569
        %v4571 = vlaneseq
        %v4572 = vshrl.u32 %v4571, 7
        %v4573 = vsub.s32 %v4570, %v4572
        %v4574 = vrot.slane %v4560, %v4573
        %v4575 = vcombine.high %v4551, 0.0
        %v4576 = vcombine.high %v4558, 0.0
        %v4577 = vcombine.high %v4567, 0.0
        %v4578 = vcombine.high %v4574, 0.0
        %v4579 = vcombine.low %v4362, %v4370
        %v4580 = vcombine.high %v4362, %v4370
        %v4582 = vunpack.c.l.s4 1983009808
        %v4583 = vunpack.c.0.s8 %v4582
        %v4584 = vlaneseq
        %v4585 = vshrl.u32 %v4584, 7
        %v4586 = vsub.s32 %v4583, %v4585
        %v4587 = vrot.slane %v4579, %v4586
        %v4589 = vunpack.c.l.s4 1983009808
        %v4590 = vunpack.c.0.s8 %v4589
        %v4591 = vlaneseq
        %v4592 = vshrl.u32 %v4591, 7
        %v4593 = vsub.s32 %v4590, %v4592
        %v4594 = vrot.slane %v4580, %v4593
        %v4595 = vcombine.low %v4366, %v4374
        %v4596 = vcombine.high %v4366, %v4374
        %v4598 = vunpack.c.l.s4 1983009808
        %v4599 = vunpack.c.0.s8 %v4598
        %v4600 = vlaneseq
        %v4601 = vshrl.u32 %v4600, 7
        %v4602 = vsub.s32 %v4599, %v4601
        %v4603 = vrot.slane %v4595, %v4602
        %v4605 = vunpack.c.l.s4 1983009808
        %v4606 = vunpack.c.0.s8 %v4605
        %v4607 = vlaneseq
        %v4608 = vshrl.u32 %v4607, 7
        %v4609 = vsub.s32 %v4606, %v4608
        %v4610 = vrot.slane %v4596, %v4609
        %v4611 = vcombine.low %v4587, %v4603
        %v4612 = vcombine.high %v4587, %v4603
        %v4614 = vunpack.c.l.s4 1934713408
        %v4615 = vunpack.c.0.s8 %v4614
        %v4616 = vlaneseq
        %v4617 = vshrl.u32 %v4616, 7
        %v4618 = vsub.s32 %v4615, %v4617
        %v4619 = vrot.slane %v4611, %v4618
        %v4621 = vunpack.c.l.s4 1934713408
        %v4622 = vunpack.c.0.s8 %v4621
        %v4623 = vlaneseq
        %v4624 = vshrl.u32 %v4623, 7
        %v4625 = vsub.s32 %v4622, %v4624
        %v4626 = vrot.slane %v4612, %v4625
        %v4627 = vcombine.low %v4594, %v4610
        %v4628 = vcombine.high %v4594, %v4610
        %v4630 = vunpack.c.l.s4 1934713408
        %v4631 = vunpack.c.0.s8 %v4630
        %v4632 = vlaneseq
        %v4633 = vshrl.u32 %v4632, 7
        %v4634 = vsub.s32 %v4631, %v4633
        %v4635 = vrot.slane %v4627, %v4634
        %v4637 = vunpack.c.l.s4 1934713408
        %v4638 = vunpack.c.0.s8 %v4637
        %v4639 = vlaneseq
        %v4640 = vshrl.u32 %v4639, 7
        %v4641 = vsub.s32 %v4638, %v4640
        %v4642 = vrot.slane %v4628, %v4641
        %v4643 = vcombine.high %v4619, 0.0
        %v4644 = vcombine.high %v4626, 0.0
        %v4645 = vcombine.high %v4635, 0.0
        %v4646 = vcombine.high %v4642, 0.0
        %4648 = vrot.lane.b32.xlu0 %v4439, 2
        %v4649 = vpop.permute.xlu0 %4648
        %4652 = vrot.lane.b32.xlu0 %v4422, 4
        %v4653 = vpop.permute.xlu0 %4652
        %4656 = vrot.lane.b32.xlu0 %v4440, 6
        %v4657 = vpop.permute.xlu0 %4656
        %4660 = vrot.lane.b32.xlu0 %v4431, 8
        %v4661 = vpop.permute.xlu0 %4660
        %4664 = vrot.lane.b32.xlu0 %v4441, 10
        %v4665 = vpop.permute.xlu0 %4664
        %4668 = vrot.lane.b32.xlu0 %v4438, 12
        %v4669 = vpop.permute.xlu0 %4668
        %4672 = vrot.lane.b32.xlu0 %v4442, 14
        %v4673 = vpop.permute.xlu0 %4672
        %4676 = vrot.lane.b32.xlu0 %v4483, 16
        %v4677 = vpop.permute.xlu0 %4676
        %4680 = vrot.lane.b32.xlu0 %v4507, 18
        %v4681 = vpop.permute.xlu0 %4680
        %4684 = vrot.lane.b32.xlu0 %v4490, 20
        %v4685 = vpop.permute.xlu0 %4684
        %4688 = vrot.lane.b32.xlu0 %v4508, 22
        %v4689 = vpop.permute.xlu0 %4688
        %4692 = vrot.lane.b32.xlu0 %v4499, 24
        %v4693 = vpop.permute.xlu0 %4692
        %4696 = vrot.lane.b32.xlu0 %v4509, 26
        %v4697 = vpop.permute.xlu0 %4696
        %4700 = vrot.lane.b32.xlu0 %v4506, 28
        %v4701 = vpop.permute.xlu0 %4700
        %4704 = vrot.lane.b32.xlu0 %v4510, 30
        %v4705 = vpop.permute.xlu0 %4704
        %4708 = vrot.lane.b32.xlu0 %v4551, 32
        %v4709 = vpop.permute.xlu0 %4708
        %4712 = vrot.lane.b32.xlu0 %v4575, 34
        %v4713 = vpop.permute.xlu0 %4712
        %4716 = vrot.lane.b32.xlu0 %v4558, 36
        %v4717 = vpop.permute.xlu0 %4716
        %4720 = vrot.lane.b32.xlu0 %v4576, 38
        %v4721 = vpop.permute.xlu0 %4720
        %4724 = vrot.lane.b32.xlu0 %v4567, 40
        %v4725 = vpop.permute.xlu0 %4724
        %4728 = vrot.lane.b32.xlu0 %v4577, 42
        %v4729 = vpop.permute.xlu0 %4728
        %4732 = vrot.lane.b32.xlu0 %v4574, 44
        %v4733 = vpop.permute.xlu0 %4732
        %4736 = vrot.lane.b32.xlu0 %v4578, 46
        %v4737 = vpop.permute.xlu0 %4736
        %4740 = vrot.lane.b32.xlu0 %v4619, 48
        %v4741 = vpop.permute.xlu0 %4740
        %4744 = vrot.lane.b32.xlu0 %v4643, 50
        %v4745 = vpop.permute.xlu0 %4744
        %4748 = vrot.lane.b32.xlu0 %v4626, 52
        %v4749 = vpop.permute.xlu0 %4748
        %4752 = vrot.lane.b32.xlu0 %v4644, 54
        %v4753 = vpop.permute.xlu0 %4752
        %4756 = vrot.lane.b32.xlu0 %v4635, 56
        %v4757 = vpop.permute.xlu0 %4756
        %4760 = vrot.lane.b32.xlu0 %v4645, 58
        %v4761 = vpop.permute.xlu0 %4760
        %4764 = vrot.lane.b32.xlu0 %v4642, 60
        %v4765 = vpop.permute.xlu0 %4764
        %4768 = vrot.lane.b32.xlu0 %v4646, 62
        %v4769 = vpop.permute.xlu0 %4768
        %v4771 = vsel %vm4310, %v4415, %v4649
        %vm4772 = vcmask 31744
        %v4773 = vsel %vm4772, %v4771, %v4653
        %vm4774 = vcmask 48128
        %v4775 = vsel %vm4774, %v4773, %v4657
        %vm4776 = vcmask 64512
        %v4777 = vsel %vm4776, %v4775, %v4661
        %vm4778 = vcmask 80896
        %v4779 = vsel %vm4778, %v4777, %v4665
        %vm4780 = vcmask 97280
        %v4781 = vsel %vm4780, %v4779, %v4669
        %vm4782 = vcmask 113664
        %v4783 = vsel %vm4782, %v4781, %v4673
        %vm4784 = vcmask 130048
        %v4785 = vsel %vm4784, %v4783, %v4677
        %vm4786 = vcmask 146432
        %v4787 = vsel %vm4786, %v4785, %v4681
        %vm4788 = vcmask 162816
        %v4789 = vsel %vm4788, %v4787, %v4685
        %vm4790 = vcmask 179200
        %v4791 = vsel %vm4790, %v4789, %v4689
        %vm4792 = vcmask 195584
        %v4793 = vsel %vm4792, %v4791, %v4693
        %vm4794 = vcmask 211968
        %v4795 = vsel %vm4794, %v4793, %v4697
        %vm4796 = vcmask 228352
        %v4797 = vsel %vm4796, %v4795, %v4701
        %vm4798 = vcmask 244736
        %v4799 = vsel %vm4798, %v4797, %v4705
        %v4800 = vsel %vm850, %v4799, %v4709
        %vm4801 = vcmask 277504
        %v4802 = vsel %vm4801, %v4800, %v4713
        %vm4803 = vcmask 293888
        %v4804 = vsel %vm4803, %v4802, %v4717
        %vm4805 = vcmask 310272
        %v4806 = vsel %vm4805, %v4804, %v4721
        %vm4807 = vcmask 326656
        %v4808 = vsel %vm4807, %v4806, %v4725
        %vm4809 = vcmask 343040
        %v4810 = vsel %vm4809, %v4808, %v4729
        %vm4811 = vcmask 359424
        %v4812 = vsel %vm4811, %v4810, %v4733
        %vm4813 = vcmask 375808
        %v4814 = vsel %vm4813, %v4812, %v4737
        %vm4815 = vcmask 392192
        %v4816 = vsel %vm4815, %v4814, %v4741
        %vm4817 = vcmask 408576
        %v4818 = vsel %vm4817, %v4816, %v4745
        %vm4819 = vcmask 424960
        %v4820 = vsel %vm4819, %v4818, %v4749
        %vm4821 = vcmask 441344
        %v4822 = vsel %vm4821, %v4820, %v4753
        %vm4823 = vcmask 457728
        %v4824 = vsel %vm4823, %v4822, %v4757
        %vm4825 = vcmask 474112
        %v4826 = vsel %vm4825, %v4824, %v4761
        %vm4827 = vcmask 490496
        %v4828 = vsel %vm4827, %v4826, %v4765
        %vm4829 = vcmask 506880
        %v4830 = vsel %vm4829, %v4828, %v4769
        %4832 = vrot.lane.b32.xlu0 %v4830, 64
        %v4833 = vpop.permute.xlu0 %4832
        %v4835 = vsel %vm905, %v4830, %v4833
        %v4837 = vcombine.low %v4835, %v4835
        %v4839 = vunpack.c.l.s4 1966171168
        %v4840 = vunpack.c.0.s8 %v4839
        %v4841 = vlaneseq
        %v4842 = vshrl.u32 %v4841, 7
        %v4843 = vsub.s32 %v4840, %v4842
        %v4844 = vrot.slane %v4837, %v4843
        %v4845 = vcombine.low %v4844, %v4844
        %v4846 = vcombine.high %v4844, %v4844
        %v4848 = vunpack.c.l.s4 1966171168
        %v4849 = vunpack.c.0.s8 %v4848
        %v4850 = vlaneseq
        %v4851 = vshrl.u32 %v4850, 7
        %v4852 = vsub.s32 %v4849, %v4851
        %v4853 = vrot.slane %v4845, %v4852
        %v4855 = vunpack.c.l.s4 1966171168
        %v4856 = vunpack.c.0.s8 %v4855
        %v4857 = vlaneseq
        %v4858 = vshrl.u32 %v4857, 7
        %v4859 = vsub.s32 %v4856, %v4858
        %v4860 = vrot.slane %v4846, %v4859
        %v4861 = vcombine.high %v4853, %v4853
        %v4862 = vcombine.high %v4860, %v4860
        %v4863 = vlaneseq
        %v4864 = vshrl.u32 %v4863, 7
        %v4865 = vsub.s32 0, %v4864
        %v4866 = vrot.slane %v4853, %v4865
        %v4867 = vlaneseq
        %v4868 = vshrl.u32 %v4867, 7
        %v4869 = vsub.s32 1, %v4868
        %v4870 = vrot.slane %v4853, %v4869
        %v4871 = vlaneseq
        %v4872 = vshrl.u32 %v4871, 7
        %v4873 = vsub.s32 2, %v4872
        %v4874 = vrot.slane %v4853, %v4873
        %v4875 = vlaneseq
        %v4876 = vshrl.u32 %v4875, 7
        %v4877 = vsub.s32 3, %v4876
        %v4878 = vrot.slane %v4853, %v4877
        %v4879 = vlaneseq
        %v4880 = vshrl.u32 %v4879, 7
        %v4881 = vsub.s32 0, %v4880
        %v4882 = vrot.slane %v4860, %v4881
        %v4883 = vlaneseq
        %v4884 = vshrl.u32 %v4883, 7
        %v4885 = vsub.s32 1, %v4884
        %v4886 = vrot.slane %v4860, %v4885
        %v4887 = vlaneseq
        %v4888 = vshrl.u32 %v4887, 7
        %v4889 = vsub.s32 2, %v4888
        %v4890 = vrot.slane %v4860, %v4889
        %v4891 = vlaneseq
        %v4892 = vshrl.u32 %v4891, 7
        %v4893 = vsub.s32 3, %v4892
        %v4894 = vrot.slane %v4860, %v4893
        %v4895 = vlaneseq
        %v4896 = vshrl.u32 %v4895, 7
        %v4897 = vsub.s32 0, %v4896
        %v4898 = vrot.slane %v4861, %v4897
        %v4899 = vlaneseq
        %v4900 = vshrl.u32 %v4899, 7
        %v4901 = vsub.s32 1, %v4900
        %v4902 = vrot.slane %v4861, %v4901
        %v4903 = vlaneseq
        %v4904 = vshrl.u32 %v4903, 7
        %v4905 = vsub.s32 2, %v4904
        %v4906 = vrot.slane %v4861, %v4905
        %v4907 = vlaneseq
        %v4908 = vshrl.u32 %v4907, 7
        %v4909 = vsub.s32 3, %v4908
        %v4910 = vrot.slane %v4861, %v4909
        %v4911 = vlaneseq
        %v4912 = vshrl.u32 %v4911, 7
        %v4913 = vsub.s32 0, %v4912
        %v4914 = vrot.slane %v4862, %v4913
        %v4915 = vlaneseq
        %v4916 = vshrl.u32 %v4915, 7
        %v4917 = vsub.s32 1, %v4916
        %v4918 = vrot.slane %v4862, %v4917
        %v4919 = vlaneseq
        %v4920 = vshrl.u32 %v4919, 7
        %v4921 = vsub.s32 2, %v4920
        %v4922 = vrot.slane %v4862, %v4921
        %v4923 = vlaneseq
        %v4924 = vshrl.u32 %v4923, 7
        %v4925 = vsub.s32 3, %v4924
        %v4926 = vrot.slane %v4862, %v4925
        %v4943 = vsub.f32 %v3248, %v4866
        %v4944 = vsub.f32 %v3249, %v4870
        %v4945 = vsub.f32 %v3250, %v4874
        %v4946 = vsub.f32 %v3251, %v4878
        %v4947 = vsub.f32 %v3252, %v4882
        %v4948 = vsub.f32 %v3253, %v4886
        %v4949 = vsub.f32 %v3254, %v4890
        %v4950 = vsub.f32 %v3255, %v4894
        %v4951 = vsub.f32 %v3256, %v4898
        %v4952 = vsub.f32 %v3257, %v4902
        %v4953 = vsub.f32 %v3258, %v4906
        %v4954 = vsub.f32 %v3259, %v4910
        %v4955 = vsub.f32 %v3260, %v4914
        %v4956 = vsub.f32 %v3261, %v4918
        %v4957 = vsub.f32 %v3262, %v4922
        %v4958 = vsub.f32 %v3263, %v4926
        %v4959 = vmul.f32 %v4943, %v4943
        %v4960 = vmul.f32 %v4944, %v4944
        %v4961 = vmul.f32 %v4945, %v4945
        %v4962 = vmul.f32 %v4946, %v4946
        %v4963 = vmul.f32 %v4947, %v4947
        %v4964 = vmul.f32 %v4948, %v4948
        %v4965 = vmul.f32 %v4949, %v4949
        %v4966 = vmul.f32 %v4950, %v4950
        %v4967 = vmul.f32 %v4951, %v4951
        %v4968 = vmul.f32 %v4952, %v4952
        %v4969 = vmul.f32 %v4953, %v4953
        %v4970 = vmul.f32 %v4954, %v4954
        %v4971 = vmul.f32 %v4955, %v4955
        %v4972 = vmul.f32 %v4956, %v4956
        %v4973 = vmul.f32 %v4957, %v4957
        %v4974 = vmul.f32 %v4958, %v4958
        %v4975 = vrot.slane %v4959, 4
        %v4976 = vadd.f32 %v4959, %v4975
        %v4977 = vrot.slane %v4976, 2
        %v4978 = vadd.f32 %v4976, %v4977
        %v4979 = vrot.slane %v4978, 1
        %v4980 = vadd.f32 %v4978, %v4979
        %v4981 = vrot.slane %v4960, 4
        %v4982 = vadd.f32 %v4960, %v4981
        %v4983 = vrot.slane %v4982, 2
        %v4984 = vadd.f32 %v4982, %v4983
        %v4985 = vrot.slane %v4984, 1
        %v4986 = vadd.f32 %v4984, %v4985
        %v4987 = vrot.slane %v4961, 4
        %v4988 = vadd.f32 %v4961, %v4987
        %v4989 = vrot.slane %v4988, 2
        %v4990 = vadd.f32 %v4988, %v4989
        %v4991 = vrot.slane %v4990, 1
        %v4992 = vadd.f32 %v4990, %v4991
        %v4993 = vrot.slane %v4962, 4
        %v4994 = vadd.f32 %v4962, %v4993
        %v4995 = vrot.slane %v4994, 2
        %v4996 = vadd.f32 %v4994, %v4995
        %v4997 = vrot.slane %v4996, 1
        %v4998 = vadd.f32 %v4996, %v4997
        %v4999 = vrot.slane %v4963, 4
        %v5000 = vadd.f32 %v4963, %v4999
        %v5001 = vrot.slane %v5000, 2
        %v5002 = vadd.f32 %v5000, %v5001
        %v5003 = vrot.slane %v5002, 1
        %v5004 = vadd.f32 %v5002, %v5003
        %v5005 = vrot.slane %v4964, 4
        %v5006 = vadd.f32 %v4964, %v5005
        %v5007 = vrot.slane %v5006, 2
        %v5008 = vadd.f32 %v5006, %v5007
        %v5009 = vrot.slane %v5008, 1
        %v5010 = vadd.f32 %v5008, %v5009
        %v5011 = vrot.slane %v4965, 4
        %v5012 = vadd.f32 %v4965, %v5011
        %v5013 = vrot.slane %v5012, 2
        %v5014 = vadd.f32 %v5012, %v5013
        %v5015 = vrot.slane %v5014, 1
        %v5016 = vadd.f32 %v5014, %v5015
        %v5017 = vrot.slane %v4966, 4
        %v5018 = vadd.f32 %v4966, %v5017
        %v5019 = vrot.slane %v5018, 2
        %v5020 = vadd.f32 %v5018, %v5019
        %v5021 = vrot.slane %v5020, 1
        %v5022 = vadd.f32 %v5020, %v5021
        %v5023 = vrot.slane %v4967, 4
        %v5024 = vadd.f32 %v4967, %v5023
        %v5025 = vrot.slane %v5024, 2
        %v5026 = vadd.f32 %v5024, %v5025
        %v5027 = vrot.slane %v5026, 1
        %v5028 = vadd.f32 %v5026, %v5027
        %v5029 = vrot.slane %v4968, 4
        %v5030 = vadd.f32 %v4968, %v5029
        %v5031 = vrot.slane %v5030, 2
        %v5032 = vadd.f32 %v5030, %v5031
        %v5033 = vrot.slane %v5032, 1
        %v5034 = vadd.f32 %v5032, %v5033
        %v5035 = vrot.slane %v4969, 4
        %v5036 = vadd.f32 %v4969, %v5035
        %v5037 = vrot.slane %v5036, 2
        %v5038 = vadd.f32 %v5036, %v5037
        %v5039 = vrot.slane %v5038, 1
        %v5040 = vadd.f32 %v5038, %v5039
        %v5041 = vrot.slane %v4970, 4
        %v5042 = vadd.f32 %v4970, %v5041
        %v5043 = vrot.slane %v5042, 2
        %v5044 = vadd.f32 %v5042, %v5043
        %v5045 = vrot.slane %v5044, 1
        %v5046 = vadd.f32 %v5044, %v5045
        %v5047 = vrot.slane %v4971, 4
        %v5048 = vadd.f32 %v4971, %v5047
        %v5049 = vrot.slane %v5048, 2
        %v5050 = vadd.f32 %v5048, %v5049
        %v5051 = vrot.slane %v5050, 1
        %v5052 = vadd.f32 %v5050, %v5051
        %v5053 = vrot.slane %v4972, 4
        %v5054 = vadd.f32 %v4972, %v5053
        %v5055 = vrot.slane %v5054, 2
        %v5056 = vadd.f32 %v5054, %v5055
        %v5057 = vrot.slane %v5056, 1
        %v5058 = vadd.f32 %v5056, %v5057
        %v5059 = vrot.slane %v4973, 4
        %v5060 = vadd.f32 %v4973, %v5059
        %v5061 = vrot.slane %v5060, 2
        %v5062 = vadd.f32 %v5060, %v5061
        %v5063 = vrot.slane %v5062, 1
        %v5064 = vadd.f32 %v5062, %v5063
        %v5065 = vrot.slane %v4974, 4
        %v5066 = vadd.f32 %v4974, %v5065
        %v5067 = vrot.slane %v5066, 2
        %v5068 = vadd.f32 %v5066, %v5067
        %v5069 = vrot.slane %v5068, 1
        %v5070 = vadd.f32 %v5068, %v5069
        %5075 = vrot.lane.b32.xlu0 %v4980, 64
        %v5076 = vpop.permute.xlu0 %5075
        %5077 = vrot.lane.b32.xlu0 %v5004, 64
        %v5078 = vpop.permute.xlu0 %5077
        %5079 = vrot.lane.b32.xlu0 %v5028, 64
        %v5080 = vpop.permute.xlu0 %5079
        %5081 = vrot.lane.b32.xlu0 %v5052, 64
        %v5082 = vpop.permute.xlu0 %5081
        %5087 = vrot.lane.b32.xlu0 %v4986, 64
        %v5088 = vpop.permute.xlu0 %5087
        %5089 = vrot.lane.b32.xlu0 %v5010, 64
        %v5090 = vpop.permute.xlu0 %5089
        %5091 = vrot.lane.b32.xlu0 %v5034, 64
        %v5092 = vpop.permute.xlu0 %5091
        %5093 = vrot.lane.b32.xlu0 %v5058, 64
        %v5094 = vpop.permute.xlu0 %5093
        %5099 = vrot.lane.b32.xlu0 %v4992, 64
        %v5100 = vpop.permute.xlu0 %5099
        %5101 = vrot.lane.b32.xlu0 %v5016, 64
        %v5102 = vpop.permute.xlu0 %5101
        %5103 = vrot.lane.b32.xlu0 %v5040, 64
        %v5104 = vpop.permute.xlu0 %5103
        %5105 = vrot.lane.b32.xlu0 %v5064, 64
        %v5106 = vpop.permute.xlu0 %5105
        %5111 = vrot.lane.b32.xlu0 %v4998, 64
        %v5112 = vpop.permute.xlu0 %5111
        %5113 = vrot.lane.b32.xlu0 %v5022, 64
        %v5114 = vpop.permute.xlu0 %5113
        %5115 = vrot.lane.b32.xlu0 %v5046, 64
        %v5116 = vpop.permute.xlu0 %5115
        %5117 = vrot.lane.b32.xlu0 %v5070, 64
        %v5118 = vpop.permute.xlu0 %5117
        %v5119 = vrot.slane %v5004, 7
        %v5120 = vsel %vm724, %v5119, %v4980
        %v5121 = vrot.slane %v5028, 6
        %v5122 = vsel %vm727, %v5121, %v5120
        %v5123 = vrot.slane %v5052, 5
        %v5124 = vsel %vm730, %v5123, %v5122
        %v5125 = vrot.slane %v5078, 7
        %v5126 = vsel %vm724, %v5125, %v5076
        %v5127 = vrot.slane %v5080, 6
        %v5128 = vsel %vm727, %v5127, %v5126
        %v5129 = vrot.slane %v5082, 5
        %v5130 = vsel %vm730, %v5129, %v5128
        %v5131 = vrot.slane %v5010, 7
        %v5132 = vsel %vm724, %v5131, %v4986
        %v5133 = vrot.slane %v5034, 6
        %v5134 = vsel %vm727, %v5133, %v5132
        %v5135 = vrot.slane %v5058, 5
        %v5136 = vsel %vm730, %v5135, %v5134
        %v5137 = vrot.slane %v5090, 7
        %v5138 = vsel %vm724, %v5137, %v5088
        %v5139 = vrot.slane %v5092, 6
        %v5140 = vsel %vm727, %v5139, %v5138
        %v5141 = vrot.slane %v5094, 5
        %v5142 = vsel %vm730, %v5141, %v5140
        %v5143 = vrot.slane %v5016, 7
        %v5144 = vsel %vm724, %v5143, %v4992
        %v5145 = vrot.slane %v5040, 6
        %v5146 = vsel %vm727, %v5145, %v5144
        %v5147 = vrot.slane %v5064, 5
        %v5148 = vsel %vm730, %v5147, %v5146
        %v5149 = vrot.slane %v5102, 7
        %v5150 = vsel %vm724, %v5149, %v5100
        %v5151 = vrot.slane %v5104, 6
        %v5152 = vsel %vm727, %v5151, %v5150
        %v5153 = vrot.slane %v5106, 5
        %v5154 = vsel %vm730, %v5153, %v5152
        %v5155 = vrot.slane %v5022, 7
        %v5156 = vsel %vm724, %v5155, %v4998
        %v5157 = vrot.slane %v5046, 6
        %v5158 = vsel %vm727, %v5157, %v5156
        %v5159 = vrot.slane %v5070, 5
        %v5160 = vsel %vm730, %v5159, %v5158
        %v5161 = vrot.slane %v5114, 7
        %v5162 = vsel %vm724, %v5161, %v5112
        %v5163 = vrot.slane %v5116, 6
        %v5164 = vsel %vm727, %v5163, %v5162
        %v5165 = vrot.slane %v5118, 5
        %v5166 = vsel %vm730, %v5165, %v5164
        %v5175 = vcombine.low %v5124, %v5136
        %v5177 = vunpack.c.l.s4 1983009808
        %v5178 = vunpack.c.0.s8 %v5177
        %v5179 = vlaneseq
        %v5180 = vshrl.u32 %v5179, 7
        %v5181 = vsub.s32 %v5178, %v5180
        %v5182 = vrot.slane %v5175, %v5181
        %v5183 = vcombine.low %v5130, %v5142
        %v5185 = vunpack.c.l.s4 1983009808
        %v5186 = vunpack.c.0.s8 %v5185
        %v5187 = vlaneseq
        %v5188 = vshrl.u32 %v5187, 7
        %v5189 = vsub.s32 %v5186, %v5188
        %v5190 = vrot.slane %v5183, %v5189
        %v5191 = vcombine.low %v5148, %v5160
        %v5193 = vunpack.c.l.s4 1983009808
        %v5194 = vunpack.c.0.s8 %v5193
        %v5195 = vlaneseq
        %v5196 = vshrl.u32 %v5195, 7
        %v5197 = vsub.s32 %v5194, %v5196
        %v5198 = vrot.slane %v5191, %v5197
        %v5199 = vcombine.low %v5154, %v5166
        %v5201 = vunpack.c.l.s4 1983009808
        %v5202 = vunpack.c.0.s8 %v5201
        %v5203 = vlaneseq
        %v5204 = vshrl.u32 %v5203, 7
        %v5205 = vsub.s32 %v5202, %v5204
        %v5206 = vrot.slane %v5199, %v5205
        %v5207 = vcombine.low %v5182, %v5190
        %v5208 = vcombine.high %v5182, %v5190
        %v5210 = vunpack.c.l.s4 1934713408
        %v5211 = vunpack.c.0.s8 %v5210
        %v5212 = vlaneseq
        %v5213 = vshrl.u32 %v5212, 7
        %v5214 = vsub.s32 %v5211, %v5213
        %v5215 = vrot.slane %v5207, %v5214
        %v5217 = vunpack.c.l.s4 1934713408
        %v5218 = vunpack.c.0.s8 %v5217
        %v5219 = vlaneseq
        %v5220 = vshrl.u32 %v5219, 7
        %v5221 = vsub.s32 %v5218, %v5220
        %v5222 = vrot.slane %v5208, %v5221
        %v5223 = vcombine.low %v5198, %v5206
        %v5224 = vcombine.high %v5198, %v5206
        %v5226 = vunpack.c.l.s4 1934713408
        %v5227 = vunpack.c.0.s8 %v5226
        %v5228 = vlaneseq
        %v5229 = vshrl.u32 %v5228, 7
        %v5230 = vsub.s32 %v5227, %v5229
        %v5231 = vrot.slane %v5223, %v5230
        %v5233 = vunpack.c.l.s4 1934713408
        %v5234 = vunpack.c.0.s8 %v5233
        %v5235 = vlaneseq
        %v5236 = vshrl.u32 %v5235, 7
        %v5237 = vsub.s32 %v5234, %v5236
        %v5238 = vrot.slane %v5224, %v5237
        %v5239 = vcombine.low %v5215, %v5231
        %v5240 = vcombine.high %v5215, %v5231
        %v5241 = vcombine.low %v5222, %v5238
        %v5242 = vcombine.high %v5222, %v5238
        %v5243 = vsel %vm905, %v5239, 0.0
        %v5244 = vrot.slane %v5243, 4
        %v5245 = vadd.f32 %v5243, %v5244
        %v5246 = vrot.slane %v5245, 2
        %v5247 = vadd.f32 %v5245, %v5246
        %v5248 = vrot.slane %v5247, 1
        %v5249 = vadd.f32 %v5247, %v5248
        %v5250 = vsel %vm905, %v5240, 0.0
        %v5251 = vrot.slane %v5250, 4
        %v5252 = vadd.f32 %v5250, %v5251
        %v5253 = vrot.slane %v5252, 2
        %v5254 = vadd.f32 %v5252, %v5253
        %v5255 = vrot.slane %v5254, 1
        %v5256 = vadd.f32 %v5254, %v5255
        %v5257 = vsel %vm905, %v5241, 0.0
        %v5258 = vrot.slane %v5257, 4
        %v5259 = vadd.f32 %v5257, %v5258
        %v5260 = vrot.slane %v5259, 2
        %v5261 = vadd.f32 %v5259, %v5260
        %v5262 = vrot.slane %v5261, 1
        %v5263 = vadd.f32 %v5261, %v5262
        %v5264 = vsel %vm905, %v5242, 0.0
        %v5265 = vrot.slane %v5264, 4
        %v5266 = vadd.f32 %v5264, %v5265
        %v5267 = vrot.slane %v5266, 2
        %v5268 = vadd.f32 %v5266, %v5267
        %v5269 = vrot.slane %v5268, 1
        %v5270 = vadd.f32 %v5268, %v5269
        %5275 = vrot.lane.b32.xlu0 %v5249, 126
        %v5276 = vpop.permute.xlu0 %5275
        %5277 = vrot.lane.b32.xlu0 %v5256, 126
        %v5278 = vpop.permute.xlu0 %5277
        %5279 = vrot.lane.b32.xlu0 %v5263, 126
        %v5280 = vpop.permute.xlu0 %5279
        %5281 = vrot.lane.b32.xlu0 %v5270, 126
        %v5282 = vpop.permute.xlu0 %5281
        %5283 = vrot.lane.b32.xlu0 %v5249, 124
        %v5284 = vpop.permute.xlu0 %5283
        %5285 = vrot.lane.b32.xlu0 %v5256, 124
        %v5286 = vpop.permute.xlu0 %5285
        %5287 = vrot.lane.b32.xlu0 %v5263, 124
        %v5288 = vpop.permute.xlu0 %5287
        %5289 = vrot.lane.b32.xlu0 %v5270, 124
        %v5290 = vpop.permute.xlu0 %5289
        %5291 = vrot.lane.b32.xlu0 %v5249, 122
        %v5292 = vpop.permute.xlu0 %5291
        %5293 = vrot.lane.b32.xlu0 %v5256, 122
        %v5294 = vpop.permute.xlu0 %5293
        %5295 = vrot.lane.b32.xlu0 %v5263, 122
        %v5296 = vpop.permute.xlu0 %5295
        %5297 = vrot.lane.b32.xlu0 %v5270, 122
        %v5298 = vpop.permute.xlu0 %5297
        %5299 = vrot.lane.b32.xlu0 %v5249, 120
        %v5300 = vpop.permute.xlu0 %5299
        %5301 = vrot.lane.b32.xlu0 %v5256, 120
        %v5302 = vpop.permute.xlu0 %5301
        %5303 = vrot.lane.b32.xlu0 %v5263, 120
        %v5304 = vpop.permute.xlu0 %5303
        %5305 = vrot.lane.b32.xlu0 %v5270, 120
        %v5306 = vpop.permute.xlu0 %5305
        %5307 = vrot.lane.b32.xlu0 %v5249, 118
        %v5308 = vpop.permute.xlu0 %5307
        %5309 = vrot.lane.b32.xlu0 %v5256, 118
        %v5310 = vpop.permute.xlu0 %5309
        %5311 = vrot.lane.b32.xlu0 %v5263, 118
        %v5312 = vpop.permute.xlu0 %5311
        %5313 = vrot.lane.b32.xlu0 %v5270, 118
        %v5314 = vpop.permute.xlu0 %5313
        %5315 = vrot.lane.b32.xlu0 %v5249, 116
        %v5316 = vpop.permute.xlu0 %5315
        %5317 = vrot.lane.b32.xlu0 %v5256, 116
        %v5318 = vpop.permute.xlu0 %5317
        %5319 = vrot.lane.b32.xlu0 %v5263, 116
        %v5320 = vpop.permute.xlu0 %5319
        %5321 = vrot.lane.b32.xlu0 %v5270, 116
        %v5322 = vpop.permute.xlu0 %5321
        %5323 = vrot.lane.b32.xlu0 %v5249, 114
        %v5324 = vpop.permute.xlu0 %5323
        %5325 = vrot.lane.b32.xlu0 %v5256, 114
        %v5326 = vpop.permute.xlu0 %5325
        %5327 = vrot.lane.b32.xlu0 %v5263, 114
        %v5328 = vpop.permute.xlu0 %5327
        %5329 = vrot.lane.b32.xlu0 %v5270, 114
        %v5330 = vpop.permute.xlu0 %5329
        %5331 = vrot.lane.b32.xlu0 %v5249, 112
        %v5332 = vpop.permute.xlu0 %5331
        %5333 = vrot.lane.b32.xlu0 %v5256, 112
        %v5334 = vpop.permute.xlu0 %5333
        %5335 = vrot.lane.b32.xlu0 %v5263, 112
        %v5336 = vpop.permute.xlu0 %5335
        %5337 = vrot.lane.b32.xlu0 %v5270, 112
        %v5338 = vpop.permute.xlu0 %5337
        %5339 = vrot.lane.b32.xlu0 %v5249, 110
        %v5340 = vpop.permute.xlu0 %5339
        %5341 = vrot.lane.b32.xlu0 %v5256, 110
        %v5342 = vpop.permute.xlu0 %5341
        %5343 = vrot.lane.b32.xlu0 %v5263, 110
        %v5344 = vpop.permute.xlu0 %5343
        %5345 = vrot.lane.b32.xlu0 %v5270, 110
        %v5346 = vpop.permute.xlu0 %5345
        %5347 = vrot.lane.b32.xlu0 %v5249, 108
        %v5348 = vpop.permute.xlu0 %5347
        %5349 = vrot.lane.b32.xlu0 %v5256, 108
        %v5350 = vpop.permute.xlu0 %5349
        %5351 = vrot.lane.b32.xlu0 %v5263, 108
        %v5352 = vpop.permute.xlu0 %5351
        %5353 = vrot.lane.b32.xlu0 %v5270, 108
        %v5354 = vpop.permute.xlu0 %5353
        %5355 = vrot.lane.b32.xlu0 %v5249, 106
        %v5356 = vpop.permute.xlu0 %5355
        %5357 = vrot.lane.b32.xlu0 %v5256, 106
        %v5358 = vpop.permute.xlu0 %5357
        %5359 = vrot.lane.b32.xlu0 %v5263, 106
        %v5360 = vpop.permute.xlu0 %5359
        %5361 = vrot.lane.b32.xlu0 %v5270, 106
        %v5362 = vpop.permute.xlu0 %5361
        %5363 = vrot.lane.b32.xlu0 %v5249, 104
        %v5364 = vpop.permute.xlu0 %5363
        %5365 = vrot.lane.b32.xlu0 %v5256, 104
        %v5366 = vpop.permute.xlu0 %5365
        %5367 = vrot.lane.b32.xlu0 %v5263, 104
        %v5368 = vpop.permute.xlu0 %5367
        %5369 = vrot.lane.b32.xlu0 %v5270, 104
        %v5370 = vpop.permute.xlu0 %5369
        %5371 = vrot.lane.b32.xlu0 %v5249, 102
        %v5372 = vpop.permute.xlu0 %5371
        %5373 = vrot.lane.b32.xlu0 %v5256, 102
        %v5374 = vpop.permute.xlu0 %5373
        %5375 = vrot.lane.b32.xlu0 %v5263, 102
        %v5376 = vpop.permute.xlu0 %5375
        %5377 = vrot.lane.b32.xlu0 %v5270, 102
        %v5378 = vpop.permute.xlu0 %5377
        %5379 = vrot.lane.b32.xlu0 %v5249, 100
        %v5380 = vpop.permute.xlu0 %5379
        %5381 = vrot.lane.b32.xlu0 %v5256, 100
        %v5382 = vpop.permute.xlu0 %5381
        %5383 = vrot.lane.b32.xlu0 %v5263, 100
        %v5384 = vpop.permute.xlu0 %5383
        %5385 = vrot.lane.b32.xlu0 %v5270, 100
        %v5386 = vpop.permute.xlu0 %5385
        %5387 = vrot.lane.b32.xlu0 %v5249, 98
        %v5388 = vpop.permute.xlu0 %5387
        %5389 = vrot.lane.b32.xlu0 %v5256, 98
        %v5390 = vpop.permute.xlu0 %5389
        %5391 = vrot.lane.b32.xlu0 %v5263, 98
        %v5392 = vpop.permute.xlu0 %5391
        %5393 = vrot.lane.b32.xlu0 %v5270, 98
        %v5394 = vpop.permute.xlu0 %5393
        %5395 = vrot.lane.b32.xlu0 %v5249, 96
        %v5396 = vpop.permute.xlu0 %5395
        %5397 = vrot.lane.b32.xlu0 %v5256, 96
        %v5398 = vpop.permute.xlu0 %5397
        %5399 = vrot.lane.b32.xlu0 %v5263, 96
        %v5400 = vpop.permute.xlu0 %5399
        %5401 = vrot.lane.b32.xlu0 %v5270, 96
        %v5402 = vpop.permute.xlu0 %5401
        %5403 = vrot.lane.b32.xlu0 %v5249, 94
        %v5404 = vpop.permute.xlu0 %5403
        %5405 = vrot.lane.b32.xlu0 %v5256, 94
        %v5406 = vpop.permute.xlu0 %5405
        %5407 = vrot.lane.b32.xlu0 %v5263, 94
        %v5408 = vpop.permute.xlu0 %5407
        %5409 = vrot.lane.b32.xlu0 %v5270, 94
        %v5410 = vpop.permute.xlu0 %5409
        %5411 = vrot.lane.b32.xlu0 %v5249, 92
        %v5412 = vpop.permute.xlu0 %5411
        %5413 = vrot.lane.b32.xlu0 %v5256, 92
        %v5414 = vpop.permute.xlu0 %5413
        %5415 = vrot.lane.b32.xlu0 %v5263, 92
        %v5416 = vpop.permute.xlu0 %5415
        %5417 = vrot.lane.b32.xlu0 %v5270, 92
        %v5418 = vpop.permute.xlu0 %5417
        %5419 = vrot.lane.b32.xlu0 %v5249, 90
        %v5420 = vpop.permute.xlu0 %5419
        %5421 = vrot.lane.b32.xlu0 %v5256, 90
        %v5422 = vpop.permute.xlu0 %5421
        %5423 = vrot.lane.b32.xlu0 %v5263, 90
        %v5424 = vpop.permute.xlu0 %5423
        %5425 = vrot.lane.b32.xlu0 %v5270, 90
        %v5426 = vpop.permute.xlu0 %5425
        %5427 = vrot.lane.b32.xlu0 %v5249, 88
        %v5428 = vpop.permute.xlu0 %5427
        %5429 = vrot.lane.b32.xlu0 %v5256, 88
        %v5430 = vpop.permute.xlu0 %5429
        %5431 = vrot.lane.b32.xlu0 %v5263, 88
        %v5432 = vpop.permute.xlu0 %5431
        %5433 = vrot.lane.b32.xlu0 %v5270, 88
        %v5434 = vpop.permute.xlu0 %5433
        %5435 = vrot.lane.b32.xlu0 %v5249, 86
        %v5436 = vpop.permute.xlu0 %5435
        %5437 = vrot.lane.b32.xlu0 %v5256, 86
        %v5438 = vpop.permute.xlu0 %5437
        %5439 = vrot.lane.b32.xlu0 %v5263, 86
        %v5440 = vpop.permute.xlu0 %5439
        %5441 = vrot.lane.b32.xlu0 %v5270, 86
        %v5442 = vpop.permute.xlu0 %5441
        %5443 = vrot.lane.b32.xlu0 %v5249, 84
        %v5444 = vpop.permute.xlu0 %5443
        %5445 = vrot.lane.b32.xlu0 %v5256, 84
        %v5446 = vpop.permute.xlu0 %5445
        %5447 = vrot.lane.b32.xlu0 %v5263, 84
        %v5448 = vpop.permute.xlu0 %5447
        %5449 = vrot.lane.b32.xlu0 %v5270, 84
        %v5450 = vpop.permute.xlu0 %5449
        %5451 = vrot.lane.b32.xlu0 %v5249, 82
        %v5452 = vpop.permute.xlu0 %5451
        %5453 = vrot.lane.b32.xlu0 %v5256, 82
        %v5454 = vpop.permute.xlu0 %5453
        %5455 = vrot.lane.b32.xlu0 %v5263, 82
        %v5456 = vpop.permute.xlu0 %5455
        %5457 = vrot.lane.b32.xlu0 %v5270, 82
        %v5458 = vpop.permute.xlu0 %5457
        %5459 = vrot.lane.b32.xlu0 %v5249, 80
        %v5460 = vpop.permute.xlu0 %5459
        %5461 = vrot.lane.b32.xlu0 %v5256, 80
        %v5462 = vpop.permute.xlu0 %5461
        %5463 = vrot.lane.b32.xlu0 %v5263, 80
        %v5464 = vpop.permute.xlu0 %5463
        %5465 = vrot.lane.b32.xlu0 %v5270, 80
        %v5466 = vpop.permute.xlu0 %5465
        %5467 = vrot.lane.b32.xlu0 %v5249, 78
        %v5468 = vpop.permute.xlu0 %5467
        %5469 = vrot.lane.b32.xlu0 %v5256, 78
        %v5470 = vpop.permute.xlu0 %5469
        %5471 = vrot.lane.b32.xlu0 %v5263, 78
        %v5472 = vpop.permute.xlu0 %5471
        %5473 = vrot.lane.b32.xlu0 %v5270, 78
        %v5474 = vpop.permute.xlu0 %5473
        %5475 = vrot.lane.b32.xlu0 %v5249, 76
        %v5476 = vpop.permute.xlu0 %5475
        %5477 = vrot.lane.b32.xlu0 %v5256, 76
        %v5478 = vpop.permute.xlu0 %5477
        %5479 = vrot.lane.b32.xlu0 %v5263, 76
        %v5480 = vpop.permute.xlu0 %5479
        %5481 = vrot.lane.b32.xlu0 %v5270, 76
        %v5482 = vpop.permute.xlu0 %5481
        %5483 = vrot.lane.b32.xlu0 %v5249, 74
        %v5484 = vpop.permute.xlu0 %5483
        %5485 = vrot.lane.b32.xlu0 %v5256, 74
        %v5486 = vpop.permute.xlu0 %5485
        %5487 = vrot.lane.b32.xlu0 %v5263, 74
        %v5488 = vpop.permute.xlu0 %5487
        %5489 = vrot.lane.b32.xlu0 %v5270, 74
        %v5490 = vpop.permute.xlu0 %5489
        %5491 = vrot.lane.b32.xlu0 %v5249, 72
        %v5492 = vpop.permute.xlu0 %5491
        %5493 = vrot.lane.b32.xlu0 %v5256, 72
        %v5494 = vpop.permute.xlu0 %5493
        %5495 = vrot.lane.b32.xlu0 %v5263, 72
        %v5496 = vpop.permute.xlu0 %5495
        %5497 = vrot.lane.b32.xlu0 %v5270, 72
        %v5498 = vpop.permute.xlu0 %5497
        %5499 = vrot.lane.b32.xlu0 %v5249, 70
        %v5500 = vpop.permute.xlu0 %5499
        %5501 = vrot.lane.b32.xlu0 %v5256, 70
        %v5502 = vpop.permute.xlu0 %5501
        %5503 = vrot.lane.b32.xlu0 %v5263, 70
        %v5504 = vpop.permute.xlu0 %5503
        %5505 = vrot.lane.b32.xlu0 %v5270, 70
        %v5506 = vpop.permute.xlu0 %5505
        %5507 = vrot.lane.b32.xlu0 %v5249, 68
        %v5508 = vpop.permute.xlu0 %5507
        %5509 = vrot.lane.b32.xlu0 %v5256, 68
        %v5510 = vpop.permute.xlu0 %5509
        %5511 = vrot.lane.b32.xlu0 %v5263, 68
        %v5512 = vpop.permute.xlu0 %5511
        %5513 = vrot.lane.b32.xlu0 %v5270, 68
        %v5514 = vpop.permute.xlu0 %5513
        %5515 = vrot.lane.b32.xlu0 %v5249, 66
        %v5516 = vpop.permute.xlu0 %5515
        %5517 = vrot.lane.b32.xlu0 %v5256, 66
        %v5518 = vpop.permute.xlu0 %5517
        %5519 = vrot.lane.b32.xlu0 %v5263, 66
        %v5520 = vpop.permute.xlu0 %5519
        %5521 = vrot.lane.b32.xlu0 %v5270, 66
        %v5522 = vpop.permute.xlu0 %5521
        %v5523 = vrot.slane %v5256, 7
        %v5524 = vsel %vm724, %v5523, %v5249
        %v5525 = vrot.slane %v5263, 6
        %v5526 = vsel %vm727, %v5525, %v5524
        %v5527 = vrot.slane %v5270, 5
        %v5528 = vsel %vm730, %v5527, %v5526
        %v5529 = vrot.slane %v5278, 7
        %v5530 = vsel %vm724, %v5529, %v5276
        %v5531 = vrot.slane %v5280, 6
        %v5532 = vsel %vm727, %v5531, %v5530
        %v5533 = vrot.slane %v5282, 5
        %v5534 = vsel %vm730, %v5533, %v5532
        %v5535 = vrot.slane %v5286, 7
        %v5536 = vsel %vm724, %v5535, %v5284
        %v5537 = vrot.slane %v5288, 6
        %v5538 = vsel %vm727, %v5537, %v5536
        %v5539 = vrot.slane %v5290, 5
        %v5540 = vsel %vm730, %v5539, %v5538
        %v5541 = vrot.slane %v5294, 7
        %v5542 = vsel %vm724, %v5541, %v5292
        %v5543 = vrot.slane %v5296, 6
        %v5544 = vsel %vm727, %v5543, %v5542
        %v5545 = vrot.slane %v5298, 5
        %v5546 = vsel %vm730, %v5545, %v5544
        %v5547 = vrot.slane %v5302, 7
        %v5548 = vsel %vm724, %v5547, %v5300
        %v5549 = vrot.slane %v5304, 6
        %v5550 = vsel %vm727, %v5549, %v5548
        %v5551 = vrot.slane %v5306, 5
        %v5552 = vsel %vm730, %v5551, %v5550
        %v5553 = vrot.slane %v5310, 7
        %v5554 = vsel %vm724, %v5553, %v5308
        %v5555 = vrot.slane %v5312, 6
        %v5556 = vsel %vm727, %v5555, %v5554
        %v5557 = vrot.slane %v5314, 5
        %v5558 = vsel %vm730, %v5557, %v5556
        %v5559 = vrot.slane %v5318, 7
        %v5560 = vsel %vm724, %v5559, %v5316
        %v5561 = vrot.slane %v5320, 6
        %v5562 = vsel %vm727, %v5561, %v5560
        %v5563 = vrot.slane %v5322, 5
        %v5564 = vsel %vm730, %v5563, %v5562
        %v5565 = vrot.slane %v5326, 7
        %v5566 = vsel %vm724, %v5565, %v5324
        %v5567 = vrot.slane %v5328, 6
        %v5568 = vsel %vm727, %v5567, %v5566
        %v5569 = vrot.slane %v5330, 5
        %v5570 = vsel %vm730, %v5569, %v5568
        %v5571 = vrot.slane %v5334, 7
        %v5572 = vsel %vm724, %v5571, %v5332
        %v5573 = vrot.slane %v5336, 6
        %v5574 = vsel %vm727, %v5573, %v5572
        %v5575 = vrot.slane %v5338, 5
        %v5576 = vsel %vm730, %v5575, %v5574
        %v5577 = vrot.slane %v5342, 7
        %v5578 = vsel %vm724, %v5577, %v5340
        %v5579 = vrot.slane %v5344, 6
        %v5580 = vsel %vm727, %v5579, %v5578
        %v5581 = vrot.slane %v5346, 5
        %v5582 = vsel %vm730, %v5581, %v5580
        %v5583 = vrot.slane %v5350, 7
        %v5584 = vsel %vm724, %v5583, %v5348
        %v5585 = vrot.slane %v5352, 6
        %v5586 = vsel %vm727, %v5585, %v5584
        %v5587 = vrot.slane %v5354, 5
        %v5588 = vsel %vm730, %v5587, %v5586
        %v5589 = vrot.slane %v5358, 7
        %v5590 = vsel %vm724, %v5589, %v5356
        %v5591 = vrot.slane %v5360, 6
        %v5592 = vsel %vm727, %v5591, %v5590
        %v5593 = vrot.slane %v5362, 5
        %v5594 = vsel %vm730, %v5593, %v5592
        %v5595 = vrot.slane %v5366, 7
        %v5596 = vsel %vm724, %v5595, %v5364
        %v5597 = vrot.slane %v5368, 6
        %v5598 = vsel %vm727, %v5597, %v5596
        %v5599 = vrot.slane %v5370, 5
        %v5600 = vsel %vm730, %v5599, %v5598
        %v5601 = vrot.slane %v5374, 7
        %v5602 = vsel %vm724, %v5601, %v5372
        %v5603 = vrot.slane %v5376, 6
        %v5604 = vsel %vm727, %v5603, %v5602
        %v5605 = vrot.slane %v5378, 5
        %v5606 = vsel %vm730, %v5605, %v5604
        %v5607 = vrot.slane %v5382, 7
        %v5608 = vsel %vm724, %v5607, %v5380
        %v5609 = vrot.slane %v5384, 6
        %v5610 = vsel %vm727, %v5609, %v5608
        %v5611 = vrot.slane %v5386, 5
        %v5612 = vsel %vm730, %v5611, %v5610
        %v5613 = vrot.slane %v5390, 7
        %v5614 = vsel %vm724, %v5613, %v5388
        %v5615 = vrot.slane %v5392, 6
        %v5616 = vsel %vm727, %v5615, %v5614
        %v5617 = vrot.slane %v5394, 5
        %v5618 = vsel %vm730, %v5617, %v5616
        %v5619 = vrot.slane %v5398, 7
        %v5620 = vsel %vm724, %v5619, %v5396
        %v5621 = vrot.slane %v5400, 6
        %v5622 = vsel %vm727, %v5621, %v5620
        %v5623 = vrot.slane %v5402, 5
        %v5624 = vsel %vm730, %v5623, %v5622
        %v5625 = vrot.slane %v5406, 7
        %v5626 = vsel %vm724, %v5625, %v5404
        %v5627 = vrot.slane %v5408, 6
        %v5628 = vsel %vm727, %v5627, %v5626
        %v5629 = vrot.slane %v5410, 5
        %v5630 = vsel %vm730, %v5629, %v5628
        %v5631 = vrot.slane %v5414, 7
        %v5632 = vsel %vm724, %v5631, %v5412
        %v5633 = vrot.slane %v5416, 6
        %v5634 = vsel %vm727, %v5633, %v5632
        %v5635 = vrot.slane %v5418, 5
        %v5636 = vsel %vm730, %v5635, %v5634
        %v5637 = vrot.slane %v5422, 7
        %v5638 = vsel %vm724, %v5637, %v5420
        %v5639 = vrot.slane %v5424, 6
        %v5640 = vsel %vm727, %v5639, %v5638
        %v5641 = vrot.slane %v5426, 5
        %v5642 = vsel %vm730, %v5641, %v5640
        %v5643 = vrot.slane %v5430, 7
        %v5644 = vsel %vm724, %v5643, %v5428
        %v5645 = vrot.slane %v5432, 6
        %v5646 = vsel %vm727, %v5645, %v5644
        %v5647 = vrot.slane %v5434, 5
        %v5648 = vsel %vm730, %v5647, %v5646
        %v5649 = vrot.slane %v5438, 7
        %v5650 = vsel %vm724, %v5649, %v5436
        %v5651 = vrot.slane %v5440, 6
        %v5652 = vsel %vm727, %v5651, %v5650
        %v5653 = vrot.slane %v5442, 5
        %v5654 = vsel %vm730, %v5653, %v5652
        %v5655 = vrot.slane %v5446, 7
        %v5656 = vsel %vm724, %v5655, %v5444
        %v5657 = vrot.slane %v5448, 6
        %v5658 = vsel %vm727, %v5657, %v5656
        %v5659 = vrot.slane %v5450, 5
        %v5660 = vsel %vm730, %v5659, %v5658
        %v5661 = vrot.slane %v5454, 7
        %v5662 = vsel %vm724, %v5661, %v5452
        %v5663 = vrot.slane %v5456, 6
        %v5664 = vsel %vm727, %v5663, %v5662
        %v5665 = vrot.slane %v5458, 5
        %v5666 = vsel %vm730, %v5665, %v5664
        %v5667 = vrot.slane %v5462, 7
        %v5668 = vsel %vm724, %v5667, %v5460
        %v5669 = vrot.slane %v5464, 6
        %v5670 = vsel %vm727, %v5669, %v5668
        %v5671 = vrot.slane %v5466, 5
        %v5672 = vsel %vm730, %v5671, %v5670
        %v5673 = vrot.slane %v5470, 7
        %v5674 = vsel %vm724, %v5673, %v5468
        %v5675 = vrot.slane %v5472, 6
        %v5676 = vsel %vm727, %v5675, %v5674
        %v5677 = vrot.slane %v5474, 5
        %v5678 = vsel %vm730, %v5677, %v5676
        %v5679 = vrot.slane %v5478, 7
        %v5680 = vsel %vm724, %v5679, %v5476
        %v5681 = vrot.slane %v5480, 6
        %v5682 = vsel %vm727, %v5681, %v5680
        %v5683 = vrot.slane %v5482, 5
        %v5684 = vsel %vm730, %v5683, %v5682
        %v5685 = vrot.slane %v5486, 7
        %v5686 = vsel %vm724, %v5685, %v5484
        %v5687 = vrot.slane %v5488, 6
        %v5688 = vsel %vm727, %v5687, %v5686
        %v5689 = vrot.slane %v5490, 5
        %v5690 = vsel %vm730, %v5689, %v5688
        %v5691 = vrot.slane %v5494, 7
        %v5692 = vsel %vm724, %v5691, %v5492
        %v5693 = vrot.slane %v5496, 6
        %v5694 = vsel %vm727, %v5693, %v5692
        %v5695 = vrot.slane %v5498, 5
        %v5696 = vsel %vm730, %v5695, %v5694
        %v5697 = vrot.slane %v5502, 7
        %v5698 = vsel %vm724, %v5697, %v5500
        %v5699 = vrot.slane %v5504, 6
        %v5700 = vsel %vm727, %v5699, %v5698
        %v5701 = vrot.slane %v5506, 5
        %v5702 = vsel %vm730, %v5701, %v5700
        %v5703 = vrot.slane %v5510, 7
        %v5704 = vsel %vm724, %v5703, %v5508
        %v5705 = vrot.slane %v5512, 6
        %v5706 = vsel %vm727, %v5705, %v5704
        %v5707 = vrot.slane %v5514, 5
        %v5708 = vsel %vm730, %v5707, %v5706
        %v5709 = vrot.slane %v5518, 7
        %v5710 = vsel %vm724, %v5709, %v5516
        %v5711 = vrot.slane %v5520, 6
        %v5712 = vsel %vm727, %v5711, %v5710
        %v5713 = vrot.slane %v5522, 5
        %v5714 = vsel %vm730, %v5713, %v5712
        %v5747 = vcombine.low %v5528, %v5540
        %v5749 = vunpack.c.l.s4 1983009808
        %v5750 = vunpack.c.0.s8 %v5749
        %v5751 = vlaneseq
        %v5752 = vshrl.u32 %v5751, 7
        %v5753 = vsub.s32 %v5750, %v5752
        %v5754 = vrot.slane %v5747, %v5753
        %v5755 = vcombine.low %v5534, %v5546
        %v5757 = vunpack.c.l.s4 1983009808
        %v5758 = vunpack.c.0.s8 %v5757
        %v5759 = vlaneseq
        %v5760 = vshrl.u32 %v5759, 7
        %v5761 = vsub.s32 %v5758, %v5760
        %v5762 = vrot.slane %v5755, %v5761
        %v5763 = vcombine.low %v5552, %v5564
        %v5765 = vunpack.c.l.s4 1983009808
        %v5766 = vunpack.c.0.s8 %v5765
        %v5767 = vlaneseq
        %v5768 = vshrl.u32 %v5767, 7
        %v5769 = vsub.s32 %v5766, %v5768
        %v5770 = vrot.slane %v5763, %v5769
        %v5771 = vcombine.low %v5558, %v5570
        %v5773 = vunpack.c.l.s4 1983009808
        %v5774 = vunpack.c.0.s8 %v5773
        %v5775 = vlaneseq
        %v5776 = vshrl.u32 %v5775, 7
        %v5777 = vsub.s32 %v5774, %v5776
        %v5778 = vrot.slane %v5771, %v5777
        %v5779 = vcombine.low %v5754, %v5762
        %v5780 = vcombine.high %v5754, %v5762
        %v5782 = vunpack.c.l.s4 1934713408
        %v5783 = vunpack.c.0.s8 %v5782
        %v5784 = vlaneseq
        %v5785 = vshrl.u32 %v5784, 7
        %v5786 = vsub.s32 %v5783, %v5785
        %v5787 = vrot.slane %v5779, %v5786
        %v5789 = vunpack.c.l.s4 1934713408
        %v5790 = vunpack.c.0.s8 %v5789
        %v5791 = vlaneseq
        %v5792 = vshrl.u32 %v5791, 7
        %v5793 = vsub.s32 %v5790, %v5792
        %v5794 = vrot.slane %v5780, %v5793
        %v5795 = vcombine.low %v5770, %v5778
        %v5796 = vcombine.high %v5770, %v5778
        %v5798 = vunpack.c.l.s4 1934713408
        %v5799 = vunpack.c.0.s8 %v5798
        %v5800 = vlaneseq
        %v5801 = vshrl.u32 %v5800, 7
        %v5802 = vsub.s32 %v5799, %v5801
        %v5803 = vrot.slane %v5795, %v5802
        %v5805 = vunpack.c.l.s4 1934713408
        %v5806 = vunpack.c.0.s8 %v5805
        %v5807 = vlaneseq
        %v5808 = vshrl.u32 %v5807, 7
        %v5809 = vsub.s32 %v5806, %v5808
        %v5810 = vrot.slane %v5796, %v5809
        %v5811 = vcombine.low %v5787, %v5803
        %v5812 = vcombine.high %v5787, %v5803
        %v5813 = vcombine.low %v5794, %v5810
        %v5814 = vcombine.high %v5794, %v5810
        %v5815 = vcombine.low %v5576, %v5588
        %v5817 = vunpack.c.l.s4 1983009808
        %v5818 = vunpack.c.0.s8 %v5817
        %v5819 = vlaneseq
        %v5820 = vshrl.u32 %v5819, 7
        %v5821 = vsub.s32 %v5818, %v5820
        %v5822 = vrot.slane %v5815, %v5821
        %v5823 = vcombine.low %v5582, %v5594
        %v5825 = vunpack.c.l.s4 1983009808
        %v5826 = vunpack.c.0.s8 %v5825
        %v5827 = vlaneseq
        %v5828 = vshrl.u32 %v5827, 7
        %v5829 = vsub.s32 %v5826, %v5828
        %v5830 = vrot.slane %v5823, %v5829
        %v5831 = vcombine.low %v5600, %v5612
        %v5833 = vunpack.c.l.s4 1983009808
        %v5834 = vunpack.c.0.s8 %v5833
        %v5835 = vlaneseq
        %v5836 = vshrl.u32 %v5835, 7
        %v5837 = vsub.s32 %v5834, %v5836
        %v5838 = vrot.slane %v5831, %v5837
        %v5839 = vcombine.low %v5606, %v5618
        %v5841 = vunpack.c.l.s4 1983009808
        %v5842 = vunpack.c.0.s8 %v5841
        %v5843 = vlaneseq
        %v5844 = vshrl.u32 %v5843, 7
        %v5845 = vsub.s32 %v5842, %v5844
        %v5846 = vrot.slane %v5839, %v5845
        %v5847 = vcombine.low %v5822, %v5830
        %v5848 = vcombine.high %v5822, %v5830
        %v5850 = vunpack.c.l.s4 1934713408
        %v5851 = vunpack.c.0.s8 %v5850
        %v5852 = vlaneseq
        %v5853 = vshrl.u32 %v5852, 7
        %v5854 = vsub.s32 %v5851, %v5853
        %v5855 = vrot.slane %v5847, %v5854
        %v5857 = vunpack.c.l.s4 1934713408
        %v5858 = vunpack.c.0.s8 %v5857
        %v5859 = vlaneseq
        %v5860 = vshrl.u32 %v5859, 7
        %v5861 = vsub.s32 %v5858, %v5860
        %v5862 = vrot.slane %v5848, %v5861
        %v5863 = vcombine.low %v5838, %v5846
        %v5864 = vcombine.high %v5838, %v5846
        %v5866 = vunpack.c.l.s4 1934713408
        %v5867 = vunpack.c.0.s8 %v5866
        %v5868 = vlaneseq
        %v5869 = vshrl.u32 %v5868, 7
        %v5870 = vsub.s32 %v5867, %v5869
        %v5871 = vrot.slane %v5863, %v5870
        %v5873 = vunpack.c.l.s4 1934713408
        %v5874 = vunpack.c.0.s8 %v5873
        %v5875 = vlaneseq
        %v5876 = vshrl.u32 %v5875, 7
        %v5877 = vsub.s32 %v5874, %v5876
        %v5878 = vrot.slane %v5864, %v5877
        %v5879 = vcombine.low %v5855, %v5871
        %v5880 = vcombine.high %v5855, %v5871
        %v5881 = vcombine.low %v5862, %v5878
        %v5882 = vcombine.high %v5862, %v5878
        %v5883 = vcombine.low %v5624, %v5636
        %v5885 = vunpack.c.l.s4 1983009808
        %v5886 = vunpack.c.0.s8 %v5885
        %v5887 = vlaneseq
        %v5888 = vshrl.u32 %v5887, 7
        %v5889 = vsub.s32 %v5886, %v5888
        %v5890 = vrot.slane %v5883, %v5889
        %v5891 = vcombine.low %v5630, %v5642
        %v5893 = vunpack.c.l.s4 1983009808
        %v5894 = vunpack.c.0.s8 %v5893
        %v5895 = vlaneseq
        %v5896 = vshrl.u32 %v5895, 7
        %v5897 = vsub.s32 %v5894, %v5896
        %v5898 = vrot.slane %v5891, %v5897
        %v5899 = vcombine.low %v5648, %v5660
        %v5901 = vunpack.c.l.s4 1983009808
        %v5902 = vunpack.c.0.s8 %v5901
        %v5903 = vlaneseq
        %v5904 = vshrl.u32 %v5903, 7
        %v5905 = vsub.s32 %v5902, %v5904
        %v5906 = vrot.slane %v5899, %v5905
        %v5907 = vcombine.low %v5654, %v5666
        %v5909 = vunpack.c.l.s4 1983009808
        %v5910 = vunpack.c.0.s8 %v5909
        %v5911 = vlaneseq
        %v5912 = vshrl.u32 %v5911, 7
        %v5913 = vsub.s32 %v5910, %v5912
        %v5914 = vrot.slane %v5907, %v5913
        %v5915 = vcombine.low %v5890, %v5898
        %v5916 = vcombine.high %v5890, %v5898
        %v5918 = vunpack.c.l.s4 1934713408
        %v5919 = vunpack.c.0.s8 %v5918
        %v5920 = vlaneseq
        %v5921 = vshrl.u32 %v5920, 7
        %v5922 = vsub.s32 %v5919, %v5921
        %v5923 = vrot.slane %v5915, %v5922
        %v5925 = vunpack.c.l.s4 1934713408
        %v5926 = vunpack.c.0.s8 %v5925
        %v5927 = vlaneseq
        %v5928 = vshrl.u32 %v5927, 7
        %v5929 = vsub.s32 %v5926, %v5928
        %v5930 = vrot.slane %v5916, %v5929
        %v5931 = vcombine.low %v5906, %v5914
        %v5932 = vcombine.high %v5906, %v5914
        %v5934 = vunpack.c.l.s4 1934713408
        %v5935 = vunpack.c.0.s8 %v5934
        %v5936 = vlaneseq
        %v5937 = vshrl.u32 %v5936, 7
        %v5938 = vsub.s32 %v5935, %v5937
        %v5939 = vrot.slane %v5931, %v5938
        %v5941 = vunpack.c.l.s4 1934713408
        %v5942 = vunpack.c.0.s8 %v5941
        %v5943 = vlaneseq
        %v5944 = vshrl.u32 %v5943, 7
        %v5945 = vsub.s32 %v5942, %v5944
        %v5946 = vrot.slane %v5932, %v5945
        %v5947 = vcombine.low %v5923, %v5939
        %v5948 = vcombine.high %v5923, %v5939
        %v5949 = vcombine.low %v5930, %v5946
        %v5950 = vcombine.high %v5930, %v5946
        %v5951 = vcombine.low %v5672, %v5684
        %v5953 = vunpack.c.l.s4 1983009808
        %v5954 = vunpack.c.0.s8 %v5953
        %v5955 = vlaneseq
        %v5956 = vshrl.u32 %v5955, 7
        %v5957 = vsub.s32 %v5954, %v5956
        %v5958 = vrot.slane %v5951, %v5957
        %v5959 = vcombine.low %v5678, %v5690
        %v5961 = vunpack.c.l.s4 1983009808
        %v5962 = vunpack.c.0.s8 %v5961
        %v5963 = vlaneseq
        %v5964 = vshrl.u32 %v5963, 7
        %v5965 = vsub.s32 %v5962, %v5964
        %v5966 = vrot.slane %v5959, %v5965
        %v5967 = vcombine.low %v5696, %v5708
        %v5969 = vunpack.c.l.s4 1983009808
        %v5970 = vunpack.c.0.s8 %v5969
        %v5971 = vlaneseq
        %v5972 = vshrl.u32 %v5971, 7
        %v5973 = vsub.s32 %v5970, %v5972
        %v5974 = vrot.slane %v5967, %v5973
        %v5975 = vcombine.low %v5702, %v5714
        %v5977 = vunpack.c.l.s4 1983009808
        %v5978 = vunpack.c.0.s8 %v5977
        %v5979 = vlaneseq
        %v5980 = vshrl.u32 %v5979, 7
        %v5981 = vsub.s32 %v5978, %v5980
        %v5982 = vrot.slane %v5975, %v5981
        %v5983 = vcombine.low %v5958, %v5966
        %v5984 = vcombine.high %v5958, %v5966
        %v5986 = vunpack.c.l.s4 1934713408
        %v5987 = vunpack.c.0.s8 %v5986
        %v5988 = vlaneseq
        %v5989 = vshrl.u32 %v5988, 7
        %v5990 = vsub.s32 %v5987, %v5989
        %v5991 = vrot.slane %v5983, %v5990
        %v5993 = vunpack.c.l.s4 1934713408
        %v5994 = vunpack.c.0.s8 %v5993
        %v5995 = vlaneseq
        %v5996 = vshrl.u32 %v5995, 7
        %v5997 = vsub.s32 %v5994, %v5996
        %v5998 = vrot.slane %v5984, %v5997
        %v5999 = vcombine.low %v5974, %v5982
        %v6000 = vcombine.high %v5974, %v5982
        %v6002 = vunpack.c.l.s4 1934713408
        %v6003 = vunpack.c.0.s8 %v6002
        %v6004 = vlaneseq
        %v6005 = vshrl.u32 %v6004, 7
        %v6006 = vsub.s32 %v6003, %v6005
        %v6007 = vrot.slane %v5999, %v6006
        %v6009 = vunpack.c.l.s4 1934713408
        %v6010 = vunpack.c.0.s8 %v6009
        %v6011 = vlaneseq
        %v6012 = vshrl.u32 %v6011, 7
        %v6013 = vsub.s32 %v6010, %v6012
        %v6014 = vrot.slane %v6000, %v6013
        %v6015 = vcombine.low %v5991, %v6007
        %v6016 = vcombine.high %v5991, %v6007
        %v6017 = vcombine.low %v5998, %v6014
        %v6018 = vcombine.high %v5998, %v6014
        %v6019 = vsel %vm4310, %v5811, 0.0
        %6020 = vadd.xlane.f32.xlu0 %v6019
        %v6021 = vpop.xlane.xlu0 %6020
        %v6022 = vsel %vm4310, %v5879, 0.0
        %6023 = vadd.xlane.f32.xlu0 %v6022
        %v6024 = vpop.xlane.xlu0 %6023
        %v6025 = vsel %vm4310, %v5947, 0.0
        %6026 = vadd.xlane.f32.xlu0 %v6025
        %v6027 = vpop.xlane.xlu0 %6026
        %v6028 = vsel %vm4310, %v6015, 0.0
        %6029 = vadd.xlane.f32.xlu0 %v6028
        %v6030 = vpop.xlane.xlu0 %6029
        %v6031 = vsel %vm4310, %v5812, 0.0
        %6032 = vadd.xlane.f32.xlu0 %v6031
        %v6033 = vpop.xlane.xlu0 %6032
        %v6034 = vsel %vm4310, %v5880, 0.0
        %6035 = vadd.xlane.f32.xlu0 %v6034
        %v6036 = vpop.xlane.xlu0 %6035
        %v6037 = vsel %vm4310, %v5948, 0.0
        %6038 = vadd.xlane.f32.xlu0 %v6037
        %v6039 = vpop.xlane.xlu0 %6038
        %v6040 = vsel %vm4310, %v6016, 0.0
        %6041 = vadd.xlane.f32.xlu0 %v6040
        %v6042 = vpop.xlane.xlu0 %6041
        %v6043 = vsel %vm4310, %v5813, 0.0
        %6044 = vadd.xlane.f32.xlu0 %v6043
        %v6045 = vpop.xlane.xlu0 %6044
        %v6046 = vsel %vm4310, %v5881, 0.0
        %6047 = vadd.xlane.f32.xlu0 %v6046
        %v6048 = vpop.xlane.xlu0 %6047
        %v6049 = vsel %vm4310, %v5949, 0.0
        %6050 = vadd.xlane.f32.xlu0 %v6049
        %v6051 = vpop.xlane.xlu0 %6050
        %v6052 = vsel %vm4310, %v6017, 0.0
        %6053 = vadd.xlane.f32.xlu0 %v6052
        %v6054 = vpop.xlane.xlu0 %6053
        %v6055 = vsel %vm4310, %v5814, 0.0
        %6056 = vadd.xlane.f32.xlu0 %v6055
        %v6057 = vpop.xlane.xlu0 %6056
        %v6058 = vsel %vm4310, %v5882, 0.0
        %6059 = vadd.xlane.f32.xlu0 %v6058
        %v6060 = vpop.xlane.xlu0 %6059
        %v6061 = vsel %vm4310, %v5950, 0.0
        %6062 = vadd.xlane.f32.xlu0 %v6061
        %v6063 = vpop.xlane.xlu0 %6062
        %v6064 = vsel %vm4310, %v6018, 0.0
        %6065 = vadd.xlane.f32.xlu0 %v6064
        %v6066 = vpop.xlane.xlu0 %6065
        %v6067 = vmul.f32 %v6021, 0.0078125
        %v6068 = vmul.f32 %v6024, 0.0078125
        %v6069 = vmul.f32 %v6027, 0.0078125
        %v6070 = vmul.f32 %v6030, 0.0078125
        %v6071 = vmul.f32 %v6033, 0.0078125
        %v6072 = vmul.f32 %v6036, 0.0078125
        %v6073 = vmul.f32 %v6039, 0.0078125
        %v6074 = vmul.f32 %v6042, 0.0078125
        %v6075 = vmul.f32 %v6045, 0.0078125
        %v6076 = vmul.f32 %v6048, 0.0078125
        %v6077 = vmul.f32 %v6051, 0.0078125
        %v6078 = vmul.f32 %v6054, 0.0078125
        %v6079 = vmul.f32 %v6057, 0.0078125
        %v6080 = vmul.f32 %v6060, 0.0078125
        %v6081 = vmul.f32 %v6063, 0.0078125
        %v6082 = vmul.f32 %v6066, 0.0078125
        %v6083 = vadd.f32 %v6067, 1e-06
        %v6084 = vadd.f32 %v6068, 1e-06
        %v6085 = vadd.f32 %v6069, 1e-06
        %v6086 = vadd.f32 %v6070, 1e-06
        %v6087 = vadd.f32 %v6071, 1e-06
        %v6088 = vadd.f32 %v6072, 1e-06
        %v6089 = vadd.f32 %v6073, 1e-06
        %v6090 = vadd.f32 %v6074, 1e-06
        %v6091 = vadd.f32 %v6075, 1e-06
        %v6092 = vadd.f32 %v6076, 1e-06
        %v6093 = vadd.f32 %v6077, 1e-06
        %v6094 = vadd.f32 %v6078, 1e-06
        %v6095 = vadd.f32 %v6079, 1e-06
        %v6096 = vadd.f32 %v6080, 1e-06
        %v6097 = vadd.f32 %v6081, 1e-06
        %v6098 = vadd.f32 %v6082, 1e-06
        %v6099 = vrsqrt.pop %v6083
        %v6100 = vrsqrt.pop %v6084
        %v6101 = vrsqrt.pop %v6085
        %v6102 = vrsqrt.pop %v6086
        %v6103 = vrsqrt.pop %v6087
        %v6104 = vrsqrt.pop %v6088
        %v6105 = vrsqrt.pop %v6089
        %v6106 = vrsqrt.pop %v6090
        %v6107 = vrsqrt.pop %v6091
        %v6108 = vrsqrt.pop %v6092
        %v6109 = vrsqrt.pop %v6093
        %v6110 = vrsqrt.pop %v6094
        %v6111 = vrsqrt.pop %v6095
        %v6112 = vrsqrt.pop %v6096
        %v6113 = vrsqrt.pop %v6097
        %v6114 = vrsqrt.pop %v6098
        %v6115 = vcombine.low %v6099, %v6107
        %v6116 = vcombine.high %v6099, %v6107
        %v6118 = vunpack.c.l.s4 1983009808
        %v6119 = vunpack.c.0.s8 %v6118
        %v6120 = vlaneseq
        %v6121 = vshrl.u32 %v6120, 7
        %v6122 = vsub.s32 %v6119, %v6121
        %v6123 = vrot.slane %v6115, %v6122
        %v6125 = vunpack.c.l.s4 1983009808
        %v6126 = vunpack.c.0.s8 %v6125
        %v6127 = vlaneseq
        %v6128 = vshrl.u32 %v6127, 7
        %v6129 = vsub.s32 %v6126, %v6128
        %v6130 = vrot.slane %v6116, %v6129
        %v6131 = vcombine.low %v6103, %v6111
        %v6132 = vcombine.high %v6103, %v6111
        %v6134 = vunpack.c.l.s4 1983009808
        %v6135 = vunpack.c.0.s8 %v6134
        %v6136 = vlaneseq
        %v6137 = vshrl.u32 %v6136, 7
        %v6138 = vsub.s32 %v6135, %v6137
        %v6139 = vrot.slane %v6131, %v6138
        %v6141 = vunpack.c.l.s4 1983009808
        %v6142 = vunpack.c.0.s8 %v6141
        %v6143 = vlaneseq
        %v6144 = vshrl.u32 %v6143, 7
        %v6145 = vsub.s32 %v6142, %v6144
        %v6146 = vrot.slane %v6132, %v6145
        %v6147 = vcombine.low %v6123, %v6139
        %v6148 = vcombine.high %v6123, %v6139
        %v6150 = vunpack.c.l.s4 1934713408
        %v6151 = vunpack.c.0.s8 %v6150
        %v6152 = vlaneseq
        %v6153 = vshrl.u32 %v6152, 7
        %v6154 = vsub.s32 %v6151, %v6153
        %v6155 = vrot.slane %v6147, %v6154
        %v6157 = vunpack.c.l.s4 1934713408
        %v6158 = vunpack.c.0.s8 %v6157
        %v6159 = vlaneseq
        %v6160 = vshrl.u32 %v6159, 7
        %v6161 = vsub.s32 %v6158, %v6160
        %v6162 = vrot.slane %v6148, %v6161
        %v6163 = vcombine.low %v6130, %v6146
        %v6164 = vcombine.high %v6130, %v6146
        %v6166 = vunpack.c.l.s4 1934713408
        %v6167 = vunpack.c.0.s8 %v6166
        %v6168 = vlaneseq
        %v6169 = vshrl.u32 %v6168, 7
        %v6170 = vsub.s32 %v6167, %v6169
        %v6171 = vrot.slane %v6163, %v6170
        %v6173 = vunpack.c.l.s4 1934713408
        %v6174 = vunpack.c.0.s8 %v6173
        %v6175 = vlaneseq
        %v6176 = vshrl.u32 %v6175, 7
        %v6177 = vsub.s32 %v6174, %v6176
        %v6178 = vrot.slane %v6164, %v6177
        %v6179 = vcombine.high %v6155, 0.0
        %v6180 = vcombine.high %v6162, 0.0
        %v6181 = vcombine.high %v6171, 0.0
        %v6182 = vcombine.high %v6178, 0.0
        %v6183 = vcombine.low %v6100, %v6108
        %v6184 = vcombine.high %v6100, %v6108
        %v6186 = vunpack.c.l.s4 1983009808
        %v6187 = vunpack.c.0.s8 %v6186
        %v6188 = vlaneseq
        %v6189 = vshrl.u32 %v6188, 7
        %v6190 = vsub.s32 %v6187, %v6189
        %v6191 = vrot.slane %v6183, %v6190
        %v6193 = vunpack.c.l.s4 1983009808
        %v6194 = vunpack.c.0.s8 %v6193
        %v6195 = vlaneseq
        %v6196 = vshrl.u32 %v6195, 7
        %v6197 = vsub.s32 %v6194, %v6196
        %v6198 = vrot.slane %v6184, %v6197
        %v6199 = vcombine.low %v6104, %v6112
        %v6200 = vcombine.high %v6104, %v6112
        %v6202 = vunpack.c.l.s4 1983009808
        %v6203 = vunpack.c.0.s8 %v6202
        %v6204 = vlaneseq
        %v6205 = vshrl.u32 %v6204, 7
        %v6206 = vsub.s32 %v6203, %v6205
        %v6207 = vrot.slane %v6199, %v6206
        %v6209 = vunpack.c.l.s4 1983009808
        %v6210 = vunpack.c.0.s8 %v6209
        %v6211 = vlaneseq
        %v6212 = vshrl.u32 %v6211, 7
        %v6213 = vsub.s32 %v6210, %v6212
        %v6214 = vrot.slane %v6200, %v6213
        %v6215 = vcombine.low %v6191, %v6207
        %v6216 = vcombine.high %v6191, %v6207
        %v6218 = vunpack.c.l.s4 1934713408
        %v6219 = vunpack.c.0.s8 %v6218
        %v6220 = vlaneseq
        %v6221 = vshrl.u32 %v6220, 7
        %v6222 = vsub.s32 %v6219, %v6221
        %v6223 = vrot.slane %v6215, %v6222
        %v6225 = vunpack.c.l.s4 1934713408
        %v6226 = vunpack.c.0.s8 %v6225
        %v6227 = vlaneseq
        %v6228 = vshrl.u32 %v6227, 7
        %v6229 = vsub.s32 %v6226, %v6228
        %v6230 = vrot.slane %v6216, %v6229
        %v6231 = vcombine.low %v6198, %v6214
        %v6232 = vcombine.high %v6198, %v6214
        %v6234 = vunpack.c.l.s4 1934713408
        %v6235 = vunpack.c.0.s8 %v6234
        %v6236 = vlaneseq
        %v6237 = vshrl.u32 %v6236, 7
        %v6238 = vsub.s32 %v6235, %v6237
        %v6239 = vrot.slane %v6231, %v6238
        %v6241 = vunpack.c.l.s4 1934713408
        %v6242 = vunpack.c.0.s8 %v6241
        %v6243 = vlaneseq
        %v6244 = vshrl.u32 %v6243, 7
        %v6245 = vsub.s32 %v6242, %v6244
        %v6246 = vrot.slane %v6232, %v6245
        %v6247 = vcombine.high %v6223, 0.0
        %v6248 = vcombine.high %v6230, 0.0
        %v6249 = vcombine.high %v6239, 0.0
        %v6250 = vcombine.high %v6246, 0.0
        %v6251 = vcombine.low %v6101, %v6109
        %v6252 = vcombine.high %v6101, %v6109
        %v6254 = vunpack.c.l.s4 1983009808
        %v6255 = vunpack.c.0.s8 %v6254
        %v6256 = vlaneseq
        %v6257 = vshrl.u32 %v6256, 7
        %v6258 = vsub.s32 %v6255, %v6257
        %v6259 = vrot.slane %v6251, %v6258
        %v6261 = vunpack.c.l.s4 1983009808
        %v6262 = vunpack.c.0.s8 %v6261
        %v6263 = vlaneseq
        %v6264 = vshrl.u32 %v6263, 7
        %v6265 = vsub.s32 %v6262, %v6264
        %v6266 = vrot.slane %v6252, %v6265
        %v6267 = vcombine.low %v6105, %v6113
        %v6268 = vcombine.high %v6105, %v6113
        %v6270 = vunpack.c.l.s4 1983009808
        %v6271 = vunpack.c.0.s8 %v6270
        %v6272 = vlaneseq
        %v6273 = vshrl.u32 %v6272, 7
        %v6274 = vsub.s32 %v6271, %v6273
        %v6275 = vrot.slane %v6267, %v6274
        %v6277 = vunpack.c.l.s4 1983009808
        %v6278 = vunpack.c.0.s8 %v6277
        %v6279 = vlaneseq
        %v6280 = vshrl.u32 %v6279, 7
        %v6281 = vsub.s32 %v6278, %v6280
        %v6282 = vrot.slane %v6268, %v6281
        %v6283 = vcombine.low %v6259, %v6275
        %v6284 = vcombine.high %v6259, %v6275
        %v6286 = vunpack.c.l.s4 1934713408
        %v6287 = vunpack.c.0.s8 %v6286
        %v6288 = vlaneseq
        %v6289 = vshrl.u32 %v6288, 7
        %v6290 = vsub.s32 %v6287, %v6289
        %v6291 = vrot.slane %v6283, %v6290
        %v6293 = vunpack.c.l.s4 1934713408
        %v6294 = vunpack.c.0.s8 %v6293
        %v6295 = vlaneseq
        %v6296 = vshrl.u32 %v6295, 7
        %v6297 = vsub.s32 %v6294, %v6296
        %v6298 = vrot.slane %v6284, %v6297
        %v6299 = vcombine.low %v6266, %v6282
        %v6300 = vcombine.high %v6266, %v6282
        %v6302 = vunpack.c.l.s4 1934713408
        %v6303 = vunpack.c.0.s8 %v6302
        %v6304 = vlaneseq
        %v6305 = vshrl.u32 %v6304, 7
        %v6306 = vsub.s32 %v6303, %v6305
        %v6307 = vrot.slane %v6299, %v6306
        %v6309 = vunpack.c.l.s4 1934713408
        %v6310 = vunpack.c.0.s8 %v6309
        %v6311 = vlaneseq
        %v6312 = vshrl.u32 %v6311, 7
        %v6313 = vsub.s32 %v6310, %v6312
        %v6314 = vrot.slane %v6300, %v6313
        %v6315 = vcombine.high %v6291, 0.0
        %v6316 = vcombine.high %v6298, 0.0
        %v6317 = vcombine.high %v6307, 0.0
        %v6318 = vcombine.high %v6314, 0.0
        %v6319 = vcombine.low %v6102, %v6110
        %v6320 = vcombine.high %v6102, %v6110
        %v6322 = vunpack.c.l.s4 1983009808
        %v6323 = vunpack.c.0.s8 %v6322
        %v6324 = vlaneseq
        %v6325 = vshrl.u32 %v6324, 7
        %v6326 = vsub.s32 %v6323, %v6325
        %v6327 = vrot.slane %v6319, %v6326
        %v6329 = vunpack.c.l.s4 1983009808
        %v6330 = vunpack.c.0.s8 %v6329
        %v6331 = vlaneseq
        %v6332 = vshrl.u32 %v6331, 7
        %v6333 = vsub.s32 %v6330, %v6332
        %v6334 = vrot.slane %v6320, %v6333
        %v6335 = vcombine.low %v6106, %v6114
        %v6336 = vcombine.high %v6106, %v6114
        %v6338 = vunpack.c.l.s4 1983009808
        %v6339 = vunpack.c.0.s8 %v6338
        %v6340 = vlaneseq
        %v6341 = vshrl.u32 %v6340, 7
        %v6342 = vsub.s32 %v6339, %v6341
        %v6343 = vrot.slane %v6335, %v6342
        %v6345 = vunpack.c.l.s4 1983009808
        %v6346 = vunpack.c.0.s8 %v6345
        %v6347 = vlaneseq
        %v6348 = vshrl.u32 %v6347, 7
        %v6349 = vsub.s32 %v6346, %v6348
        %v6350 = vrot.slane %v6336, %v6349
        %v6351 = vcombine.low %v6327, %v6343
        %v6352 = vcombine.high %v6327, %v6343
        %v6354 = vunpack.c.l.s4 1934713408
        %v6355 = vunpack.c.0.s8 %v6354
        %v6356 = vlaneseq
        %v6357 = vshrl.u32 %v6356, 7
        %v6358 = vsub.s32 %v6355, %v6357
        %v6359 = vrot.slane %v6351, %v6358
        %v6361 = vunpack.c.l.s4 1934713408
        %v6362 = vunpack.c.0.s8 %v6361
        %v6363 = vlaneseq
        %v6364 = vshrl.u32 %v6363, 7
        %v6365 = vsub.s32 %v6362, %v6364
        %v6366 = vrot.slane %v6352, %v6365
        %v6367 = vcombine.low %v6334, %v6350
        %v6368 = vcombine.high %v6334, %v6350
        %v6370 = vunpack.c.l.s4 1934713408
        %v6371 = vunpack.c.0.s8 %v6370
        %v6372 = vlaneseq
        %v6373 = vshrl.u32 %v6372, 7
        %v6374 = vsub.s32 %v6371, %v6373
        %v6375 = vrot.slane %v6367, %v6374
        %v6377 = vunpack.c.l.s4 1934713408
        %v6378 = vunpack.c.0.s8 %v6377
        %v6379 = vlaneseq
        %v6380 = vshrl.u32 %v6379, 7
        %v6381 = vsub.s32 %v6378, %v6380
        %v6382 = vrot.slane %v6368, %v6381
        %v6383 = vcombine.high %v6359, 0.0
        %v6384 = vcombine.high %v6366, 0.0
        %v6385 = vcombine.high %v6375, 0.0
        %v6386 = vcombine.high %v6382, 0.0
        %6388 = vrot.lane.b32.xlu0 %v6179, 2
        %v6389 = vpop.permute.xlu0 %6388
        %6392 = vrot.lane.b32.xlu0 %v6162, 4
        %v6393 = vpop.permute.xlu0 %6392
        %6396 = vrot.lane.b32.xlu0 %v6180, 6
        %v6397 = vpop.permute.xlu0 %6396
        %6400 = vrot.lane.b32.xlu0 %v6171, 8
        %v6401 = vpop.permute.xlu0 %6400
        %6404 = vrot.lane.b32.xlu0 %v6181, 10
        %v6405 = vpop.permute.xlu0 %6404
        %6408 = vrot.lane.b32.xlu0 %v6178, 12
        %v6409 = vpop.permute.xlu0 %6408
        %6412 = vrot.lane.b32.xlu0 %v6182, 14
        %v6413 = vpop.permute.xlu0 %6412
        %6416 = vrot.lane.b32.xlu0 %v6223, 16
        %v6417 = vpop.permute.xlu0 %6416
        %6420 = vrot.lane.b32.xlu0 %v6247, 18
        %v6421 = vpop.permute.xlu0 %6420
        %6424 = vrot.lane.b32.xlu0 %v6230, 20
        %v6425 = vpop.permute.xlu0 %6424
        %6428 = vrot.lane.b32.xlu0 %v6248, 22
        %v6429 = vpop.permute.xlu0 %6428
        %6432 = vrot.lane.b32.xlu0 %v6239, 24
        %v6433 = vpop.permute.xlu0 %6432
        %6436 = vrot.lane.b32.xlu0 %v6249, 26
        %v6437 = vpop.permute.xlu0 %6436
        %6440 = vrot.lane.b32.xlu0 %v6246, 28
        %v6441 = vpop.permute.xlu0 %6440
        %6444 = vrot.lane.b32.xlu0 %v6250, 30
        %v6445 = vpop.permute.xlu0 %6444
        %6448 = vrot.lane.b32.xlu0 %v6291, 32
        %v6449 = vpop.permute.xlu0 %6448
        %6452 = vrot.lane.b32.xlu0 %v6315, 34
        %v6453 = vpop.permute.xlu0 %6452
        %6456 = vrot.lane.b32.xlu0 %v6298, 36
        %v6457 = vpop.permute.xlu0 %6456
        %6460 = vrot.lane.b32.xlu0 %v6316, 38
        %v6461 = vpop.permute.xlu0 %6460
        %6464 = vrot.lane.b32.xlu0 %v6307, 40
        %v6465 = vpop.permute.xlu0 %6464
        %6468 = vrot.lane.b32.xlu0 %v6317, 42
        %v6469 = vpop.permute.xlu0 %6468
        %6472 = vrot.lane.b32.xlu0 %v6314, 44
        %v6473 = vpop.permute.xlu0 %6472
        %6476 = vrot.lane.b32.xlu0 %v6318, 46
        %v6477 = vpop.permute.xlu0 %6476
        %6480 = vrot.lane.b32.xlu0 %v6359, 48
        %v6481 = vpop.permute.xlu0 %6480
        %6484 = vrot.lane.b32.xlu0 %v6383, 50
        %v6485 = vpop.permute.xlu0 %6484
        %6488 = vrot.lane.b32.xlu0 %v6366, 52
        %v6489 = vpop.permute.xlu0 %6488
        %6492 = vrot.lane.b32.xlu0 %v6384, 54
        %v6493 = vpop.permute.xlu0 %6492
        %6496 = vrot.lane.b32.xlu0 %v6375, 56
        %v6497 = vpop.permute.xlu0 %6496
        %6500 = vrot.lane.b32.xlu0 %v6385, 58
        %v6501 = vpop.permute.xlu0 %6500
        %6504 = vrot.lane.b32.xlu0 %v6382, 60
        %v6505 = vpop.permute.xlu0 %6504
        %6508 = vrot.lane.b32.xlu0 %v6386, 62
        %v6509 = vpop.permute.xlu0 %6508
        %v6511 = vsel %vm4310, %v6155, %v6389
        %v6512 = vsel %vm4772, %v6511, %v6393
        %v6513 = vsel %vm4774, %v6512, %v6397
        %v6514 = vsel %vm4776, %v6513, %v6401
        %v6515 = vsel %vm4778, %v6514, %v6405
        %v6516 = vsel %vm4780, %v6515, %v6409
        %v6517 = vsel %vm4782, %v6516, %v6413
        %v6518 = vsel %vm4784, %v6517, %v6417
        %v6519 = vsel %vm4786, %v6518, %v6421
        %v6520 = vsel %vm4788, %v6519, %v6425
        %v6521 = vsel %vm4790, %v6520, %v6429
        %v6522 = vsel %vm4792, %v6521, %v6433
        %v6523 = vsel %vm4794, %v6522, %v6437
        %v6524 = vsel %vm4796, %v6523, %v6441
        %v6525 = vsel %vm4798, %v6524, %v6445
        %v6526 = vsel %vm850, %v6525, %v6449
        %v6527 = vsel %vm4801, %v6526, %v6453
        %v6528 = vsel %vm4803, %v6527, %v6457
        %v6529 = vsel %vm4805, %v6528, %v6461
        %v6530 = vsel %vm4807, %v6529, %v6465
        %v6531 = vsel %vm4809, %v6530, %v6469
        %v6532 = vsel %vm4811, %v6531, %v6473
        %v6533 = vsel %vm4813, %v6532, %v6477
        %v6534 = vsel %vm4815, %v6533, %v6481
        %v6535 = vsel %vm4817, %v6534, %v6485
        %v6536 = vsel %vm4819, %v6535, %v6489
        %v6537 = vsel %vm4821, %v6536, %v6493
        %v6538 = vsel %vm4823, %v6537, %v6497
        %v6539 = vsel %vm4825, %v6538, %v6501
        %v6540 = vsel %vm4827, %v6539, %v6505
        %v6541 = vsel %vm4829, %v6540, %v6509
        %6543 = vrot.lane.b32.xlu0 %v6541, 64
        %v6544 = vpop.permute.xlu0 %6543
        %v6546 = vsel %vm905, %v6541, %v6544
        %v6548 = vcombine.low %v6546, %v6546
        %v6550 = vunpack.c.l.s4 1966171168
        %v6551 = vunpack.c.0.s8 %v6550
        %v6552 = vlaneseq
        %v6553 = vshrl.u32 %v6552, 7
        %v6554 = vsub.s32 %v6551, %v6553
        %v6555 = vrot.slane %v6548, %v6554
        %v6556 = vcombine.low %v6555, %v6555
        %v6557 = vcombine.high %v6555, %v6555
        %v6559 = vunpack.c.l.s4 1966171168
        %v6560 = vunpack.c.0.s8 %v6559
        %v6561 = vlaneseq
        %v6562 = vshrl.u32 %v6561, 7
        %v6563 = vsub.s32 %v6560, %v6562
        %v6564 = vrot.slane %v6556, %v6563
        %v6566 = vunpack.c.l.s4 1966171168
        %v6567 = vunpack.c.0.s8 %v6566
        %v6568 = vlaneseq
        %v6569 = vshrl.u32 %v6568, 7
        %v6570 = vsub.s32 %v6567, %v6569
        %v6571 = vrot.slane %v6557, %v6570
        %v6572 = vcombine.high %v6564, %v6564
        %v6573 = vcombine.high %v6571, %v6571
        %v6578 = vmul.f32 %v6564, %v3264
        %v6579 = vmul.f32 %v6571, %v3264
        %v6580 = vmul.f32 %v6572, %v3264
        %v6581 = vmul.f32 %v6573, %v3264
        %v6586 = vlaneseq
        %v6587 = vshrl.u32 %v6586, 7
        %v6588 = vsub.s32 0, %v6587
        %v6589 = vrot.slane %v6578, %v6588
        %v6590 = vlaneseq
        %v6591 = vshrl.u32 %v6590, 7
        %v6592 = vsub.s32 1, %v6591
        %v6593 = vrot.slane %v6578, %v6592
        %v6594 = vlaneseq
        %v6595 = vshrl.u32 %v6594, 7
        %v6596 = vsub.s32 2, %v6595
        %v6597 = vrot.slane %v6578, %v6596
        %v6598 = vlaneseq
        %v6599 = vshrl.u32 %v6598, 7
        %v6600 = vsub.s32 3, %v6599
        %v6601 = vrot.slane %v6578, %v6600
        %v6602 = vlaneseq
        %v6603 = vshrl.u32 %v6602, 7
        %v6604 = vsub.s32 0, %v6603
        %v6605 = vrot.slane %v6579, %v6604
        %v6606 = vlaneseq
        %v6607 = vshrl.u32 %v6606, 7
        %v6608 = vsub.s32 1, %v6607
        %v6609 = vrot.slane %v6579, %v6608
        %v6610 = vlaneseq
        %v6611 = vshrl.u32 %v6610, 7
        %v6612 = vsub.s32 2, %v6611
        %v6613 = vrot.slane %v6579, %v6612
        %v6614 = vlaneseq
        %v6615 = vshrl.u32 %v6614, 7
        %v6616 = vsub.s32 3, %v6615
        %v6617 = vrot.slane %v6579, %v6616
        %v6618 = vlaneseq
        %v6619 = vshrl.u32 %v6618, 7
        %v6620 = vsub.s32 0, %v6619
        %v6621 = vrot.slane %v6580, %v6620
        %v6622 = vlaneseq
        %v6623 = vshrl.u32 %v6622, 7
        %v6624 = vsub.s32 1, %v6623
        %v6625 = vrot.slane %v6580, %v6624
        %v6626 = vlaneseq
        %v6627 = vshrl.u32 %v6626, 7
        %v6628 = vsub.s32 2, %v6627
        %v6629 = vrot.slane %v6580, %v6628
        %v6630 = vlaneseq
        %v6631 = vshrl.u32 %v6630, 7
        %v6632 = vsub.s32 3, %v6631
        %v6633 = vrot.slane %v6580, %v6632
        %v6634 = vlaneseq
        %v6635 = vshrl.u32 %v6634, 7
        %v6636 = vsub.s32 0, %v6635
        %v6637 = vrot.slane %v6581, %v6636
        %v6638 = vlaneseq
        %v6639 = vshrl.u32 %v6638, 7
        %v6640 = vsub.s32 1, %v6639
        %v6641 = vrot.slane %v6581, %v6640
        %v6642 = vlaneseq
        %v6643 = vshrl.u32 %v6642, 7
        %v6644 = vsub.s32 2, %v6643
        %v6645 = vrot.slane %v6581, %v6644
        %v6646 = vlaneseq
        %v6647 = vshrl.u32 %v6646, 7
        %v6648 = vsub.s32 3, %v6647
        %v6649 = vrot.slane %v6581, %v6648
        %v6666 = vmul.f32 %v4943, %v6589
        %v6667 = vmul.f32 %v4944, %v6593
        %v6668 = vmul.f32 %v4945, %v6597
        %v6669 = vmul.f32 %v4946, %v6601
        %v6670 = vmul.f32 %v4947, %v6605
        %v6671 = vmul.f32 %v4948, %v6609
        %v6672 = vmul.f32 %v4949, %v6613
        %v6673 = vmul.f32 %v4950, %v6617
        %v6674 = vmul.f32 %v4951, %v6621
        %v6675 = vmul.f32 %v4952, %v6625
        %v6676 = vmul.f32 %v4953, %v6629
        %v6677 = vmul.f32 %v4954, %v6633
        %v6678 = vmul.f32 %v4955, %v6637
        %v6679 = vmul.f32 %v4956, %v6641
        %v6680 = vmul.f32 %v4957, %v6645
        %v6681 = vmul.f32 %v4958, %v6649
        %v6683 = vlaneseq
        %v6684 = vshrl.u32 %v6683, 7
        %v6685 = vsub.s32 0, %v6684
        %v6686 = vrot.slane %v3265, %v6685
        %v6687 = vlaneseq
        %v6688 = vshrl.u32 %v6687, 7
        %v6689 = vsub.s32 1, %v6688
        %v6690 = vrot.slane %v3265, %v6689
        %v6691 = vlaneseq
        %v6692 = vshrl.u32 %v6691, 7
        %v6693 = vsub.s32 2, %v6692
        %v6694 = vrot.slane %v3265, %v6693
        %v6695 = vlaneseq
        %v6696 = vshrl.u32 %v6695, 7
        %v6697 = vsub.s32 3, %v6696
        %v6698 = vrot.slane %v3265, %v6697
        %v6703 = vadd.f32 %v6666, %v6686
        %v6704 = vadd.f32 %v6667, %v6690
        %v6705 = vadd.f32 %v6668, %v6694
        %v6706 = vadd.f32 %v6669, %v6698
        %v6707 = vadd.f32 %v6670, %v6686
        %v6708 = vadd.f32 %v6671, %v6690
        %v6709 = vadd.f32 %v6672, %v6694
        %v6710 = vadd.f32 %v6673, %v6698
        %v6711 = vadd.f32 %v6674, %v6686
        %v6712 = vadd.f32 %v6675, %v6690
        %v6713 = vadd.f32 %v6676, %v6694
        %v6714 = vadd.f32 %v6677, %v6698
        %v6715 = vadd.f32 %v6678, %v6686
        %v6716 = vadd.f32 %v6679, %v6690
        %v6717 = vadd.f32 %v6680, %v6694
        %v6718 = vadd.f32 %v6681, %v6698
        %v6719 = vsub.f32 0.0, %v6703
        %v6720 = vsub.f32 0.0, %v6704
        %v6721 = vsub.f32 0.0, %v6705
        %v6722 = vsub.f32 0.0, %v6706
        %v6723 = vsub.f32 0.0, %v6707
        %v6724 = vsub.f32 0.0, %v6708
        %v6725 = vsub.f32 0.0, %v6709
        %v6726 = vsub.f32 0.0, %v6710
        %v6727 = vsub.f32 0.0, %v6711
        %v6728 = vsub.f32 0.0, %v6712
        %v6729 = vsub.f32 0.0, %v6713
        %v6730 = vsub.f32 0.0, %v6714
        %v6731 = vsub.f32 0.0, %v6715
        %v6732 = vsub.f32 0.0, %v6716
        %v6733 = vsub.f32 0.0, %v6717
        %v6734 = vsub.f32 0.0, %v6718
        %v6735 = vmin.f32 %v6719, 80.0
        %v6736 = vmin.f32 %v6720, 80.0
        %v6737 = vmin.f32 %v6721, 80.0
        %v6738 = vmin.f32 %v6722, 80.0
        %v6739 = vmin.f32 %v6723, 80.0
        %v6740 = vmin.f32 %v6724, 80.0
        %v6741 = vmin.f32 %v6725, 80.0
        %v6742 = vmin.f32 %v6726, 80.0
        %v6743 = vmin.f32 %v6727, 80.0
        %v6744 = vmin.f32 %v6728, 80.0
        %v6745 = vmin.f32 %v6729, 80.0
        %v6746 = vmin.f32 %v6730, 80.0
        %v6747 = vmin.f32 %v6731, 80.0
        %v6748 = vmin.f32 %v6732, 80.0
        %v6749 = vmin.f32 %v6733, 80.0
        %v6750 = vmin.f32 %v6734, 80.0
        %v6751 = vmul.f32 %v6735, 1.442695
        %v6752 = vpow.pop %v6751
        %v6753 = vmul.f32 %v6736, 1.442695
        %v6754 = vpow.pop %v6753
        %v6755 = vmul.f32 %v6737, 1.442695
        %v6756 = vpow.pop %v6755
        %v6757 = vmul.f32 %v6738, 1.442695
        %v6758 = vpow.pop %v6757
        %v6759 = vmul.f32 %v6739, 1.442695
        %v6760 = vpow.pop %v6759
        %v6761 = vmul.f32 %v6740, 1.442695
        %v6762 = vpow.pop %v6761
        %v6763 = vmul.f32 %v6741, 1.442695
        %v6764 = vpow.pop %v6763
        %v6765 = vmul.f32 %v6742, 1.442695
        %v6766 = vpow.pop %v6765
        %v6767 = vmul.f32 %v6743, 1.442695
        %v6768 = vpow.pop %v6767
        %v6769 = vmul.f32 %v6744, 1.442695
        %v6770 = vpow.pop %v6769
        %v6771 = vmul.f32 %v6745, 1.442695
        %v6772 = vpow.pop %v6771
        %v6773 = vmul.f32 %v6746, 1.442695
        %v6774 = vpow.pop %v6773
        %v6775 = vmul.f32 %v6747, 1.442695
        %v6776 = vpow.pop %v6775
        %v6777 = vmul.f32 %v6748, 1.442695
        %v6778 = vpow.pop %v6777
        %v6779 = vmul.f32 %v6749, 1.442695
        %v6780 = vpow.pop %v6779
        %v6781 = vmul.f32 %v6750, 1.442695
        %v6782 = vpow.pop %v6781
        %v6783 = vadd.f32 %v6752, 1.0
        %v6784 = vadd.f32 %v6754, 1.0
        %v6785 = vadd.f32 %v6756, 1.0
        %v6786 = vadd.f32 %v6758, 1.0
        %v6787 = vadd.f32 %v6760, 1.0
        %v6788 = vadd.f32 %v6762, 1.0
        %v6789 = vadd.f32 %v6764, 1.0
        %v6790 = vadd.f32 %v6766, 1.0
        %v6791 = vadd.f32 %v6768, 1.0
        %v6792 = vadd.f32 %v6770, 1.0
        %v6793 = vadd.f32 %v6772, 1.0
        %v6794 = vadd.f32 %v6774, 1.0
        %v6795 = vadd.f32 %v6776, 1.0
        %v6796 = vadd.f32 %v6778, 1.0
        %v6797 = vadd.f32 %v6780, 1.0
        %v6798 = vadd.f32 %v6782, 1.0
        %v6799 = vrcp.pop %v6783
        %v6800 = vrcp.pop %v6784
        %v6801 = vrcp.pop %v6785
        %v6802 = vrcp.pop %v6786
        %v6803 = vrcp.pop %v6787
        %v6804 = vrcp.pop %v6788
        %v6805 = vrcp.pop %v6789
        %v6806 = vrcp.pop %v6790
        %v6807 = vrcp.pop %v6791
        %v6808 = vrcp.pop %v6792
        %v6809 = vrcp.pop %v6793
        %v6810 = vrcp.pop %v6794
        %v6811 = vrcp.pop %v6795
        %v6812 = vrcp.pop %v6796
        %v6813 = vrcp.pop %v6797
        %v6814 = vrcp.pop %v6798
        %v6815 = vmul.f32 %v6703, %v6799
        %v6816 = vmul.f32 %v6704, %v6800
        %v6817 = vmul.f32 %v6705, %v6801
        %v6818 = vmul.f32 %v6706, %v6802
        %v6819 = vmul.f32 %v6707, %v6803
        %v6820 = vmul.f32 %v6708, %v6804
        %v6821 = vmul.f32 %v6709, %v6805
        %v6822 = vmul.f32 %v6710, %v6806
        %v6823 = vmul.f32 %v6711, %v6807
        %v6824 = vmul.f32 %v6712, %v6808
        %v6825 = vmul.f32 %v6713, %v6809
        %v6826 = vmul.f32 %v6714, %v6810
        %v6827 = vmul.f32 %v6715, %v6811
        %v6828 = vmul.f32 %v6716, %v6812
        %v6829 = vmul.f32 %v6717, %v6813
        %v6830 = vmul.f32 %v6718, %v6814
        %v6831 = vpack.c.bf16 %v6815, %v6815
        %v6832 = vpack.c.bf16 %v6816, %v6816
        %v6833 = vpack.c.bf16 %v6817, %v6817
        %v6834 = vpack.c.bf16 %v6818, %v6818
        %v6835 = vpack.c.bf16 %v6819, %v6819
        %v6836 = vpack.c.bf16 %v6820, %v6820
        %v6837 = vpack.c.bf16 %v6821, %v6821
        %v6838 = vpack.c.bf16 %v6822, %v6822
        %v6839 = vpack.c.bf16 %v6823, %v6823
        %v6840 = vpack.c.bf16 %v6824, %v6824
        %v6841 = vpack.c.bf16 %v6825, %v6825
        %v6842 = vpack.c.bf16 %v6826, %v6826
        %v6843 = vpack.c.bf16 %v6827, %v6827
        %v6844 = vpack.c.bf16 %v6828, %v6828
        %v6845 = vpack.c.bf16 %v6829, %v6829
        %v6846 = vpack.c.bf16 %v6830, %v6830
        %v6847 = vld [vmem:[#allocation17] sm:$0xf]
        %v6849 = vshrl.u32 %v6831, 16
        %v6851 = vrot.slane %v6849, 7
        %v6852 = vshll.u32 %v6831, 16
        %v6854 = vor.u32 %v6851, %v6852
        %v6856 = vshrl.u32 %v6832, 16
        %v6858 = vrot.slane %v6856, 7
        %v6859 = vshll.u32 %v6832, 16
        %v6861 = vor.u32 %v6858, %v6859
        %v6863 = vshrl.u32 %v6833, 16
        %v6865 = vrot.slane %v6863, 7
        %v6866 = vshll.u32 %v6833, 16
        %v6868 = vor.u32 %v6865, %v6866
        %v6870 = vshrl.u32 %v6834, 16
        %v6872 = vrot.slane %v6870, 7
        %v6873 = vshll.u32 %v6834, 16
        %v6875 = vor.u32 %v6872, %v6873
        %v6877 = vshrl.u32 %v6835, 16
        %v6879 = vrot.slane %v6877, 7
        %v6880 = vshll.u32 %v6835, 16
        %v6882 = vor.u32 %v6879, %v6880
        %v6884 = vshrl.u32 %v6836, 16
        %v6886 = vrot.slane %v6884, 7
        %v6887 = vshll.u32 %v6836, 16
        %v6889 = vor.u32 %v6886, %v6887
        %v6891 = vshrl.u32 %v6837, 16
        %v6893 = vrot.slane %v6891, 7
        %v6894 = vshll.u32 %v6837, 16
        %v6896 = vor.u32 %v6893, %v6894
        %v6898 = vshrl.u32 %v6838, 16
        %v6900 = vrot.slane %v6898, 7
        %v6901 = vshll.u32 %v6838, 16
        %v6903 = vor.u32 %v6900, %v6901
        %v6905 = vshrl.u32 %v6839, 16
        %v6907 = vrot.slane %v6905, 7
        %v6908 = vshll.u32 %v6839, 16
        %v6910 = vor.u32 %v6907, %v6908
        %v6912 = vshrl.u32 %v6840, 16
        %v6914 = vrot.slane %v6912, 7
        %v6915 = vshll.u32 %v6840, 16
        %v6917 = vor.u32 %v6914, %v6915
        %v6919 = vshrl.u32 %v6841, 16
        %v6921 = vrot.slane %v6919, 7
        %v6922 = vshll.u32 %v6841, 16
        %v6924 = vor.u32 %v6921, %v6922
        %v6926 = vshrl.u32 %v6842, 16
        %v6928 = vrot.slane %v6926, 7
        %v6929 = vshll.u32 %v6842, 16
        %v6931 = vor.u32 %v6928, %v6929
        %v6933 = vshrl.u32 %v6843, 16
        %v6935 = vrot.slane %v6933, 7
        %v6936 = vshll.u32 %v6843, 16
        %v6938 = vor.u32 %v6935, %v6936
        %v6940 = vshrl.u32 %v6844, 16
        %v6942 = vrot.slane %v6940, 7
        %v6943 = vshll.u32 %v6844, 16
        %v6945 = vor.u32 %v6942, %v6943
        %v6947 = vshrl.u32 %v6845, 16
        %v6949 = vrot.slane %v6947, 7
        %v6950 = vshll.u32 %v6845, 16
        %v6952 = vor.u32 %v6949, %v6950
        %v6954 = vshrl.u32 %v6846, 16
        %v6956 = vrot.slane %v6954, 7
        %v6957 = vshll.u32 %v6846, 16
        %v6959 = vor.u32 %v6956, %v6957
        %v6976 = vsel %vm1519, 0, %v6854
        %v6977 = vsel %vm1519, 0, %v6861
        %v6978 = vsel %vm1519, 0, %v6868
        %v6979 = vsel %vm1519, 0, %v6875
        %v6980 = vsel %vm1519, 0, %v6882
        %v6981 = vsel %vm1519, 0, %v6889
        %v6982 = vsel %vm1519, 0, %v6896
        %v6983 = vsel %vm1519, 0, %v6903
        %v6984 = vsel %vm1519, 0, %v6910
        %v6985 = vsel %vm1519, 0, %v6917
        %v6986 = vsel %vm1519, 0, %v6924
        %v6987 = vsel %vm1519, 0, %v6931
        %v6988 = vsel %vm1519, 0, %v6938
        %v6989 = vsel %vm1519, 0, %v6945
        %v6990 = vsel %vm1519, 0, %v6952
        %v6991 = vsel %vm1519, 0, %v6959
        %v6992 = vrot.slane %v6852, 1
        %v6993 = vor.u32 %v6849, %v6992
        %v6994 = vrot.slane %v6859, 1
        %v6995 = vor.u32 %v6856, %v6994
        %v6996 = vrot.slane %v6866, 1
        %v6997 = vor.u32 %v6863, %v6996
        %v6998 = vrot.slane %v6873, 1
        %v6999 = vor.u32 %v6870, %v6998
        %v7000 = vrot.slane %v6880, 1
        %v7001 = vor.u32 %v6877, %v7000
        %v7002 = vrot.slane %v6887, 1
        %v7003 = vor.u32 %v6884, %v7002
        %v7004 = vrot.slane %v6894, 1
        %v7005 = vor.u32 %v6891, %v7004
        %v7006 = vrot.slane %v6901, 1
        %v7007 = vor.u32 %v6898, %v7006
        %v7008 = vrot.slane %v6908, 1
        %v7009 = vor.u32 %v6905, %v7008
        %v7010 = vrot.slane %v6915, 1
        %v7011 = vor.u32 %v6912, %v7010
        %v7012 = vrot.slane %v6922, 1
        %v7013 = vor.u32 %v6919, %v7012
        %v7014 = vrot.slane %v6929, 1
        %v7015 = vor.u32 %v6926, %v7014
        %v7016 = vrot.slane %v6936, 1
        %v7017 = vor.u32 %v6933, %v7016
        %v7018 = vrot.slane %v6943, 1
        %v7019 = vor.u32 %v6940, %v7018
        %v7020 = vrot.slane %v6950, 1
        %v7021 = vor.u32 %v6947, %v7020
        %v7022 = vrot.slane %v6957, 1
        %v7023 = vor.u32 %v6954, %v7022
        %v7040 = vsel %vm1554, %v6993, 0
        %v7041 = vsel %vm1554, %v6995, 0
        %v7042 = vsel %vm1554, %v6997, 0
        %v7043 = vsel %vm1554, %v6999, 0
        %v7044 = vsel %vm1554, %v7001, 0
        %v7045 = vsel %vm1554, %v7003, 0
        %v7046 = vsel %vm1554, %v7005, 0
        %v7047 = vsel %vm1554, %v7007, 0
        %v7048 = vsel %vm1554, %v7009, 0
        %v7049 = vsel %vm1554, %v7011, 0
        %v7050 = vsel %vm1554, %v7013, 0
        %v7051 = vsel %vm1554, %v7015, 0
        %v7052 = vsel %vm1554, %v7017, 0
        %v7053 = vsel %vm1554, %v7019, 0
        %v7054 = vsel %vm1554, %v7021, 0
        %v7055 = vsel %vm1554, %v7023, 0
        %v7072 = vunpack.c.l.b16 %v6976
        %v7073 = vunpack.c.l.b16 %v6977
        %v7074 = vunpack.c.l.b16 %v6978
        %v7075 = vunpack.c.l.b16 %v6979
        %v7076 = vunpack.c.l.b16 %v6980
        %v7077 = vunpack.c.l.b16 %v6981
        %v7078 = vunpack.c.l.b16 %v6982
        %v7079 = vunpack.c.l.b16 %v6983
        %v7080 = vunpack.c.l.b16 %v6984
        %v7081 = vunpack.c.l.b16 %v6985
        %v7082 = vunpack.c.l.b16 %v6986
        %v7083 = vunpack.c.l.b16 %v6987
        %v7084 = vunpack.c.l.b16 %v6988
        %v7085 = vunpack.c.l.b16 %v6989
        %v7086 = vunpack.c.l.b16 %v6990
        %v7087 = vunpack.c.l.b16 %v6991
        %v7088 = vld [vmem:[#allocation16] sm:$0xff]
        %v7089 = vld [vmem:[#allocation16 + $0x8] sm:$0xff]
        %v7090 = vld [vmem:[#allocation16 + $0x10] sm:$0xff]
        %v7091 = vld [vmem:[#allocation16 + $0x18] sm:$0xff]
        %v7092 = vld [vmem:[#allocation16 + $0x20] sm:$0xff]
        %v7093 = vld [vmem:[#allocation16 + $0x28] sm:$0xff]
        %v7094 = vld [vmem:[#allocation16 + $0x30] sm:$0xff]
        %v7095 = vld [vmem:[#allocation16 + $0x38] sm:$0xff]
        %v7096 = vld [vmem:[#allocation16 + $0x40] sm:$0xff]
        %v7097 = vld [vmem:[#allocation16 + $0x48] sm:$0xff]
        %v7098 = vld [vmem:[#allocation16 + $0x50] sm:$0xff]
        %v7099 = vld [vmem:[#allocation16 + $0x58] sm:$0xff]
        %v7100 = vld [vmem:[#allocation16 + $0x60] sm:$0xff]
        %v7101 = vld [vmem:[#allocation16 + $0x68] sm:$0xff]
        %v7102 = vld [vmem:[#allocation16 + $0x70] sm:$0xff]
        %v7103 = vld [vmem:[#allocation16 + $0x78] sm:$0xff]
        %v7104 = vld [vmem:[#allocation16 + $0x80] sm:$0xff]
        %v7105 = vld [vmem:[#allocation16 + $0x88] sm:$0xff]
        %v7106 = vld [vmem:[#allocation16 + $0x90] sm:$0xff]
        %v7107 = vld [vmem:[#allocation16 + $0x98] sm:$0xff]
        %v7108 = vld [vmem:[#allocation16 + $0xa0] sm:$0xff]
        %v7109 = vld [vmem:[#allocation16 + $0xa8] sm:$0xff]
        %v7110 = vld [vmem:[#allocation16 + $0xb0] sm:$0xff]
        %v7111 = vld [vmem:[#allocation16 + $0xb8] sm:$0xff]
        %v7112 = vld [vmem:[#allocation16 + $0xc0] sm:$0xff]
        %v7113 = vld [vmem:[#allocation16 + $0xc8] sm:$0xff]
        %v7114 = vld [vmem:[#allocation16 + $0xd0] sm:$0xff]
        %v7115 = vld [vmem:[#allocation16 + $0xd8] sm:$0xff]
        %v7116 = vld [vmem:[#allocation16 + $0xe0] sm:$0xff]
        %v7117 = vld [vmem:[#allocation16 + $0xe8] sm:$0xff]
        %v7118 = vld [vmem:[#allocation16 + $0xf0] sm:$0xff]
        %v7119 = vld [vmem:[#allocation16 + $0xf8] sm:$0xff]
        %v7120 = vld [vmem:[#allocation16 + $0x100] sm:$0xff]
        %v7121 = vld [vmem:[#allocation16 + $0x108] sm:$0xff]
        %v7122 = vld [vmem:[#allocation16 + $0x110] sm:$0xff]
        %v7123 = vld [vmem:[#allocation16 + $0x118] sm:$0xff]
        %v7124 = vld [vmem:[#allocation16 + $0x120] sm:$0xff]
        %v7125 = vld [vmem:[#allocation16 + $0x128] sm:$0xff]
        %v7126 = vld [vmem:[#allocation16 + $0x130] sm:$0xff]
        %v7127 = vld [vmem:[#allocation16 + $0x138] sm:$0xff]
        %v7128 = vld [vmem:[#allocation16 + $0x140] sm:$0xff]
        %v7129 = vld [vmem:[#allocation16 + $0x148] sm:$0xff]
        %v7130 = vld [vmem:[#allocation16 + $0x150] sm:$0xff]
        %v7131 = vld [vmem:[#allocation16 + $0x158] sm:$0xff]
        %v7132 = vld [vmem:[#allocation16 + $0x160] sm:$0xff]
        %v7133 = vld [vmem:[#allocation16 + $0x168] sm:$0xff]
        %v7134 = vld [vmem:[#allocation16 + $0x170] sm:$0xff]
        %v7135 = vld [vmem:[#allocation16 + $0x178] sm:$0xff]
        %v7136 = vld [vmem:[#allocation16 + $0x180] sm:$0xff]
        %v7137 = vld [vmem:[#allocation16 + $0x188] sm:$0xff]
        %v7138 = vld [vmem:[#allocation16 + $0x190] sm:$0xff]
        %v7139 = vld [vmem:[#allocation16 + $0x198] sm:$0xff]
        %v7140 = vld [vmem:[#allocation16 + $0x1a0] sm:$0xff]
        %v7141 = vld [vmem:[#allocation16 + $0x1a8] sm:$0xff]
        %v7142 = vld [vmem:[#allocation16 + $0x1b0] sm:$0xff]
        %v7143 = vld [vmem:[#allocation16 + $0x1b8] sm:$0xff]
        %v7144 = vld [vmem:[#allocation16 + $0x1c0] sm:$0xff]
        %v7145 = vld [vmem:[#allocation16 + $0x1c8] sm:$0xff]
        %v7146 = vld [vmem:[#allocation16 + $0x1d0] sm:$0xff]
        %v7147 = vld [vmem:[#allocation16 + $0x1d8] sm:$0xff]
        %v7148 = vld [vmem:[#allocation16 + $0x1e0] sm:$0xff]
        %v7149 = vld [vmem:[#allocation16 + $0x1e8] sm:$0xff]
        %v7150 = vld [vmem:[#allocation16 + $0x1f0] sm:$0xff]
        %v7151 = vld [vmem:[#allocation16 + $0x1f8] sm:$0xff]
        %v7152 = vld [vmem:[#allocation16 + $0x200] sm:$0xff]
        %v7153 = vld [vmem:[#allocation16 + $0x208] sm:$0xff]
        %v7154 = vld [vmem:[#allocation16 + $0x210] sm:$0xff]
        %v7155 = vld [vmem:[#allocation16 + $0x218] sm:$0xff]
        %v7156 = vld [vmem:[#allocation16 + $0x220] sm:$0xff]
        %v7157 = vld [vmem:[#allocation16 + $0x228] sm:$0xff]
        %v7158 = vld [vmem:[#allocation16 + $0x230] sm:$0xff]
        %v7159 = vld [vmem:[#allocation16 + $0x238] sm:$0xff]
        %v7160 = vld [vmem:[#allocation16 + $0x240] sm:$0xff]
        %v7161 = vld [vmem:[#allocation16 + $0x248] sm:$0xff]
        %v7162 = vld [vmem:[#allocation16 + $0x250] sm:$0xff]
        %v7163 = vld [vmem:[#allocation16 + $0x258] sm:$0xff]
        %v7164 = vld [vmem:[#allocation16 + $0x260] sm:$0xff]
        %v7165 = vld [vmem:[#allocation16 + $0x268] sm:$0xff]
        %v7166 = vld [vmem:[#allocation16 + $0x270] sm:$0xff]
        %v7167 = vld [vmem:[#allocation16 + $0x278] sm:$0xff]
        %v7168 = vld [vmem:[#allocation16 + $0x280] sm:$0xff]
        %v7169 = vld [vmem:[#allocation16 + $0x288] sm:$0xff]
        %v7170 = vld [vmem:[#allocation16 + $0x290] sm:$0xff]
        %v7171 = vld [vmem:[#allocation16 + $0x298] sm:$0xff]
        %v7172 = vld [vmem:[#allocation16 + $0x2a0] sm:$0xff]
        %v7173 = vld [vmem:[#allocation16 + $0x2a8] sm:$0xff]
        %v7174 = vld [vmem:[#allocation16 + $0x2b0] sm:$0xff]
        %v7175 = vld [vmem:[#allocation16 + $0x2b8] sm:$0xff]
        %v7176 = vld [vmem:[#allocation16 + $0x2c0] sm:$0xff]
        %v7177 = vld [vmem:[#allocation16 + $0x2c8] sm:$0xff]
        %v7178 = vld [vmem:[#allocation16 + $0x2d0] sm:$0xff]
        %v7179 = vld [vmem:[#allocation16 + $0x2d8] sm:$0xff]
        %v7180 = vld [vmem:[#allocation16 + $0x2e0] sm:$0xff]
        %v7181 = vld [vmem:[#allocation16 + $0x2e8] sm:$0xff]
        %v7182 = vld [vmem:[#allocation16 + $0x2f0] sm:$0xff]
        %v7183 = vld [vmem:[#allocation16 + $0x2f8] sm:$0xff]
        %v7184 = vld [vmem:[#allocation16 + $0x300] sm:$0xff]
        %v7185 = vld [vmem:[#allocation16 + $0x308] sm:$0xff]
        %v7186 = vld [vmem:[#allocation16 + $0x310] sm:$0xff]
        %v7187 = vld [vmem:[#allocation16 + $0x318] sm:$0xff]
        %v7188 = vld [vmem:[#allocation16 + $0x320] sm:$0xff]
        %v7189 = vld [vmem:[#allocation16 + $0x328] sm:$0xff]
        %v7190 = vld [vmem:[#allocation16 + $0x330] sm:$0xff]
        %v7191 = vld [vmem:[#allocation16 + $0x338] sm:$0xff]
        %v7192 = vld [vmem:[#allocation16 + $0x340] sm:$0xff]
        %v7193 = vld [vmem:[#allocation16 + $0x348] sm:$0xff]
        %v7194 = vld [vmem:[#allocation16 + $0x350] sm:$0xff]
        %v7195 = vld [vmem:[#allocation16 + $0x358] sm:$0xff]
        %v7196 = vld [vmem:[#allocation16 + $0x360] sm:$0xff]
        %v7197 = vld [vmem:[#allocation16 + $0x368] sm:$0xff]
        %v7198 = vld [vmem:[#allocation16 + $0x370] sm:$0xff]
        %v7199 = vld [vmem:[#allocation16 + $0x378] sm:$0xff]
        %v7200 = vld [vmem:[#allocation16 + $0x380] sm:$0xff]
        %v7201 = vld [vmem:[#allocation16 + $0x388] sm:$0xff]
        %v7202 = vld [vmem:[#allocation16 + $0x390] sm:$0xff]
        %v7203 = vld [vmem:[#allocation16 + $0x398] sm:$0xff]
        %v7204 = vld [vmem:[#allocation16 + $0x3a0] sm:$0xff]
        %v7205 = vld [vmem:[#allocation16 + $0x3a8] sm:$0xff]
        %v7206 = vld [vmem:[#allocation16 + $0x3b0] sm:$0xff]
        %v7207 = vld [vmem:[#allocation16 + $0x3b8] sm:$0xff]
        %v7208 = vld [vmem:[#allocation16 + $0x3c0] sm:$0xff]
        %v7209 = vld [vmem:[#allocation16 + $0x3c8] sm:$0xff]
        %v7210 = vld [vmem:[#allocation16 + $0x3d0] sm:$0xff]
        %v7211 = vld [vmem:[#allocation16 + $0x3d8] sm:$0xff]
        %v7212 = vld [vmem:[#allocation16 + $0x3e0] sm:$0xff]
        %v7213 = vld [vmem:[#allocation16 + $0x3e8] sm:$0xff]
        %v7214 = vld [vmem:[#allocation16 + $0x3f0] sm:$0xff]
        %v7215 = vld [vmem:[#allocation16 + $0x3f8] sm:$0xff]
        %v7232 = vunpack.c.l.b16 %v6831
        %v7233 = vunpack.c.l.b16 %v6832
        %v7234 = vunpack.c.l.b16 %v6833
        %v7235 = vunpack.c.l.b16 %v6834
        %v7236 = vunpack.c.l.b16 %v6835
        %v7237 = vunpack.c.l.b16 %v6836
        %v7238 = vunpack.c.l.b16 %v6837
        %v7239 = vunpack.c.l.b16 %v6838
        %v7240 = vunpack.c.l.b16 %v6839
        %v7241 = vunpack.c.l.b16 %v6840
        %v7242 = vunpack.c.l.b16 %v6841
        %v7243 = vunpack.c.l.b16 %v6842
        %v7244 = vunpack.c.l.b16 %v6843
        %v7245 = vunpack.c.l.b16 %v6844
        %v7246 = vunpack.c.l.b16 %v6845
        %v7247 = vunpack.c.l.b16 %v6846
        %s7248 = scalar_lea.vmem [#allocation16], 1024
        %v7249 = vld [vmem:[%s7248] sm:$0xff]
        %v7250 = vld [vmem:[%s7248 + $0x8] sm:$0xff]
        %v7251 = vld [vmem:[%s7248 + $0x10] sm:$0xff]
        %v7252 = vld [vmem:[%s7248 + $0x18] sm:$0xff]
        %v7253 = vld [vmem:[%s7248 + $0x20] sm:$0xff]
        %v7254 = vld [vmem:[%s7248 + $0x28] sm:$0xff]
        %v7255 = vld [vmem:[%s7248 + $0x30] sm:$0xff]
        %v7256 = vld [vmem:[%s7248 + $0x38] sm:$0xff]
        %v7257 = vld [vmem:[%s7248 + $0x40] sm:$0xff]
        %v7258 = vld [vmem:[%s7248 + $0x48] sm:$0xff]
        %v7259 = vld [vmem:[%s7248 + $0x50] sm:$0xff]
        %v7260 = vld [vmem:[%s7248 + $0x58] sm:$0xff]
        %v7261 = vld [vmem:[%s7248 + $0x60] sm:$0xff]
        %v7262 = vld [vmem:[%s7248 + $0x68] sm:$0xff]
        %v7263 = vld [vmem:[%s7248 + $0x70] sm:$0xff]
        %v7264 = vld [vmem:[%s7248 + $0x78] sm:$0xff]
        %v7265 = vld [vmem:[%s7248 + $0x80] sm:$0xff]
        %v7266 = vld [vmem:[%s7248 + $0x88] sm:$0xff]
        %v7267 = vld [vmem:[%s7248 + $0x90] sm:$0xff]
        %v7268 = vld [vmem:[%s7248 + $0x98] sm:$0xff]
        %v7269 = vld [vmem:[%s7248 + $0xa0] sm:$0xff]
        %v7270 = vld [vmem:[%s7248 + $0xa8] sm:$0xff]
        %v7271 = vld [vmem:[%s7248 + $0xb0] sm:$0xff]
        %v7272 = vld [vmem:[%s7248 + $0xb8] sm:$0xff]
        %v7273 = vld [vmem:[%s7248 + $0xc0] sm:$0xff]
        %v7274 = vld [vmem:[%s7248 + $0xc8] sm:$0xff]
        %v7275 = vld [vmem:[%s7248 + $0xd0] sm:$0xff]
        %v7276 = vld [vmem:[%s7248 + $0xd8] sm:$0xff]
        %v7277 = vld [vmem:[%s7248 + $0xe0] sm:$0xff]
        %v7278 = vld [vmem:[%s7248 + $0xe8] sm:$0xff]
        %v7279 = vld [vmem:[%s7248 + $0xf0] sm:$0xff]
        %v7280 = vld [vmem:[%s7248 + $0xf8] sm:$0xff]
        %v7281 = vld [vmem:[%s7248 + $0x100] sm:$0xff]
        %v7282 = vld [vmem:[%s7248 + $0x108] sm:$0xff]
        %v7283 = vld [vmem:[%s7248 + $0x110] sm:$0xff]
        %v7284 = vld [vmem:[%s7248 + $0x118] sm:$0xff]
        %v7285 = vld [vmem:[%s7248 + $0x120] sm:$0xff]
        %v7286 = vld [vmem:[%s7248 + $0x128] sm:$0xff]
        %v7287 = vld [vmem:[%s7248 + $0x130] sm:$0xff]
        %v7288 = vld [vmem:[%s7248 + $0x138] sm:$0xff]
        %v7289 = vld [vmem:[%s7248 + $0x140] sm:$0xff]
        %v7290 = vld [vmem:[%s7248 + $0x148] sm:$0xff]
        %v7291 = vld [vmem:[%s7248 + $0x150] sm:$0xff]
        %v7292 = vld [vmem:[%s7248 + $0x158] sm:$0xff]
        %v7293 = vld [vmem:[%s7248 + $0x160] sm:$0xff]
        %v7294 = vld [vmem:[%s7248 + $0x168] sm:$0xff]
        %v7295 = vld [vmem:[%s7248 + $0x170] sm:$0xff]
        %v7296 = vld [vmem:[%s7248 + $0x178] sm:$0xff]
        %v7297 = vld [vmem:[%s7248 + $0x180] sm:$0xff]
        %v7298 = vld [vmem:[%s7248 + $0x188] sm:$0xff]
        %v7299 = vld [vmem:[%s7248 + $0x190] sm:$0xff]
        %v7300 = vld [vmem:[%s7248 + $0x198] sm:$0xff]
        %v7301 = vld [vmem:[%s7248 + $0x1a0] sm:$0xff]
        %v7302 = vld [vmem:[%s7248 + $0x1a8] sm:$0xff]
        %v7303 = vld [vmem:[%s7248 + $0x1b0] sm:$0xff]
        %v7304 = vld [vmem:[%s7248 + $0x1b8] sm:$0xff]
        %v7305 = vld [vmem:[%s7248 + $0x1c0] sm:$0xff]
        %v7306 = vld [vmem:[%s7248 + $0x1c8] sm:$0xff]
        %v7307 = vld [vmem:[%s7248 + $0x1d0] sm:$0xff]
        %v7308 = vld [vmem:[%s7248 + $0x1d8] sm:$0xff]
        %v7309 = vld [vmem:[%s7248 + $0x1e0] sm:$0xff]
        %v7310 = vld [vmem:[%s7248 + $0x1e8] sm:$0xff]
        %v7311 = vld [vmem:[%s7248 + $0x1f0] sm:$0xff]
        %v7312 = vld [vmem:[%s7248 + $0x1f8] sm:$0xff]
        %v7313 = vld [vmem:[%s7248 + $0x200] sm:$0xff]
        %v7314 = vld [vmem:[%s7248 + $0x208] sm:$0xff]
        %v7315 = vld [vmem:[%s7248 + $0x210] sm:$0xff]
        %v7316 = vld [vmem:[%s7248 + $0x218] sm:$0xff]
        %v7317 = vld [vmem:[%s7248 + $0x220] sm:$0xff]
        %v7318 = vld [vmem:[%s7248 + $0x228] sm:$0xff]
        %v7319 = vld [vmem:[%s7248 + $0x230] sm:$0xff]
        %v7320 = vld [vmem:[%s7248 + $0x238] sm:$0xff]
        %v7321 = vld [vmem:[%s7248 + $0x240] sm:$0xff]
        %v7322 = vld [vmem:[%s7248 + $0x248] sm:$0xff]
        %v7323 = vld [vmem:[%s7248 + $0x250] sm:$0xff]
        %v7324 = vld [vmem:[%s7248 + $0x258] sm:$0xff]
        %v7325 = vld [vmem:[%s7248 + $0x260] sm:$0xff]
        %v7326 = vld [vmem:[%s7248 + $0x268] sm:$0xff]
        %v7327 = vld [vmem:[%s7248 + $0x270] sm:$0xff]
        %v7328 = vld [vmem:[%s7248 + $0x278] sm:$0xff]
        %v7329 = vld [vmem:[%s7248 + $0x280] sm:$0xff]
        %v7330 = vld [vmem:[%s7248 + $0x288] sm:$0xff]
        %v7331 = vld [vmem:[%s7248 + $0x290] sm:$0xff]
        %v7332 = vld [vmem:[%s7248 + $0x298] sm:$0xff]
        %v7333 = vld [vmem:[%s7248 + $0x2a0] sm:$0xff]
        %v7334 = vld [vmem:[%s7248 + $0x2a8] sm:$0xff]
        %v7335 = vld [vmem:[%s7248 + $0x2b0] sm:$0xff]
        %v7336 = vld [vmem:[%s7248 + $0x2b8] sm:$0xff]
        %v7337 = vld [vmem:[%s7248 + $0x2c0] sm:$0xff]
        %v7338 = vld [vmem:[%s7248 + $0x2c8] sm:$0xff]
        %v7339 = vld [vmem:[%s7248 + $0x2d0] sm:$0xff]
        %v7340 = vld [vmem:[%s7248 + $0x2d8] sm:$0xff]
        %v7341 = vld [vmem:[%s7248 + $0x2e0] sm:$0xff]
        %v7342 = vld [vmem:[%s7248 + $0x2e8] sm:$0xff]
        %v7343 = vld [vmem:[%s7248 + $0x2f0] sm:$0xff]
        %v7344 = vld [vmem:[%s7248 + $0x2f8] sm:$0xff]
        %v7345 = vld [vmem:[%s7248 + $0x300] sm:$0xff]
        %v7346 = vld [vmem:[%s7248 + $0x308] sm:$0xff]
        %v7347 = vld [vmem:[%s7248 + $0x310] sm:$0xff]
        %v7348 = vld [vmem:[%s7248 + $0x318] sm:$0xff]
        %v7349 = vld [vmem:[%s7248 + $0x320] sm:$0xff]
        %v7350 = vld [vmem:[%s7248 + $0x328] sm:$0xff]
        %v7351 = vld [vmem:[%s7248 + $0x330] sm:$0xff]
        %v7352 = vld [vmem:[%s7248 + $0x338] sm:$0xff]
        %v7353 = vld [vmem:[%s7248 + $0x340] sm:$0xff]
        %v7354 = vld [vmem:[%s7248 + $0x348] sm:$0xff]
        %v7355 = vld [vmem:[%s7248 + $0x350] sm:$0xff]
        %v7356 = vld [vmem:[%s7248 + $0x358] sm:$0xff]
        %v7357 = vld [vmem:[%s7248 + $0x360] sm:$0xff]
        %v7358 = vld [vmem:[%s7248 + $0x368] sm:$0xff]
        %v7359 = vld [vmem:[%s7248 + $0x370] sm:$0xff]
        %v7360 = vld [vmem:[%s7248 + $0x378] sm:$0xff]
        %v7361 = vld [vmem:[%s7248 + $0x380] sm:$0xff]
        %v7362 = vld [vmem:[%s7248 + $0x388] sm:$0xff]
        %v7363 = vld [vmem:[%s7248 + $0x390] sm:$0xff]
        %v7364 = vld [vmem:[%s7248 + $0x398] sm:$0xff]
        %v7365 = vld [vmem:[%s7248 + $0x3a0] sm:$0xff]
        %v7366 = vld [vmem:[%s7248 + $0x3a8] sm:$0xff]
        %v7367 = vld [vmem:[%s7248 + $0x3b0] sm:$0xff]
        %v7368 = vld [vmem:[%s7248 + $0x3b8] sm:$0xff]
        %v7369 = vld [vmem:[%s7248 + $0x3c0] sm:$0xff]
        %v7370 = vld [vmem:[%s7248 + $0x3c8] sm:$0xff]
        %v7371 = vld [vmem:[%s7248 + $0x3d0] sm:$0xff]
        %v7372 = vld [vmem:[%s7248 + $0x3d8] sm:$0xff]
        %v7373 = vld [vmem:[%s7248 + $0x3e0] sm:$0xff]
        %v7374 = vld [vmem:[%s7248 + $0x3e8] sm:$0xff]
        %v7375 = vld [vmem:[%s7248 + $0x3f0] sm:$0xff]
        %v7376 = vld [vmem:[%s7248 + $0x3f8] sm:$0xff]
        %v7377 = vpack.c.b16 %v7236, %v7232
        %v7378 = vpack.c.b16 %v7237, %v7233
        %v7379 = vpack.c.b16 %v7238, %v7234
        %v7380 = vpack.c.b16 %v7239, %v7235
        %v7381 = vpack.c.b16 %v7244, %v7240
        %v7382 = vpack.c.b16 %v7245, %v7241
        %v7383 = vpack.c.b16 %v7246, %v7242
        %v7384 = vpack.c.b16 %v7247, %v7243
        %v7521 = vunpack.c.l.b16 %v7249
        %v7522 = vunpack.c.h.b16 %v7249
        %v7523 = vunpack.c.l.b16 %v7250
        %v7524 = vunpack.c.h.b16 %v7250
        %v7525 = vunpack.c.l.b16 %v7251
        %v7526 = vunpack.c.h.b16 %v7251
        %v7527 = vunpack.c.l.b16 %v7252
        %v7528 = vunpack.c.h.b16 %v7252
        %v7529 = vunpack.c.l.b16 %v7253
        %v7530 = vunpack.c.h.b16 %v7253
        %v7531 = vunpack.c.l.b16 %v7254
        %v7532 = vunpack.c.h.b16 %v7254
        %v7533 = vunpack.c.l.b16 %v7255
        %v7534 = vunpack.c.h.b16 %v7255
        %v7535 = vunpack.c.l.b16 %v7256
        %v7536 = vunpack.c.h.b16 %v7256
        %v7537 = vunpack.c.l.b16 %v7257
        %v7538 = vunpack.c.h.b16 %v7257
        %v7539 = vunpack.c.l.b16 %v7258
        %v7540 = vunpack.c.h.b16 %v7258
        %v7541 = vunpack.c.l.b16 %v7259
        %v7542 = vunpack.c.h.b16 %v7259
        %v7543 = vunpack.c.l.b16 %v7260
        %v7544 = vunpack.c.h.b16 %v7260
        %v7545 = vunpack.c.l.b16 %v7261
        %v7546 = vunpack.c.h.b16 %v7261
        %v7547 = vunpack.c.l.b16 %v7262
        %v7548 = vunpack.c.h.b16 %v7262
        %v7549 = vunpack.c.l.b16 %v7263
        %v7550 = vunpack.c.h.b16 %v7263
        %v7551 = vunpack.c.l.b16 %v7264
        %v7552 = vunpack.c.h.b16 %v7264
        %v7553 = vunpack.c.l.b16 %v7265
        %v7554 = vunpack.c.h.b16 %v7265
        %v7555 = vunpack.c.l.b16 %v7266
        %v7556 = vunpack.c.h.b16 %v7266
        %v7557 = vunpack.c.l.b16 %v7267
        %v7558 = vunpack.c.h.b16 %v7267
        %v7559 = vunpack.c.l.b16 %v7268
        %v7560 = vunpack.c.h.b16 %v7268
        %v7561 = vunpack.c.l.b16 %v7269
        %v7562 = vunpack.c.h.b16 %v7269
        %v7563 = vunpack.c.l.b16 %v7270
        %v7564 = vunpack.c.h.b16 %v7270
        %v7565 = vunpack.c.l.b16 %v7271
        %v7566 = vunpack.c.h.b16 %v7271
        %v7567 = vunpack.c.l.b16 %v7272
        %v7568 = vunpack.c.h.b16 %v7272
        %v7569 = vunpack.c.l.b16 %v7273
        %v7570 = vunpack.c.h.b16 %v7273
        %v7571 = vunpack.c.l.b16 %v7274
        %v7572 = vunpack.c.h.b16 %v7274
        %v7573 = vunpack.c.l.b16 %v7275
        %v7574 = vunpack.c.h.b16 %v7275
        %v7575 = vunpack.c.l.b16 %v7276
        %v7576 = vunpack.c.h.b16 %v7276
        %v7577 = vunpack.c.l.b16 %v7277
        %v7578 = vunpack.c.h.b16 %v7277
        %v7579 = vunpack.c.l.b16 %v7278
        %v7580 = vunpack.c.h.b16 %v7278
        %v7581 = vunpack.c.l.b16 %v7279
        %v7582 = vunpack.c.h.b16 %v7279
        %v7583 = vunpack.c.l.b16 %v7280
        %v7584 = vunpack.c.h.b16 %v7280
        %v7585 = vunpack.c.l.b16 %v7281
        %v7586 = vunpack.c.h.b16 %v7281
        %v7587 = vunpack.c.l.b16 %v7282
        %v7588 = vunpack.c.h.b16 %v7282
        %v7589 = vunpack.c.l.b16 %v7283
        %v7590 = vunpack.c.h.b16 %v7283
        %v7591 = vunpack.c.l.b16 %v7284
        %v7592 = vunpack.c.h.b16 %v7284
        %v7593 = vunpack.c.l.b16 %v7285
        %v7594 = vunpack.c.h.b16 %v7285
        %v7595 = vunpack.c.l.b16 %v7286
        %v7596 = vunpack.c.h.b16 %v7286
        %v7597 = vunpack.c.l.b16 %v7287
        %v7598 = vunpack.c.h.b16 %v7287
        %v7599 = vunpack.c.l.b16 %v7288
        %v7600 = vunpack.c.h.b16 %v7288
        %v7601 = vunpack.c.l.b16 %v7289
        %v7602 = vunpack.c.h.b16 %v7289
        %v7603 = vunpack.c.l.b16 %v7290
        %v7604 = vunpack.c.h.b16 %v7290
        %v7605 = vunpack.c.l.b16 %v7291
        %v7606 = vunpack.c.h.b16 %v7291
        %v7607 = vunpack.c.l.b16 %v7292
        %v7608 = vunpack.c.h.b16 %v7292
        %v7609 = vunpack.c.l.b16 %v7293
        %v7610 = vunpack.c.h.b16 %v7293
        %v7611 = vunpack.c.l.b16 %v7294
        %v7612 = vunpack.c.h.b16 %v7294
        %v7613 = vunpack.c.l.b16 %v7295
        %v7614 = vunpack.c.h.b16 %v7295
        %v7615 = vunpack.c.l.b16 %v7296
        %v7616 = vunpack.c.h.b16 %v7296
        %v7617 = vunpack.c.l.b16 %v7297
        %v7618 = vunpack.c.h.b16 %v7297
        %v7619 = vunpack.c.l.b16 %v7298
        %v7620 = vunpack.c.h.b16 %v7298
        %v7621 = vunpack.c.l.b16 %v7299
        %v7622 = vunpack.c.h.b16 %v7299
        %v7623 = vunpack.c.l.b16 %v7300
        %v7624 = vunpack.c.h.b16 %v7300
        %v7625 = vunpack.c.l.b16 %v7301
        %v7626 = vunpack.c.h.b16 %v7301
        %v7627 = vunpack.c.l.b16 %v7302
        %v7628 = vunpack.c.h.b16 %v7302
        %v7629 = vunpack.c.l.b16 %v7303
        %v7630 = vunpack.c.h.b16 %v7303
        %v7631 = vunpack.c.l.b16 %v7304
        %v7632 = vunpack.c.h.b16 %v7304
        %v7633 = vunpack.c.l.b16 %v7305
        %v7634 = vunpack.c.h.b16 %v7305
        %v7635 = vunpack.c.l.b16 %v7306
        %v7636 = vunpack.c.h.b16 %v7306
        %v7637 = vunpack.c.l.b16 %v7307
        %v7638 = vunpack.c.h.b16 %v7307
        %v7639 = vunpack.c.l.b16 %v7308
        %v7640 = vunpack.c.h.b16 %v7308
        %v7641 = vunpack.c.l.b16 %v7309
        %v7642 = vunpack.c.h.b16 %v7309
        %v7643 = vunpack.c.l.b16 %v7310
        %v7644 = vunpack.c.h.b16 %v7310
        %v7645 = vunpack.c.l.b16 %v7311
        %v7646 = vunpack.c.h.b16 %v7311
        %v7647 = vunpack.c.l.b16 %v7312
        %v7648 = vunpack.c.h.b16 %v7312
        %v7649 = vunpack.c.l.b16 %v7313
        %v7650 = vunpack.c.h.b16 %v7313
        %v7651 = vunpack.c.l.b16 %v7314
        %v7652 = vunpack.c.h.b16 %v7314
        %v7653 = vunpack.c.l.b16 %v7315
        %v7654 = vunpack.c.h.b16 %v7315
        %v7655 = vunpack.c.l.b16 %v7316
        %v7656 = vunpack.c.h.b16 %v7316
        %v7657 = vunpack.c.l.b16 %v7317
        %v7658 = vunpack.c.h.b16 %v7317
        %v7659 = vunpack.c.l.b16 %v7318
        %v7660 = vunpack.c.h.b16 %v7318
        %v7661 = vunpack.c.l.b16 %v7319
        %v7662 = vunpack.c.h.b16 %v7319
        %v7663 = vunpack.c.l.b16 %v7320
        %v7664 = vunpack.c.h.b16 %v7320
        %v7665 = vunpack.c.l.b16 %v7321
        %v7666 = vunpack.c.h.b16 %v7321
        %v7667 = vunpack.c.l.b16 %v7322
        %v7668 = vunpack.c.h.b16 %v7322
        %v7669 = vunpack.c.l.b16 %v7323
        %v7670 = vunpack.c.h.b16 %v7323
        %v7671 = vunpack.c.l.b16 %v7324
        %v7672 = vunpack.c.h.b16 %v7324
        %v7673 = vunpack.c.l.b16 %v7325
        %v7674 = vunpack.c.h.b16 %v7325
        %v7675 = vunpack.c.l.b16 %v7326
        %v7676 = vunpack.c.h.b16 %v7326
        %v7677 = vunpack.c.l.b16 %v7327
        %v7678 = vunpack.c.h.b16 %v7327
        %v7679 = vunpack.c.l.b16 %v7328
        %v7680 = vunpack.c.h.b16 %v7328
        %v7681 = vunpack.c.l.b16 %v7329
        %v7682 = vunpack.c.h.b16 %v7329
        %v7683 = vunpack.c.l.b16 %v7330
        %v7684 = vunpack.c.h.b16 %v7330
        %v7685 = vunpack.c.l.b16 %v7331
        %v7686 = vunpack.c.h.b16 %v7331
        %v7687 = vunpack.c.l.b16 %v7332
        %v7688 = vunpack.c.h.b16 %v7332
        %v7689 = vunpack.c.l.b16 %v7333
        %v7690 = vunpack.c.h.b16 %v7333
        %v7691 = vunpack.c.l.b16 %v7334
        %v7692 = vunpack.c.h.b16 %v7334
        %v7693 = vunpack.c.l.b16 %v7335
        %v7694 = vunpack.c.h.b16 %v7335
        %v7695 = vunpack.c.l.b16 %v7336
        %v7696 = vunpack.c.h.b16 %v7336
        %v7697 = vunpack.c.l.b16 %v7337
        %v7698 = vunpack.c.h.b16 %v7337
        %v7699 = vunpack.c.l.b16 %v7338
        %v7700 = vunpack.c.h.b16 %v7338
        %v7701 = vunpack.c.l.b16 %v7339
        %v7702 = vunpack.c.h.b16 %v7339
        %v7703 = vunpack.c.l.b16 %v7340
        %v7704 = vunpack.c.h.b16 %v7340
        %v7705 = vunpack.c.l.b16 %v7341
        %v7706 = vunpack.c.h.b16 %v7341
        %v7707 = vunpack.c.l.b16 %v7342
        %v7708 = vunpack.c.h.b16 %v7342
        %v7709 = vunpack.c.l.b16 %v7343
        %v7710 = vunpack.c.h.b16 %v7343
        %v7711 = vunpack.c.l.b16 %v7344
        %v7712 = vunpack.c.h.b16 %v7344
        %v7713 = vunpack.c.l.b16 %v7345
        %v7714 = vunpack.c.h.b16 %v7345
        %v7715 = vunpack.c.l.b16 %v7346
        %v7716 = vunpack.c.h.b16 %v7346
        %v7717 = vunpack.c.l.b16 %v7347
        %v7718 = vunpack.c.h.b16 %v7347
        %v7719 = vunpack.c.l.b16 %v7348
        %v7720 = vunpack.c.h.b16 %v7348
        %v7721 = vunpack.c.l.b16 %v7349
        %v7722 = vunpack.c.h.b16 %v7349
        %v7723 = vunpack.c.l.b16 %v7350
        %v7724 = vunpack.c.h.b16 %v7350
        %v7725 = vunpack.c.l.b16 %v7351
        %v7726 = vunpack.c.h.b16 %v7351
        %v7727 = vunpack.c.l.b16 %v7352
        %v7728 = vunpack.c.h.b16 %v7352
        %v7729 = vunpack.c.l.b16 %v7353
        %v7730 = vunpack.c.h.b16 %v7353
        %v7731 = vunpack.c.l.b16 %v7354
        %v7732 = vunpack.c.h.b16 %v7354
        %v7733 = vunpack.c.l.b16 %v7355
        %v7734 = vunpack.c.h.b16 %v7355
        %v7735 = vunpack.c.l.b16 %v7356
        %v7736 = vunpack.c.h.b16 %v7356
        %v7737 = vunpack.c.l.b16 %v7357
        %v7738 = vunpack.c.h.b16 %v7357
        %v7739 = vunpack.c.l.b16 %v7358
        %v7740 = vunpack.c.h.b16 %v7358
        %v7741 = vunpack.c.l.b16 %v7359
        %v7742 = vunpack.c.h.b16 %v7359
        %v7743 = vunpack.c.l.b16 %v7360
        %v7744 = vunpack.c.h.b16 %v7360
        %v7745 = vunpack.c.l.b16 %v7361
        %v7746 = vunpack.c.h.b16 %v7361
        %v7747 = vunpack.c.l.b16 %v7362
        %v7748 = vunpack.c.h.b16 %v7362
        %v7749 = vunpack.c.l.b16 %v7363
        %v7750 = vunpack.c.h.b16 %v7363
        %v7751 = vunpack.c.l.b16 %v7364
        %v7752 = vunpack.c.h.b16 %v7364
        %v7753 = vunpack.c.l.b16 %v7365
        %v7754 = vunpack.c.h.b16 %v7365
        %v7755 = vunpack.c.l.b16 %v7366
        %v7756 = vunpack.c.h.b16 %v7366
        %v7757 = vunpack.c.l.b16 %v7367
        %v7758 = vunpack.c.h.b16 %v7367
        %v7759 = vunpack.c.l.b16 %v7368
        %v7760 = vunpack.c.h.b16 %v7368
        %v7761 = vunpack.c.l.b16 %v7369
        %v7762 = vunpack.c.h.b16 %v7369
        %v7763 = vunpack.c.l.b16 %v7370
        %v7764 = vunpack.c.h.b16 %v7370
        %v7765 = vunpack.c.l.b16 %v7371
        %v7766 = vunpack.c.h.b16 %v7371
        %v7767 = vunpack.c.l.b16 %v7372
        %v7768 = vunpack.c.h.b16 %v7372
        %v7769 = vunpack.c.l.b16 %v7373
        %v7770 = vunpack.c.h.b16 %v7373
        %v7771 = vunpack.c.l.b16 %v7374
        %v7772 = vunpack.c.h.b16 %v7374
        %v7773 = vunpack.c.l.b16 %v7375
        %v7774 = vunpack.c.h.b16 %v7375
        %v7775 = vunpack.c.l.b16 %v7376
        %v7776 = vunpack.c.h.b16 %v7376
        %v7777 = vpack.c.b16 %v7525, %v7521
        %v7778 = vpack.c.b16 %v7526, %v7522
        %v7779 = vpack.c.b16 %v7527, %v7523
        %v7780 = vpack.c.b16 %v7528, %v7524
        %v7781 = vpack.c.b16 %v7533, %v7529
        %v7782 = vpack.c.b16 %v7534, %v7530
        %v7783 = vpack.c.b16 %v7535, %v7531
        %v7784 = vpack.c.b16 %v7536, %v7532
        %v7785 = vpack.c.b16 %v7541, %v7537
        %v7786 = vpack.c.b16 %v7542, %v7538
        %v7787 = vpack.c.b16 %v7543, %v7539
        %v7788 = vpack.c.b16 %v7544, %v7540
        %v7789 = vpack.c.b16 %v7549, %v7545
        %v7790 = vpack.c.b16 %v7550, %v7546
        %v7791 = vpack.c.b16 %v7551, %v7547
        %v7792 = vpack.c.b16 %v7552, %v7548
        %v7793 = vpack.c.b16 %v7557, %v7553
        %v7794 = vpack.c.b16 %v7558, %v7554
        %v7795 = vpack.c.b16 %v7559, %v7555
        %v7796 = vpack.c.b16 %v7560, %v7556
        %v7797 = vpack.c.b16 %v7565, %v7561
        %v7798 = vpack.c.b16 %v7566, %v7562
        %v7799 = vpack.c.b16 %v7567, %v7563
        %v7800 = vpack.c.b16 %v7568, %v7564
        %v7801 = vpack.c.b16 %v7573, %v7569
        %v7802 = vpack.c.b16 %v7574, %v7570
        %v7803 = vpack.c.b16 %v7575, %v7571
        %v7804 = vpack.c.b16 %v7576, %v7572
        %v7805 = vpack.c.b16 %v7581, %v7577
        %v7806 = vpack.c.b16 %v7582, %v7578
        %v7807 = vpack.c.b16 %v7583, %v7579
        %v7808 = vpack.c.b16 %v7584, %v7580
        %v7809 = vpack.c.b16 %v7589, %v7585
        %v7810 = vpack.c.b16 %v7590, %v7586
        %v7811 = vpack.c.b16 %v7591, %v7587
        %v7812 = vpack.c.b16 %v7592, %v7588
        %v7813 = vpack.c.b16 %v7597, %v7593
        %v7814 = vpack.c.b16 %v7598, %v7594
        %v7815 = vpack.c.b16 %v7599, %v7595
        %v7816 = vpack.c.b16 %v7600, %v7596
        %v7817 = vpack.c.b16 %v7605, %v7601
        %v7818 = vpack.c.b16 %v7606, %v7602
        %v7819 = vpack.c.b16 %v7607, %v7603
        %v7820 = vpack.c.b16 %v7608, %v7604
        %v7821 = vpack.c.b16 %v7613, %v7609
        %v7822 = vpack.c.b16 %v7614, %v7610
        %v7823 = vpack.c.b16 %v7615, %v7611
        %v7824 = vpack.c.b16 %v7616, %v7612
        %v7825 = vpack.c.b16 %v7621, %v7617
        %v7826 = vpack.c.b16 %v7622, %v7618
        %v7827 = vpack.c.b16 %v7623, %v7619
        %v7828 = vpack.c.b16 %v7624, %v7620
        %v7829 = vpack.c.b16 %v7629, %v7625
        %v7830 = vpack.c.b16 %v7630, %v7626
        %v7831 = vpack.c.b16 %v7631, %v7627
        %v7832 = vpack.c.b16 %v7632, %v7628
        %v7833 = vpack.c.b16 %v7637, %v7633
        %v7834 = vpack.c.b16 %v7638, %v7634
        %v7835 = vpack.c.b16 %v7639, %v7635
        %v7836 = vpack.c.b16 %v7640, %v7636
        %v7837 = vpack.c.b16 %v7645, %v7641
        %v7838 = vpack.c.b16 %v7646, %v7642
        %v7839 = vpack.c.b16 %v7647, %v7643
        %v7840 = vpack.c.b16 %v7648, %v7644
        %v7841 = vpack.c.b16 %v7653, %v7649
        %v7842 = vpack.c.b16 %v7654, %v7650
        %v7843 = vpack.c.b16 %v7655, %v7651
        %v7844 = vpack.c.b16 %v7656, %v7652
        %v7845 = vpack.c.b16 %v7661, %v7657
        %v7846 = vpack.c.b16 %v7662, %v7658
        %v7847 = vpack.c.b16 %v7663, %v7659
        %v7848 = vpack.c.b16 %v7664, %v7660
        %v7849 = vpack.c.b16 %v7669, %v7665
        %v7850 = vpack.c.b16 %v7670, %v7666
        %v7851 = vpack.c.b16 %v7671, %v7667
        %v7852 = vpack.c.b16 %v7672, %v7668
        %v7853 = vpack.c.b16 %v7677, %v7673
        %v7854 = vpack.c.b16 %v7678, %v7674
        %v7855 = vpack.c.b16 %v7679, %v7675
        %v7856 = vpack.c.b16 %v7680, %v7676
        %v7857 = vpack.c.b16 %v7685, %v7681
        %v7858 = vpack.c.b16 %v7686, %v7682
        %v7859 = vpack.c.b16 %v7687, %v7683
        %v7860 = vpack.c.b16 %v7688, %v7684
        %v7861 = vpack.c.b16 %v7693, %v7689
        %v7862 = vpack.c.b16 %v7694, %v7690
        %v7863 = vpack.c.b16 %v7695, %v7691
        %v7864 = vpack.c.b16 %v7696, %v7692
        %v7865 = vpack.c.b16 %v7701, %v7697
        %v7866 = vpack.c.b16 %v7702, %v7698
        %v7867 = vpack.c.b16 %v7703, %v7699
        %v7868 = vpack.c.b16 %v7704, %v7700
        %v7869 = vpack.c.b16 %v7709, %v7705
        %v7870 = vpack.c.b16 %v7710, %v7706
        %v7871 = vpack.c.b16 %v7711, %v7707
        %v7872 = vpack.c.b16 %v7712, %v7708
        %v7873 = vpack.c.b16 %v7717, %v7713
        %v7874 = vpack.c.b16 %v7718, %v7714
        %v7875 = vpack.c.b16 %v7719, %v7715
        %v7876 = vpack.c.b16 %v7720, %v7716
        %v7877 = vpack.c.b16 %v7725, %v7721
        %v7878 = vpack.c.b16 %v7726, %v7722
        %v7879 = vpack.c.b16 %v7727, %v7723
        %v7880 = vpack.c.b16 %v7728, %v7724
        %v7881 = vpack.c.b16 %v7733, %v7729
        %v7882 = vpack.c.b16 %v7734, %v7730
        %v7883 = vpack.c.b16 %v7735, %v7731
        %v7884 = vpack.c.b16 %v7736, %v7732
        %v7885 = vpack.c.b16 %v7741, %v7737
        %v7886 = vpack.c.b16 %v7742, %v7738
        %v7887 = vpack.c.b16 %v7743, %v7739
        %v7888 = vpack.c.b16 %v7744, %v7740
        %v7889 = vpack.c.b16 %v7749, %v7745
        %v7890 = vpack.c.b16 %v7750, %v7746
        %v7891 = vpack.c.b16 %v7751, %v7747
        %v7892 = vpack.c.b16 %v7752, %v7748
        %v7893 = vpack.c.b16 %v7757, %v7753
        %v7894 = vpack.c.b16 %v7758, %v7754
        %v7895 = vpack.c.b16 %v7759, %v7755
        %v7896 = vpack.c.b16 %v7760, %v7756
        %v7897 = vpack.c.b16 %v7765, %v7761
        %v7898 = vpack.c.b16 %v7766, %v7762
        %v7899 = vpack.c.b16 %v7767, %v7763
        %v7900 = vpack.c.b16 %v7768, %v7764
        %v7901 = vpack.c.b16 %v7773, %v7769
        %v7902 = vpack.c.b16 %v7774, %v7770
        %v7903 = vpack.c.b16 %v7775, %v7771
        %v7904 = vpack.c.b16 %v7776, %v7772
        %8033 = vmatprep.subr.bf16.mxu0 %v7806
        %8034 = vmatpush1.bf16.msra.mxu0 %v7805
        %8035 = vmatprep.subr.bf16.mxu0 %v7802
        %8036 = vmatpush1.bf16.msra.mxu0 %v7801
        %8037 = vmatprep.subr.bf16.mxu0 %v7798
        %8038 = vmatpush1.bf16.msra.mxu0 %v7797
        %8039 = vmatprep.subr.bf16.mxu0 %v7794
        %8040 = vmatpush1.bf16.msra.mxu0 %v7793
        %8041 = vmatprep.subr.bf16.mxu0 %v7790
        %8042 = vmatpush1.bf16.msra.mxu0 %v7789
        %8043 = vmatprep.subr.bf16.mxu0 %v7786
        %8044 = vmatpush1.bf16.msra.mxu0 %v7785
        %8045 = vmatprep.subr.bf16.mxu0 %v7782
        %8046 = vmatpush1.bf16.msra.mxu0 %v7781
        %8047 = vmatprep.subr.bf16.mxu0 %v7778
        %8048 = vmatpush1.bf16.msra.mxu0 %v7777
        %8049 = vmatprep.subr.bf16.mxu0 %v7838
        %8050 = vmatpush2.bf16.msra.mxu0 %v7837
        %8051 = vmatprep.subr.bf16.mxu0 %v7834
        %8052 = vmatpush2.bf16.msra.mxu0 %v7833
        %8053 = vmatprep.subr.bf16.mxu0 %v7830
        %8054 = vmatpush2.bf16.msra.mxu0 %v7829
        %8055 = vmatprep.subr.bf16.mxu0 %v7826
        %8056 = vmatpush2.bf16.msra.mxu0 %v7825
        %8057 = vmatprep.subr.bf16.mxu0 %v7822
        %8058 = vmatpush2.bf16.msra.mxu0 %v7821
        %8059 = vmatprep.subr.bf16.mxu0 %v7818
        %8060 = vmatpush2.bf16.msra.mxu0 %v7817
        %8061 = vmatprep.subr.bf16.mxu0 %v7814
        %8062 = vmatpush2.bf16.msra.mxu0 %v7813
        %8063 = vmatprep.subr.bf16.mxu0 %v7810
        %8064 = vmatpush2.bf16.msra.mxu0 %v7809
        %8065 = vmatprep.mubr.bf16.mxu0 %v7378
        %8066 = vmatmul.mubr.bf16.gmra.mxu0 %v7377
        %v8067 = vpop.f32.mrf.mxu0
        %v8068 = vadd.f32 0.0, %v8067
        %v8069 = vpop.f32.mrf.mxu0
        %v8070 = vadd.f32 0.0, %v8069
        %v8071 = vpop.f32.mrf.mxu0
        %v8072 = vadd.f32 0.0, %v8071
        %v8073 = vpop.f32.mrf.mxu0
        %v8074 = vadd.f32 0.0, %v8073
        %8075 = vmatprep.mubr.bf16.mxu0 %v7382
        %8076 = vmatmul.mubr.bf16.gmra.mxu0 %v7381
        %v8077 = vpop.f32.mrf.mxu0
        %v8078 = vadd.f32 0.0, %v8077
        %v8079 = vpop.f32.mrf.mxu0
        %v8080 = vadd.f32 0.0, %v8079
        %v8081 = vpop.f32.mrf.mxu0
        %v8082 = vadd.f32 0.0, %v8081
        %v8083 = vpop.f32.mrf.mxu0
        %v8084 = vadd.f32 0.0, %v8083
        %8085 = vdwg.mxu0
        %8086 = vmatprep.subr.bf16.mxu0 %v7870
        %8087 = vmatpush1.bf16.msra.mxu0 %v7869
        %8088 = vmatprep.subr.bf16.mxu0 %v7866
        %8089 = vmatpush1.bf16.msra.mxu0 %v7865
        %8090 = vmatprep.subr.bf16.mxu0 %v7862
        %8091 = vmatpush1.bf16.msra.mxu0 %v7861
        %8092 = vmatprep.subr.bf16.mxu0 %v7858
        %8093 = vmatpush1.bf16.msra.mxu0 %v7857
        %8094 = vmatprep.subr.bf16.mxu0 %v7854
        %8095 = vmatpush1.bf16.msra.mxu0 %v7853
        %8096 = vmatprep.subr.bf16.mxu0 %v7850
        %8097 = vmatpush1.bf16.msra.mxu0 %v7849
        %8098 = vmatprep.subr.bf16.mxu0 %v7846
        %8099 = vmatpush1.bf16.msra.mxu0 %v7845
        %8100 = vmatprep.subr.bf16.mxu0 %v7842
        %8101 = vmatpush1.bf16.msra.mxu0 %v7841
        %8102 = vmatprep.subr.bf16.mxu0 %v7902
        %8103 = vmatpush2.bf16.msra.mxu0 %v7901
        %8104 = vmatprep.subr.bf16.mxu0 %v7898
        %8105 = vmatpush2.bf16.msra.mxu0 %v7897
        %8106 = vmatprep.subr.bf16.mxu0 %v7894
        %8107 = vmatpush2.bf16.msra.mxu0 %v7893
        %8108 = vmatprep.subr.bf16.mxu0 %v7890
        %8109 = vmatpush2.bf16.msra.mxu0 %v7889
        %8110 = vmatprep.subr.bf16.mxu0 %v7886
        %8111 = vmatpush2.bf16.msra.mxu0 %v7885
        %8112 = vmatprep.subr.bf16.mxu0 %v7882
        %8113 = vmatpush2.bf16.msra.mxu0 %v7881
        %8114 = vmatprep.subr.bf16.mxu0 %v7878
        %8115 = vmatpush2.bf16.msra.mxu0 %v7877
        %8116 = vmatprep.subr.bf16.mxu0 %v7874
        %8117 = vmatpush2.bf16.msra.mxu0 %v7873
        %8118 = vmatprep.mubr.bf16.mxu0 %v7380
        %8119 = vmatmul.mubr.bf16.gmra.mxu0 %v7379
        %v8120 = vpop.f32.mrf.mxu0
        %v8121 = vadd.f32 %v8068, %v8120
        %v8122 = vpop.f32.mrf.mxu0
        %v8123 = vadd.f32 %v8070, %v8122
        %v8124 = vpop.f32.mrf.mxu0
        %v8125 = vadd.f32 %v8072, %v8124
        %v8126 = vpop.f32.mrf.mxu0
        %v8127 = vadd.f32 %v8074, %v8126
        %8128 = vmatprep.mubr.bf16.mxu0 %v7384
        %8129 = vmatmul.mubr.bf16.gmra.mxu0 %v7383
        %v8130 = vpop.f32.mrf.mxu0
        %v8131 = vadd.f32 %v8078, %v8130
        %v8132 = vpop.f32.mrf.mxu0
        %v8133 = vadd.f32 %v8080, %v8132
        %v8134 = vpop.f32.mrf.mxu0
        %v8135 = vadd.f32 %v8082, %v8134
        %v8136 = vpop.f32.mrf.mxu0
        %v8137 = vadd.f32 %v8084, %v8136
        %8138 = vdwg.mxu0
        %8139 = vmatprep.subr.bf16.mxu0 %v7808
        %8140 = vmatpush1.bf16.msra.mxu0 %v7807
        %8141 = vmatprep.subr.bf16.mxu0 %v7804
        %8142 = vmatpush1.bf16.msra.mxu0 %v7803
        %8143 = vmatprep.subr.bf16.mxu0 %v7800
        %8144 = vmatpush1.bf16.msra.mxu0 %v7799
        %8145 = vmatprep.subr.bf16.mxu0 %v7796
        %8146 = vmatpush1.bf16.msra.mxu0 %v7795
        %8147 = vmatprep.subr.bf16.mxu0 %v7792
        %8148 = vmatpush1.bf16.msra.mxu0 %v7791
        %8149 = vmatprep.subr.bf16.mxu0 %v7788
        %8150 = vmatpush1.bf16.msra.mxu0 %v7787
        %8151 = vmatprep.subr.bf16.mxu0 %v7784
        %8152 = vmatpush1.bf16.msra.mxu0 %v7783
        %8153 = vmatprep.subr.bf16.mxu0 %v7780
        %8154 = vmatpush1.bf16.msra.mxu0 %v7779
        %8155 = vmatprep.subr.bf16.mxu0 %v7840
        %8156 = vmatpush2.bf16.msra.mxu0 %v7839
        %8157 = vmatprep.subr.bf16.mxu0 %v7836
        %8158 = vmatpush2.bf16.msra.mxu0 %v7835
        %8159 = vmatprep.subr.bf16.mxu0 %v7832
        %8160 = vmatpush2.bf16.msra.mxu0 %v7831
        %8161 = vmatprep.subr.bf16.mxu0 %v7828
        %8162 = vmatpush2.bf16.msra.mxu0 %v7827
        %8163 = vmatprep.subr.bf16.mxu0 %v7824
        %8164 = vmatpush2.bf16.msra.mxu0 %v7823
        %8165 = vmatprep.subr.bf16.mxu0 %v7820
        %8166 = vmatpush2.bf16.msra.mxu0 %v7819
        %8167 = vmatprep.subr.bf16.mxu0 %v7816
        %8168 = vmatpush2.bf16.msra.mxu0 %v7815
        %8169 = vmatprep.subr.bf16.mxu0 %v7812
        %8170 = vmatpush2.bf16.msra.mxu0 %v7811
        %8171 = vmatprep.mubr.bf16.mxu0 %v7378
        %8172 = vmatmul.mubr.bf16.gmra.mxu0 %v7377
        %v8173 = vpop.f32.mrf.mxu0
        %v8174 = vadd.f32 0.0, %v8173
        %v8175 = vpop.f32.mrf.mxu0
        %v8176 = vadd.f32 0.0, %v8175
        %v8177 = vpop.f32.mrf.mxu0
        %v8178 = vadd.f32 0.0, %v8177
        %v8179 = vpop.f32.mrf.mxu0
        %v8180 = vadd.f32 0.0, %v8179
        %8181 = vmatprep.mubr.bf16.mxu0 %v7382
        %8182 = vmatmul.mubr.bf16.gmra.mxu0 %v7381
        %v8183 = vpop.f32.mrf.mxu0
        %v8184 = vadd.f32 0.0, %v8183
        %v8185 = vpop.f32.mrf.mxu0
        %v8186 = vadd.f32 0.0, %v8185
        %v8187 = vpop.f32.mrf.mxu0
        %v8188 = vadd.f32 0.0, %v8187
        %v8189 = vpop.f32.mrf.mxu0
        %v8190 = vadd.f32 0.0, %v8189
        %8191 = vdwg.mxu0
        %8192 = vmatprep.subr.bf16.mxu0 %v7872
        %8193 = vmatpush1.bf16.msra.mxu0 %v7871
        %8194 = vmatprep.subr.bf16.mxu0 %v7868
        %8195 = vmatpush1.bf16.msra.mxu0 %v7867
        %8196 = vmatprep.subr.bf16.mxu0 %v7864
        %8197 = vmatpush1.bf16.msra.mxu0 %v7863
        %8198 = vmatprep.subr.bf16.mxu0 %v7860
        %8199 = vmatpush1.bf16.msra.mxu0 %v7859
        %8200 = vmatprep.subr.bf16.mxu0 %v7856
        %8201 = vmatpush1.bf16.msra.mxu0 %v7855
        %8202 = vmatprep.subr.bf16.mxu0 %v7852
        %8203 = vmatpush1.bf16.msra.mxu0 %v7851
        %8204 = vmatprep.subr.bf16.mxu0 %v7848
        %8205 = vmatpush1.bf16.msra.mxu0 %v7847
        %8206 = vmatprep.subr.bf16.mxu0 %v7844
        %8207 = vmatpush1.bf16.msra.mxu0 %v7843
        %8208 = vmatprep.subr.bf16.mxu0 %v7904
        %8209 = vmatpush2.bf16.msra.mxu0 %v7903
        %8210 = vmatprep.subr.bf16.mxu0 %v7900
        %8211 = vmatpush2.bf16.msra.mxu0 %v7899
        %8212 = vmatprep.subr.bf16.mxu0 %v7896
        %8213 = vmatpush2.bf16.msra.mxu0 %v7895
        %8214 = vmatprep.subr.bf16.mxu0 %v7892
        %8215 = vmatpush2.bf16.msra.mxu0 %v7891
        %8216 = vmatprep.subr.bf16.mxu0 %v7888
        %8217 = vmatpush2.bf16.msra.mxu0 %v7887
        %8218 = vmatprep.subr.bf16.mxu0 %v7884
        %8219 = vmatpush2.bf16.msra.mxu0 %v7883
        %8220 = vmatprep.subr.bf16.mxu0 %v7880
        %8221 = vmatpush2.bf16.msra.mxu0 %v7879
        %8222 = vmatprep.subr.bf16.mxu0 %v7876
        %8223 = vmatpush2.bf16.msra.mxu0 %v7875
        %8224 = vmatprep.mubr.bf16.mxu0 %v7380
        %8225 = vmatmul.mubr.bf16.gmra.mxu0 %v7379
        %v8226 = vpop.f32.mrf.mxu0
        %v8227 = vadd.f32 %v8174, %v8226
        %v8228 = vpop.f32.mrf.mxu0
        %v8229 = vadd.f32 %v8176, %v8228
        %v8230 = vpop.f32.mrf.mxu0
        %v8231 = vadd.f32 %v8178, %v8230
        %v8232 = vpop.f32.mrf.mxu0
        %v8233 = vadd.f32 %v8180, %v8232
        %8234 = vmatprep.mubr.bf16.mxu0 %v7384
        %8235 = vmatmul.mubr.bf16.gmra.mxu0 %v7383
        %v8236 = vpop.f32.mrf.mxu0
        %v8237 = vadd.f32 %v8184, %v8236
        %v8238 = vpop.f32.mrf.mxu0
        %v8239 = vadd.f32 %v8186, %v8238
        %v8240 = vpop.f32.mrf.mxu0
        %v8241 = vadd.f32 %v8188, %v8240
        %v8242 = vpop.f32.mrf.mxu0
        %v8243 = vadd.f32 %v8190, %v8242
        %8244 = vdwg.mxu0
        %v8245 = vpack.c.b16 %v7076, %v7072
        %v8246 = vpack.c.b16 %v7077, %v7073
        %v8247 = vpack.c.b16 %v7078, %v7074
        %v8248 = vpack.c.b16 %v7079, %v7075
        %v8249 = vpack.c.b16 %v7084, %v7080
        %v8250 = vpack.c.b16 %v7085, %v7081
        %v8251 = vpack.c.b16 %v7086, %v7082
        %v8252 = vpack.c.b16 %v7087, %v7083
        %v8389 = vunpack.c.l.b16 %v7088
        %v8390 = vunpack.c.h.b16 %v7088
        %v8391 = vunpack.c.l.b16 %v7089
        %v8392 = vunpack.c.h.b16 %v7089
        %v8393 = vunpack.c.l.b16 %v7090
        %v8394 = vunpack.c.h.b16 %v7090
        %v8395 = vunpack.c.l.b16 %v7091
        %v8396 = vunpack.c.h.b16 %v7091
        %v8397 = vunpack.c.l.b16 %v7092
        %v8398 = vunpack.c.h.b16 %v7092
        %v8399 = vunpack.c.l.b16 %v7093
        %v8400 = vunpack.c.h.b16 %v7093
        %v8401 = vunpack.c.l.b16 %v7094
        %v8402 = vunpack.c.h.b16 %v7094
        %v8403 = vunpack.c.l.b16 %v7095
        %v8404 = vunpack.c.h.b16 %v7095
        %v8405 = vunpack.c.l.b16 %v7096
        %v8406 = vunpack.c.h.b16 %v7096
        %v8407 = vunpack.c.l.b16 %v7097
        %v8408 = vunpack.c.h.b16 %v7097
        %v8409 = vunpack.c.l.b16 %v7098
        %v8410 = vunpack.c.h.b16 %v7098
        %v8411 = vunpack.c.l.b16 %v7099
        %v8412 = vunpack.c.h.b16 %v7099
        %v8413 = vunpack.c.l.b16 %v7100
        %v8414 = vunpack.c.h.b16 %v7100
        %v8415 = vunpack.c.l.b16 %v7101
        %v8416 = vunpack.c.h.b16 %v7101
        %v8417 = vunpack.c.l.b16 %v7102
        %v8418 = vunpack.c.h.b16 %v7102
        %v8419 = vunpack.c.l.b16 %v7103
        %v8420 = vunpack.c.h.b16 %v7103
        %v8421 = vunpack.c.l.b16 %v7104
        %v8422 = vunpack.c.h.b16 %v7104
        %v8423 = vunpack.c.l.b16 %v7105
        %v8424 = vunpack.c.h.b16 %v7105
        %v8425 = vunpack.c.l.b16 %v7106
        %v8426 = vunpack.c.h.b16 %v7106
        %v8427 = vunpack.c.l.b16 %v7107
        %v8428 = vunpack.c.h.b16 %v7107
        %v8429 = vunpack.c.l.b16 %v7108
        %v8430 = vunpack.c.h.b16 %v7108
        %v8431 = vunpack.c.l.b16 %v7109
        %v8432 = vunpack.c.h.b16 %v7109
        %v8433 = vunpack.c.l.b16 %v7110
        %v8434 = vunpack.c.h.b16 %v7110
        %v8435 = vunpack.c.l.b16 %v7111
        %v8436 = vunpack.c.h.b16 %v7111
        %v8437 = vunpack.c.l.b16 %v7112
        %v8438 = vunpack.c.h.b16 %v7112
        %v8439 = vunpack.c.l.b16 %v7113
        %v8440 = vunpack.c.h.b16 %v7113
        %v8441 = vunpack.c.l.b16 %v7114
        %v8442 = vunpack.c.h.b16 %v7114
        %v8443 = vunpack.c.l.b16 %v7115
        %v8444 = vunpack.c.h.b16 %v7115
        %v8445 = vunpack.c.l.b16 %v7116
        %v8446 = vunpack.c.h.b16 %v7116
        %v8447 = vunpack.c.l.b16 %v7117
        %v8448 = vunpack.c.h.b16 %v7117
        %v8449 = vunpack.c.l.b16 %v7118
        %v8450 = vunpack.c.h.b16 %v7118
        %v8451 = vunpack.c.l.b16 %v7119
        %v8452 = vunpack.c.h.b16 %v7119
        %v8453 = vunpack.c.l.b16 %v7120
        %v8454 = vunpack.c.h.b16 %v7120
        %v8455 = vunpack.c.l.b16 %v7121
        %v8456 = vunpack.c.h.b16 %v7121
        %v8457 = vunpack.c.l.b16 %v7122
        %v8458 = vunpack.c.h.b16 %v7122
        %v8459 = vunpack.c.l.b16 %v7123
        %v8460 = vunpack.c.h.b16 %v7123
        %v8461 = vunpack.c.l.b16 %v7124
        %v8462 = vunpack.c.h.b16 %v7124
        %v8463 = vunpack.c.l.b16 %v7125
        %v8464 = vunpack.c.h.b16 %v7125
        %v8465 = vunpack.c.l.b16 %v7126
        %v8466 = vunpack.c.h.b16 %v7126
        %v8467 = vunpack.c.l.b16 %v7127
        %v8468 = vunpack.c.h.b16 %v7127
        %v8469 = vunpack.c.l.b16 %v7128
        %v8470 = vunpack.c.h.b16 %v7128
        %v8471 = vunpack.c.l.b16 %v7129
        %v8472 = vunpack.c.h.b16 %v7129
        %v8473 = vunpack.c.l.b16 %v7130
        %v8474 = vunpack.c.h.b16 %v7130
        %v8475 = vunpack.c.l.b16 %v7131
        %v8476 = vunpack.c.h.b16 %v7131
        %v8477 = vunpack.c.l.b16 %v7132
        %v8478 = vunpack.c.h.b16 %v7132
        %v8479 = vunpack.c.l.b16 %v7133
        %v8480 = vunpack.c.h.b16 %v7133
        %v8481 = vunpack.c.l.b16 %v7134
        %v8482 = vunpack.c.h.b16 %v7134
        %v8483 = vunpack.c.l.b16 %v7135
        %v8484 = vunpack.c.h.b16 %v7135
        %v8485 = vunpack.c.l.b16 %v7136
        %v8486 = vunpack.c.h.b16 %v7136
        %v8487 = vunpack.c.l.b16 %v7137
        %v8488 = vunpack.c.h.b16 %v7137
        %v8489 = vunpack.c.l.b16 %v7138
        %v8490 = vunpack.c.h.b16 %v7138
        %v8491 = vunpack.c.l.b16 %v7139
        %v8492 = vunpack.c.h.b16 %v7139
        %v8493 = vunpack.c.l.b16 %v7140
        %v8494 = vunpack.c.h.b16 %v7140
        %v8495 = vunpack.c.l.b16 %v7141
        %v8496 = vunpack.c.h.b16 %v7141
        %v8497 = vunpack.c.l.b16 %v7142
        %v8498 = vunpack.c.h.b16 %v7142
        %v8499 = vunpack.c.l.b16 %v7143
        %v8500 = vunpack.c.h.b16 %v7143
        %v8501 = vunpack.c.l.b16 %v7144
        %v8502 = vunpack.c.h.b16 %v7144
        %v8503 = vunpack.c.l.b16 %v7145
        %v8504 = vunpack.c.h.b16 %v7145
        %v8505 = vunpack.c.l.b16 %v7146
        %v8506 = vunpack.c.h.b16 %v7146
        %v8507 = vunpack.c.l.b16 %v7147
        %v8508 = vunpack.c.h.b16 %v7147
        %v8509 = vunpack.c.l.b16 %v7148
        %v8510 = vunpack.c.h.b16 %v7148
        %v8511 = vunpack.c.l.b16 %v7149
        %v8512 = vunpack.c.h.b16 %v7149
        %v8513 = vunpack.c.l.b16 %v7150
        %v8514 = vunpack.c.h.b16 %v7150
        %v8515 = vunpack.c.l.b16 %v7151
        %v8516 = vunpack.c.h.b16 %v7151
        %v8517 = vunpack.c.l.b16 %v7152
        %v8518 = vunpack.c.h.b16 %v7152
        %v8519 = vunpack.c.l.b16 %v7153
        %v8520 = vunpack.c.h.b16 %v7153
        %v8521 = vunpack.c.l.b16 %v7154
        %v8522 = vunpack.c.h.b16 %v7154
        %v8523 = vunpack.c.l.b16 %v7155
        %v8524 = vunpack.c.h.b16 %v7155
        %v8525 = vunpack.c.l.b16 %v7156
        %v8526 = vunpack.c.h.b16 %v7156
        %v8527 = vunpack.c.l.b16 %v7157
        %v8528 = vunpack.c.h.b16 %v7157
        %v8529 = vunpack.c.l.b16 %v7158
        %v8530 = vunpack.c.h.b16 %v7158
        %v8531 = vunpack.c.l.b16 %v7159
        %v8532 = vunpack.c.h.b16 %v7159
        %v8533 = vunpack.c.l.b16 %v7160
        %v8534 = vunpack.c.h.b16 %v7160
        %v8535 = vunpack.c.l.b16 %v7161
        %v8536 = vunpack.c.h.b16 %v7161
        %v8537 = vunpack.c.l.b16 %v7162
        %v8538 = vunpack.c.h.b16 %v7162
        %v8539 = vunpack.c.l.b16 %v7163
        %v8540 = vunpack.c.h.b16 %v7163
        %v8541 = vunpack.c.l.b16 %v7164
        %v8542 = vunpack.c.h.b16 %v7164
        %v8543 = vunpack.c.l.b16 %v7165
        %v8544 = vunpack.c.h.b16 %v7165
        %v8545 = vunpack.c.l.b16 %v7166
        %v8546 = vunpack.c.h.b16 %v7166
        %v8547 = vunpack.c.l.b16 %v7167
        %v8548 = vunpack.c.h.b16 %v7167
        %v8549 = vunpack.c.l.b16 %v7168
        %v8550 = vunpack.c.h.b16 %v7168
        %v8551 = vunpack.c.l.b16 %v7169
        %v8552 = vunpack.c.h.b16 %v7169
        %v8553 = vunpack.c.l.b16 %v7170
        %v8554 = vunpack.c.h.b16 %v7170
        %v8555 = vunpack.c.l.b16 %v7171
        %v8556 = vunpack.c.h.b16 %v7171
        %v8557 = vunpack.c.l.b16 %v7172
        %v8558 = vunpack.c.h.b16 %v7172
        %v8559 = vunpack.c.l.b16 %v7173
        %v8560 = vunpack.c.h.b16 %v7173
        %v8561 = vunpack.c.l.b16 %v7174
        %v8562 = vunpack.c.h.b16 %v7174
        %v8563 = vunpack.c.l.b16 %v7175
        %v8564 = vunpack.c.h.b16 %v7175
        %v8565 = vunpack.c.l.b16 %v7176
        %v8566 = vunpack.c.h.b16 %v7176
        %v8567 = vunpack.c.l.b16 %v7177
        %v8568 = vunpack.c.h.b16 %v7177
        %v8569 = vunpack.c.l.b16 %v7178
        %v8570 = vunpack.c.h.b16 %v7178
        %v8571 = vunpack.c.l.b16 %v7179
        %v8572 = vunpack.c.h.b16 %v7179
        %v8573 = vunpack.c.l.b16 %v7180
        %v8574 = vunpack.c.h.b16 %v7180
        %v8575 = vunpack.c.l.b16 %v7181
        %v8576 = vunpack.c.h.b16 %v7181
        %v8577 = vunpack.c.l.b16 %v7182
        %v8578 = vunpack.c.h.b16 %v7182
        %v8579 = vunpack.c.l.b16 %v7183
        %v8580 = vunpack.c.h.b16 %v7183
        %v8581 = vunpack.c.l.b16 %v7184
        %v8582 = vunpack.c.h.b16 %v7184
        %v8583 = vunpack.c.l.b16 %v7185
        %v8584 = vunpack.c.h.b16 %v7185
        %v8585 = vunpack.c.l.b16 %v7186
        %v8586 = vunpack.c.h.b16 %v7186
        %v8587 = vunpack.c.l.b16 %v7187
        %v8588 = vunpack.c.h.b16 %v7187
        %v8589 = vunpack.c.l.b16 %v7188
        %v8590 = vunpack.c.h.b16 %v7188
        %v8591 = vunpack.c.l.b16 %v7189
        %v8592 = vunpack.c.h.b16 %v7189
        %v8593 = vunpack.c.l.b16 %v7190
        %v8594 = vunpack.c.h.b16 %v7190
        %v8595 = vunpack.c.l.b16 %v7191
        %v8596 = vunpack.c.h.b16 %v7191
        %v8597 = vunpack.c.l.b16 %v7192
        %v8598 = vunpack.c.h.b16 %v7192
        %v8599 = vunpack.c.l.b16 %v7193
        %v8600 = vunpack.c.h.b16 %v7193
        %v8601 = vunpack.c.l.b16 %v7194
        %v8602 = vunpack.c.h.b16 %v7194
        %v8603 = vunpack.c.l.b16 %v7195
        %v8604 = vunpack.c.h.b16 %v7195
        %v8605 = vunpack.c.l.b16 %v7196
        %v8606 = vunpack.c.h.b16 %v7196
        %v8607 = vunpack.c.l.b16 %v7197
        %v8608 = vunpack.c.h.b16 %v7197
        %v8609 = vunpack.c.l.b16 %v7198
        %v8610 = vunpack.c.h.b16 %v7198
        %v8611 = vunpack.c.l.b16 %v7199
        %v8612 = vunpack.c.h.b16 %v7199
        %v8613 = vunpack.c.l.b16 %v7200
        %v8614 = vunpack.c.h.b16 %v7200
        %v8615 = vunpack.c.l.b16 %v7201
        %v8616 = vunpack.c.h.b16 %v7201
        %v8617 = vunpack.c.l.b16 %v7202
        %v8618 = vunpack.c.h.b16 %v7202
        %v8619 = vunpack.c.l.b16 %v7203
        %v8620 = vunpack.c.h.b16 %v7203
        %v8621 = vunpack.c.l.b16 %v7204
        %v8622 = vunpack.c.h.b16 %v7204
        %v8623 = vunpack.c.l.b16 %v7205
        %v8624 = vunpack.c.h.b16 %v7205
        %v8625 = vunpack.c.l.b16 %v7206
        %v8626 = vunpack.c.h.b16 %v7206
        %v8627 = vunpack.c.l.b16 %v7207
        %v8628 = vunpack.c.h.b16 %v7207
        %v8629 = vunpack.c.l.b16 %v7208
        %v8630 = vunpack.c.h.b16 %v7208
        %v8631 = vunpack.c.l.b16 %v7209
        %v8632 = vunpack.c.h.b16 %v7209
        %v8633 = vunpack.c.l.b16 %v7210
        %v8634 = vunpack.c.h.b16 %v7210
        %v8635 = vunpack.c.l.b16 %v7211
        %v8636 = vunpack.c.h.b16 %v7211
        %v8637 = vunpack.c.l.b16 %v7212
        %v8638 = vunpack.c.h.b16 %v7212
        %v8639 = vunpack.c.l.b16 %v7213
        %v8640 = vunpack.c.h.b16 %v7213
        %v8641 = vunpack.c.l.b16 %v7214
        %v8642 = vunpack.c.h.b16 %v7214
        %v8643 = vunpack.c.l.b16 %v7215
        %v8644 = vunpack.c.h.b16 %v7215
        %v8645 = vpack.c.b16 %v8393, %v8389
        %v8646 = vpack.c.b16 %v8394, %v8390
        %v8647 = vpack.c.b16 %v8395, %v8391
        %v8648 = vpack.c.b16 %v8396, %v8392
        %v8649 = vpack.c.b16 %v8401, %v8397
        %v8650 = vpack.c.b16 %v8402, %v8398
        %v8651 = vpack.c.b16 %v8403, %v8399
        %v8652 = vpack.c.b16 %v8404, %v8400
        %v8653 = vpack.c.b16 %v8409, %v8405
        %v8654 = vpack.c.b16 %v8410, %v8406
        %v8655 = vpack.c.b16 %v8411, %v8407
        %v8656 = vpack.c.b16 %v8412, %v8408
        %v8657 = vpack.c.b16 %v8417, %v8413
        %v8658 = vpack.c.b16 %v8418, %v8414
        %v8659 = vpack.c.b16 %v8419, %v8415
        %v8660 = vpack.c.b16 %v8420, %v8416
        %v8661 = vpack.c.b16 %v8425, %v8421
        %v8662 = vpack.c.b16 %v8426, %v8422
        %v8663 = vpack.c.b16 %v8427, %v8423
        %v8664 = vpack.c.b16 %v8428, %v8424
        %v8665 = vpack.c.b16 %v8433, %v8429
        %v8666 = vpack.c.b16 %v8434, %v8430
        %v8667 = vpack.c.b16 %v8435, %v8431
        %v8668 = vpack.c.b16 %v8436, %v8432
        %v8669 = vpack.c.b16 %v8441, %v8437
        %v8670 = vpack.c.b16 %v8442, %v8438
        %v8671 = vpack.c.b16 %v8443, %v8439
        %v8672 = vpack.c.b16 %v8444, %v8440
        %v8673 = vpack.c.b16 %v8449, %v8445
        %v8674 = vpack.c.b16 %v8450, %v8446
        %v8675 = vpack.c.b16 %v8451, %v8447
        %v8676 = vpack.c.b16 %v8452, %v8448
        %v8677 = vpack.c.b16 %v8457, %v8453
        %v8678 = vpack.c.b16 %v8458, %v8454
        %v8679 = vpack.c.b16 %v8459, %v8455
        %v8680 = vpack.c.b16 %v8460, %v8456
        %v8681 = vpack.c.b16 %v8465, %v8461
        %v8682 = vpack.c.b16 %v8466, %v8462
        %v8683 = vpack.c.b16 %v8467, %v8463
        %v8684 = vpack.c.b16 %v8468, %v8464
        %v8685 = vpack.c.b16 %v8473, %v8469
        %v8686 = vpack.c.b16 %v8474, %v8470
        %v8687 = vpack.c.b16 %v8475, %v8471
        %v8688 = vpack.c.b16 %v8476, %v8472
        %v8689 = vpack.c.b16 %v8481, %v8477
        %v8690 = vpack.c.b16 %v8482, %v8478
        %v8691 = vpack.c.b16 %v8483, %v8479
        %v8692 = vpack.c.b16 %v8484, %v8480
        %v8693 = vpack.c.b16 %v8489, %v8485
        %v8694 = vpack.c.b16 %v8490, %v8486
        %v8695 = vpack.c.b16 %v8491, %v8487
        %v8696 = vpack.c.b16 %v8492, %v8488
        %v8697 = vpack.c.b16 %v8497, %v8493
        %v8698 = vpack.c.b16 %v8498, %v8494
        %v8699 = vpack.c.b16 %v8499, %v8495
        %v8700 = vpack.c.b16 %v8500, %v8496
        %v8701 = vpack.c.b16 %v8505, %v8501
        %v8702 = vpack.c.b16 %v8506, %v8502
        %v8703 = vpack.c.b16 %v8507, %v8503
        %v8704 = vpack.c.b16 %v8508, %v8504
        %v8705 = vpack.c.b16 %v8513, %v8509
        %v8706 = vpack.c.b16 %v8514, %v8510
        %v8707 = vpack.c.b16 %v8515, %v8511
        %v8708 = vpack.c.b16 %v8516, %v8512
        %v8709 = vpack.c.b16 %v8521, %v8517
        %v8710 = vpack.c.b16 %v8522, %v8518
        %v8711 = vpack.c.b16 %v8523, %v8519
        %v8712 = vpack.c.b16 %v8524, %v8520
        %v8713 = vpack.c.b16 %v8529, %v8525
        %v8714 = vpack.c.b16 %v8530, %v8526
        %v8715 = vpack.c.b16 %v8531, %v8527
        %v8716 = vpack.c.b16 %v8532, %v8528
        %v8717 = vpack.c.b16 %v8537, %v8533
        %v8718 = vpack.c.b16 %v8538, %v8534
        %v8719 = vpack.c.b16 %v8539, %v8535
        %v8720 = vpack.c.b16 %v8540, %v8536
        %v8721 = vpack.c.b16 %v8545, %v8541
        %v8722 = vpack.c.b16 %v8546, %v8542
        %v8723 = vpack.c.b16 %v8547, %v8543
        %v8724 = vpack.c.b16 %v8548, %v8544
        %v8725 = vpack.c.b16 %v8553, %v8549
        %v8726 = vpack.c.b16 %v8554, %v8550
        %v8727 = vpack.c.b16 %v8555, %v8551
        %v8728 = vpack.c.b16 %v8556, %v8552
        %v8729 = vpack.c.b16 %v8561, %v8557
        %v8730 = vpack.c.b16 %v8562, %v8558
        %v8731 = vpack.c.b16 %v8563, %v8559
        %v8732 = vpack.c.b16 %v8564, %v8560
        %v8733 = vpack.c.b16 %v8569, %v8565
        %v8734 = vpack.c.b16 %v8570, %v8566
        %v8735 = vpack.c.b16 %v8571, %v8567
        %v8736 = vpack.c.b16 %v8572, %v8568
        %v8737 = vpack.c.b16 %v8577, %v8573
        %v8738 = vpack.c.b16 %v8578, %v8574
        %v8739 = vpack.c.b16 %v8579, %v8575
        %v8740 = vpack.c.b16 %v8580, %v8576
        %v8741 = vpack.c.b16 %v8585, %v8581
        %v8742 = vpack.c.b16 %v8586, %v8582
        %v8743 = vpack.c.b16 %v8587, %v8583
        %v8744 = vpack.c.b16 %v8588, %v8584
        %v8745 = vpack.c.b16 %v8593, %v8589
        %v8746 = vpack.c.b16 %v8594, %v8590
        %v8747 = vpack.c.b16 %v8595, %v8591
        %v8748 = vpack.c.b16 %v8596, %v8592
        %v8749 = vpack.c.b16 %v8601, %v8597
        %v8750 = vpack.c.b16 %v8602, %v8598
        %v8751 = vpack.c.b16 %v8603, %v8599
        %v8752 = vpack.c.b16 %v8604, %v8600
        %v8753 = vpack.c.b16 %v8609, %v8605
        %v8754 = vpack.c.b16 %v8610, %v8606
        %v8755 = vpack.c.b16 %v8611, %v8607
        %v8756 = vpack.c.b16 %v8612, %v8608
        %v8757 = vpack.c.b16 %v8617, %v8613
        %v8758 = vpack.c.b16 %v8618, %v8614
        %v8759 = vpack.c.b16 %v8619, %v8615
        %v8760 = vpack.c.b16 %v8620, %v8616
        %v8761 = vpack.c.b16 %v8625, %v8621
        %v8762 = vpack.c.b16 %v8626, %v8622
        %v8763 = vpack.c.b16 %v8627, %v8623
        %v8764 = vpack.c.b16 %v8628, %v8624
        %v8765 = vpack.c.b16 %v8633, %v8629
        %v8766 = vpack.c.b16 %v8634, %v8630
        %v8767 = vpack.c.b16 %v8635, %v8631
        %v8768 = vpack.c.b16 %v8636, %v8632
        %v8769 = vpack.c.b16 %v8641, %v8637
        %v8770 = vpack.c.b16 %v8642, %v8638
        %v8771 = vpack.c.b16 %v8643, %v8639
        %v8772 = vpack.c.b16 %v8644, %v8640
        %8901 = vmatprep.subr.bf16.mxu0 %v8674
        %8902 = vmatpush1.bf16.msra.mxu0 %v8673
        %8903 = vmatprep.subr.bf16.mxu0 %v8670
        %8904 = vmatpush1.bf16.msra.mxu0 %v8669
        %8905 = vmatprep.subr.bf16.mxu0 %v8666
        %8906 = vmatpush1.bf16.msra.mxu0 %v8665
        %8907 = vmatprep.subr.bf16.mxu0 %v8662
        %8908 = vmatpush1.bf16.msra.mxu0 %v8661
        %8909 = vmatprep.subr.bf16.mxu0 %v8658
        %8910 = vmatpush1.bf16.msra.mxu0 %v8657
        %8911 = vmatprep.subr.bf16.mxu0 %v8654
        %8912 = vmatpush1.bf16.msra.mxu0 %v8653
        %8913 = vmatprep.subr.bf16.mxu0 %v8650
        %8914 = vmatpush1.bf16.msra.mxu0 %v8649
        %8915 = vmatprep.subr.bf16.mxu0 %v8646
        %8916 = vmatpush1.bf16.msra.mxu0 %v8645
        %8917 = vmatprep.subr.bf16.mxu0 %v8706
        %8918 = vmatpush2.bf16.msra.mxu0 %v8705
        %8919 = vmatprep.subr.bf16.mxu0 %v8702
        %8920 = vmatpush2.bf16.msra.mxu0 %v8701
        %8921 = vmatprep.subr.bf16.mxu0 %v8698
        %8922 = vmatpush2.bf16.msra.mxu0 %v8697
        %8923 = vmatprep.subr.bf16.mxu0 %v8694
        %8924 = vmatpush2.bf16.msra.mxu0 %v8693
        %8925 = vmatprep.subr.bf16.mxu0 %v8690
        %8926 = vmatpush2.bf16.msra.mxu0 %v8689
        %8927 = vmatprep.subr.bf16.mxu0 %v8686
        %8928 = vmatpush2.bf16.msra.mxu0 %v8685
        %8929 = vmatprep.subr.bf16.mxu0 %v8682
        %8930 = vmatpush2.bf16.msra.mxu0 %v8681
        %8931 = vmatprep.subr.bf16.mxu0 %v8678
        %8932 = vmatpush2.bf16.msra.mxu0 %v8677
        %8933 = vmatprep.mubr.bf16.mxu0 %v8246
        %8934 = vmatmul.mubr.bf16.gmra.mxu0 %v8245
        %v8935 = vpop.f32.mrf.mxu0
        %v8936 = vadd.f32 %v8121, %v8935
        %v8937 = vpop.f32.mrf.mxu0
        %v8938 = vadd.f32 %v8123, %v8937
        %v8939 = vpop.f32.mrf.mxu0
        %v8940 = vadd.f32 %v8125, %v8939
        %v8941 = vpop.f32.mrf.mxu0
        %v8942 = vadd.f32 %v8127, %v8941
        %8943 = vmatprep.mubr.bf16.mxu0 %v8250
        %8944 = vmatmul.mubr.bf16.gmra.mxu0 %v8249
        %v8945 = vpop.f32.mrf.mxu0
        %v8946 = vadd.f32 %v8131, %v8945
        %v8947 = vpop.f32.mrf.mxu0
        %v8948 = vadd.f32 %v8133, %v8947
        %v8949 = vpop.f32.mrf.mxu0
        %v8950 = vadd.f32 %v8135, %v8949
        %v8951 = vpop.f32.mrf.mxu0
        %v8952 = vadd.f32 %v8137, %v8951
        %8953 = vdwg.mxu0
        %8954 = vmatprep.subr.bf16.mxu0 %v8738
        %8955 = vmatpush1.bf16.msra.mxu0 %v8737
        %8956 = vmatprep.subr.bf16.mxu0 %v8734
        %8957 = vmatpush1.bf16.msra.mxu0 %v8733
        %8958 = vmatprep.subr.bf16.mxu0 %v8730
        %8959 = vmatpush1.bf16.msra.mxu0 %v8729
        %8960 = vmatprep.subr.bf16.mxu0 %v8726
        %8961 = vmatpush1.bf16.msra.mxu0 %v8725
        %8962 = vmatprep.subr.bf16.mxu0 %v8722
        %8963 = vmatpush1.bf16.msra.mxu0 %v8721
        %8964 = vmatprep.subr.bf16.mxu0 %v8718
        %8965 = vmatpush1.bf16.msra.mxu0 %v8717
        %8966 = vmatprep.subr.bf16.mxu0 %v8714
        %8967 = vmatpush1.bf16.msra.mxu0 %v8713
        %8968 = vmatprep.subr.bf16.mxu0 %v8710
        %8969 = vmatpush1.bf16.msra.mxu0 %v8709
        %8970 = vmatprep.subr.bf16.mxu0 %v8770
        %8971 = vmatpush2.bf16.msra.mxu0 %v8769
        %8972 = vmatprep.subr.bf16.mxu0 %v8766
        %8973 = vmatpush2.bf16.msra.mxu0 %v8765
        %8974 = vmatprep.subr.bf16.mxu0 %v8762
        %8975 = vmatpush2.bf16.msra.mxu0 %v8761
        %8976 = vmatprep.subr.bf16.mxu0 %v8758
        %8977 = vmatpush2.bf16.msra.mxu0 %v8757
        %8978 = vmatprep.subr.bf16.mxu0 %v8754
        %8979 = vmatpush2.bf16.msra.mxu0 %v8753
        %8980 = vmatprep.subr.bf16.mxu0 %v8750
        %8981 = vmatpush2.bf16.msra.mxu0 %v8749
        %8982 = vmatprep.subr.bf16.mxu0 %v8746
        %8983 = vmatpush2.bf16.msra.mxu0 %v8745
        %8984 = vmatprep.subr.bf16.mxu0 %v8742
        %8985 = vmatpush2.bf16.msra.mxu0 %v8741
        %8986 = vmatprep.mubr.bf16.mxu0 %v8248
        %8987 = vmatmul.mubr.bf16.gmra.mxu0 %v8247
        %v8988 = vpop.f32.mrf.mxu0
        %v8989 = vadd.f32 %v8936, %v8988
        %v8990 = vpop.f32.mrf.mxu0
        %v8991 = vadd.f32 %v8938, %v8990
        %v8992 = vpop.f32.mrf.mxu0
        %v8993 = vadd.f32 %v8940, %v8992
        %v8994 = vpop.f32.mrf.mxu0
        %v8995 = vadd.f32 %v8942, %v8994
        %8996 = vmatprep.mubr.bf16.mxu0 %v8252
        %8997 = vmatmul.mubr.bf16.gmra.mxu0 %v8251
        %v8998 = vpop.f32.mrf.mxu0
        %v8999 = vadd.f32 %v8946, %v8998
        %v9000 = vpop.f32.mrf.mxu0
        %v9001 = vadd.f32 %v8948, %v9000
        %v9002 = vpop.f32.mrf.mxu0
        %v9003 = vadd.f32 %v8950, %v9002
        %v9004 = vpop.f32.mrf.mxu0
        %v9005 = vadd.f32 %v8952, %v9004
        %9006 = vdwg.mxu0
        %9007 = vmatprep.subr.bf16.mxu0 %v8676
        %9008 = vmatpush1.bf16.msra.mxu0 %v8675
        %9009 = vmatprep.subr.bf16.mxu0 %v8672
        %9010 = vmatpush1.bf16.msra.mxu0 %v8671
        %9011 = vmatprep.subr.bf16.mxu0 %v8668
        %9012 = vmatpush1.bf16.msra.mxu0 %v8667
        %9013 = vmatprep.subr.bf16.mxu0 %v8664
        %9014 = vmatpush1.bf16.msra.mxu0 %v8663
        %9015 = vmatprep.subr.bf16.mxu0 %v8660
        %9016 = vmatpush1.bf16.msra.mxu0 %v8659
        %9017 = vmatprep.subr.bf16.mxu0 %v8656
        %9018 = vmatpush1.bf16.msra.mxu0 %v8655
        %9019 = vmatprep.subr.bf16.mxu0 %v8652
        %9020 = vmatpush1.bf16.msra.mxu0 %v8651
        %9021 = vmatprep.subr.bf16.mxu0 %v8648
        %9022 = vmatpush1.bf16.msra.mxu0 %v8647
        %9023 = vmatprep.subr.bf16.mxu0 %v8708
        %9024 = vmatpush2.bf16.msra.mxu0 %v8707
        %9025 = vmatprep.subr.bf16.mxu0 %v8704
        %9026 = vmatpush2.bf16.msra.mxu0 %v8703
        %9027 = vmatprep.subr.bf16.mxu0 %v8700
        %9028 = vmatpush2.bf16.msra.mxu0 %v8699
        %9029 = vmatprep.subr.bf16.mxu0 %v8696
        %9030 = vmatpush2.bf16.msra.mxu0 %v8695
        %9031 = vmatprep.subr.bf16.mxu0 %v8692
        %9032 = vmatpush2.bf16.msra.mxu0 %v8691
        %9033 = vmatprep.subr.bf16.mxu0 %v8688
        %9034 = vmatpush2.bf16.msra.mxu0 %v8687
        %9035 = vmatprep.subr.bf16.mxu0 %v8684
        %9036 = vmatpush2.bf16.msra.mxu0 %v8683
        %9037 = vmatprep.subr.bf16.mxu0 %v8680
        %9038 = vmatpush2.bf16.msra.mxu0 %v8679
        %9039 = vmatprep.mubr.bf16.mxu0 %v8246
        %9040 = vmatmul.mubr.bf16.gmra.mxu0 %v8245
        %v9041 = vpop.f32.mrf.mxu0
        %v9042 = vadd.f32 %v8227, %v9041
        %v9043 = vpop.f32.mrf.mxu0
        %v9044 = vadd.f32 %v8229, %v9043
        %v9045 = vpop.f32.mrf.mxu0
        %v9046 = vadd.f32 %v8231, %v9045
        %v9047 = vpop.f32.mrf.mxu0
        %v9048 = vadd.f32 %v8233, %v9047
        %9049 = vmatprep.mubr.bf16.mxu0 %v8250
        %9050 = vmatmul.mubr.bf16.gmra.mxu0 %v8249
        %v9051 = vpop.f32.mrf.mxu0
        %v9052 = vadd.f32 %v8237, %v9051
        %v9053 = vpop.f32.mrf.mxu0
        %v9054 = vadd.f32 %v8239, %v9053
        %v9055 = vpop.f32.mrf.mxu0
        %v9056 = vadd.f32 %v8241, %v9055
        %v9057 = vpop.f32.mrf.mxu0
        %v9058 = vadd.f32 %v8243, %v9057
        %9059 = vdwg.mxu0
        %9060 = vmatprep.subr.bf16.mxu0 %v8740
        %9061 = vmatpush1.bf16.msra.mxu0 %v8739
        %9062 = vmatprep.subr.bf16.mxu0 %v8736
        %9063 = vmatpush1.bf16.msra.mxu0 %v8735
        %9064 = vmatprep.subr.bf16.mxu0 %v8732
        %9065 = vmatpush1.bf16.msra.mxu0 %v8731
        %9066 = vmatprep.subr.bf16.mxu0 %v8728
        %9067 = vmatpush1.bf16.msra.mxu0 %v8727
        %9068 = vmatprep.subr.bf16.mxu0 %v8724
        %9069 = vmatpush1.bf16.msra.mxu0 %v8723
        %9070 = vmatprep.subr.bf16.mxu0 %v8720
        %9071 = vmatpush1.bf16.msra.mxu0 %v8719
        %9072 = vmatprep.subr.bf16.mxu0 %v8716
        %9073 = vmatpush1.bf16.msra.mxu0 %v8715
        %9074 = vmatprep.subr.bf16.mxu0 %v8712
        %9075 = vmatpush1.bf16.msra.mxu0 %v8711
        %9076 = vmatprep.subr.bf16.mxu0 %v8772
        %9077 = vmatpush2.bf16.msra.mxu0 %v8771
        %9078 = vmatprep.subr.bf16.mxu0 %v8768
        %9079 = vmatpush2.bf16.msra.mxu0 %v8767
        %9080 = vmatprep.subr.bf16.mxu0 %v8764
        %9081 = vmatpush2.bf16.msra.mxu0 %v8763
        %9082 = vmatprep.subr.bf16.mxu0 %v8760
        %9083 = vmatpush2.bf16.msra.mxu0 %v8759
        %9084 = vmatprep.subr.bf16.mxu0 %v8756
        %9085 = vmatpush2.bf16.msra.mxu0 %v8755
        %9086 = vmatprep.subr.bf16.mxu0 %v8752
        %9087 = vmatpush2.bf16.msra.mxu0 %v8751
        %9088 = vmatprep.subr.bf16.mxu0 %v8748
        %9089 = vmatpush2.bf16.msra.mxu0 %v8747
        %9090 = vmatprep.subr.bf16.mxu0 %v8744
        %9091 = vmatpush2.bf16.msra.mxu0 %v8743
        %9092 = vmatprep.mubr.bf16.mxu0 %v8248
        %9093 = vmatmul.mubr.bf16.gmra.mxu0 %v8247
        %v9094 = vpop.f32.mrf.mxu0
        %v9095 = vadd.f32 %v9042, %v9094
        %v9096 = vpop.f32.mrf.mxu0
        %v9097 = vadd.f32 %v9044, %v9096
        %v9098 = vpop.f32.mrf.mxu0
        %v9099 = vadd.f32 %v9046, %v9098
        %v9100 = vpop.f32.mrf.mxu0
        %v9101 = vadd.f32 %v9048, %v9100
        %9102 = vmatprep.mubr.bf16.mxu0 %v8252
        %9103 = vmatmul.mubr.bf16.gmra.mxu0 %v8251
        %v9104 = vpop.f32.mrf.mxu0
        %v9105 = vadd.f32 %v9052, %v9104
        %v9106 = vpop.f32.mrf.mxu0
        %v9107 = vadd.f32 %v9054, %v9106
        %v9108 = vpop.f32.mrf.mxu0
        %v9109 = vadd.f32 %v9056, %v9108
        %v9110 = vpop.f32.mrf.mxu0
        %v9111 = vadd.f32 %v9058, %v9110
        %9112 = vdwg.mxu0
        %v9129 = vunpack.c.l.b16 %v7040
        %v9130 = vunpack.c.l.b16 %v7041
        %v9131 = vunpack.c.l.b16 %v7042
        %v9132 = vunpack.c.l.b16 %v7043
        %v9133 = vunpack.c.l.b16 %v7044
        %v9134 = vunpack.c.l.b16 %v7045
        %v9135 = vunpack.c.l.b16 %v7046
        %v9136 = vunpack.c.l.b16 %v7047
        %v9137 = vunpack.c.l.b16 %v7048
        %v9138 = vunpack.c.l.b16 %v7049
        %v9139 = vunpack.c.l.b16 %v7050
        %v9140 = vunpack.c.l.b16 %v7051
        %v9141 = vunpack.c.l.b16 %v7052
        %v9142 = vunpack.c.l.b16 %v7053
        %v9143 = vunpack.c.l.b16 %v7054
        %v9144 = vunpack.c.l.b16 %v7055
        %s9145 = scalar_lea.vmem [#allocation16], 2048
        %v9146 = vld [vmem:[%s9145] sm:$0xff]
        %v9147 = vld [vmem:[%s9145 + $0x8] sm:$0xff]
        %v9148 = vld [vmem:[%s9145 + $0x10] sm:$0xff]
        %v9149 = vld [vmem:[%s9145 + $0x18] sm:$0xff]
        %v9150 = vld [vmem:[%s9145 + $0x20] sm:$0xff]
        %v9151 = vld [vmem:[%s9145 + $0x28] sm:$0xff]
        %v9152 = vld [vmem:[%s9145 + $0x30] sm:$0xff]
        %v9153 = vld [vmem:[%s9145 + $0x38] sm:$0xff]
        %v9154 = vld [vmem:[%s9145 + $0x40] sm:$0xff]
        %v9155 = vld [vmem:[%s9145 + $0x48] sm:$0xff]
        %v9156 = vld [vmem:[%s9145 + $0x50] sm:$0xff]
        %v9157 = vld [vmem:[%s9145 + $0x58] sm:$0xff]
        %v9158 = vld [vmem:[%s9145 + $0x60] sm:$0xff]
        %v9159 = vld [vmem:[%s9145 + $0x68] sm:$0xff]
        %v9160 = vld [vmem:[%s9145 + $0x70] sm:$0xff]
        %v9161 = vld [vmem:[%s9145 + $0x78] sm:$0xff]
        %v9162 = vld [vmem:[%s9145 + $0x80] sm:$0xff]
        %v9163 = vld [vmem:[%s9145 + $0x88] sm:$0xff]
        %v9164 = vld [vmem:[%s9145 + $0x90] sm:$0xff]
        %v9165 = vld [vmem:[%s9145 + $0x98] sm:$0xff]
        %v9166 = vld [vmem:[%s9145 + $0xa0] sm:$0xff]
        %v9167 = vld [vmem:[%s9145 + $0xa8] sm:$0xff]
        %v9168 = vld [vmem:[%s9145 + $0xb0] sm:$0xff]
        %v9169 = vld [vmem:[%s9145 + $0xb8] sm:$0xff]
        %v9170 = vld [vmem:[%s9145 + $0xc0] sm:$0xff]
        %v9171 = vld [vmem:[%s9145 + $0xc8] sm:$0xff]
        %v9172 = vld [vmem:[%s9145 + $0xd0] sm:$0xff]
        %v9173 = vld [vmem:[%s9145 + $0xd8] sm:$0xff]
        %v9174 = vld [vmem:[%s9145 + $0xe0] sm:$0xff]
        %v9175 = vld [vmem:[%s9145 + $0xe8] sm:$0xff]
        %v9176 = vld [vmem:[%s9145 + $0xf0] sm:$0xff]
        %v9177 = vld [vmem:[%s9145 + $0xf8] sm:$0xff]
        %v9178 = vld [vmem:[%s9145 + $0x100] sm:$0xff]
        %v9179 = vld [vmem:[%s9145 + $0x108] sm:$0xff]
        %v9180 = vld [vmem:[%s9145 + $0x110] sm:$0xff]
        %v9181 = vld [vmem:[%s9145 + $0x118] sm:$0xff]
        %v9182 = vld [vmem:[%s9145 + $0x120] sm:$0xff]
        %v9183 = vld [vmem:[%s9145 + $0x128] sm:$0xff]
        %v9184 = vld [vmem:[%s9145 + $0x130] sm:$0xff]
        %v9185 = vld [vmem:[%s9145 + $0x138] sm:$0xff]
        %v9186 = vld [vmem:[%s9145 + $0x140] sm:$0xff]
        %v9187 = vld [vmem:[%s9145 + $0x148] sm:$0xff]
        %v9188 = vld [vmem:[%s9145 + $0x150] sm:$0xff]
        %v9189 = vld [vmem:[%s9145 + $0x158] sm:$0xff]
        %v9190 = vld [vmem:[%s9145 + $0x160] sm:$0xff]
        %v9191 = vld [vmem:[%s9145 + $0x168] sm:$0xff]
        %v9192 = vld [vmem:[%s9145 + $0x170] sm:$0xff]
        %v9193 = vld [vmem:[%s9145 + $0x178] sm:$0xff]
        %v9194 = vld [vmem:[%s9145 + $0x180] sm:$0xff]
        %v9195 = vld [vmem:[%s9145 + $0x188] sm:$0xff]
        %v9196 = vld [vmem:[%s9145 + $0x190] sm:$0xff]
        %v9197 = vld [vmem:[%s9145 + $0x198] sm:$0xff]
        %v9198 = vld [vmem:[%s9145 + $0x1a0] sm:$0xff]
        %v9199 = vld [vmem:[%s9145 + $0x1a8] sm:$0xff]
        %v9200 = vld [vmem:[%s9145 + $0x1b0] sm:$0xff]
        %v9201 = vld [vmem:[%s9145 + $0x1b8] sm:$0xff]
        %v9202 = vld [vmem:[%s9145 + $0x1c0] sm:$0xff]
        %v9203 = vld [vmem:[%s9145 + $0x1c8] sm:$0xff]
        %v9204 = vld [vmem:[%s9145 + $0x1d0] sm:$0xff]
        %v9205 = vld [vmem:[%s9145 + $0x1d8] sm:$0xff]
        %v9206 = vld [vmem:[%s9145 + $0x1e0] sm:$0xff]
        %v9207 = vld [vmem:[%s9145 + $0x1e8] sm:$0xff]
        %v9208 = vld [vmem:[%s9145 + $0x1f0] sm:$0xff]
        %v9209 = vld [vmem:[%s9145 + $0x1f8] sm:$0xff]
        %v9210 = vld [vmem:[%s9145 + $0x200] sm:$0xff]
        %v9211 = vld [vmem:[%s9145 + $0x208] sm:$0xff]
        %v9212 = vld [vmem:[%s9145 + $0x210] sm:$0xff]
        %v9213 = vld [vmem:[%s9145 + $0x218] sm:$0xff]
        %v9214 = vld [vmem:[%s9145 + $0x220] sm:$0xff]
        %v9215 = vld [vmem:[%s9145 + $0x228] sm:$0xff]
        %v9216 = vld [vmem:[%s9145 + $0x230] sm:$0xff]
        %v9217 = vld [vmem:[%s9145 + $0x238] sm:$0xff]
        %v9218 = vld [vmem:[%s9145 + $0x240] sm:$0xff]
        %v9219 = vld [vmem:[%s9145 + $0x248] sm:$0xff]
        %v9220 = vld [vmem:[%s9145 + $0x250] sm:$0xff]
        %v9221 = vld [vmem:[%s9145 + $0x258] sm:$0xff]
        %v9222 = vld [vmem:[%s9145 + $0x260] sm:$0xff]
        %v9223 = vld [vmem:[%s9145 + $0x268] sm:$0xff]
        %v9224 = vld [vmem:[%s9145 + $0x270] sm:$0xff]
        %v9225 = vld [vmem:[%s9145 + $0x278] sm:$0xff]
        %v9226 = vld [vmem:[%s9145 + $0x280] sm:$0xff]
        %v9227 = vld [vmem:[%s9145 + $0x288] sm:$0xff]
        %v9228 = vld [vmem:[%s9145 + $0x290] sm:$0xff]
        %v9229 = vld [vmem:[%s9145 + $0x298] sm:$0xff]
        %v9230 = vld [vmem:[%s9145 + $0x2a0] sm:$0xff]
        %v9231 = vld [vmem:[%s9145 + $0x2a8] sm:$0xff]
        %v9232 = vld [vmem:[%s9145 + $0x2b0] sm:$0xff]
        %v9233 = vld [vmem:[%s9145 + $0x2b8] sm:$0xff]
        %v9234 = vld [vmem:[%s9145 + $0x2c0] sm:$0xff]
        %v9235 = vld [vmem:[%s9145 + $0x2c8] sm:$0xff]
        %v9236 = vld [vmem:[%s9145 + $0x2d0] sm:$0xff]
        %v9237 = vld [vmem:[%s9145 + $0x2d8] sm:$0xff]
        %v9238 = vld [vmem:[%s9145 + $0x2e0] sm:$0xff]
        %v9239 = vld [vmem:[%s9145 + $0x2e8] sm:$0xff]
        %v9240 = vld [vmem:[%s9145 + $0x2f0] sm:$0xff]
        %v9241 = vld [vmem:[%s9145 + $0x2f8] sm:$0xff]
        %v9242 = vld [vmem:[%s9145 + $0x300] sm:$0xff]
        %v9243 = vld [vmem:[%s9145 + $0x308] sm:$0xff]
        %v9244 = vld [vmem:[%s9145 + $0x310] sm:$0xff]
        %v9245 = vld [vmem:[%s9145 + $0x318] sm:$0xff]
        %v9246 = vld [vmem:[%s9145 + $0x320] sm:$0xff]
        %v9247 = vld [vmem:[%s9145 + $0x328] sm:$0xff]
        %v9248 = vld [vmem:[%s9145 + $0x330] sm:$0xff]
        %v9249 = vld [vmem:[%s9145 + $0x338] sm:$0xff]
        %v9250 = vld [vmem:[%s9145 + $0x340] sm:$0xff]
        %v9251 = vld [vmem:[%s9145 + $0x348] sm:$0xff]
        %v9252 = vld [vmem:[%s9145 + $0x350] sm:$0xff]
        %v9253 = vld [vmem:[%s9145 + $0x358] sm:$0xff]
        %v9254 = vld [vmem:[%s9145 + $0x360] sm:$0xff]
        %v9255 = vld [vmem:[%s9145 + $0x368] sm:$0xff]
        %v9256 = vld [vmem:[%s9145 + $0x370] sm:$0xff]
        %v9257 = vld [vmem:[%s9145 + $0x378] sm:$0xff]
        %v9258 = vld [vmem:[%s9145 + $0x380] sm:$0xff]
        %v9259 = vld [vmem:[%s9145 + $0x388] sm:$0xff]
        %v9260 = vld [vmem:[%s9145 + $0x390] sm:$0xff]
        %v9261 = vld [vmem:[%s9145 + $0x398] sm:$0xff]
        %v9262 = vld [vmem:[%s9145 + $0x3a0] sm:$0xff]
        %v9263 = vld [vmem:[%s9145 + $0x3a8] sm:$0xff]
        %v9264 = vld [vmem:[%s9145 + $0x3b0] sm:$0xff]
        %v9265 = vld [vmem:[%s9145 + $0x3b8] sm:$0xff]
        %v9266 = vld [vmem:[%s9145 + $0x3c0] sm:$0xff]
        %v9267 = vld [vmem:[%s9145 + $0x3c8] sm:$0xff]
        %v9268 = vld [vmem:[%s9145 + $0x3d0] sm:$0xff]
        %v9269 = vld [vmem:[%s9145 + $0x3d8] sm:$0xff]
        %v9270 = vld [vmem:[%s9145 + $0x3e0] sm:$0xff]
        %v9271 = vld [vmem:[%s9145 + $0x3e8] sm:$0xff]
        %v9272 = vld [vmem:[%s9145 + $0x3f0] sm:$0xff]
        %v9273 = vld [vmem:[%s9145 + $0x3f8] sm:$0xff]
        %v9274 = vpack.c.b16 %v9133, %v9129
        %v9275 = vpack.c.b16 %v9134, %v9130
        %v9276 = vpack.c.b16 %v9135, %v9131
        %v9277 = vpack.c.b16 %v9136, %v9132
        %v9278 = vpack.c.b16 %v9141, %v9137
        %v9279 = vpack.c.b16 %v9142, %v9138
        %v9280 = vpack.c.b16 %v9143, %v9139
        %v9281 = vpack.c.b16 %v9144, %v9140
        %v9418 = vunpack.c.l.b16 %v9146
        %v9419 = vunpack.c.h.b16 %v9146
        %v9420 = vunpack.c.l.b16 %v9147
        %v9421 = vunpack.c.h.b16 %v9147
        %v9422 = vunpack.c.l.b16 %v9148
        %v9423 = vunpack.c.h.b16 %v9148
        %v9424 = vunpack.c.l.b16 %v9149
        %v9425 = vunpack.c.h.b16 %v9149
        %v9426 = vunpack.c.l.b16 %v9150
        %v9427 = vunpack.c.h.b16 %v9150
        %v9428 = vunpack.c.l.b16 %v9151
        %v9429 = vunpack.c.h.b16 %v9151
        %v9430 = vunpack.c.l.b16 %v9152
        %v9431 = vunpack.c.h.b16 %v9152
        %v9432 = vunpack.c.l.b16 %v9153
        %v9433 = vunpack.c.h.b16 %v9153
        %v9434 = vunpack.c.l.b16 %v9154
        %v9435 = vunpack.c.h.b16 %v9154
        %v9436 = vunpack.c.l.b16 %v9155
        %v9437 = vunpack.c.h.b16 %v9155
        %v9438 = vunpack.c.l.b16 %v9156
        %v9439 = vunpack.c.h.b16 %v9156
        %v9440 = vunpack.c.l.b16 %v9157
        %v9441 = vunpack.c.h.b16 %v9157
        %v9442 = vunpack.c.l.b16 %v9158
        %v9443 = vunpack.c.h.b16 %v9158
        %v9444 = vunpack.c.l.b16 %v9159
        %v9445 = vunpack.c.h.b16 %v9159
        %v9446 = vunpack.c.l.b16 %v9160
        %v9447 = vunpack.c.h.b16 %v9160
        %v9448 = vunpack.c.l.b16 %v9161
        %v9449 = vunpack.c.h.b16 %v9161
        %v9450 = vunpack.c.l.b16 %v9162
        %v9451 = vunpack.c.h.b16 %v9162
        %v9452 = vunpack.c.l.b16 %v9163
        %v9453 = vunpack.c.h.b16 %v9163
        %v9454 = vunpack.c.l.b16 %v9164
        %v9455 = vunpack.c.h.b16 %v9164
        %v9456 = vunpack.c.l.b16 %v9165
        %v9457 = vunpack.c.h.b16 %v9165
        %v9458 = vunpack.c.l.b16 %v9166
        %v9459 = vunpack.c.h.b16 %v9166
        %v9460 = vunpack.c.l.b16 %v9167
        %v9461 = vunpack.c.h.b16 %v9167
        %v9462 = vunpack.c.l.b16 %v9168
        %v9463 = vunpack.c.h.b16 %v9168
        %v9464 = vunpack.c.l.b16 %v9169
        %v9465 = vunpack.c.h.b16 %v9169
        %v9466 = vunpack.c.l.b16 %v9170
        %v9467 = vunpack.c.h.b16 %v9170
        %v9468 = vunpack.c.l.b16 %v9171
        %v9469 = vunpack.c.h.b16 %v9171
        %v9470 = vunpack.c.l.b16 %v9172
        %v9471 = vunpack.c.h.b16 %v9172
        %v9472 = vunpack.c.l.b16 %v9173
        %v9473 = vunpack.c.h.b16 %v9173
        %v9474 = vunpack.c.l.b16 %v9174
        %v9475 = vunpack.c.h.b16 %v9174
        %v9476 = vunpack.c.l.b16 %v9175
        %v9477 = vunpack.c.h.b16 %v9175
        %v9478 = vunpack.c.l.b16 %v9176
        %v9479 = vunpack.c.h.b16 %v9176
        %v9480 = vunpack.c.l.b16 %v9177
        %v9481 = vunpack.c.h.b16 %v9177
        %v9482 = vunpack.c.l.b16 %v9178
        %v9483 = vunpack.c.h.b16 %v9178
        %v9484 = vunpack.c.l.b16 %v9179
        %v9485 = vunpack.c.h.b16 %v9179
        %v9486 = vunpack.c.l.b16 %v9180
        %v9487 = vunpack.c.h.b16 %v9180
        %v9488 = vunpack.c.l.b16 %v9181
        %v9489 = vunpack.c.h.b16 %v9181
        %v9490 = vunpack.c.l.b16 %v9182
        %v9491 = vunpack.c.h.b16 %v9182
        %v9492 = vunpack.c.l.b16 %v9183
        %v9493 = vunpack.c.h.b16 %v9183
        %v9494 = vunpack.c.l.b16 %v9184
        %v9495 = vunpack.c.h.b16 %v9184
        %v9496 = vunpack.c.l.b16 %v9185
        %v9497 = vunpack.c.h.b16 %v9185
        %v9498 = vunpack.c.l.b16 %v9186
        %v9499 = vunpack.c.h.b16 %v9186
        %v9500 = vunpack.c.l.b16 %v9187
        %v9501 = vunpack.c.h.b16 %v9187
        %v9502 = vunpack.c.l.b16 %v9188
        %v9503 = vunpack.c.h.b16 %v9188
        %v9504 = vunpack.c.l.b16 %v9189
        %v9505 = vunpack.c.h.b16 %v9189
        %v9506 = vunpack.c.l.b16 %v9190
        %v9507 = vunpack.c.h.b16 %v9190
        %v9508 = vunpack.c.l.b16 %v9191
        %v9509 = vunpack.c.h.b16 %v9191
        %v9510 = vunpack.c.l.b16 %v9192
        %v9511 = vunpack.c.h.b16 %v9192
        %v9512 = vunpack.c.l.b16 %v9193
        %v9513 = vunpack.c.h.b16 %v9193
        %v9514 = vunpack.c.l.b16 %v9194
        %v9515 = vunpack.c.h.b16 %v9194
        %v9516 = vunpack.c.l.b16 %v9195
        %v9517 = vunpack.c.h.b16 %v9195
        %v9518 = vunpack.c.l.b16 %v9196
        %v9519 = vunpack.c.h.b16 %v9196
        %v9520 = vunpack.c.l.b16 %v9197
        %v9521 = vunpack.c.h.b16 %v9197
        %v9522 = vunpack.c.l.b16 %v9198
        %v9523 = vunpack.c.h.b16 %v9198
        %v9524 = vunpack.c.l.b16 %v9199
        %v9525 = vunpack.c.h.b16 %v9199
        %v9526 = vunpack.c.l.b16 %v9200
        %v9527 = vunpack.c.h.b16 %v9200
        %v9528 = vunpack.c.l.b16 %v9201
        %v9529 = vunpack.c.h.b16 %v9201
        %v9530 = vunpack.c.l.b16 %v9202
        %v9531 = vunpack.c.h.b16 %v9202
        %v9532 = vunpack.c.l.b16 %v9203
        %v9533 = vunpack.c.h.b16 %v9203
        %v9534 = vunpack.c.l.b16 %v9204
        %v9535 = vunpack.c.h.b16 %v9204
        %v9536 = vunpack.c.l.b16 %v9205
        %v9537 = vunpack.c.h.b16 %v9205
        %v9538 = vunpack.c.l.b16 %v9206
        %v9539 = vunpack.c.h.b16 %v9206
        %v9540 = vunpack.c.l.b16 %v9207
        %v9541 = vunpack.c.h.b16 %v9207
        %v9542 = vunpack.c.l.b16 %v9208
        %v9543 = vunpack.c.h.b16 %v9208
        %v9544 = vunpack.c.l.b16 %v9209
        %v9545 = vunpack.c.h.b16 %v9209
        %v9546 = vunpack.c.l.b16 %v9210
        %v9547 = vunpack.c.h.b16 %v9210
        %v9548 = vunpack.c.l.b16 %v9211
        %v9549 = vunpack.c.h.b16 %v9211
        %v9550 = vunpack.c.l.b16 %v9212
        %v9551 = vunpack.c.h.b16 %v9212
        %v9552 = vunpack.c.l.b16 %v9213
        %v9553 = vunpack.c.h.b16 %v9213
        %v9554 = vunpack.c.l.b16 %v9214
        %v9555 = vunpack.c.h.b16 %v9214
        %v9556 = vunpack.c.l.b16 %v9215
        %v9557 = vunpack.c.h.b16 %v9215
        %v9558 = vunpack.c.l.b16 %v9216
        %v9559 = vunpack.c.h.b16 %v9216
        %v9560 = vunpack.c.l.b16 %v9217
        %v9561 = vunpack.c.h.b16 %v9217
        %v9562 = vunpack.c.l.b16 %v9218
        %v9563 = vunpack.c.h.b16 %v9218
        %v9564 = vunpack.c.l.b16 %v9219
        %v9565 = vunpack.c.h.b16 %v9219
        %v9566 = vunpack.c.l.b16 %v9220
        %v9567 = vunpack.c.h.b16 %v9220
        %v9568 = vunpack.c.l.b16 %v9221
        %v9569 = vunpack.c.h.b16 %v9221
        %v9570 = vunpack.c.l.b16 %v9222
        %v9571 = vunpack.c.h.b16 %v9222
        %v9572 = vunpack.c.l.b16 %v9223
        %v9573 = vunpack.c.h.b16 %v9223
        %v9574 = vunpack.c.l.b16 %v9224
        %v9575 = vunpack.c.h.b16 %v9224
        %v9576 = vunpack.c.l.b16 %v9225
        %v9577 = vunpack.c.h.b16 %v9225
        %v9578 = vunpack.c.l.b16 %v9226
        %v9579 = vunpack.c.h.b16 %v9226
        %v9580 = vunpack.c.l.b16 %v9227
        %v9581 = vunpack.c.h.b16 %v9227
        %v9582 = vunpack.c.l.b16 %v9228
        %v9583 = vunpack.c.h.b16 %v9228
        %v9584 = vunpack.c.l.b16 %v9229
        %v9585 = vunpack.c.h.b16 %v9229
        %v9586 = vunpack.c.l.b16 %v9230
        %v9587 = vunpack.c.h.b16 %v9230
        %v9588 = vunpack.c.l.b16 %v9231
        %v9589 = vunpack.c.h.b16 %v9231
        %v9590 = vunpack.c.l.b16 %v9232
        %v9591 = vunpack.c.h.b16 %v9232
        %v9592 = vunpack.c.l.b16 %v9233
        %v9593 = vunpack.c.h.b16 %v9233
        %v9594 = vunpack.c.l.b16 %v9234
        %v9595 = vunpack.c.h.b16 %v9234
        %v9596 = vunpack.c.l.b16 %v9235
        %v9597 = vunpack.c.h.b16 %v9235
        %v9598 = vunpack.c.l.b16 %v9236
        %v9599 = vunpack.c.h.b16 %v9236
        %v9600 = vunpack.c.l.b16 %v9237
        %v9601 = vunpack.c.h.b16 %v9237
        %v9602 = vunpack.c.l.b16 %v9238
        %v9603 = vunpack.c.h.b16 %v9238
        %v9604 = vunpack.c.l.b16 %v9239
        %v9605 = vunpack.c.h.b16 %v9239
        %v9606 = vunpack.c.l.b16 %v9240
        %v9607 = vunpack.c.h.b16 %v9240
        %v9608 = vunpack.c.l.b16 %v9241
        %v9609 = vunpack.c.h.b16 %v9241
        %v9610 = vunpack.c.l.b16 %v9242
        %v9611 = vunpack.c.h.b16 %v9242
        %v9612 = vunpack.c.l.b16 %v9243
        %v9613 = vunpack.c.h.b16 %v9243
        %v9614 = vunpack.c.l.b16 %v9244
        %v9615 = vunpack.c.h.b16 %v9244
        %v9616 = vunpack.c.l.b16 %v9245
        %v9617 = vunpack.c.h.b16 %v9245
        %v9618 = vunpack.c.l.b16 %v9246
        %v9619 = vunpack.c.h.b16 %v9246
        %v9620 = vunpack.c.l.b16 %v9247
        %v9621 = vunpack.c.h.b16 %v9247
        %v9622 = vunpack.c.l.b16 %v9248
        %v9623 = vunpack.c.h.b16 %v9248
        %v9624 = vunpack.c.l.b16 %v9249
        %v9625 = vunpack.c.h.b16 %v9249
        %v9626 = vunpack.c.l.b16 %v9250
        %v9627 = vunpack.c.h.b16 %v9250
        %v9628 = vunpack.c.l.b16 %v9251
        %v9629 = vunpack.c.h.b16 %v9251
        %v9630 = vunpack.c.l.b16 %v9252
        %v9631 = vunpack.c.h.b16 %v9252
        %v9632 = vunpack.c.l.b16 %v9253
        %v9633 = vunpack.c.h.b16 %v9253
        %v9634 = vunpack.c.l.b16 %v9254
        %v9635 = vunpack.c.h.b16 %v9254
        %v9636 = vunpack.c.l.b16 %v9255
        %v9637 = vunpack.c.h.b16 %v9255
        %v9638 = vunpack.c.l.b16 %v9256
        %v9639 = vunpack.c.h.b16 %v9256
        %v9640 = vunpack.c.l.b16 %v9257
        %v9641 = vunpack.c.h.b16 %v9257
        %v9642 = vunpack.c.l.b16 %v9258
        %v9643 = vunpack.c.h.b16 %v9258
        %v9644 = vunpack.c.l.b16 %v9259
        %v9645 = vunpack.c.h.b16 %v9259
        %v9646 = vunpack.c.l.b16 %v9260
        %v9647 = vunpack.c.h.b16 %v9260
        %v9648 = vunpack.c.l.b16 %v9261
        %v9649 = vunpack.c.h.b16 %v9261
        %v9650 = vunpack.c.l.b16 %v9262
        %v9651 = vunpack.c.h.b16 %v9262
        %v9652 = vunpack.c.l.b16 %v9263
        %v9653 = vunpack.c.h.b16 %v9263
        %v9654 = vunpack.c.l.b16 %v9264
        %v9655 = vunpack.c.h.b16 %v9264
        %v9656 = vunpack.c.l.b16 %v9265
        %v9657 = vunpack.c.h.b16 %v9265
        %v9658 = vunpack.c.l.b16 %v9266
        %v9659 = vunpack.c.h.b16 %v9266
        %v9660 = vunpack.c.l.b16 %v9267
        %v9661 = vunpack.c.h.b16 %v9267
        %v9662 = vunpack.c.l.b16 %v9268
        %v9663 = vunpack.c.h.b16 %v9268
        %v9664 = vunpack.c.l.b16 %v9269
        %v9665 = vunpack.c.h.b16 %v9269
        %v9666 = vunpack.c.l.b16 %v9270
        %v9667 = vunpack.c.h.b16 %v9270
        %v9668 = vunpack.c.l.b16 %v9271
        %v9669 = vunpack.c.h.b16 %v9271
        %v9670 = vunpack.c.l.b16 %v9272
        %v9671 = vunpack.c.h.b16 %v9272
        %v9672 = vunpack.c.l.b16 %v9273
        %v9673 = vunpack.c.h.b16 %v9273
        %v9674 = vpack.c.b16 %v9422, %v9418
        %v9675 = vpack.c.b16 %v9423, %v9419
        %v9676 = vpack.c.b16 %v9424, %v9420
        %v9677 = vpack.c.b16 %v9425, %v9421
        %v9678 = vpack.c.b16 %v9430, %v9426
        %v9679 = vpack.c.b16 %v9431, %v9427
        %v9680 = vpack.c.b16 %v9432, %v9428
        %v9681 = vpack.c.b16 %v9433, %v9429
        %v9682 = vpack.c.b16 %v9438, %v9434
        %v9683 = vpack.c.b16 %v9439, %v9435
        %v9684 = vpack.c.b16 %v9440, %v9436
        %v9685 = vpack.c.b16 %v9441, %v9437
        %v9686 = vpack.c.b16 %v9446, %v9442
        %v9687 = vpack.c.b16 %v9447, %v9443
        %v9688 = vpack.c.b16 %v9448, %v9444
        %v9689 = vpack.c.b16 %v9449, %v9445
        %v9690 = vpack.c.b16 %v9454, %v9450
        %v9691 = vpack.c.b16 %v9455, %v9451
        %v9692 = vpack.c.b16 %v9456, %v9452
        %v9693 = vpack.c.b16 %v9457, %v9453
        %v9694 = vpack.c.b16 %v9462, %v9458
        %v9695 = vpack.c.b16 %v9463, %v9459
        %v9696 = vpack.c.b16 %v9464, %v9460
        %v9697 = vpack.c.b16 %v9465, %v9461
        %v9698 = vpack.c.b16 %v9470, %v9466
        %v9699 = vpack.c.b16 %v9471, %v9467
        %v9700 = vpack.c.b16 %v9472, %v9468
        %v9701 = vpack.c.b16 %v9473, %v9469
        %v9702 = vpack.c.b16 %v9478, %v9474
        %v9703 = vpack.c.b16 %v9479, %v9475
        %v9704 = vpack.c.b16 %v9480, %v9476
        %v9705 = vpack.c.b16 %v9481, %v9477
        %v9706 = vpack.c.b16 %v9486, %v9482
        %v9707 = vpack.c.b16 %v9487, %v9483
        %v9708 = vpack.c.b16 %v9488, %v9484
        %v9709 = vpack.c.b16 %v9489, %v9485
        %v9710 = vpack.c.b16 %v9494, %v9490
        %v9711 = vpack.c.b16 %v9495, %v9491
        %v9712 = vpack.c.b16 %v9496, %v9492
        %v9713 = vpack.c.b16 %v9497, %v9493
        %v9714 = vpack.c.b16 %v9502, %v9498
        %v9715 = vpack.c.b16 %v9503, %v9499
        %v9716 = vpack.c.b16 %v9504, %v9500
        %v9717 = vpack.c.b16 %v9505, %v9501
        %v9718 = vpack.c.b16 %v9510, %v9506
        %v9719 = vpack.c.b16 %v9511, %v9507
        %v9720 = vpack.c.b16 %v9512, %v9508
        %v9721 = vpack.c.b16 %v9513, %v9509
        %v9722 = vpack.c.b16 %v9518, %v9514
        %v9723 = vpack.c.b16 %v9519, %v9515
        %v9724 = vpack.c.b16 %v9520, %v9516
        %v9725 = vpack.c.b16 %v9521, %v9517
        %v9726 = vpack.c.b16 %v9526, %v9522
        %v9727 = vpack.c.b16 %v9527, %v9523
        %v9728 = vpack.c.b16 %v9528, %v9524
        %v9729 = vpack.c.b16 %v9529, %v9525
        %v9730 = vpack.c.b16 %v9534, %v9530
        %v9731 = vpack.c.b16 %v9535, %v9531
        %v9732 = vpack.c.b16 %v9536, %v9532
        %v9733 = vpack.c.b16 %v9537, %v9533
        %v9734 = vpack.c.b16 %v9542, %v9538
        %v9735 = vpack.c.b16 %v9543, %v9539
        %v9736 = vpack.c.b16 %v9544, %v9540
        %v9737 = vpack.c.b16 %v9545, %v9541
        %v9738 = vpack.c.b16 %v9550, %v9546
        %v9739 = vpack.c.b16 %v9551, %v9547
        %v9740 = vpack.c.b16 %v9552, %v9548
        %v9741 = vpack.c.b16 %v9553, %v9549
        %v9742 = vpack.c.b16 %v9558, %v9554
        %v9743 = vpack.c.b16 %v9559, %v9555
        %v9744 = vpack.c.b16 %v9560, %v9556
        %v9745 = vpack.c.b16 %v9561, %v9557
        %v9746 = vpack.c.b16 %v9566, %v9562
        %v9747 = vpack.c.b16 %v9567, %v9563
        %v9748 = vpack.c.b16 %v9568, %v9564
        %v9749 = vpack.c.b16 %v9569, %v9565
        %v9750 = vpack.c.b16 %v9574, %v9570
        %v9751 = vpack.c.b16 %v9575, %v9571
        %v9752 = vpack.c.b16 %v9576, %v9572
        %v9753 = vpack.c.b16 %v9577, %v9573
        %v9754 = vpack.c.b16 %v9582, %v9578
        %v9755 = vpack.c.b16 %v9583, %v9579
        %v9756 = vpack.c.b16 %v9584, %v9580
        %v9757 = vpack.c.b16 %v9585, %v9581
        %v9758 = vpack.c.b16 %v9590, %v9586
        %v9759 = vpack.c.b16 %v9591, %v9587
        %v9760 = vpack.c.b16 %v9592, %v9588
        %v9761 = vpack.c.b16 %v9593, %v9589
        %v9762 = vpack.c.b16 %v9598, %v9594
        %v9763 = vpack.c.b16 %v9599, %v9595
        %v9764 = vpack.c.b16 %v9600, %v9596
        %v9765 = vpack.c.b16 %v9601, %v9597
        %v9766 = vpack.c.b16 %v9606, %v9602
        %v9767 = vpack.c.b16 %v9607, %v9603
        %v9768 = vpack.c.b16 %v9608, %v9604
        %v9769 = vpack.c.b16 %v9609, %v9605
        %v9770 = vpack.c.b16 %v9614, %v9610
        %v9771 = vpack.c.b16 %v9615, %v9611
        %v9772 = vpack.c.b16 %v9616, %v9612
        %v9773 = vpack.c.b16 %v9617, %v9613
        %v9774 = vpack.c.b16 %v9622, %v9618
        %v9775 = vpack.c.b16 %v9623, %v9619
        %v9776 = vpack.c.b16 %v9624, %v9620
        %v9777 = vpack.c.b16 %v9625, %v9621
        %v9778 = vpack.c.b16 %v9630, %v9626
        %v9779 = vpack.c.b16 %v9631, %v9627
        %v9780 = vpack.c.b16 %v9632, %v9628
        %v9781 = vpack.c.b16 %v9633, %v9629
        %v9782 = vpack.c.b16 %v9638, %v9634
        %v9783 = vpack.c.b16 %v9639, %v9635
        %v9784 = vpack.c.b16 %v9640, %v9636
        %v9785 = vpack.c.b16 %v9641, %v9637
        %v9786 = vpack.c.b16 %v9646, %v9642
        %v9787 = vpack.c.b16 %v9647, %v9643
        %v9788 = vpack.c.b16 %v9648, %v9644
        %v9789 = vpack.c.b16 %v9649, %v9645
        %v9790 = vpack.c.b16 %v9654, %v9650
        %v9791 = vpack.c.b16 %v9655, %v9651
        %v9792 = vpack.c.b16 %v9656, %v9652
        %v9793 = vpack.c.b16 %v9657, %v9653
        %v9794 = vpack.c.b16 %v9662, %v9658
        %v9795 = vpack.c.b16 %v9663, %v9659
        %v9796 = vpack.c.b16 %v9664, %v9660
        %v9797 = vpack.c.b16 %v9665, %v9661
        %v9798 = vpack.c.b16 %v9670, %v9666
        %v9799 = vpack.c.b16 %v9671, %v9667
        %v9800 = vpack.c.b16 %v9672, %v9668
        %v9801 = vpack.c.b16 %v9673, %v9669
        %9930 = vmatprep.subr.bf16.mxu0 %v9703
        %9931 = vmatpush1.bf16.msra.mxu0 %v9702
        %9932 = vmatprep.subr.bf16.mxu0 %v9699
        %9933 = vmatpush1.bf16.msra.mxu0 %v9698
        %9934 = vmatprep.subr.bf16.mxu0 %v9695
        %9935 = vmatpush1.bf16.msra.mxu0 %v9694
        %9936 = vmatprep.subr.bf16.mxu0 %v9691
        %9937 = vmatpush1.bf16.msra.mxu0 %v9690
        %9938 = vmatprep.subr.bf16.mxu0 %v9687
        %9939 = vmatpush1.bf16.msra.mxu0 %v9686
        %9940 = vmatprep.subr.bf16.mxu0 %v9683
        %9941 = vmatpush1.bf16.msra.mxu0 %v9682
        %9942 = vmatprep.subr.bf16.mxu0 %v9679
        %9943 = vmatpush1.bf16.msra.mxu0 %v9678
        %9944 = vmatprep.subr.bf16.mxu0 %v9675
        %9945 = vmatpush1.bf16.msra.mxu0 %v9674
        %9946 = vmatprep.subr.bf16.mxu0 %v9735
        %9947 = vmatpush2.bf16.msra.mxu0 %v9734
        %9948 = vmatprep.subr.bf16.mxu0 %v9731
        %9949 = vmatpush2.bf16.msra.mxu0 %v9730
        %9950 = vmatprep.subr.bf16.mxu0 %v9727
        %9951 = vmatpush2.bf16.msra.mxu0 %v9726
        %9952 = vmatprep.subr.bf16.mxu0 %v9723
        %9953 = vmatpush2.bf16.msra.mxu0 %v9722
        %9954 = vmatprep.subr.bf16.mxu0 %v9719
        %9955 = vmatpush2.bf16.msra.mxu0 %v9718
        %9956 = vmatprep.subr.bf16.mxu0 %v9715
        %9957 = vmatpush2.bf16.msra.mxu0 %v9714
        %9958 = vmatprep.subr.bf16.mxu0 %v9711
        %9959 = vmatpush2.bf16.msra.mxu0 %v9710
        %9960 = vmatprep.subr.bf16.mxu0 %v9707
        %9961 = vmatpush2.bf16.msra.mxu0 %v9706
        %9962 = vmatprep.mubr.bf16.mxu0 %v9275
        %9963 = vmatmul.mubr.bf16.gmra.mxu0 %v9274
        %v9964 = vpop.f32.mrf.mxu0
        %v9965 = vadd.f32 0.0, %v9964
        %v9966 = vpop.f32.mrf.mxu0
        %v9967 = vadd.f32 0.0, %v9966
        %v9968 = vpop.f32.mrf.mxu0
        %v9969 = vadd.f32 0.0, %v9968
        %v9970 = vpop.f32.mrf.mxu0
        %v9971 = vadd.f32 0.0, %v9970
        %9972 = vmatprep.mubr.bf16.mxu0 %v9279
        %9973 = vmatmul.mubr.bf16.gmra.mxu0 %v9278
        %v9974 = vpop.f32.mrf.mxu0
        %v9975 = vadd.f32 0.0, %v9974
        %v9976 = vpop.f32.mrf.mxu0
        %v9977 = vadd.f32 0.0, %v9976
        %v9978 = vpop.f32.mrf.mxu0
        %v9979 = vadd.f32 0.0, %v9978
        %v9980 = vpop.f32.mrf.mxu0
        %v9981 = vadd.f32 0.0, %v9980
        %9982 = vdwg.mxu0
        %9983 = vmatprep.subr.bf16.mxu0 %v9767
        %9984 = vmatpush1.bf16.msra.mxu0 %v9766
        %9985 = vmatprep.subr.bf16.mxu0 %v9763
        %9986 = vmatpush1.bf16.msra.mxu0 %v9762
        %9987 = vmatprep.subr.bf16.mxu0 %v9759
        %9988 = vmatpush1.bf16.msra.mxu0 %v9758
        %9989 = vmatprep.subr.bf16.mxu0 %v9755
        %9990 = vmatpush1.bf16.msra.mxu0 %v9754
        %9991 = vmatprep.subr.bf16.mxu0 %v9751
        %9992 = vmatpush1.bf16.msra.mxu0 %v9750
        %9993 = vmatprep.subr.bf16.mxu0 %v9747
        %9994 = vmatpush1.bf16.msra.mxu0 %v9746
        %9995 = vmatprep.subr.bf16.mxu0 %v9743
        %9996 = vmatpush1.bf16.msra.mxu0 %v9742
        %9997 = vmatprep.subr.bf16.mxu0 %v9739
        %9998 = vmatpush1.bf16.msra.mxu0 %v9738
        %9999 = vmatprep.subr.bf16.mxu0 %v9799
        %10000 = vmatpush2.bf16.msra.mxu0 %v9798
        %10001 = vmatprep.subr.bf16.mxu0 %v9795
        %10002 = vmatpush2.bf16.msra.mxu0 %v9794
        %10003 = vmatprep.subr.bf16.mxu0 %v9791
        %10004 = vmatpush2.bf16.msra.mxu0 %v9790
        %10005 = vmatprep.subr.bf16.mxu0 %v9787
        %10006 = vmatpush2.bf16.msra.mxu0 %v9786
        %10007 = vmatprep.subr.bf16.mxu0 %v9783
        %10008 = vmatpush2.bf16.msra.mxu0 %v9782
        %10009 = vmatprep.subr.bf16.mxu0 %v9779
        %10010 = vmatpush2.bf16.msra.mxu0 %v9778
        %10011 = vmatprep.subr.bf16.mxu0 %v9775
        %10012 = vmatpush2.bf16.msra.mxu0 %v9774
        %10013 = vmatprep.subr.bf16.mxu0 %v9771
        %10014 = vmatpush2.bf16.msra.mxu0 %v9770
        %10015 = vmatprep.mubr.bf16.mxu0 %v9277
        %10016 = vmatmul.mubr.bf16.gmra.mxu0 %v9276
        %v10017 = vpop.f32.mrf.mxu0
        %v10018 = vadd.f32 %v9965, %v10017
        %v10019 = vpop.f32.mrf.mxu0
        %v10020 = vadd.f32 %v9967, %v10019
        %v10021 = vpop.f32.mrf.mxu0
        %v10022 = vadd.f32 %v9969, %v10021
        %v10023 = vpop.f32.mrf.mxu0
        %v10024 = vadd.f32 %v9971, %v10023
        %10025 = vmatprep.mubr.bf16.mxu0 %v9281
        %10026 = vmatmul.mubr.bf16.gmra.mxu0 %v9280
        %v10027 = vpop.f32.mrf.mxu0
        %v10028 = vadd.f32 %v9975, %v10027
        %v10029 = vpop.f32.mrf.mxu0
        %v10030 = vadd.f32 %v9977, %v10029
        %v10031 = vpop.f32.mrf.mxu0
        %v10032 = vadd.f32 %v9979, %v10031
        %v10033 = vpop.f32.mrf.mxu0
        %v10034 = vadd.f32 %v9981, %v10033
        %10035 = vdwg.mxu0
        %10036 = vmatprep.subr.bf16.mxu0 %v9705
        %10037 = vmatpush1.bf16.msra.mxu0 %v9704
        %10038 = vmatprep.subr.bf16.mxu0 %v9701
        %10039 = vmatpush1.bf16.msra.mxu0 %v9700
        %10040 = vmatprep.subr.bf16.mxu0 %v9697
        %10041 = vmatpush1.bf16.msra.mxu0 %v9696
        %10042 = vmatprep.subr.bf16.mxu0 %v9693
        %10043 = vmatpush1.bf16.msra.mxu0 %v9692
        %10044 = vmatprep.subr.bf16.mxu0 %v9689
        %10045 = vmatpush1.bf16.msra.mxu0 %v9688
        %10046 = vmatprep.subr.bf16.mxu0 %v9685
        %10047 = vmatpush1.bf16.msra.mxu0 %v9684
        %10048 = vmatprep.subr.bf16.mxu0 %v9681
        %10049 = vmatpush1.bf16.msra.mxu0 %v9680
        %10050 = vmatprep.subr.bf16.mxu0 %v9677
        %10051 = vmatpush1.bf16.msra.mxu0 %v9676
        %10052 = vmatprep.subr.bf16.mxu0 %v9737
        %10053 = vmatpush2.bf16.msra.mxu0 %v9736
        %10054 = vmatprep.subr.bf16.mxu0 %v9733
        %10055 = vmatpush2.bf16.msra.mxu0 %v9732
        %10056 = vmatprep.subr.bf16.mxu0 %v9729
        %10057 = vmatpush2.bf16.msra.mxu0 %v9728
        %10058 = vmatprep.subr.bf16.mxu0 %v9725
        %10059 = vmatpush2.bf16.msra.mxu0 %v9724
        %10060 = vmatprep.subr.bf16.mxu0 %v9721
        %10061 = vmatpush2.bf16.msra.mxu0 %v9720
        %10062 = vmatprep.subr.bf16.mxu0 %v9717
        %10063 = vmatpush2.bf16.msra.mxu0 %v9716
        %10064 = vmatprep.subr.bf16.mxu0 %v9713
        %10065 = vmatpush2.bf16.msra.mxu0 %v9712
        %10066 = vmatprep.subr.bf16.mxu0 %v9709
        %10067 = vmatpush2.bf16.msra.mxu0 %v9708
        %10068 = vmatprep.mubr.bf16.mxu0 %v9275
        %10069 = vmatmul.mubr.bf16.gmra.mxu0 %v9274
        %v10070 = vpop.f32.mrf.mxu0
        %v10071 = vadd.f32 0.0, %v10070
        %v10072 = vpop.f32.mrf.mxu0
        %v10073 = vadd.f32 0.0, %v10072
        %v10074 = vpop.f32.mrf.mxu0
        %v10075 = vadd.f32 0.0, %v10074
        %v10076 = vpop.f32.mrf.mxu0
        %v10077 = vadd.f32 0.0, %v10076
        %10078 = vmatprep.mubr.bf16.mxu0 %v9279
        %10079 = vmatmul.mubr.bf16.gmra.mxu0 %v9278
        %v10080 = vpop.f32.mrf.mxu0
        %v10081 = vadd.f32 0.0, %v10080
        %v10082 = vpop.f32.mrf.mxu0
        %v10083 = vadd.f32 0.0, %v10082
        %v10084 = vpop.f32.mrf.mxu0
        %v10085 = vadd.f32 0.0, %v10084
        %v10086 = vpop.f32.mrf.mxu0
        %v10087 = vadd.f32 0.0, %v10086
        %10088 = vdwg.mxu0
        %10089 = vmatprep.subr.bf16.mxu0 %v9769
        %10090 = vmatpush1.bf16.msra.mxu0 %v9768
        %10091 = vmatprep.subr.bf16.mxu0 %v9765
        %10092 = vmatpush1.bf16.msra.mxu0 %v9764
        %10093 = vmatprep.subr.bf16.mxu0 %v9761
        %10094 = vmatpush1.bf16.msra.mxu0 %v9760
        %10095 = vmatprep.subr.bf16.mxu0 %v9757
        %10096 = vmatpush1.bf16.msra.mxu0 %v9756
        %10097 = vmatprep.subr.bf16.mxu0 %v9753
        %10098 = vmatpush1.bf16.msra.mxu0 %v9752
        %10099 = vmatprep.subr.bf16.mxu0 %v9749
        %10100 = vmatpush1.bf16.msra.mxu0 %v9748
        %10101 = vmatprep.subr.bf16.mxu0 %v9745
        %10102 = vmatpush1.bf16.msra.mxu0 %v9744
        %10103 = vmatprep.subr.bf16.mxu0 %v9741
        %10104 = vmatpush1.bf16.msra.mxu0 %v9740
        %10105 = vmatprep.subr.bf16.mxu0 %v9801
        %10106 = vmatpush2.bf16.msra.mxu0 %v9800
        %10107 = vmatprep.subr.bf16.mxu0 %v9797
        %10108 = vmatpush2.bf16.msra.mxu0 %v9796
        %10109 = vmatprep.subr.bf16.mxu0 %v9793
        %10110 = vmatpush2.bf16.msra.mxu0 %v9792
        %10111 = vmatprep.subr.bf16.mxu0 %v9789
        %10112 = vmatpush2.bf16.msra.mxu0 %v9788
        %10113 = vmatprep.subr.bf16.mxu0 %v9785
        %10114 = vmatpush2.bf16.msra.mxu0 %v9784
        %10115 = vmatprep.subr.bf16.mxu0 %v9781
        %10116 = vmatpush2.bf16.msra.mxu0 %v9780
        %10117 = vmatprep.subr.bf16.mxu0 %v9777
        %10118 = vmatpush2.bf16.msra.mxu0 %v9776
        %10119 = vmatprep.subr.bf16.mxu0 %v9773
        %10120 = vmatpush2.bf16.msra.mxu0 %v9772
        %10121 = vmatprep.mubr.bf16.mxu0 %v9277
        %10122 = vmatmul.mubr.bf16.gmra.mxu0 %v9276
        %v10123 = vpop.f32.mrf.mxu0
        %v10124 = vadd.f32 %v10071, %v10123
        %v10125 = vpop.f32.mrf.mxu0
        %v10126 = vadd.f32 %v10073, %v10125
        %v10127 = vpop.f32.mrf.mxu0
        %v10128 = vadd.f32 %v10075, %v10127
        %v10129 = vpop.f32.mrf.mxu0
        %v10130 = vadd.f32 %v10077, %v10129
        %10131 = vmatprep.mubr.bf16.mxu0 %v9281
        %10132 = vmatmul.mubr.bf16.gmra.mxu0 %v9280
        %v10133 = vpop.f32.mrf.mxu0
        %v10134 = vadd.f32 %v10081, %v10133
        %v10135 = vpop.f32.mrf.mxu0
        %v10136 = vadd.f32 %v10083, %v10135
        %v10137 = vpop.f32.mrf.mxu0
        %v10138 = vadd.f32 %v10085, %v10137
        %v10139 = vpop.f32.mrf.mxu0
        %v10140 = vadd.f32 %v10087, %v10139
        %10141 = vdwg.mxu0
        %v10142 = vadd.f32 %v8989, %v10018
        %v10143 = vadd.f32 %v8991, %v10020
        %v10144 = vadd.f32 %v9095, %v10124
        %v10145 = vadd.f32 %v9097, %v10126
        %v10146 = vadd.f32 %v8993, %v10022
        %v10147 = vadd.f32 %v8995, %v10024
        %v10148 = vadd.f32 %v9099, %v10128
        %v10149 = vadd.f32 %v9101, %v10130
        %v10150 = vadd.f32 %v8999, %v10028
        %v10151 = vadd.f32 %v9001, %v10030
        %v10152 = vadd.f32 %v9105, %v10134
        %v10153 = vadd.f32 %v9107, %v10136
        %v10154 = vadd.f32 %v9003, %v10032
        %v10155 = vadd.f32 %v9005, %v10034
        %v10156 = vadd.f32 %v9109, %v10138
        %v10157 = vadd.f32 %v9111, %v10140
        %v10159 = vlaneseq
        %v10160 = vshrl.u32 %v10159, 7
        %v10161 = vsub.s32 0, %v10160
        %v10162 = vrot.slane %v6847, %v10161
        %v10163 = vlaneseq
        %v10164 = vshrl.u32 %v10163, 7
        %v10165 = vsub.s32 1, %v10164
        %v10166 = vrot.slane %v6847, %v10165
        %v10167 = vlaneseq
        %v10168 = vshrl.u32 %v10167, 7
        %v10169 = vsub.s32 2, %v10168
        %v10170 = vrot.slane %v6847, %v10169
        %v10171 = vlaneseq
        %v10172 = vshrl.u32 %v10171, 7
        %v10173 = vsub.s32 3, %v10172
        %v10174 = vrot.slane %v6847, %v10173
        %v10179 = vadd.f32 %v10142, %v10162
        %v10180 = vadd.f32 %v10143, %v10166
        %v10181 = vadd.f32 %v10144, %v10170
        %v10182 = vadd.f32 %v10145, %v10174
        %v10183 = vadd.f32 %v10146, %v10162
        %v10184 = vadd.f32 %v10147, %v10166
        %v10185 = vadd.f32 %v10148, %v10170
        %v10186 = vadd.f32 %v10149, %v10174
        %v10187 = vadd.f32 %v10150, %v10162
        %v10188 = vadd.f32 %v10151, %v10166
        %v10189 = vadd.f32 %v10152, %v10170
        %v10190 = vadd.f32 %v10153, %v10174
        %v10191 = vadd.f32 %v10154, %v10162
        %v10192 = vadd.f32 %v10155, %v10166
        %v10193 = vadd.f32 %v10156, %v10170
        %v10194 = vadd.f32 %v10157, %v10174
        %v10195 = vpack.c.bf16 %v609, %v609
        %v10196 = vpack.c.bf16 %v610, %v610
        %v10197 = vpack.c.bf16 %v611, %v611
        %v10198 = vpack.c.bf16 %v612, %v612
        %v10199 = vpack.c.bf16 %v613, %v613
        %v10200 = vpack.c.bf16 %v614, %v614
        %v10201 = vpack.c.bf16 %v615, %v615
        %v10202 = vpack.c.bf16 %v616, %v616
        %v10211 = vunpack.c.l.b16 %v10195
        %v10212 = vunpack.c.l.b16 %v10196
        %v10213 = vunpack.c.l.b16 %v10197
        %v10214 = vunpack.c.l.b16 %v10198
        %v10215 = vunpack.c.l.b16 %v10199
        %v10216 = vunpack.c.l.b16 %v10200
        %v10217 = vunpack.c.l.b16 %v10201
        %v10218 = vunpack.c.l.b16 %v10202
        %v10219 = vld [vmem:[#allocation19] sm:$0xff]
        %v10220 = vld [vmem:[#allocation19 + $0x8] sm:$0xff]
        %v10221 = vld [vmem:[#allocation19 + $0x10] sm:$0xff]
        %v10222 = vld [vmem:[#allocation19 + $0x18] sm:$0xff]
        %v10223 = vld [vmem:[#allocation19 + $0x20] sm:$0xff]
        %v10224 = vld [vmem:[#allocation19 + $0x28] sm:$0xff]
        %v10225 = vld [vmem:[#allocation19 + $0x30] sm:$0xff]
        %v10226 = vld [vmem:[#allocation19 + $0x38] sm:$0xff]
        %v10227 = vld [vmem:[#allocation19 + $0x40] sm:$0xff]
        %v10228 = vld [vmem:[#allocation19 + $0x48] sm:$0xff]
        %v10229 = vld [vmem:[#allocation19 + $0x50] sm:$0xff]
        %v10230 = vld [vmem:[#allocation19 + $0x58] sm:$0xff]
        %v10231 = vld [vmem:[#allocation19 + $0x60] sm:$0xff]
        %v10232 = vld [vmem:[#allocation19 + $0x68] sm:$0xff]
        %v10233 = vld [vmem:[#allocation19 + $0x70] sm:$0xff]
        %v10234 = vld [vmem:[#allocation19 + $0x78] sm:$0xff]
        %v10235 = vld [vmem:[#allocation19 + $0x80] sm:$0xff]
        %v10236 = vld [vmem:[#allocation19 + $0x88] sm:$0xff]
        %v10237 = vld [vmem:[#allocation19 + $0x90] sm:$0xff]
        %v10238 = vld [vmem:[#allocation19 + $0x98] sm:$0xff]
        %v10239 = vld [vmem:[#allocation19 + $0xa0] sm:$0xff]
        %v10240 = vld [vmem:[#allocation19 + $0xa8] sm:$0xff]
        %v10241 = vld [vmem:[#allocation19 + $0xb0] sm:$0xff]
        %v10242 = vld [vmem:[#allocation19 + $0xb8] sm:$0xff]
        %v10243 = vld [vmem:[#allocation19 + $0xc0] sm:$0xff]
        %v10244 = vld [vmem:[#allocation19 + $0xc8] sm:$0xff]
        %v10245 = vld [vmem:[#allocation19 + $0xd0] sm:$0xff]
        %v10246 = vld [vmem:[#allocation19 + $0xd8] sm:$0xff]
        %v10247 = vld [vmem:[#allocation19 + $0xe0] sm:$0xff]
        %v10248 = vld [vmem:[#allocation19 + $0xe8] sm:$0xff]
        %v10249 = vld [vmem:[#allocation19 + $0xf0] sm:$0xff]
        %v10250 = vld [vmem:[#allocation19 + $0xf8] sm:$0xff]
        %v10251 = vld [vmem:[#allocation19 + $0x100] sm:$0xff]
        %v10252 = vld [vmem:[#allocation19 + $0x108] sm:$0xff]
        %v10253 = vld [vmem:[#allocation19 + $0x110] sm:$0xff]
        %v10254 = vld [vmem:[#allocation19 + $0x118] sm:$0xff]
        %v10255 = vld [vmem:[#allocation19 + $0x120] sm:$0xff]
        %v10256 = vld [vmem:[#allocation19 + $0x128] sm:$0xff]
        %v10257 = vld [vmem:[#allocation19 + $0x130] sm:$0xff]
        %v10258 = vld [vmem:[#allocation19 + $0x138] sm:$0xff]
        %v10259 = vld [vmem:[#allocation19 + $0x140] sm:$0xff]
        %v10260 = vld [vmem:[#allocation19 + $0x148] sm:$0xff]
        %v10261 = vld [vmem:[#allocation19 + $0x150] sm:$0xff]
        %v10262 = vld [vmem:[#allocation19 + $0x158] sm:$0xff]
        %v10263 = vld [vmem:[#allocation19 + $0x160] sm:$0xff]
        %v10264 = vld [vmem:[#allocation19 + $0x168] sm:$0xff]
        %v10265 = vld [vmem:[#allocation19 + $0x170] sm:$0xff]
        %v10266 = vld [vmem:[#allocation19 + $0x178] sm:$0xff]
        %v10267 = vld [vmem:[#allocation19 + $0x180] sm:$0xff]
        %v10268 = vld [vmem:[#allocation19 + $0x188] sm:$0xff]
        %v10269 = vld [vmem:[#allocation19 + $0x190] sm:$0xff]
        %v10270 = vld [vmem:[#allocation19 + $0x198] sm:$0xff]
        %v10271 = vld [vmem:[#allocation19 + $0x1a0] sm:$0xff]
        %v10272 = vld [vmem:[#allocation19 + $0x1a8] sm:$0xff]
        %v10273 = vld [vmem:[#allocation19 + $0x1b0] sm:$0xff]
        %v10274 = vld [vmem:[#allocation19 + $0x1b8] sm:$0xff]
        %v10275 = vld [vmem:[#allocation19 + $0x1c0] sm:$0xff]
        %v10276 = vld [vmem:[#allocation19 + $0x1c8] sm:$0xff]
        %v10277 = vld [vmem:[#allocation19 + $0x1d0] sm:$0xff]
        %v10278 = vld [vmem:[#allocation19 + $0x1d8] sm:$0xff]
        %v10279 = vld [vmem:[#allocation19 + $0x1e0] sm:$0xff]
        %v10280 = vld [vmem:[#allocation19 + $0x1e8] sm:$0xff]
        %v10281 = vld [vmem:[#allocation19 + $0x1f0] sm:$0xff]
        %v10282 = vld [vmem:[#allocation19 + $0x1f8] sm:$0xff]
        %v10283 = vpack.c.b16 %v10213, %v10211
        %v10284 = vpack.c.b16 %v10214, %v10212
        %v10285 = vpack.c.b16 %v10217, %v10215
        %v10286 = vpack.c.b16 %v10218, %v10216
        %v10355 = vunpack.c.l.b16 %v10219
        %v10356 = vunpack.c.h.b16 %v10219
        %v10357 = vunpack.c.l.b16 %v10220
        %v10358 = vunpack.c.h.b16 %v10220
        %v10359 = vunpack.c.l.b16 %v10221
        %v10360 = vunpack.c.h.b16 %v10221
        %v10361 = vunpack.c.l.b16 %v10222
        %v10362 = vunpack.c.h.b16 %v10222
        %v10363 = vunpack.c.l.b16 %v10223
        %v10364 = vunpack.c.h.b16 %v10223
        %v10365 = vunpack.c.l.b16 %v10224
        %v10366 = vunpack.c.h.b16 %v10224
        %v10367 = vunpack.c.l.b16 %v10225
        %v10368 = vunpack.c.h.b16 %v10225
        %v10369 = vunpack.c.l.b16 %v10226
        %v10370 = vunpack.c.h.b16 %v10226
        %v10371 = vunpack.c.l.b16 %v10227
        %v10372 = vunpack.c.h.b16 %v10227
        %v10373 = vunpack.c.l.b16 %v10228
        %v10374 = vunpack.c.h.b16 %v10228
        %v10375 = vunpack.c.l.b16 %v10229
        %v10376 = vunpack.c.h.b16 %v10229
        %v10377 = vunpack.c.l.b16 %v10230
        %v10378 = vunpack.c.h.b16 %v10230
        %v10379 = vunpack.c.l.b16 %v10231
        %v10380 = vunpack.c.h.b16 %v10231
        %v10381 = vunpack.c.l.b16 %v10232
        %v10382 = vunpack.c.h.b16 %v10232
        %v10383 = vunpack.c.l.b16 %v10233
        %v10384 = vunpack.c.h.b16 %v10233
        %v10385 = vunpack.c.l.b16 %v10234
        %v10386 = vunpack.c.h.b16 %v10234
        %v10387 = vunpack.c.l.b16 %v10235
        %v10388 = vunpack.c.h.b16 %v10235
        %v10389 = vunpack.c.l.b16 %v10236
        %v10390 = vunpack.c.h.b16 %v10236
        %v10391 = vunpack.c.l.b16 %v10237
        %v10392 = vunpack.c.h.b16 %v10237
        %v10393 = vunpack.c.l.b16 %v10238
        %v10394 = vunpack.c.h.b16 %v10238
        %v10395 = vunpack.c.l.b16 %v10239
        %v10396 = vunpack.c.h.b16 %v10239
        %v10397 = vunpack.c.l.b16 %v10240
        %v10398 = vunpack.c.h.b16 %v10240
        %v10399 = vunpack.c.l.b16 %v10241
        %v10400 = vunpack.c.h.b16 %v10241
        %v10401 = vunpack.c.l.b16 %v10242
        %v10402 = vunpack.c.h.b16 %v10242
        %v10403 = vunpack.c.l.b16 %v10243
        %v10404 = vunpack.c.h.b16 %v10243
        %v10405 = vunpack.c.l.b16 %v10244
        %v10406 = vunpack.c.h.b16 %v10244
        %v10407 = vunpack.c.l.b16 %v10245
        %v10408 = vunpack.c.h.b16 %v10245
        %v10409 = vunpack.c.l.b16 %v10246
        %v10410 = vunpack.c.h.b16 %v10246
        %v10411 = vunpack.c.l.b16 %v10247
        %v10412 = vunpack.c.h.b16 %v10247
        %v10413 = vunpack.c.l.b16 %v10248
        %v10414 = vunpack.c.h.b16 %v10248
        %v10415 = vunpack.c.l.b16 %v10249
        %v10416 = vunpack.c.h.b16 %v10249
        %v10417 = vunpack.c.l.b16 %v10250
        %v10418 = vunpack.c.h.b16 %v10250
        %v10419 = vunpack.c.l.b16 %v10251
        %v10420 = vunpack.c.h.b16 %v10251
        %v10421 = vunpack.c.l.b16 %v10252
        %v10422 = vunpack.c.h.b16 %v10252
        %v10423 = vunpack.c.l.b16 %v10253
        %v10424 = vunpack.c.h.b16 %v10253
        %v10425 = vunpack.c.l.b16 %v10254
        %v10426 = vunpack.c.h.b16 %v10254
        %v10427 = vunpack.c.l.b16 %v10255
        %v10428 = vunpack.c.h.b16 %v10255
        %v10429 = vunpack.c.l.b16 %v10256
        %v10430 = vunpack.c.h.b16 %v10256
        %v10431 = vunpack.c.l.b16 %v10257
        %v10432 = vunpack.c.h.b16 %v10257
        %v10433 = vunpack.c.l.b16 %v10258
        %v10434 = vunpack.c.h.b16 %v10258
        %v10435 = vunpack.c.l.b16 %v10259
        %v10436 = vunpack.c.h.b16 %v10259
        %v10437 = vunpack.c.l.b16 %v10260
        %v10438 = vunpack.c.h.b16 %v10260
        %v10439 = vunpack.c.l.b16 %v10261
        %v10440 = vunpack.c.h.b16 %v10261
        %v10441 = vunpack.c.l.b16 %v10262
        %v10442 = vunpack.c.h.b16 %v10262
        %v10443 = vunpack.c.l.b16 %v10263
        %v10444 = vunpack.c.h.b16 %v10263
        %v10445 = vunpack.c.l.b16 %v10264
        %v10446 = vunpack.c.h.b16 %v10264
        %v10447 = vunpack.c.l.b16 %v10265
        %v10448 = vunpack.c.h.b16 %v10265
        %v10449 = vunpack.c.l.b16 %v10266
        %v10450 = vunpack.c.h.b16 %v10266
        %v10451 = vunpack.c.l.b16 %v10267
        %v10452 = vunpack.c.h.b16 %v10267
        %v10453 = vunpack.c.l.b16 %v10268
        %v10454 = vunpack.c.h.b16 %v10268
        %v10455 = vunpack.c.l.b16 %v10269
        %v10456 = vunpack.c.h.b16 %v10269
        %v10457 = vunpack.c.l.b16 %v10270
        %v10458 = vunpack.c.h.b16 %v10270
        %v10459 = vunpack.c.l.b16 %v10271
        %v10460 = vunpack.c.h.b16 %v10271
        %v10461 = vunpack.c.l.b16 %v10272
        %v10462 = vunpack.c.h.b16 %v10272
        %v10463 = vunpack.c.l.b16 %v10273
        %v10464 = vunpack.c.h.b16 %v10273
        %v10465 = vunpack.c.l.b16 %v10274
        %v10466 = vunpack.c.h.b16 %v10274
        %v10467 = vunpack.c.l.b16 %v10275
        %v10468 = vunpack.c.h.b16 %v10275
        %v10469 = vunpack.c.l.b16 %v10276
        %v10470 = vunpack.c.h.b16 %v10276
        %v10471 = vunpack.c.l.b16 %v10277
        %v10472 = vunpack.c.h.b16 %v10277
        %v10473 = vunpack.c.l.b16 %v10278
        %v10474 = vunpack.c.h.b16 %v10278
        %v10475 = vunpack.c.l.b16 %v10279
        %v10476 = vunpack.c.h.b16 %v10279
        %v10477 = vunpack.c.l.b16 %v10280
        %v10478 = vunpack.c.h.b16 %v10280
        %v10479 = vunpack.c.l.b16 %v10281
        %v10480 = vunpack.c.h.b16 %v10281
        %v10481 = vunpack.c.l.b16 %v10282
        %v10482 = vunpack.c.h.b16 %v10282
        %v10483 = vpack.c.b16 %v10359, %v10355
        %v10484 = vpack.c.b16 %v10360, %v10356
        %v10485 = vpack.c.b16 %v10361, %v10357
        %v10486 = vpack.c.b16 %v10362, %v10358
        %v10487 = vpack.c.b16 %v10367, %v10363
        %v10488 = vpack.c.b16 %v10368, %v10364
        %v10489 = vpack.c.b16 %v10369, %v10365
        %v10490 = vpack.c.b16 %v10370, %v10366
        %v10491 = vpack.c.b16 %v10375, %v10371
        %v10492 = vpack.c.b16 %v10376, %v10372
        %v10493 = vpack.c.b16 %v10377, %v10373
        %v10494 = vpack.c.b16 %v10378, %v10374
        %v10495 = vpack.c.b16 %v10383, %v10379
        %v10496 = vpack.c.b16 %v10384, %v10380
        %v10497 = vpack.c.b16 %v10385, %v10381
        %v10498 = vpack.c.b16 %v10386, %v10382
        %v10499 = vpack.c.b16 %v10391, %v10387
        %v10500 = vpack.c.b16 %v10392, %v10388
        %v10501 = vpack.c.b16 %v10393, %v10389
        %v10502 = vpack.c.b16 %v10394, %v10390
        %v10503 = vpack.c.b16 %v10399, %v10395
        %v10504 = vpack.c.b16 %v10400, %v10396
        %v10505 = vpack.c.b16 %v10401, %v10397
        %v10506 = vpack.c.b16 %v10402, %v10398
        %v10507 = vpack.c.b16 %v10407, %v10403
        %v10508 = vpack.c.b16 %v10408, %v10404
        %v10509 = vpack.c.b16 %v10409, %v10405
        %v10510 = vpack.c.b16 %v10410, %v10406
        %v10511 = vpack.c.b16 %v10415, %v10411
        %v10512 = vpack.c.b16 %v10416, %v10412
        %v10513 = vpack.c.b16 %v10417, %v10413
        %v10514 = vpack.c.b16 %v10418, %v10414
        %v10515 = vpack.c.b16 %v10423, %v10419
        %v10516 = vpack.c.b16 %v10424, %v10420
        %v10517 = vpack.c.b16 %v10425, %v10421
        %v10518 = vpack.c.b16 %v10426, %v10422
        %v10519 = vpack.c.b16 %v10431, %v10427
        %v10520 = vpack.c.b16 %v10432, %v10428
        %v10521 = vpack.c.b16 %v10433, %v10429
        %v10522 = vpack.c.b16 %v10434, %v10430
        %v10523 = vpack.c.b16 %v10439, %v10435
        %v10524 = vpack.c.b16 %v10440, %v10436
        %v10525 = vpack.c.b16 %v10441, %v10437
        %v10526 = vpack.c.b16 %v10442, %v10438
        %v10527 = vpack.c.b16 %v10447, %v10443
        %v10528 = vpack.c.b16 %v10448, %v10444
        %v10529 = vpack.c.b16 %v10449, %v10445
        %v10530 = vpack.c.b16 %v10450, %v10446
        %v10531 = vpack.c.b16 %v10455, %v10451
        %v10532 = vpack.c.b16 %v10456, %v10452
        %v10533 = vpack.c.b16 %v10457, %v10453
        %v10534 = vpack.c.b16 %v10458, %v10454
        %v10535 = vpack.c.b16 %v10463, %v10459
        %v10536 = vpack.c.b16 %v10464, %v10460
        %v10537 = vpack.c.b16 %v10465, %v10461
        %v10538 = vpack.c.b16 %v10466, %v10462
        %v10539 = vpack.c.b16 %v10471, %v10467
        %v10540 = vpack.c.b16 %v10472, %v10468
        %v10541 = vpack.c.b16 %v10473, %v10469
        %v10542 = vpack.c.b16 %v10474, %v10470
        %v10543 = vpack.c.b16 %v10479, %v10475
        %v10544 = vpack.c.b16 %v10480, %v10476
        %v10545 = vpack.c.b16 %v10481, %v10477
        %v10546 = vpack.c.b16 %v10482, %v10478
        %10611 = vmatprep.subr.bf16.mxu0 %v10512
        %10612 = vmatpush1.bf16.msra.mxu0 %v10511
        %10613 = vmatprep.subr.bf16.mxu0 %v10508
        %10614 = vmatpush1.bf16.msra.mxu0 %v10507
        %10615 = vmatprep.subr.bf16.mxu0 %v10504
        %10616 = vmatpush1.bf16.msra.mxu0 %v10503
        %10617 = vmatprep.subr.bf16.mxu0 %v10500
        %10618 = vmatpush1.bf16.msra.mxu0 %v10499
        %10619 = vmatprep.subr.bf16.mxu0 %v10496
        %10620 = vmatpush1.bf16.msra.mxu0 %v10495
        %10621 = vmatprep.subr.bf16.mxu0 %v10492
        %10622 = vmatpush1.bf16.msra.mxu0 %v10491
        %10623 = vmatprep.subr.bf16.mxu0 %v10488
        %10624 = vmatpush1.bf16.msra.mxu0 %v10487
        %10625 = vmatprep.subr.bf16.mxu0 %v10484
        %10626 = vmatpush1.bf16.msra.mxu0 %v10483
        %10627 = vmatprep.subr.bf16.mxu0 %v10544
        %10628 = vmatpush2.bf16.msra.mxu0 %v10543
        %10629 = vmatprep.subr.bf16.mxu0 %v10540
        %10630 = vmatpush2.bf16.msra.mxu0 %v10539
        %10631 = vmatprep.subr.bf16.mxu0 %v10536
        %10632 = vmatpush2.bf16.msra.mxu0 %v10535
        %10633 = vmatprep.subr.bf16.mxu0 %v10532
        %10634 = vmatpush2.bf16.msra.mxu0 %v10531
        %10635 = vmatprep.subr.bf16.mxu0 %v10528
        %10636 = vmatpush2.bf16.msra.mxu0 %v10527
        %10637 = vmatprep.subr.bf16.mxu0 %v10524
        %10638 = vmatpush2.bf16.msra.mxu0 %v10523
        %10639 = vmatprep.subr.bf16.mxu0 %v10520
        %10640 = vmatpush2.bf16.msra.mxu0 %v10519
        %10641 = vmatprep.subr.bf16.mxu0 %v10516
        %10642 = vmatpush2.bf16.msra.mxu0 %v10515
        %10643 = vmatprep.mubr.bf16.mxu0 %v10284
        %10644 = vmatmul.mubr.bf16.gmra.mxu0 %v10283
        %v10645 = vpop.f32.mrf.mxu0
        %v10646 = vadd.f32 0.0, %v10645
        %v10647 = vpop.f32.mrf.mxu0
        %v10648 = vadd.f32 0.0, %v10647
        %v10649 = vpop.f32.mrf.mxu0
        %v10650 = vadd.f32 0.0, %v10649
        %v10651 = vpop.f32.mrf.mxu0
        %v10652 = vadd.f32 0.0, %v10651
        %10653 = vmatprep.mubr.bf16.mxu0 %v10286
        %10654 = vmatmul.mubr.bf16.gmra.mxu0 %v10285
        %v10655 = vpop.f32.mrf.mxu0
        %v10656 = vadd.f32 0.0, %v10655
        %v10657 = vpop.f32.mrf.mxu0
        %v10658 = vadd.f32 0.0, %v10657
        %v10659 = vpop.f32.mrf.mxu0
        %v10660 = vadd.f32 0.0, %v10659
        %v10661 = vpop.f32.mrf.mxu0
        %v10662 = vadd.f32 0.0, %v10661
        %10663 = vdwg.mxu0
        %10664 = vmatprep.subr.bf16.mxu0 %v10514
        %10665 = vmatpush1.bf16.msra.mxu0 %v10513
        %10666 = vmatprep.subr.bf16.mxu0 %v10510
        %10667 = vmatpush1.bf16.msra.mxu0 %v10509
        %10668 = vmatprep.subr.bf16.mxu0 %v10506
        %10669 = vmatpush1.bf16.msra.mxu0 %v10505
        %10670 = vmatprep.subr.bf16.mxu0 %v10502
        %10671 = vmatpush1.bf16.msra.mxu0 %v10501
        %10672 = vmatprep.subr.bf16.mxu0 %v10498
        %10673 = vmatpush1.bf16.msra.mxu0 %v10497
        %10674 = vmatprep.subr.bf16.mxu0 %v10494
        %10675 = vmatpush1.bf16.msra.mxu0 %v10493
        %10676 = vmatprep.subr.bf16.mxu0 %v10490
        %10677 = vmatpush1.bf16.msra.mxu0 %v10489
        %10678 = vmatprep.subr.bf16.mxu0 %v10486
        %10679 = vmatpush1.bf16.msra.mxu0 %v10485
        %10680 = vmatprep.subr.bf16.mxu0 %v10546
        %10681 = vmatpush2.bf16.msra.mxu0 %v10545
        %10682 = vmatprep.subr.bf16.mxu0 %v10542
        %10683 = vmatpush2.bf16.msra.mxu0 %v10541
        %10684 = vmatprep.subr.bf16.mxu0 %v10538
        %10685 = vmatpush2.bf16.msra.mxu0 %v10537
        %10686 = vmatprep.subr.bf16.mxu0 %v10534
        %10687 = vmatpush2.bf16.msra.mxu0 %v10533
        %10688 = vmatprep.subr.bf16.mxu0 %v10530
        %10689 = vmatpush2.bf16.msra.mxu0 %v10529
        %10690 = vmatprep.subr.bf16.mxu0 %v10526
        %10691 = vmatpush2.bf16.msra.mxu0 %v10525
        %10692 = vmatprep.subr.bf16.mxu0 %v10522
        %10693 = vmatpush2.bf16.msra.mxu0 %v10521
        %10694 = vmatprep.subr.bf16.mxu0 %v10518
        %10695 = vmatpush2.bf16.msra.mxu0 %v10517
        %10696 = vmatprep.mubr.bf16.mxu0 %v10284
        %10697 = vmatmul.mubr.bf16.gmra.mxu0 %v10283
        %v10698 = vpop.f32.mrf.mxu0
        %v10699 = vadd.f32 0.0, %v10698
        %v10700 = vpop.f32.mrf.mxu0
        %v10701 = vadd.f32 0.0, %v10700
        %v10702 = vpop.f32.mrf.mxu0
        %v10703 = vadd.f32 0.0, %v10702
        %v10704 = vpop.f32.mrf.mxu0
        %v10705 = vadd.f32 0.0, %v10704
        %10706 = vmatprep.mubr.bf16.mxu0 %v10286
        %10707 = vmatmul.mubr.bf16.gmra.mxu0 %v10285
        %v10708 = vpop.f32.mrf.mxu0
        %v10709 = vadd.f32 0.0, %v10708
        %v10710 = vpop.f32.mrf.mxu0
        %v10711 = vadd.f32 0.0, %v10710
        %v10712 = vpop.f32.mrf.mxu0
        %v10713 = vadd.f32 0.0, %v10712
        %v10714 = vpop.f32.mrf.mxu0
        %v10715 = vadd.f32 0.0, %v10714
        %10716 = vdwg.mxu0
        %v10717 = vld [vmem:[#allocation20] sm:$0xf]
        %v10719 = vlaneseq
        %v10720 = vshrl.u32 %v10719, 7
        %v10721 = vsub.s32 0, %v10720
        %v10722 = vrot.slane %v10717, %v10721
        %v10723 = vlaneseq
        %v10724 = vshrl.u32 %v10723, 7
        %v10725 = vsub.s32 1, %v10724
        %v10726 = vrot.slane %v10717, %v10725
        %v10727 = vlaneseq
        %v10728 = vshrl.u32 %v10727, 7
        %v10729 = vsub.s32 2, %v10728
        %v10730 = vrot.slane %v10717, %v10729
        %v10731 = vlaneseq
        %v10732 = vshrl.u32 %v10731, 7
        %v10733 = vsub.s32 3, %v10732
        %v10734 = vrot.slane %v10717, %v10733
        %v10739 = vadd.f32 %v10646, %v10722
        %v10740 = vadd.f32 %v10648, %v10726
        %v10741 = vadd.f32 %v10699, %v10730
        %v10742 = vadd.f32 %v10701, %v10734
        %v10743 = vadd.f32 %v10650, %v10722
        %v10744 = vadd.f32 %v10652, %v10726
        %v10745 = vadd.f32 %v10703, %v10730
        %v10746 = vadd.f32 %v10705, %v10734
        %v10747 = vadd.f32 %v10656, %v10722
        %v10748 = vadd.f32 %v10658, %v10726
        %v10749 = vadd.f32 %v10709, %v10730
        %v10750 = vadd.f32 %v10711, %v10734
        %v10751 = vadd.f32 %v10660, %v10722
        %v10752 = vadd.f32 %v10662, %v10726
        %v10753 = vadd.f32 %v10713, %v10730
        %v10754 = vadd.f32 %v10715, %v10734
        %v10755 = vadd.f32 %v10739, %v10179
        %v10756 = vadd.f32 %v10740, %v10180
        %v10757 = vadd.f32 %v10741, %v10181
        %v10758 = vadd.f32 %v10742, %v10182
        %v10759 = vadd.f32 %v10743, %v10183
        %v10760 = vadd.f32 %v10744, %v10184
        %v10761 = vadd.f32 %v10745, %v10185
        %v10762 = vadd.f32 %v10746, %v10186
        %v10763 = vadd.f32 %v10747, %v10187
        %v10764 = vadd.f32 %v10748, %v10188
        %v10765 = vadd.f32 %v10749, %v10189
        %v10766 = vadd.f32 %v10750, %v10190
        %v10767 = vadd.f32 %v10751, %v10191
        %v10768 = vadd.f32 %v10752, %v10192
        %v10769 = vadd.f32 %v10753, %v10193
        %v10770 = vadd.f32 %v10754, %v10194
        %10771 = vst [vmem:[%s604] sm:$0xff] %v10755
        %10772 = vst [vmem:[%s604 + $0x8] sm:$0xff] %v10756
        %10773 = vst [vmem:[%s604 + $0x10] sm:$0xff] %v10757
        %10774 = vst [vmem:[%s604 + $0x18] sm:$0xff] %v10758
        %10775 = vst [vmem:[%s604 + $0x20] sm:$0xff] %v10759
        %10776 = vst [vmem:[%s604 + $0x28] sm:$0xff] %v10760
        %10777 = vst [vmem:[%s604 + $0x30] sm:$0xff] %v10761
        %10778 = vst [vmem:[%s604 + $0x38] sm:$0xff] %v10762
        %10779 = vst [vmem:[%s604 + $0x40] sm:$0xff] %v10763
        %10780 = vst [vmem:[%s604 + $0x48] sm:$0xff] %v10764
        %10781 = vst [vmem:[%s604 + $0x50] sm:$0xff] %v10765
        %10782 = vst [vmem:[%s604 + $0x58] sm:$0xff] %v10766
        %10783 = vst [vmem:[%s604 + $0x60] sm:$0xff] %v10767
        %10784 = vst [vmem:[%s604 + $0x68] sm:$0xff] %v10768
        %10785 = vst [vmem:[%s604 + $0x70] sm:$0xff] %v10769
        %10786 = vst [vmem:[%s604 + $0x78] sm:$0xff] %v10770
        %s10787 = sand.u32 %s307, 1
        %s10788 = scalar_lea.sflag [#allocation4], %s10787
        %s10789 = sand.u32 %s307, 1
        %s10790 = smul.addr %s10789, 128
        %s10791 = scalar_lea.vmem [#allocation22], %s10790
        // Predicated region
        $region117: #{tpu_custom_call.1} parent=67 // pred_check
          %p10792 = pneg %p317
        $region118: #{tpu_custom_call.1} parent=67 // pred_check_branch
          %10794 = sbr.rel (%p10792) target = $region120
        $region119: #{tpu_custom_call.1} parent=67 // pred_region
          %s10795 = smul.u32 4, %s37
          %s10797 = ssub.s32 2048, 2048
          %10798 = vsyncadd %s10788, %s10797
          %s10799 = smul.addr %s10795, 4
          %s10800 = smul.addr %s10799, 128
          %s10801 = scalar_lea.hbm %s12, %s10800
          %s10802 = sshll.u32 %s10791, 4
          %s10803 = int_to_ptr.vmem [resolvable:$true] %s10802
          %10808 = dma.vmem_to_hbm [thread:$0]  %s10803, 2048, %s10801, %s10788, 512, 512, 32
        $region120: #{tpu_custom_call.1} parent=67 // pred_fallthru
          _
      $region68: #{tpu_custom_call.1} parent=5 // pred_fallthru
        _
      %p10809 = scmp.le.s32.totalorder 2, %s32
      // Predicated region
      $region121: #{tpu_custom_call.1} parent=5 // pred_check
        %p10810 = pneg %p10809
      $region122: #{tpu_custom_call.1} parent=5 // pred_check_branch
        %10812 = sbr.rel (%p10810) target = $region124
      $region123: #{tpu_custom_call.1} parent=5 // pred_region
        %s10813 = ssub.s32 %s32, 2
        // Predicated region
        $region125: #{tpu_custom_call.1} parent=123 // pred_check
          %p10814 = pneg %p323
        $region126: #{tpu_custom_call.1} parent=123 // pred_check_branch
          %10816 = sbr.rel (%p10814) target = $region128
        $region127: #{tpu_custom_call.1} parent=123 // pred_region
          %s10817 = sand.u32 %s308, 1
          %s10818 = scalar_lea.sflag [#allocation4], %s10817
          %s10819 = sand.u32 %s308, 1
          %s10820 = smul.addr %s10819, 128
          %s10821 = scalar_lea.vmem [#allocation22], %s10820
          %10822 = dma.done %s10818, 2048
        $region128: #{tpu_custom_call.1} parent=123 // pred_fallthru
          _
      $region124: #{tpu_custom_call.1} parent=5 // pred_fallthru
        _
    $region6: #{tpu_custom_call.1} parent=1 // loop_footer
      %s36 = sadd.s32 1, %s32
    $region7: #{tpu_custom_call.1} parent=1 // loop_footer_branch
      %31 = sbr.rel target = $region3
    $region8: #{tpu_custom_call.1} parent=1 // loop_exit
      _
    %10823 = vsyncpa [#allocation3], 1
    %s10824 = scalar_lea.sflag [#allocation3], 1
    %10825 = vsyncpa %s10824, 1
    %10826 = vsyncpa [#allocation6], 1
    %s10827 = scalar_lea.sflag [#allocation6], 1
    %10828 = vsyncpa %s10827, 1
    %10829 = vsyncpa [#allocation9], 1
    %10830 = vsyncpa [#allocation12], 1
    %10831 = vsyncpa [#allocation15], 1
    %10832 = vsyncpa [#allocation18], 1
    %10833 = vsyncpa [#allocation21], 1
    %10834 = vsyncpa [#allocation4], 1
    %s10835 = scalar_lea.sflag [#allocation4], 1
    %10836 = vsyncpa %s10835, 1

</llo_original>
